<compile_context>
chip_gen: v5e
topology: v5e:2x2
jax: 0.10.0
libtpu: 0.0.40
codegen_flags: <defaults>
</compile_context>

<pallas_src>
import math
import functools

import jax
import jax.numpy as jnp
from jax.experimental import pallas as pl
from jax.experimental.pallas import tpu as pltpu

LANE = 128


def _round_up(x, m):
    return (x + m - 1) // m * m


def _silu(x):
    # Stable, EUP-friendly SiLU: sigmoid(x) == 0.5*(tanh(x/2) + 1).
    # tanh uses the (otherwise idle) EUP slot and never overflows in f32.
    return x * (0.5 * jnp.tanh(0.5 * x) + 0.5)


def time_embedding_kernel(t_ref, pack_ref, w1s_ref, w1c_ref, w2_ref, w3_ref,
                          o_ref, *, half_dim, hidden, dim,
                          off_freq, off_b1, off_b2, off_b3):
    # pack_ref = [freq*(1/half_dim) | b1 | b2 | b3] at 128-lane-aligned static
    # offsets (a single DMA instead of four tiny ones).
    freq = pack_ref[:, pl.ds(off_freq, half_dim)]   # (1, half_dim) f32
    b1 = pack_ref[:, pl.ds(off_b1, hidden)]         # (1, hidden)   f32
    b2 = pack_ref[:, pl.ds(off_b2, dim)]            # (1, dim)      f32
    b3 = pack_ref[:, pl.ds(off_b3, dim)]            # (1, dim)      f32

    # freq already carries the 1/half_dim timestep scale (folded at init), so
    # ang == (t / half_dim) * emb exactly as in the PyTorch module
    # (bit-exact when half_dim is a power of two, e.g. dim=256).
    ang = t_ref[...] * freq                         # (BM, half_dim) f32
    s = jnp.sin(ang)
    c = jnp.cos(ang)

    # Concat-free first layer: [sin, cos] @ w1 == sin @ w1[:H] + cos @ w1[H:].
    h = (jnp.dot(s.astype(jnp.bfloat16), w1s_ref[...],
                 preferred_element_type=jnp.float32)
         + jnp.dot(c.astype(jnp.bfloat16), w1c_ref[...],
                   preferred_element_type=jnp.float32)
         + b1)
    h = _silu(h)

    h = jnp.dot(h.astype(jnp.bfloat16), w2_ref[...],
                preferred_element_type=jnp.float32) + b2
    h = _silu(h)

    o_ref[...] = (jnp.dot(h.astype(jnp.bfloat16), w3_ref[...],
                          preferred_element_type=jnp.float32)
                  + b3)


def prepare_params(freq, w1, b1, w2, b2, w3, b3):
    """One-time weight prep, hoisted out of the per-call path.

    - bf16 cast of the matmul weights (halves per-call weight DMA),
    - split of w1 into sin/cos halves (concat-free first layer),
    - 1/half_dim timestep scale folded into the freq row,
    - freq + the three biases packed into a single 128-lane-aligned f32 row.
    """
    half_dim = freq.shape[0]
    hidden = w1.shape[1]
    dim = w3.shape[1]

    w1_sin = w1[:half_dim, :].astype(jnp.bfloat16)
    w1_cos = w1[half_dim:, :].astype(jnp.bfloat16)
    w2_bf = w2.astype(jnp.bfloat16)
    w3_bf = w3.astype(jnp.bfloat16)

    off_freq = 0
    off_b1 = _round_up(off_freq + half_dim, LANE)
    off_b2 = _round_up(off_b1 + hidden, LANE)
    off_b3 = _round_up(off_b2 + dim, LANE)
    total = _round_up(off_b3 + dim, LANE)

    pack = jnp.zeros((1, total), jnp.float32)
    pack = pack.at[0, off_freq:off_freq + half_dim].set(
        freq * jnp.float32(1.0 / half_dim))
    pack = pack.at[0, off_b1:off_b1 + hidden].set(b1)
    pack = pack.at[0, off_b2:off_b2 + dim].set(b2)
    pack = pack.at[0, off_b3:off_b3 + dim].set(b3)

    params = (pack, w1_sin, w1_cos, w2_bf, w3_bf)
    meta = dict(half_dim=half_dim, hidden=hidden, dim=dim,
                off_freq=off_freq, off_b1=off_b1, off_b2=off_b2,
                off_b3=off_b3)
    return params, meta


def time_embedding(t, params, meta, *, block_b=128):
    """t: (B,) int or float timesteps. Returns (B, dim) float32."""
    pack, w1_sin, w1_cos, w2_bf, w3_bf = params
    half_dim, hidden, dim = meta["half_dim"], meta["hidden"], meta["dim"]
    P = pack.shape[1]
    B = t.shape[0]

    # Pad the batch to a sublane-friendly row-block multiple.
    bm = min(block_b, _round_up(B, 8))
    Bp = _round_up(B, bm)
    t2d = t.astype(jnp.float32).reshape(B, 1)
    if Bp != B:
        t2d = jnp.pad(t2d, ((0, Bp - B), (0, 0)))

    kernel = functools.partial(
        time_embedding_kernel, half_dim=half_dim, hidden=hidden, dim=dim,
        off_freq=meta["off_freq"], off_b1=meta["off_b1"],
        off_b2=meta["off_b2"], off_b3=meta["off_b3"])

    # Advisory cost estimate so XLA schedules this small custom call sensibly.
    flops = 2 * Bp * (dim * hidden + hidden * dim + dim * dim)
    transcendentals = Bp * (2 * half_dim + hidden + dim)  # sin+cos + 2x tanh
    bytes_accessed = (2 * (dim * hidden + hidden * dim + dim * dim)  # bf16 W
                      + 4 * P + 4 * Bp + 4 * Bp * dim)
    cost = pl.CostEstimate(flops=flops, transcendentals=transcendentals,
                           bytes_accessed=bytes_accessed)

    out = pl.pallas_call(
        kernel,
        out_shape=jax.ShapeDtypeStruct((Bp, dim), jnp.float32),
        grid=(Bp // bm,),
        in_specs=[
            pl.BlockSpec((bm, 1), lambda i: (i, 0)),            # t rows
            pl.BlockSpec((1, P), lambda i: (0, 0)),              # freq+biases
            pl.BlockSpec((half_dim, hidden), lambda i: (0, 0)),  # w1_sin
            pl.BlockSpec((half_dim, hidden), lambda i: (0, 0)),  # w1_cos
            pl.BlockSpec((hidden, dim), lambda i: (0, 0)),       # w2
            pl.BlockSpec((dim, dim), lambda i: (0, 0)),          # w3
        ],
        out_specs=pl.BlockSpec((bm, dim), lambda i: (i, 0)),
        compiler_params=pltpu.CompilerParams(
            dimension_semantics=("parallel",)),  # shards rows across v7x TCs
        cost_estimate=cost,
    )(t2d, pack, w1_sin, w1_cos, w2_bf, w3_bf)

    return out[:B] if Bp != B else out


def init_params(key, dim):
    """Deterministic init matching nn.Linear defaults (uniform +-1/sqrt(fan_in)).
    Weights stored as (in, out) = transpose of PyTorch's (out, in)."""
    hidden = dim * 4
    ks = jax.random.split(key, 6)

    def lin(kw, kb, fan_in, fan_out):
        bound = 1.0 / math.sqrt(fan_in)
        w = jax.random.uniform(kw, (fan_in, fan_out), jnp.float32, -bound, bound)
        b = jax.random.uniform(kb, (fan_out,), jnp.float32, -bound, bound)
        return w, b

    w1, b1 = lin(ks[0], ks[1], dim, hidden)
    w2, b2 = lin(ks[2], ks[3], hidden, dim)
    w3, b3 = lin(ks[4], ks[5], dim, dim)

    half_dim = dim // 2
    emb_scale = math.log(10000.0) / (half_dim - 1)
    freq = jnp.exp(jnp.arange(half_dim, dtype=jnp.float32) * -emb_scale)
    return freq, w1, b1, w2, b2, w3, b3


def reference(t, freq, w1, b1, w2, b2, w3, b3):
    # Pure-f32 reference matching the PyTorch module exactly.
    half_dim = freq.shape[0]
    tt = t.astype(jnp.float32) / half_dim
    ang = tt[:, None] * freq[None, :]
    emb = jnp.concatenate([jnp.sin(ang), jnp.cos(ang)], axis=-1)
    h = jax.nn.silu(emb @ w1 + b1)
    h = jax.nn.silu(h @ w2 + b2)
    return h @ w3 + b3


if __name__ == "__main__":
    dim = 256        # module default; half_dim = 128, hidden = 1024
    B = 256          # batched timesteps (amortizes the weight DMA), grid=(2,)

    key = jax.random.PRNGKey(0)
    kp, kt = jax.random.split(key)
    freq, w1, b1, w2, b2, w3, b3 = init_params(kp, dim)

    # One-time weight prep (hoisted out of the per-call path).
    params, meta = prepare_params(freq, w1, b1, w2, b2, w3, b3)
    params = jax.block_until_ready(params)

    # Integer timesteps, like a diffusion schedule.
    t = jax.random.randint(kt, (B,), 0, 1000)

    out = time_embedding(t, params, meta)
    out = jax.block_until_ready(out)

    ref = reference(t, freq, w1, b1, w2, b2, w3, b3)
    assert out.shape == (B, dim)
    # Tolerance is dominated by the bf16 weight cast (intentional DMA saving).
    assert jnp.allclose(out, ref, atol=3e-2, rtol=3e-2), (
        "mismatch vs reference, max abs diff = "
        f"{float(jnp.max(jnp.abs(out - ref)))}")

    print("KERNEL_OK")
</pallas_src>

<mosaic_0001>
module attributes {stable_mosaic.version = 11 : i64} {
  func.func @time_embedding_kernel(%arg0: i32, %arg1: memref<128x1xf32, #tpu.memory_space<vmem>>, %arg2: memref<1x1664xf32, #tpu.memory_space<vmem>>, %arg3: memref<128x1024xbf16, #tpu.memory_space<vmem>>, %arg4: memref<128x1024xbf16, #tpu.memory_space<vmem>>, %arg5: memref<1024x256xbf16, #tpu.memory_space<vmem>>, %arg6: memref<256x256xbf16, #tpu.memory_space<vmem>>, %arg7: memref<128x256xf32, #tpu.memory_space<vmem>>) attributes {dimension_semantics = [#tpu.dimension_semantics<parallel>], iteration_bounds = array<i64: 2>, scalar_prefetch = 0 : i64, scratch_operands = 0 : i64, tpu.core_type = #tpu.core_type<tc>, window_params = [{transform_indices = @transform_0, window_bounds = array<i64: 128, 1>}, {pipeline_mode = #tpu.pipeline_mode<synchronous>, transform_indices = @transform_1, window_bounds = array<i64: 1, 1664>}, {pipeline_mode = #tpu.pipeline_mode<synchronous>, transform_indices = @transform_2, window_bounds = array<i64: 128, 1024>}, {pipeline_mode = #tpu.pipeline_mode<synchronous>, transform_indices = @transform_3, window_bounds = array<i64: 128, 1024>}, {pipeline_mode = #tpu.pipeline_mode<synchronous>, transform_indices = @transform_4, window_bounds = array<i64: 1024, 256>}, {pipeline_mode = #tpu.pipeline_mode<synchronous>, transform_indices = @transform_5, window_bounds = array<i64: 256, 256>}, {transform_indices = @transform_6, window_bounds = array<i64: 128, 256>}]} {
    %c0 = arith.constant 0 : index
    %c0_0 = arith.constant 0 : index
    %0 = vector.load %arg2[%c0, %c0_0] : memref<1x1664xf32, #tpu.memory_space<vmem>>, vector<1x128xf32>
    %c0_1 = arith.constant 0 : index
    %c128 = arith.constant 128 : index
    %1 = vector.load %arg2[%c0_1, %c128] : memref<1x1664xf32, #tpu.memory_space<vmem>>, vector<1x1024xf32>
    %c0_2 = arith.constant 0 : index
    %c1152 = arith.constant 1152 : index
    %2 = vector.load %arg2[%c0_2, %c1152] : memref<1x1664xf32, #tpu.memory_space<vmem>>, vector<1x256xf32>
    %c0_3 = arith.constant 0 : index
    %c1408 = arith.constant 1408 : index
    %3 = vector.load %arg2[%c0_3, %c1408] : memref<1x1664xf32, #tpu.memory_space<vmem>>, vector<1x256xf32>
    %c0_4 = arith.constant 0 : index
    %c0_5 = arith.constant 0 : index
    %4 = vector.load %arg1[%c0_4, %c0_5] : memref<128x1xf32, #tpu.memory_space<vmem>>, vector<128x1xf32>
    %5 = vector.broadcast %4 : vector<128x1xf32> to vector<128x128xf32>
    %6 = vector.broadcast %0 : vector<1x128xf32> to vector<128x128xf32>
    %7 = arith.mulf %5, %6 : vector<128x128xf32>
    %8 = math.sin %7 : vector<128x128xf32>
    %9 = math.cos %7 : vector<128x128xf32>
    %10 = arith.truncf %8 : vector<128x128xf32> to vector<128x128xbf16>
    %c0_6 = arith.constant 0 : index
    %c0_7 = arith.constant 0 : index
    %11 = vector.load %arg3[%c0_6, %c0_7] : memref<128x1024xbf16, #tpu.memory_space<vmem>>, vector<128x1024xbf16>
    %cst = arith.constant dense<0.000000e+00> : vector<128x1024xf32>
    %12 = tpu.matmul %10, %11, %cst {dimension_numbers = #tpu.dot_dimension_numbers<[1], [0], [0], [1], [0, 0, 1, 1], [], []>} : vector<128x128xbf16>, vector<128x1024xbf16>, vector<128x1024xf32> -> vector<128x1024xf32>
    %13 = arith.truncf %9 : vector<128x128xf32> to vector<128x128xbf16>
    %c0_8 = arith.constant 0 : index
    %c0_9 = arith.constant 0 : index
    %14 = vector.load %arg4[%c0_8, %c0_9] : memref<128x1024xbf16, #tpu.memory_space<vmem>>, vector<128x1024xbf16>
    %cst_10 = arith.constant dense<0.000000e+00> : vector<128x1024xf32>
    %15 = tpu.matmul %13, %14, %cst_10 {dimension_numbers = #tpu.dot_dimension_numbers<[1], [0], [0], [1], [0, 0, 1, 1], [], []>} : vector<128x128xbf16>, vector<128x1024xbf16>, vector<128x1024xf32> -> vector<128x1024xf32>
    %16 = arith.addf %12, %15 : vector<128x1024xf32>
    %17 = vector.broadcast %1 : vector<1x1024xf32> to vector<128x1024xf32>
    %18 = arith.addf %16, %17 : vector<128x1024xf32>
    %cst_11 = arith.constant 5.000000e-01 : f32
    %19 = vector.broadcast %cst_11 : f32 to vector<128x1024xf32>
    %20 = arith.mulf %19, %18 : vector<128x1024xf32>
    %21 = math.tanh %20 : vector<128x1024xf32>
    %cst_12 = arith.constant 5.000000e-01 : f32
    %22 = vector.broadcast %cst_12 : f32 to vector<128x1024xf32>
    %23 = arith.mulf %22, %21 : vector<128x1024xf32>
    %cst_13 = arith.constant 5.000000e-01 : f32
    %24 = vector.broadcast %cst_13 : f32 to vector<128x1024xf32>
    %25 = arith.addf %23, %24 : vector<128x1024xf32>
    %26 = arith.mulf %18, %25 : vector<128x1024xf32>
    %27 = arith.truncf %26 : vector<128x1024xf32> to vector<128x1024xbf16>
    %c0_14 = arith.constant 0 : index
    %c0_15 = arith.constant 0 : index
    %28 = vector.load %arg5[%c0_14, %c0_15] : memref<1024x256xbf16, #tpu.memory_space<vmem>>, vector<1024x256xbf16>
    %cst_16 = arith.constant dense<0.000000e+00> : vector<128x256xf32>
    %29 = tpu.matmul %27, %28, %cst_16 {dimension_numbers = #tpu.dot_dimension_numbers<[1], [0], [0], [1], [0, 0, 1, 1], [], []>} : vector<128x1024xbf16>, vector<1024x256xbf16>, vector<128x256xf32> -> vector<128x256xf32>
    %30 = vector.broadcast %2 : vector<1x256xf32> to vector<128x256xf32>
    %31 = arith.addf %29, %30 : vector<128x256xf32>
    %cst_17 = arith.constant 5.000000e-01 : f32
    %32 = vector.broadcast %cst_17 : f32 to vector<128x256xf32>
    %33 = arith.mulf %32, %31 : vector<128x256xf32>
    %34 = math.tanh %33 : vector<128x256xf32>
    %cst_18 = arith.constant 5.000000e-01 : f32
    %35 = vector.broadcast %cst_18 : f32 to vector<128x256xf32>
    %36 = arith.mulf %35, %34 : vector<128x256xf32>
    %cst_19 = arith.constant 5.000000e-01 : f32
    %37 = vector.broadcast %cst_19 : f32 to vector<128x256xf32>
    %38 = arith.addf %36, %37 : vector<128x256xf32>
    %39 = arith.mulf %31, %38 : vector<128x256xf32>
    %40 = arith.truncf %39 : vector<128x256xf32> to vector<128x256xbf16>
    %c0_20 = arith.constant 0 : index
    %c0_21 = arith.constant 0 : index
    %41 = vector.load %arg6[%c0_20, %c0_21] : memref<256x256xbf16, #tpu.memory_space<vmem>>, vector<256x256xbf16>
    %cst_22 = arith.constant dense<0.000000e+00> : vector<128x256xf32>
    %42 = tpu.matmul %40, %41, %cst_22 {dimension_numbers = #tpu.dot_dimension_numbers<[1], [0], [0], [1], [0, 0, 1, 1], [], []>} : vector<128x256xbf16>, vector<256x256xbf16>, vector<128x256xf32> -> vector<128x256xf32>
    %43 = vector.broadcast %3 : vector<1x256xf32> to vector<128x256xf32>
    %44 = arith.addf %42, %43 : vector<128x256xf32>
    %c0_23 = arith.constant 0 : index
    %c0_24 = arith.constant 0 : index
    %45 = vector.load %arg7[%c0_23, %c0_24] : memref<128x256xf32, #tpu.memory_space<vmem>>, vector<128x256xf32>
    tpu.vector_store %arg7[%c0_23, %c0_24], %44 {strides = array<i32>} : memref<128x256xf32, #tpu.memory_space<vmem>>, vector<128x256xf32>,
    return
  }
  func.func @transform_0(%arg0: i32) -> (i32, i32) {
    %c0_i32 = arith.constant 0 : i32
    %c0_i32_0 = arith.constant 0 : i32
    return %arg0, %c0_i32 : i32, i32
  }
  func.func @transform_1(%arg0: i32) -> (i32, i32) {
    %c0_i32 = arith.constant 0 : i32
    %c0_i32_0 = arith.constant 0 : i32
    %c0_i32_1 = arith.constant 0 : i32
    return %c0_i32, %c0_i32_0 : i32, i32
  }
  func.func @transform_2(%arg0: i32) -> (i32, i32) {
    %c0_i32 = arith.constant 0 : i32
    %c0_i32_0 = arith.constant 0 : i32
    %c0_i32_1 = arith.constant 0 : i32
    return %c0_i32, %c0_i32_0 : i32, i32
  }
  func.func @transform_3(%arg0: i32) -> (i32, i32) {
    %c0_i32 = arith.constant 0 : i32
    %c0_i32_0 = arith.constant 0 : i32
    %c0_i32_1 = arith.constant 0 : i32
    return %c0_i32, %c0_i32_0 : i32, i32
  }
  func.func @transform_4(%arg0: i32) -> (i32, i32) {
    %c0_i32 = arith.constant 0 : i32
    %c0_i32_0 = arith.constant 0 : i32
    %c0_i32_1 = arith.constant 0 : i32
    return %c0_i32, %c0_i32_0 : i32, i32
  }
  func.func @transform_5(%arg0: i32) -> (i32, i32) {
    %c0_i32 = arith.constant 0 : i32
    %c0_i32_0 = arith.constant 0 : i32
    %c0_i32_1 = arith.constant 0 : i32
    return %c0_i32, %c0_i32_0 : i32, i32
  }
  func.func @transform_6(%arg0: i32) -> (i32, i32) {
    %c0_i32 = arith.constant 0 : i32
    %c0_i32_0 = arith.constant 0 : i32
    return %arg0, %c0_i32 : i32, i32
  }
}

</mosaic_0001>

<llo_original>
// kernel: tpu_custom_call.1
$region0: #{tpu_custom_call.1}
  #allocation0 [shape = 'u32[]', space=smem, size = 0x4, offset = 0x4, fixed_abs, tag = 'smem constant byte address 0x4 - core index']
  #allocation1 [shape = 'u32[72,128]{1,0:T(1,128)}', space=vmem, size = 0x9000, scoped, tag = 'internal scratch']
  %s0 = inlined_call_operand.vmem [shape: f32[256,1], index: 0, kind: input, shape index: {}]
  %s1 = inlined_call_operand.hbm [shape: f32[1,1664], index: 1, kind: input, shape index: {}]
  %s2 = inlined_call_operand.hbm [shape: bf16[128,1024], index: 2, kind: input, shape index: {}]
  %s3 = inlined_call_operand.hbm [shape: bf16[128,1024], index: 3, kind: input, shape index: {}]
  %s4 = inlined_call_operand.hbm [shape: bf16[1024,256], index: 4, kind: input, shape index: {}]
  %s5 = inlined_call_operand.vmem [shape: bf16[256,256], index: 5, kind: input, shape index: {}]
  %s6 = inlined_call_operand.hbm [shape: f32[256,256], index: 6, kind: output, shape index: {}]
  %s7 = sld [smem:[#allocation0]]
  $region73: #{tpu_custom_call.1} parent=0
    _
  %s9 = ssub.s32 1, %s7
  %s10 = scalar_select 0, %s9, %s7
  $region1: #{tpu_custom_call.1} parent=0
    #allocation2 [shape = 'u8[6656]{0}', space=vmem, size = 0x1c00, scoped, tag = 'input window, operand 1, single buffered']
    #allocation3 [shape = 's32[2]{0}', space=sflag, size = 0x8, scoped, tag = 'scoped memory for tpu_custom_call.1']
    #allocation4 [shape = 's32[2]{0}', space=sflag, size = 0x8, scoped, tag = 'scoped memory for tpu_custom_call.1']
    #allocation5 [shape = 'u8[262144]{0}', space=vmem, size = 0x40000, scoped, tag = 'input window, operand 2, single buffered']
    #allocation6 [shape = 's32[1]{0}', space=sflag, size = 0x4, scoped, tag = 'scoped memory for tpu_custom_call.1']
    #allocation7 [shape = 'u8[262144]{0}', space=vmem, size = 0x40000, scoped, tag = 'input window, operand 3, single buffered']
    #allocation8 [shape = 'u8[524288]{0}', space=vmem, size = 0x80000, scoped, tag = 'input window, operand 4, single buffered']
    #allocation9 [shape = 's32[1]{0}', space=sflag, size = 0x4, scoped, tag = 'scoped memory for tpu_custom_call.1']
    #allocation10 [shape = 'u8[262144]{0}', space=vmem, size = 0x40000, scoped, tag = 'output window, operand 0']
    %11 = vsyncpa [#allocation3], 0
    %12 = vsyncpa [#allocation6], 0
    %13 = vsyncpa [#allocation9], 0
    %14 = vsyncpa [#allocation4], 0
    %s15 = scalar_lea.sflag [#allocation4], 1
    %16 = vsyncpa %s15, 0
    loop: start=0, step=1, limit=4
    $region2: #{tpu_custom_call.1} parent=1 // loop_pre_header
      _
    $region3: #{tpu_custom_call.1} parent=1 // loop_header
      %s18 = sphi 0, %s22
      %p19 = scmp.ge.s32.totalorder %s18, 4
      %s28 = sphi 0, %s30
      %s31 = sphi 0, %s28
      %s32 = sphi 0, %s31
      %s48 = sphi 0, %s32
      %s52 = sphi 0, %s52
      %s54 = sphi 0, %s52
      %s55 = sphi 0, %s54
      %s69 = sphi 0, %s55
      %s73 = sphi 0, %s73
      %s75 = sphi 0, %s73
      %s76 = sphi 0, %s75
      %s90 = sphi 0, %s76
      %s94 = sphi 0, %s94
      %s96 = sphi 0, %s94
      %s97 = sphi 0, %s96
      %s111 = sphi 0, %s97
      %s115 = sphi 0, %s115
      %s117 = sphi 0, %s115
      %s118 = sphi 0, %s117
      %s132 = sphi 0, %s118
      %s136 = sphi 0, %s136
      %s138 = sphi 0, %s136
      %s139 = sphi 0, %s138
      %s153 = sphi 0, %s139
      %s159 = sphi 0, %s161
      %s162 = sphi 0, %s159
      %s163 = sphi 0, %s162
      %s179 = sphi 0, %s163
    $region4: #{tpu_custom_call.1} parent=1 // loop_header_branch
      %21 = sbr.rel (%p19) target = $region8
    $region5: #{tpu_custom_call.1} parent=1 // loop_body
      %s23 = ssub.s32 %s18, 1
      %s24 = ssub.s32 %s18, 2
      %s25 = sadd.s32 %s18, 1
      %s26 = ssub.s32 %s18, %s25
      %p27 = scmp.eq.s32.totalorder %s26, 0
      %s29 = sadd.s32 %s28, 1
      %s30 = scalar_select %p27, %s28, %s29
      %p33 = pneg %p27
      %p34 = scmp.eq.s32.totalorder %s18, 1
      %p35 = por %p33, %p34
      %p36 = scmp.ne.s32.totalorder %s28, %s31
      %p37 = scmp.eq.s32.totalorder %s18, 0
      %p38 = por %p36, %p37
      %p39 = scmp.ne.s32.totalorder %s28, %s31
      %p40 = scmp.eq.s32.totalorder %s23, 1
      %p41 = por %p39, %p40
      %p42 = scmp.ne.s32.totalorder %s31, %s32
      %p43 = scmp.eq.s32.totalorder %s23, 0
      %p44 = por %p42, %p43
      %p45 = scmp.ne.s32.totalorder %s31, %s32
      %p46 = scmp.eq.s32.totalorder %s24, 1
      %p47 = por %p45, %p46
      %p49 = scmp.ne.s32.totalorder %s32, %s48
      %p50 = scmp.eq.s32.totalorder %s24, 0
      %p51 = por %p49, %p50
      %s53 = sadd.s32 %s52, 1
      %p56 = scmp.eq.s32.totalorder %s18, 1
      %p57 = scmp.ne.s32.totalorder %s52, %s54
      %p58 = scmp.eq.s32.totalorder %s18, 0
      %p59 = por %p57, %p58
      %p60 = scmp.ne.s32.totalorder %s52, %s54
      %p61 = scmp.eq.s32.totalorder %s23, 1
      %p62 = por %p60, %p61
      %p63 = scmp.ne.s32.totalorder %s54, %s55
      %p64 = scmp.eq.s32.totalorder %s23, 0
      %p65 = por %p63, %p64
      %p66 = scmp.ne.s32.totalorder %s54, %s55
      %p67 = scmp.eq.s32.totalorder %s24, 1
      %p68 = por %p66, %p67
      %p70 = scmp.ne.s32.totalorder %s55, %s69
      %p71 = scmp.eq.s32.totalorder %s24, 0
      %p72 = por %p70, %p71
      %s74 = sadd.s32 %s73, 1
      %p77 = scmp.eq.s32.totalorder %s18, 1
      %p78 = scmp.ne.s32.totalorder %s73, %s75
      %p79 = scmp.eq.s32.totalorder %s18, 0
      %p80 = por %p78, %p79
      %p81 = scmp.ne.s32.totalorder %s73, %s75
      %p82 = scmp.eq.s32.totalorder %s23, 1
      %p83 = por %p81, %p82
      %p84 = scmp.ne.s32.totalorder %s75, %s76
      %p85 = scmp.eq.s32.totalorder %s23, 0
      %p86 = por %p84, %p85
      %p87 = scmp.ne.s32.totalorder %s75, %s76
      %p88 = scmp.eq.s32.totalorder %s24, 1
      %p89 = por %p87, %p88
      %p91 = scmp.ne.s32.totalorder %s76, %s90
      %p92 = scmp.eq.s32.totalorder %s24, 0
      %p93 = por %p91, %p92
      %s95 = sadd.s32 %s94, 1
      %p98 = scmp.eq.s32.totalorder %s18, 1
      %p99 = scmp.ne.s32.totalorder %s94, %s96
      %p100 = scmp.eq.s32.totalorder %s18, 0
      %p101 = por %p99, %p100
      %p102 = scmp.ne.s32.totalorder %s94, %s96
      %p103 = scmp.eq.s32.totalorder %s23, 1
      %p104 = por %p102, %p103
      %p105 = scmp.ne.s32.totalorder %s96, %s97
      %p106 = scmp.eq.s32.totalorder %s23, 0
      %p107 = por %p105, %p106
      %p108 = scmp.ne.s32.totalorder %s96, %s97
      %p109 = scmp.eq.s32.totalorder %s24, 1
      %p110 = por %p108, %p109
      %p112 = scmp.ne.s32.totalorder %s97, %s111
      %p113 = scmp.eq.s32.totalorder %s24, 0
      %p114 = por %p112, %p113
      %s116 = sadd.s32 %s115, 1
      %p119 = scmp.eq.s32.totalorder %s18, 1
      %p120 = scmp.ne.s32.totalorder %s115, %s117
      %p121 = scmp.eq.s32.totalorder %s18, 0
      %p122 = por %p120, %p121
      %p123 = scmp.ne.s32.totalorder %s115, %s117
      %p124 = scmp.eq.s32.totalorder %s23, 1
      %p125 = por %p123, %p124
      %p126 = scmp.ne.s32.totalorder %s117, %s118
      %p127 = scmp.eq.s32.totalorder %s23, 0
      %p128 = por %p126, %p127
      %p129 = scmp.ne.s32.totalorder %s117, %s118
      %p130 = scmp.eq.s32.totalorder %s24, 1
      %p131 = por %p129, %p130
      %p133 = scmp.ne.s32.totalorder %s118, %s132
      %p134 = scmp.eq.s32.totalorder %s24, 0
      %p135 = por %p133, %p134
      %s137 = sadd.s32 %s136, 1
      %p140 = scmp.eq.s32.totalorder %s18, 1
      %p141 = scmp.ne.s32.totalorder %s136, %s138
      %p142 = scmp.eq.s32.totalorder %s18, 0
      %p143 = por %p141, %p142
      %p144 = scmp.ne.s32.totalorder %s136, %s138
      %p145 = scmp.eq.s32.totalorder %s23, 1
      %p146 = por %p144, %p145
      %p147 = scmp.ne.s32.totalorder %s138, %s139
      %p148 = scmp.eq.s32.totalorder %s23, 0
      %p149 = por %p147, %p148
      %p150 = scmp.ne.s32.totalorder %s138, %s139
      %p151 = scmp.eq.s32.totalorder %s24, 1
      %p152 = por %p150, %p151
      %p154 = scmp.ne.s32.totalorder %s139, %s153
      %p155 = scmp.eq.s32.totalorder %s24, 0
      %p156 = por %p154, %p155
      %s157 = ssub.s32 %s18, %s25
      %p158 = scmp.eq.s32.totalorder %s157, 0
      %s160 = sadd.s32 %s159, 1
      %s161 = scalar_select %p158, %s159, %s160
      %p164 = pneg %p158
      %p165 = scmp.eq.s32.totalorder %s18, 1
      %p166 = por %p164, %p165
      %p167 = scmp.ne.s32.totalorder %s159, %s162
      %p168 = scmp.eq.s32.totalorder %s18, 0
      %p169 = por %p167, %p168
      %p170 = scmp.ne.s32.totalorder %s159, %s162
      %p171 = scmp.eq.s32.totalorder %s23, 1
      %p172 = por %p170, %p171
      %p173 = scmp.ne.s32.totalorder %s162, %s163
      %p174 = scmp.eq.s32.totalorder %s23, 0
      %p175 = por %p173, %p174
      %p176 = scmp.ne.s32.totalorder %s162, %s163
      %p177 = scmp.eq.s32.totalorder %s24, 1
      %p178 = por %p176, %p177
      %p180 = scmp.ne.s32.totalorder %s163, %s179
      %p181 = scmp.eq.s32.totalorder %s24, 0
      %p182 = por %p180, %p181
      %p183 = scmp.le.s32.totalorder 1, %s18
      %p184 = scmp.lt.s32.totalorder %s18, 3
      %p185 = pnand %p183, %p184
      %p186 = pneg %p185
      // Predicated region
      $region9: #{tpu_custom_call.1} parent=5 // pred_check
        _
      $region10: #{tpu_custom_call.1} parent=5 // pred_check_branch
        %188 = sbr.rel (%p185) target = $region12
      $region11: #{tpu_custom_call.1} parent=5 // pred_region
        %s189 = ssub.s32 %s18, 1
        // Predicated region
        $region13: #{tpu_custom_call.1} parent=11 // pred_check
          %p190 = pneg %p65
        $region14: #{tpu_custom_call.1} parent=11 // pred_check_branch
          %192 = sbr.rel (%p190) target = $region16
        $region15: #{tpu_custom_call.1} parent=11 // pred_region
          %194 = vsyncadd [#allocation3], 0
          %s196 = sshll.u32 %s1, 4
          %s197 = int_to_ptr.hbm [resolvable:$true] %s196
          %s198 = sshll.u32 [#allocation2], 4
          %s199 = int_to_ptr.vmem [resolvable:$true] %s198
          %201 = dma.hbm_to_vmem [thread:$0]  %s197, 208, %s199, [#allocation3]
        $region16: #{tpu_custom_call.1} parent=11 // pred_fallthru
          _
        // Predicated region
        $region17: #{tpu_custom_call.1} parent=11 // pred_check
          %p202 = pneg %p86
        $region18: #{tpu_custom_call.1} parent=11 // pred_check_branch
          %204 = sbr.rel (%p202) target = $region20
        $region19: #{tpu_custom_call.1} parent=11 // pred_region
          %206 = vsyncadd [#allocation6], 0
          %s207 = sshll.u32 %s2, 4
          %s208 = int_to_ptr.hbm [resolvable:$true] %s207
          %s209 = sshll.u32 [#allocation5], 4
          %s210 = int_to_ptr.vmem [resolvable:$true] %s209
          %215 = dma.hbm_to_vmem [thread:$0]  %s208, 8192, %s210, [#allocation6], 512, 512, 32
        $region20: #{tpu_custom_call.1} parent=11 // pred_fallthru
          _
        // Predicated region
        $region21: #{tpu_custom_call.1} parent=11 // pred_check
          %p216 = pneg %p107
        $region22: #{tpu_custom_call.1} parent=11 // pred_check_branch
          %218 = sbr.rel (%p216) target = $region24
        $region23: #{tpu_custom_call.1} parent=11 // pred_region
          %220 = vsyncadd [#allocation6], 0
          %s221 = sshll.u32 %s3, 4
          %s222 = int_to_ptr.hbm [resolvable:$true] %s221
          %s223 = sshll.u32 [#allocation7], 4
          %s224 = int_to_ptr.vmem [resolvable:$true] %s223
          %229 = dma.hbm_to_vmem [thread:$0]  %s222, 8192, %s224, [#allocation6], 512, 512, 32
        $region24: #{tpu_custom_call.1} parent=11 // pred_fallthru
          _
        // Predicated region
        $region25: #{tpu_custom_call.1} parent=11 // pred_check
          %p230 = pneg %p128
        $region26: #{tpu_custom_call.1} parent=11 // pred_check_branch
          %232 = sbr.rel (%p230) target = $region28
        $region27: #{tpu_custom_call.1} parent=11 // pred_region
          %234 = vsyncadd [#allocation9], 0
          %s235 = sshll.u32 %s4, 4
          %s236 = int_to_ptr.hbm [resolvable:$true] %s235
          %s237 = sshll.u32 [#allocation8], 4
          %s238 = int_to_ptr.vmem [resolvable:$true] %s237
          %243 = dma.hbm_to_vmem [thread:$0]  %s236, 16384, %s238, [#allocation9], 128, 128, 8
        $region28: #{tpu_custom_call.1} parent=11 // pred_fallthru
          _
        // Predicated region
        $region29: #{tpu_custom_call.1} parent=11 // pred_check
          %p244 = pneg %p149
        $region30: #{tpu_custom_call.1} parent=11 // pred_check_branch
          %246 = sbr.rel (%p244) target = $region32
        $region31: #{tpu_custom_call.1} parent=11 // pred_region
          _
        $region32: #{tpu_custom_call.1} parent=11 // pred_fallthru
          _
      $region12: #{tpu_custom_call.1} parent=5 // pred_fallthru
        _
      %p247 = scmp.lt.s32.totalorder %s18, 2
      // Predicated region
      $region33: #{tpu_custom_call.1} parent=5 // pred_check
        %p248 = pneg %p247
      $region34: #{tpu_custom_call.1} parent=5 // pred_check_branch
        %250 = sbr.rel (%p248) target = $region36
      $region35: #{tpu_custom_call.1} parent=5 // pred_region
        // Predicated region
        $region37: #{tpu_custom_call.1} parent=35 // pred_check
          %p251 = pneg %p38
        $region38: #{tpu_custom_call.1} parent=35 // pred_check_branch
          %253 = sbr.rel (%p251) target = $region40
        $region39: #{tpu_custom_call.1} parent=35 // pred_region
          %s254 = smul.u32 16, %s18
          %p255 = scmp.lt.s32.totalorder %s254, 31
          %s256 = scalar_select %p255, %s254, 31
          %s257 = smul.addr %s256, 8
          %s258 = scalar_lea.vmem %s0, %s257
          %s259 = smul.u32 16, %s18
        $region40: #{tpu_custom_call.1} parent=35 // pred_fallthru
          _
      $region36: #{tpu_custom_call.1} parent=5 // pred_fallthru
        _
      %p260 = scmp.le.s32.totalorder 1, %s18
      %p261 = scmp.lt.s32.totalorder %s18, 3
      %p262 = pnand %p260, %p261
      %p263 = pneg %p262
      // Predicated region
      $region41: #{tpu_custom_call.1} parent=5 // pred_check
        _
      $region42: #{tpu_custom_call.1} parent=5 // pred_check_branch
        %265 = sbr.rel (%p262) target = $region44
      $region43: #{tpu_custom_call.1} parent=5 // pred_region
        %s266 = ssub.s32 %s18, 1
        // Predicated region
        $region45: #{tpu_custom_call.1} parent=43 // pred_check
          %p267 = pneg %p65
        $region46: #{tpu_custom_call.1} parent=43 // pred_check_branch
          %269 = sbr.rel (%p267) target = $region48
        $region47: #{tpu_custom_call.1} parent=43 // pred_region
          %271 = dma.done [#allocation3], 208
        $region48: #{tpu_custom_call.1} parent=43 // pred_fallthru
          _
        // Predicated region
        $region49: #{tpu_custom_call.1} parent=43 // pred_check
          %p272 = pneg %p86
        $region50: #{tpu_custom_call.1} parent=43 // pred_check_branch
          %274 = sbr.rel (%p272) target = $region52
        $region51: #{tpu_custom_call.1} parent=43 // pred_region
          %276 = dma.done [#allocation6], 8192
        $region52: #{tpu_custom_call.1} parent=43 // pred_fallthru
          _
        // Predicated region
        $region53: #{tpu_custom_call.1} parent=43 // pred_check
          %p277 = pneg %p107
        $region54: #{tpu_custom_call.1} parent=43 // pred_check_branch
          %279 = sbr.rel (%p277) target = $region56
        $region55: #{tpu_custom_call.1} parent=43 // pred_region
          %281 = dma.done [#allocation6], 8192
        $region56: #{tpu_custom_call.1} parent=43 // pred_fallthru
          _
        // Predicated region
        $region57: #{tpu_custom_call.1} parent=43 // pred_check
          %p282 = pneg %p128
        $region58: #{tpu_custom_call.1} parent=43 // pred_check_branch
          %284 = sbr.rel (%p282) target = $region60
        $region59: #{tpu_custom_call.1} parent=43 // pred_region
          %286 = dma.done [#allocation9], 16384
        $region60: #{tpu_custom_call.1} parent=43 // pred_fallthru
          _
        %s287 = smul.u32 16, %s23
        %p288 = scmp.lt.s32.totalorder %s287, 31
        %s289 = scalar_select %p288, %s287, 31
        %s290 = smul.addr %s289, 8
        %s291 = scalar_lea.vmem %s0, %s290
        %p292 = pneg %p44
        %p293 = pneg %p41
        %p294 = pneg %p65
        %p295 = pneg %p62
        %p296 = pneg %p86
        %p297 = pneg %p83
        %p298 = pneg %p107
        %p299 = pneg %p104
        %p300 = pneg %p128
        %p301 = pneg %p125
        %p302 = pneg %p149
        %p303 = pneg %p146
        %p304 = pneg %p175
        %p305 = pneg %p172
        %s306 = sand.u32 %s162, 1
        %s307 = scalar_lea.sflag [#allocation4], %s306
        %s308 = sand.u32 %s162, 1
        %s309 = smul.addr %s308, 256
        %s310 = scalar_lea.vmem [#allocation10], %s309
        %s311 = smul.u32 16, %s23
        %p312 = scmp.lt.s32.totalorder %s311, 31
        %s313 = scalar_select %p312, %s311, 31
        %s314 = smul.addr %s313, 8
        %s315 = scalar_lea.vmem %s0, %s314
        %s316 = smul.u32 16, %s23
        %s317 = smul.u32 16, %s23
        %v318 = vld [vmem:[#allocation2] sm:$0x1]
        %v319 = vld [vmem:[#allocation2 + $0x1] sm:$0xff]
        %v320 = vld [vmem:[#allocation2 + $0x9] sm:$0x3]
        %v321 = vld [vmem:[#allocation2 + $0xb] sm:$0x3]
        %v322 = vld [vmem:[%s315] sm:$0xff]
        %v323 = vld [vmem:[%s315 + $0x8] sm:$0xff]
        %v324 = vld [vmem:[%s315 + $0x10] sm:$0xff]
        %v325 = vld [vmem:[%s315 + $0x18] sm:$0xff]
        %v326 = vld [vmem:[%s315 + $0x20] sm:$0xff]
        %v327 = vld [vmem:[%s315 + $0x28] sm:$0xff]
        %v328 = vld [vmem:[%s315 + $0x30] sm:$0xff]
        %v329 = vld [vmem:[%s315 + $0x38] sm:$0xff]
        %v330 = vld [vmem:[%s315 + $0x40] sm:$0xff]
        %v331 = vld [vmem:[%s315 + $0x48] sm:$0xff]
        %v332 = vld [vmem:[%s315 + $0x50] sm:$0xff]
        %v333 = vld [vmem:[%s315 + $0x58] sm:$0xff]
        %v334 = vld [vmem:[%s315 + $0x60] sm:$0xff]
        %v335 = vld [vmem:[%s315 + $0x68] sm:$0xff]
        %v336 = vld [vmem:[%s315 + $0x70] sm:$0xff]
        %v337 = vld [vmem:[%s315 + $0x78] sm:$0xff]
        %339 = vset.pattern.permute.xlu0 0
        %340 = vperm.xlu0 %339, %v322
        %v341 = vpop.permute.xlu0 %340
        %344 = vset.pattern.permute.xlu0 0
        %345 = vperm.xlu0 %344, %v323
        %v346 = vpop.permute.xlu0 %345
        %349 = vset.pattern.permute.xlu0 0
        %350 = vperm.xlu0 %349, %v324
        %v351 = vpop.permute.xlu0 %350
        %354 = vset.pattern.permute.xlu0 0
        %355 = vperm.xlu0 %354, %v325
        %v356 = vpop.permute.xlu0 %355
        %359 = vset.pattern.permute.xlu0 0
        %360 = vperm.xlu0 %359, %v326
        %v361 = vpop.permute.xlu0 %360
        %364 = vset.pattern.permute.xlu0 0
        %365 = vperm.xlu0 %364, %v327
        %v366 = vpop.permute.xlu0 %365
        %369 = vset.pattern.permute.xlu0 0
        %370 = vperm.xlu0 %369, %v328
        %v371 = vpop.permute.xlu0 %370
        %374 = vset.pattern.permute.xlu0 0
        %375 = vperm.xlu0 %374, %v329
        %v376 = vpop.permute.xlu0 %375
        %379 = vset.pattern.permute.xlu0 0
        %380 = vperm.xlu0 %379, %v330
        %v381 = vpop.permute.xlu0 %380
        %384 = vset.pattern.permute.xlu0 0
        %385 = vperm.xlu0 %384, %v331
        %v386 = vpop.permute.xlu0 %385
        %389 = vset.pattern.permute.xlu0 0
        %390 = vperm.xlu0 %389, %v332
        %v391 = vpop.permute.xlu0 %390
        %394 = vset.pattern.permute.xlu0 0
        %395 = vperm.xlu0 %394, %v333
        %v396 = vpop.permute.xlu0 %395
        %399 = vset.pattern.permute.xlu0 0
        %400 = vperm.xlu0 %399, %v334
        %v401 = vpop.permute.xlu0 %400
        %404 = vset.pattern.permute.xlu0 0
        %405 = vperm.xlu0 %404, %v335
        %v406 = vpop.permute.xlu0 %405
        %409 = vset.pattern.permute.xlu0 0
        %410 = vperm.xlu0 %409, %v336
        %v411 = vpop.permute.xlu0 %410
        %414 = vset.pattern.permute.xlu0 0
        %415 = vperm.xlu0 %414, %v337
        %v416 = vpop.permute.xlu0 %415
        %v419 = vperm.slane %v318, 0
        %v421 = vmul.f32 %v341, %v419
        %v422 = vmul.f32 %v346, %v419
        %v423 = vmul.f32 %v351, %v419
        %v424 = vmul.f32 %v356, %v419
        %v425 = vmul.f32 %v361, %v419
        %v426 = vmul.f32 %v366, %v419
        %v427 = vmul.f32 %v371, %v419
        %v428 = vmul.f32 %v376, %v419
        %v429 = vmul.f32 %v381, %v419
        %v430 = vmul.f32 %v386, %v419
        %v431 = vmul.f32 %v391, %v419
        %v432 = vmul.f32 %v396, %v419
        %v433 = vmul.f32 %v401, %v419
        %v434 = vmul.f32 %v406, %v419
        %v435 = vmul.f32 %v411, %v419
        %v436 = vmul.f32 %v416, %v419
        %v437 = vand.u32 2147483647, %v421
        %vm438 = vcmp.le.f32.partialorder %v437, 0.7853982
        %vm439 = vcmp.lt.s32.totalorder %v421, 0
        %v440 = vand.u32 %v421, 2139095040
        %v441 = vshrl.u32 %v440, 23
        %v442 = vsub.s32 %v441, 127
        %v443 = vand.u32 2147483647, %v421
        %v444 = vand.u32 %v443, 8388607
        %v445 = vor.u32 %v444, 8388608
        %v446 = vsub.s32 0, %v445
        %v447 = vadd.s32 %v442, 1
        %vm448 = vcmp.gt.s32.totalorder %v447, 0
        %v449 = vsel %vm448, %v447, 0
        %v450 = vshrl.u32 %v449, 5
        %v451 = vand.u32 %v449, 31
        %v452 = vsub.s32 32, %v451
        %v453 = vshrl.u32 683565275, %v452
        %v454 = vshll.u32 683565275, %v451
        %v455 = vshrl.u32 2475754826, %v452
        %v456 = vor.u32 %v454, %v455
        %v457 = vshll.u32 2475754826, %v451
        %v458 = vshrl.u32 2131351028, %v452
        %v459 = vor.u32 %v457, %v458
        %v460 = vshll.u32 2131351028, %v451
        %v461 = vshrl.u32 2102212464, %v452
        %v462 = vor.u32 %v460, %v461
        %v463 = vshll.u32 2102212464, %v451
        %v464 = vshrl.u32 920167782, %v452
        %v465 = vor.u32 %v463, %v464
        %v466 = vshll.u32 920167782, %v451
        %v467 = vshrl.u32 1326507024, %v452
        %v468 = vor.u32 %v466, %v467
        %vm469 = vcmp.lt.s32.totalorder %v450, 1
        %vm470 = vcmp.lt.s32.totalorder %v450, 2
        %vm471 = vcmp.lt.s32.totalorder %v450, 3
        %vm472 = vcmp.lt.s32.totalorder %v450, 4
        %v473 = vsel %vm469, %v453, %v456
        %v474 = vsel %vm472, %v462, 2102212464
        %v475 = vsel %vm471, %v459, %v474
        %v476 = vsel %vm470, %v473, %v475
        %v477 = vsel %vm469, %v456, %v459
        %v478 = vsel %vm472, %v465, 920167782
        %v479 = vsel %vm471, %v462, %v478
        %v480 = vsel %vm470, %v477, %v479
        %v481 = vsel %vm469, %v459, %v462
        %v482 = vsel %vm472, %v468, 1326507024
        %v483 = vsel %vm471, %v465, %v482
        %v484 = vsel %vm470, %v481, %v483
        %v485 = vshll.u32 %v445, 8
        %v486 = vand.u32 %v485, 65535
        %v487 = vshrl.u32 %v485, 16
        %v488 = vand.u32 %v484, 65535
        %v489 = vshrl.u32 %v484, 16
        %v490 = vmul.u32 %v486, %v488
        %v491 = vmul.u32 %v486, %v489
        %v492 = vmul.u32 %v487, %v488
        %v493 = vmul.u32 %v487, %v489
        %v494 = vshll.u32 %v491, 16
        %v495 = vshrl.u32 %v491, 16
        %v496 = vshll.u32 %v492, 16
        %v497 = vshrl.u32 %v492, 16
        %vm498 = vc.u32 %v490, %v494
        %v499 = vsel %vm498, 1, 0
        %v500 = vadd.s32 %v490, %v494
        %v501 = vadd.s32 %v493, %v499
        %vm502 = vc.u32 %v500, %v496
        %v503 = vsel %vm502, 1, 0
        %v504 = vadd.s32 %v500, %v496
        %v505 = vadd.s32 %v501, %v503
        %v506 = vadd.s32 %v505, %v495
        %v507 = vadd.s32 %v506, %v497
        %v508 = vand.u32 %v485, 65535
        %v509 = vshrl.u32 %v485, 16
        %v510 = vand.u32 %v480, 65535
        %v511 = vshrl.u32 %v480, 16
        %v512 = vmul.u32 %v508, %v510
        %v513 = vmul.u32 %v508, %v511
        %v514 = vmul.u32 %v509, %v510
        %v515 = vmul.u32 %v509, %v511
        %v516 = vshll.u32 %v513, 16
        %v517 = vshrl.u32 %v513, 16
        %v518 = vshll.u32 %v514, 16
        %v519 = vshrl.u32 %v514, 16
        %vm520 = vc.u32 %v512, %v516
        %v521 = vsel %vm520, 1, 0
        %v522 = vadd.s32 %v512, %v516
        %v523 = vadd.s32 %v515, %v521
        %vm524 = vc.u32 %v522, %v518
        %v525 = vsel %vm524, 1, 0
        %v526 = vadd.s32 %v522, %v518
        %v527 = vadd.s32 %v523, %v525
        %v528 = vadd.s32 %v527, %v517
        %v529 = vadd.s32 %v528, %v519
        %v530 = vmul.u32 %v485, %v476
        %v531 = vadd.s32 %v507, %v526
        %vm532 = vc.u32 %v507, %v526
        %v533 = vadd.s32 %v529, 1
        %v534 = vsel %vm532, %v533, %v529
        %v535 = vadd.s32 %v530, %v534
        %v536 = vadd.s32 %v535, 536870912
        %v537 = vshrl.u32 %v536, 30
        %v538 = vshll.u32 %v537, 30
        %v539 = vsub.s32 %v535, %v538
        %vm540 = vcmp.lt.s32.totalorder %v539, 0
        %v541 = vsub.s32 0, %v539
        %v542 = vsel %vm540, %v541, %v539
        %v543 = vclz %v542
        %v544 = vsub.s32 %v543, 2
        %vm545 = vcmp.gt.s32.totalorder 0, %v544
        %v546 = vsel %vm545, 0, %v544
        %v547 = vsub.s32 32, %v546
        %v548 = vshll.u32 %v539, %v546
        %v549 = vshrl.u32 %v531, %v547
        %v550 = vor.u32 %v548, %v549
        %v551 = vsub.s32 4294967266, %v546
        %v552 = vadd.s32 %v551, 127
        %v553 = vshll.u32 %v552, 23
        %v554 = vor.u32 4788187, %v553
        %v555 = vand.u32 2147483647, %v554
        %v557 = vcvt.s32.f32 %v550
        %v558 = vmul.f32 %v557, %v555
        %v559 = vxor.u32 %v558, 2147483648
        %v560 = vsel %vm439, %v559, %v558
        %v561 = vsub.s32 4, %v537
        %v562 = vsel %vm439, %v561, %v537
        %v563 = vsel %vm438, %v421, %v560
        %v564 = vsel %vm438, 0, %v562
        %v565 = vmul.f32 %v563, %v563
        %v566 = vmul.f32 %v565, -0.001358992
        %v567 = vadd.f32 %v566, 0.041655596
        %v568 = vmul.f32 %v565, %v567
        %v569 = vadd.f32 %v568, -0.4999988
        %v570 = vmul.f32 %v565, %v569
        %v571 = vadd.f32 1.0, %v570
        %v572 = vmul.f32 %v563, %v563
        %v573 = vmul.f32 %v572, -0.00019511016
        %v574 = vadd.f32 %v573, 0.008332121
        %v575 = vmul.f32 %v572, %v574
        %v576 = vadd.f32 %v575, -0.16666654
        %v577 = vmul.f32 %v572, %v576
        %v578 = vadd.f32 %v577, 1.0
        %v579 = vmul.f32 %v578, %v563
        %vm580 = vweird.f32 %v421
        %v581 = vadd.s32 %v564, 3
        %v582 = vand.u32 %v581, 3
        %vm583 = vcmp.lt.s32.totalorder %v582, 2
        %vm584 = vcmp.eq.s32.totalorder %v582, 0
        %v585 = vxor.u32 %v579, 2147483648
        %v586 = vsel %vm584, %v571, %v585
        %vm587 = vcmp.eq.s32.totalorder %v582, 2
        %v588 = vxor.u32 %v571, 2147483648
        %v589 = vsel %vm587, %v588, %v579
        %v590 = vsel %vm583, %v586, %v589
        %v591 = vsel %vm580, nan, %v590
        %v592 = vand.u32 2147483647, %v422
        %vm593 = vcmp.le.f32.partialorder %v592, 0.7853982
        %vm594 = vcmp.lt.s32.totalorder %v422, 0
        %v595 = vand.u32 %v422, 2139095040
        %v596 = vshrl.u32 %v595, 23
        %v597 = vsub.s32 %v596, 127
        %v598 = vand.u32 2147483647, %v422
        %v599 = vand.u32 %v598, 8388607
        %v600 = vor.u32 %v599, 8388608
        %v601 = vsub.s32 0, %v600
        %v602 = vadd.s32 %v597, 1
        %vm603 = vcmp.gt.s32.totalorder %v602, 0
        %v604 = vsel %vm603, %v602, 0
        %v605 = vshrl.u32 %v604, 5
        %v606 = vand.u32 %v604, 31
        %v607 = vsub.s32 32, %v606
        %v608 = vshrl.u32 683565275, %v607
        %v609 = vshll.u32 683565275, %v606
        %v610 = vshrl.u32 2475754826, %v607
        %v611 = vor.u32 %v609, %v610
        %v612 = vshll.u32 2475754826, %v606
        %v613 = vshrl.u32 2131351028, %v607
        %v614 = vor.u32 %v612, %v613
        %v615 = vshll.u32 2131351028, %v606
        %v616 = vshrl.u32 2102212464, %v607
        %v617 = vor.u32 %v615, %v616
        %v618 = vshll.u32 2102212464, %v606
        %v619 = vshrl.u32 920167782, %v607
        %v620 = vor.u32 %v618, %v619
        %v621 = vshll.u32 920167782, %v606
        %v622 = vshrl.u32 1326507024, %v607
        %v623 = vor.u32 %v621, %v622
        %vm624 = vcmp.lt.s32.totalorder %v605, 1
        %vm625 = vcmp.lt.s32.totalorder %v605, 2
        %vm626 = vcmp.lt.s32.totalorder %v605, 3
        %vm627 = vcmp.lt.s32.totalorder %v605, 4
        %v628 = vsel %vm624, %v608, %v611
        %v629 = vsel %vm627, %v617, 2102212464
        %v630 = vsel %vm626, %v614, %v629
        %v631 = vsel %vm625, %v628, %v630
        %v632 = vsel %vm624, %v611, %v614
        %v633 = vsel %vm627, %v620, 920167782
        %v634 = vsel %vm626, %v617, %v633
        %v635 = vsel %vm625, %v632, %v634
        %v636 = vsel %vm624, %v614, %v617
        %v637 = vsel %vm627, %v623, 1326507024
        %v638 = vsel %vm626, %v620, %v637
        %v639 = vsel %vm625, %v636, %v638
        %v640 = vshll.u32 %v600, 8
        %v641 = vand.u32 %v640, 65535
        %v642 = vshrl.u32 %v640, 16
        %v643 = vand.u32 %v639, 65535
        %v644 = vshrl.u32 %v639, 16
        %v645 = vmul.u32 %v641, %v643
        %v646 = vmul.u32 %v641, %v644
        %v647 = vmul.u32 %v642, %v643
        %v648 = vmul.u32 %v642, %v644
        %v649 = vshll.u32 %v646, 16
        %v650 = vshrl.u32 %v646, 16
        %v651 = vshll.u32 %v647, 16
        %v652 = vshrl.u32 %v647, 16
        %vm653 = vc.u32 %v645, %v649
        %v654 = vsel %vm653, 1, 0
        %v655 = vadd.s32 %v645, %v649
        %v656 = vadd.s32 %v648, %v654
        %vm657 = vc.u32 %v655, %v651
        %v658 = vsel %vm657, 1, 0
        %v659 = vadd.s32 %v655, %v651
        %v660 = vadd.s32 %v656, %v658
        %v661 = vadd.s32 %v660, %v650
        %v662 = vadd.s32 %v661, %v652
        %v663 = vand.u32 %v640, 65535
        %v664 = vshrl.u32 %v640, 16
        %v665 = vand.u32 %v635, 65535
        %v666 = vshrl.u32 %v635, 16
        %v667 = vmul.u32 %v663, %v665
        %v668 = vmul.u32 %v663, %v666
        %v669 = vmul.u32 %v664, %v665
        %v670 = vmul.u32 %v664, %v666
        %v671 = vshll.u32 %v668, 16
        %v672 = vshrl.u32 %v668, 16
        %v673 = vshll.u32 %v669, 16
        %v674 = vshrl.u32 %v669, 16
        %vm675 = vc.u32 %v667, %v671
        %v676 = vsel %vm675, 1, 0
        %v677 = vadd.s32 %v667, %v671
        %v678 = vadd.s32 %v670, %v676
        %vm679 = vc.u32 %v677, %v673
        %v680 = vsel %vm679, 1, 0
        %v681 = vadd.s32 %v677, %v673
        %v682 = vadd.s32 %v678, %v680
        %v683 = vadd.s32 %v682, %v672
        %v684 = vadd.s32 %v683, %v674
        %v685 = vmul.u32 %v640, %v631
        %v686 = vadd.s32 %v662, %v681
        %vm687 = vc.u32 %v662, %v681
        %v688 = vadd.s32 %v684, 1
        %v689 = vsel %vm687, %v688, %v684
        %v690 = vadd.s32 %v685, %v689
        %v691 = vadd.s32 %v690, 536870912
        %v692 = vshrl.u32 %v691, 30
        %v693 = vshll.u32 %v692, 30
        %v694 = vsub.s32 %v690, %v693
        %vm695 = vcmp.lt.s32.totalorder %v694, 0
        %v696 = vsub.s32 0, %v694
        %v697 = vsel %vm695, %v696, %v694
        %v698 = vclz %v697
        %v699 = vsub.s32 %v698, 2
        %vm700 = vcmp.gt.s32.totalorder 0, %v699
        %v701 = vsel %vm700, 0, %v699
        %v702 = vsub.s32 32, %v701
        %v703 = vshll.u32 %v694, %v701
        %v704 = vshrl.u32 %v686, %v702
        %v705 = vor.u32 %v703, %v704
        %v706 = vsub.s32 4294967266, %v701
        %v707 = vadd.s32 %v706, 127
        %v708 = vshll.u32 %v707, 23
        %v709 = vor.u32 4788187, %v708
        %v710 = vand.u32 2147483647, %v709
        %v712 = vcvt.s32.f32 %v705
        %v713 = vmul.f32 %v712, %v710
        %v714 = vxor.u32 %v713, 2147483648
        %v715 = vsel %vm594, %v714, %v713
        %v716 = vsub.s32 4, %v692
        %v717 = vsel %vm594, %v716, %v692
        %v718 = vsel %vm593, %v422, %v715
        %v719 = vsel %vm593, 0, %v717
        %v720 = vmul.f32 %v718, %v718
        %v721 = vmul.f32 %v720, -0.001358992
        %v722 = vadd.f32 %v721, 0.041655596
        %v723 = vmul.f32 %v720, %v722
        %v724 = vadd.f32 %v723, -0.4999988
        %v725 = vmul.f32 %v720, %v724
        %v726 = vadd.f32 1.0, %v725
        %v727 = vmul.f32 %v718, %v718
        %v728 = vmul.f32 %v727, -0.00019511016
        %v729 = vadd.f32 %v728, 0.008332121
        %v730 = vmul.f32 %v727, %v729
        %v731 = vadd.f32 %v730, -0.16666654
        %v732 = vmul.f32 %v727, %v731
        %v733 = vadd.f32 %v732, 1.0
        %v734 = vmul.f32 %v733, %v718
        %vm735 = vweird.f32 %v422
        %v736 = vadd.s32 %v719, 3
        %v737 = vand.u32 %v736, 3
        %vm738 = vcmp.lt.s32.totalorder %v737, 2
        %vm739 = vcmp.eq.s32.totalorder %v737, 0
        %v740 = vxor.u32 %v734, 2147483648
        %v741 = vsel %vm739, %v726, %v740
        %vm742 = vcmp.eq.s32.totalorder %v737, 2
        %v743 = vxor.u32 %v726, 2147483648
        %v744 = vsel %vm742, %v743, %v734
        %v745 = vsel %vm738, %v741, %v744
        %v746 = vsel %vm735, nan, %v745
        %v747 = vand.u32 2147483647, %v423
        %vm748 = vcmp.le.f32.partialorder %v747, 0.7853982
        %vm749 = vcmp.lt.s32.totalorder %v423, 0
        %v750 = vand.u32 %v423, 2139095040
        %v751 = vshrl.u32 %v750, 23
        %v752 = vsub.s32 %v751, 127
        %v753 = vand.u32 2147483647, %v423
        %v754 = vand.u32 %v753, 8388607
        %v755 = vor.u32 %v754, 8388608
        %v756 = vsub.s32 0, %v755
        %v757 = vadd.s32 %v752, 1
        %vm758 = vcmp.gt.s32.totalorder %v757, 0
        %v759 = vsel %vm758, %v757, 0
        %v760 = vshrl.u32 %v759, 5
        %v761 = vand.u32 %v759, 31
        %v762 = vsub.s32 32, %v761
        %v763 = vshrl.u32 683565275, %v762
        %v764 = vshll.u32 683565275, %v761
        %v765 = vshrl.u32 2475754826, %v762
        %v766 = vor.u32 %v764, %v765
        %v767 = vshll.u32 2475754826, %v761
        %v768 = vshrl.u32 2131351028, %v762
        %v769 = vor.u32 %v767, %v768
        %v770 = vshll.u32 2131351028, %v761
        %v771 = vshrl.u32 2102212464, %v762
        %v772 = vor.u32 %v770, %v771
        %v773 = vshll.u32 2102212464, %v761
        %v774 = vshrl.u32 920167782, %v762
        %v775 = vor.u32 %v773, %v774
        %v776 = vshll.u32 920167782, %v761
        %v777 = vshrl.u32 1326507024, %v762
        %v778 = vor.u32 %v776, %v777
        %vm779 = vcmp.lt.s32.totalorder %v760, 1
        %vm780 = vcmp.lt.s32.totalorder %v760, 2
        %vm781 = vcmp.lt.s32.totalorder %v760, 3
        %vm782 = vcmp.lt.s32.totalorder %v760, 4
        %v783 = vsel %vm779, %v763, %v766
        %v784 = vsel %vm782, %v772, 2102212464
        %v785 = vsel %vm781, %v769, %v784
        %v786 = vsel %vm780, %v783, %v785
        %v787 = vsel %vm779, %v766, %v769
        %v788 = vsel %vm782, %v775, 920167782
        %v789 = vsel %vm781, %v772, %v788
        %v790 = vsel %vm780, %v787, %v789
        %v791 = vsel %vm779, %v769, %v772
        %v792 = vsel %vm782, %v778, 1326507024
        %v793 = vsel %vm781, %v775, %v792
        %v794 = vsel %vm780, %v791, %v793
        %v795 = vshll.u32 %v755, 8
        %v796 = vand.u32 %v795, 65535
        %v797 = vshrl.u32 %v795, 16
        %v798 = vand.u32 %v794, 65535
        %v799 = vshrl.u32 %v794, 16
        %v800 = vmul.u32 %v796, %v798
        %v801 = vmul.u32 %v796, %v799
        %v802 = vmul.u32 %v797, %v798
        %v803 = vmul.u32 %v797, %v799
        %v804 = vshll.u32 %v801, 16
        %v805 = vshrl.u32 %v801, 16
        %v806 = vshll.u32 %v802, 16
        %v807 = vshrl.u32 %v802, 16
        %vm808 = vc.u32 %v800, %v804
        %v809 = vsel %vm808, 1, 0
        %v810 = vadd.s32 %v800, %v804
        %v811 = vadd.s32 %v803, %v809
        %vm812 = vc.u32 %v810, %v806
        %v813 = vsel %vm812, 1, 0
        %v814 = vadd.s32 %v810, %v806
        %v815 = vadd.s32 %v811, %v813
        %v816 = vadd.s32 %v815, %v805
        %v817 = vadd.s32 %v816, %v807
        %v818 = vand.u32 %v795, 65535
        %v819 = vshrl.u32 %v795, 16
        %v820 = vand.u32 %v790, 65535
        %v821 = vshrl.u32 %v790, 16
        %v822 = vmul.u32 %v818, %v820
        %v823 = vmul.u32 %v818, %v821
        %v824 = vmul.u32 %v819, %v820
        %v825 = vmul.u32 %v819, %v821
        %v826 = vshll.u32 %v823, 16
        %v827 = vshrl.u32 %v823, 16
        %v828 = vshll.u32 %v824, 16
        %v829 = vshrl.u32 %v824, 16
        %vm830 = vc.u32 %v822, %v826
        %v831 = vsel %vm830, 1, 0
        %v832 = vadd.s32 %v822, %v826
        %v833 = vadd.s32 %v825, %v831
        %vm834 = vc.u32 %v832, %v828
        %v835 = vsel %vm834, 1, 0
        %v836 = vadd.s32 %v832, %v828
        %v837 = vadd.s32 %v833, %v835
        %v838 = vadd.s32 %v837, %v827
        %v839 = vadd.s32 %v838, %v829
        %v840 = vmul.u32 %v795, %v786
        %v841 = vadd.s32 %v817, %v836
        %vm842 = vc.u32 %v817, %v836
        %v843 = vadd.s32 %v839, 1
        %v844 = vsel %vm842, %v843, %v839
        %v845 = vadd.s32 %v840, %v844
        %v846 = vadd.s32 %v845, 536870912
        %v847 = vshrl.u32 %v846, 30
        %v848 = vshll.u32 %v847, 30
        %v849 = vsub.s32 %v845, %v848
        %vm850 = vcmp.lt.s32.totalorder %v849, 0
        %v851 = vsub.s32 0, %v849
        %v852 = vsel %vm850, %v851, %v849
        %v853 = vclz %v852
        %v854 = vsub.s32 %v853, 2
        %vm855 = vcmp.gt.s32.totalorder 0, %v854
        %v856 = vsel %vm855, 0, %v854
        %v857 = vsub.s32 32, %v856
        %v858 = vshll.u32 %v849, %v856
        %v859 = vshrl.u32 %v841, %v857
        %v860 = vor.u32 %v858, %v859
        %v861 = vsub.s32 4294967266, %v856
        %v862 = vadd.s32 %v861, 127
        %v863 = vshll.u32 %v862, 23
        %v864 = vor.u32 4788187, %v863
        %v865 = vand.u32 2147483647, %v864
        %v867 = vcvt.s32.f32 %v860
        %v868 = vmul.f32 %v867, %v865
        %v869 = vxor.u32 %v868, 2147483648
        %v870 = vsel %vm749, %v869, %v868
        %v871 = vsub.s32 4, %v847
        %v872 = vsel %vm749, %v871, %v847
        %v873 = vsel %vm748, %v423, %v870
        %v874 = vsel %vm748, 0, %v872
        %v875 = vmul.f32 %v873, %v873
        %v876 = vmul.f32 %v875, -0.001358992
        %v877 = vadd.f32 %v876, 0.041655596
        %v878 = vmul.f32 %v875, %v877
        %v879 = vadd.f32 %v878, -0.4999988
        %v880 = vmul.f32 %v875, %v879
        %v881 = vadd.f32 1.0, %v880
        %v882 = vmul.f32 %v873, %v873
        %v883 = vmul.f32 %v882, -0.00019511016
        %v884 = vadd.f32 %v883, 0.008332121
        %v885 = vmul.f32 %v882, %v884
        %v886 = vadd.f32 %v885, -0.16666654
        %v887 = vmul.f32 %v882, %v886
        %v888 = vadd.f32 %v887, 1.0
        %v889 = vmul.f32 %v888, %v873
        %vm890 = vweird.f32 %v423
        %v891 = vadd.s32 %v874, 3
        %v892 = vand.u32 %v891, 3
        %vm893 = vcmp.lt.s32.totalorder %v892, 2
        %vm894 = vcmp.eq.s32.totalorder %v892, 0
        %v895 = vxor.u32 %v889, 2147483648
        %v896 = vsel %vm894, %v881, %v895
        %vm897 = vcmp.eq.s32.totalorder %v892, 2
        %v898 = vxor.u32 %v881, 2147483648
        %v899 = vsel %vm897, %v898, %v889
        %v900 = vsel %vm893, %v896, %v899
        %v901 = vsel %vm890, nan, %v900
        %v902 = vand.u32 2147483647, %v424
        %vm903 = vcmp.le.f32.partialorder %v902, 0.7853982
        %vm904 = vcmp.lt.s32.totalorder %v424, 0
        %v905 = vand.u32 %v424, 2139095040
        %v906 = vshrl.u32 %v905, 23
        %v907 = vsub.s32 %v906, 127
        %v908 = vand.u32 2147483647, %v424
        %v909 = vand.u32 %v908, 8388607
        %v910 = vor.u32 %v909, 8388608
        %v911 = vsub.s32 0, %v910
        %v912 = vadd.s32 %v907, 1
        %vm913 = vcmp.gt.s32.totalorder %v912, 0
        %v914 = vsel %vm913, %v912, 0
        %v915 = vshrl.u32 %v914, 5
        %v916 = vand.u32 %v914, 31
        %v917 = vsub.s32 32, %v916
        %v918 = vshrl.u32 683565275, %v917
        %v919 = vshll.u32 683565275, %v916
        %v920 = vshrl.u32 2475754826, %v917
        %v921 = vor.u32 %v919, %v920
        %v922 = vshll.u32 2475754826, %v916
        %v923 = vshrl.u32 2131351028, %v917
        %v924 = vor.u32 %v922, %v923
        %v925 = vshll.u32 2131351028, %v916
        %v926 = vshrl.u32 2102212464, %v917
        %v927 = vor.u32 %v925, %v926
        %v928 = vshll.u32 2102212464, %v916
        %v929 = vshrl.u32 920167782, %v917
        %v930 = vor.u32 %v928, %v929
        %v931 = vshll.u32 920167782, %v916
        %v932 = vshrl.u32 1326507024, %v917
        %v933 = vor.u32 %v931, %v932
        %vm934 = vcmp.lt.s32.totalorder %v915, 1
        %vm935 = vcmp.lt.s32.totalorder %v915, 2
        %vm936 = vcmp.lt.s32.totalorder %v915, 3
        %vm937 = vcmp.lt.s32.totalorder %v915, 4
        %v938 = vsel %vm934, %v918, %v921
        %v939 = vsel %vm937, %v927, 2102212464
        %v940 = vsel %vm936, %v924, %v939
        %v941 = vsel %vm935, %v938, %v940
        %v942 = vsel %vm934, %v921, %v924
        %v943 = vsel %vm937, %v930, 920167782
        %v944 = vsel %vm936, %v927, %v943
        %v945 = vsel %vm935, %v942, %v944
        %v946 = vsel %vm934, %v924, %v927
        %v947 = vsel %vm937, %v933, 1326507024
        %v948 = vsel %vm936, %v930, %v947
        %v949 = vsel %vm935, %v946, %v948
        %v950 = vshll.u32 %v910, 8
        %v951 = vand.u32 %v950, 65535
        %v952 = vshrl.u32 %v950, 16
        %v953 = vand.u32 %v949, 65535
        %v954 = vshrl.u32 %v949, 16
        %v955 = vmul.u32 %v951, %v953
        %v956 = vmul.u32 %v951, %v954
        %v957 = vmul.u32 %v952, %v953
        %v958 = vmul.u32 %v952, %v954
        %v959 = vshll.u32 %v956, 16
        %v960 = vshrl.u32 %v956, 16
        %v961 = vshll.u32 %v957, 16
        %v962 = vshrl.u32 %v957, 16
        %vm963 = vc.u32 %v955, %v959
        %v964 = vsel %vm963, 1, 0
        %v965 = vadd.s32 %v955, %v959
        %v966 = vadd.s32 %v958, %v964
        %vm967 = vc.u32 %v965, %v961
        %v968 = vsel %vm967, 1, 0
        %v969 = vadd.s32 %v965, %v961
        %v970 = vadd.s32 %v966, %v968
        %v971 = vadd.s32 %v970, %v960
        %v972 = vadd.s32 %v971, %v962
        %v973 = vand.u32 %v950, 65535
        %v974 = vshrl.u32 %v950, 16
        %v975 = vand.u32 %v945, 65535
        %v976 = vshrl.u32 %v945, 16
        %v977 = vmul.u32 %v973, %v975
        %v978 = vmul.u32 %v973, %v976
        %v979 = vmul.u32 %v974, %v975
        %v980 = vmul.u32 %v974, %v976
        %v981 = vshll.u32 %v978, 16
        %v982 = vshrl.u32 %v978, 16
        %v983 = vshll.u32 %v979, 16
        %v984 = vshrl.u32 %v979, 16
        %vm985 = vc.u32 %v977, %v981
        %v986 = vsel %vm985, 1, 0
        %v987 = vadd.s32 %v977, %v981
        %v988 = vadd.s32 %v980, %v986
        %vm989 = vc.u32 %v987, %v983
        %v990 = vsel %vm989, 1, 0
        %v991 = vadd.s32 %v987, %v983
        %v992 = vadd.s32 %v988, %v990
        %v993 = vadd.s32 %v992, %v982
        %v994 = vadd.s32 %v993, %v984
        %v995 = vmul.u32 %v950, %v941
        %v996 = vadd.s32 %v972, %v991
        %vm997 = vc.u32 %v972, %v991
        %v998 = vadd.s32 %v994, 1
        %v999 = vsel %vm997, %v998, %v994
        %v1000 = vadd.s32 %v995, %v999
        %v1001 = vadd.s32 %v1000, 536870912
        %v1002 = vshrl.u32 %v1001, 30
        %v1003 = vshll.u32 %v1002, 30
        %v1004 = vsub.s32 %v1000, %v1003
        %vm1005 = vcmp.lt.s32.totalorder %v1004, 0
        %v1006 = vsub.s32 0, %v1004
        %v1007 = vsel %vm1005, %v1006, %v1004
        %v1008 = vclz %v1007
        %v1009 = vsub.s32 %v1008, 2
        %vm1010 = vcmp.gt.s32.totalorder 0, %v1009
        %v1011 = vsel %vm1010, 0, %v1009
        %v1012 = vsub.s32 32, %v1011
        %v1013 = vshll.u32 %v1004, %v1011
        %v1014 = vshrl.u32 %v996, %v1012
        %v1015 = vor.u32 %v1013, %v1014
        %v1016 = vsub.s32 4294967266, %v1011
        %v1017 = vadd.s32 %v1016, 127
        %v1018 = vshll.u32 %v1017, 23
        %v1019 = vor.u32 4788187, %v1018
        %v1020 = vand.u32 2147483647, %v1019
        %v1022 = vcvt.s32.f32 %v1015
        %v1023 = vmul.f32 %v1022, %v1020
        %v1024 = vxor.u32 %v1023, 2147483648
        %v1025 = vsel %vm904, %v1024, %v1023
        %v1026 = vsub.s32 4, %v1002
        %v1027 = vsel %vm904, %v1026, %v1002
        %v1028 = vsel %vm903, %v424, %v1025
        %v1029 = vsel %vm903, 0, %v1027
        %v1030 = vmul.f32 %v1028, %v1028
        %v1031 = vmul.f32 %v1030, -0.001358992
        %v1032 = vadd.f32 %v1031, 0.041655596
        %v1033 = vmul.f32 %v1030, %v1032
        %v1034 = vadd.f32 %v1033, -0.4999988
        %v1035 = vmul.f32 %v1030, %v1034
        %v1036 = vadd.f32 1.0, %v1035
        %v1037 = vmul.f32 %v1028, %v1028
        %v1038 = vmul.f32 %v1037, -0.00019511016
        %v1039 = vadd.f32 %v1038, 0.008332121
        %v1040 = vmul.f32 %v1037, %v1039
        %v1041 = vadd.f32 %v1040, -0.16666654
        %v1042 = vmul.f32 %v1037, %v1041
        %v1043 = vadd.f32 %v1042, 1.0
        %v1044 = vmul.f32 %v1043, %v1028
        %vm1045 = vweird.f32 %v424
        %v1046 = vadd.s32 %v1029, 3
        %v1047 = vand.u32 %v1046, 3
        %vm1048 = vcmp.lt.s32.totalorder %v1047, 2
        %vm1049 = vcmp.eq.s32.totalorder %v1047, 0
        %v1050 = vxor.u32 %v1044, 2147483648
        %v1051 = vsel %vm1049, %v1036, %v1050
        %vm1052 = vcmp.eq.s32.totalorder %v1047, 2
        %v1053 = vxor.u32 %v1036, 2147483648
        %v1054 = vsel %vm1052, %v1053, %v1044
        %v1055 = vsel %vm1048, %v1051, %v1054
        %v1056 = vsel %vm1045, nan, %v1055
        %v1057 = vand.u32 2147483647, %v425
        %vm1058 = vcmp.le.f32.partialorder %v1057, 0.7853982
        %vm1059 = vcmp.lt.s32.totalorder %v425, 0
        %v1060 = vand.u32 %v425, 2139095040
        %v1061 = vshrl.u32 %v1060, 23
        %v1062 = vsub.s32 %v1061, 127
        %v1063 = vand.u32 2147483647, %v425
        %v1064 = vand.u32 %v1063, 8388607
        %v1065 = vor.u32 %v1064, 8388608
        %v1066 = vsub.s32 0, %v1065
        %v1067 = vadd.s32 %v1062, 1
        %vm1068 = vcmp.gt.s32.totalorder %v1067, 0
        %v1069 = vsel %vm1068, %v1067, 0
        %v1070 = vshrl.u32 %v1069, 5
        %v1071 = vand.u32 %v1069, 31
        %v1072 = vsub.s32 32, %v1071
        %v1073 = vshrl.u32 683565275, %v1072
        %v1074 = vshll.u32 683565275, %v1071
        %v1075 = vshrl.u32 2475754826, %v1072
        %v1076 = vor.u32 %v1074, %v1075
        %v1077 = vshll.u32 2475754826, %v1071
        %v1078 = vshrl.u32 2131351028, %v1072
        %v1079 = vor.u32 %v1077, %v1078
        %v1080 = vshll.u32 2131351028, %v1071
        %v1081 = vshrl.u32 2102212464, %v1072
        %v1082 = vor.u32 %v1080, %v1081
        %v1083 = vshll.u32 2102212464, %v1071
        %v1084 = vshrl.u32 920167782, %v1072
        %v1085 = vor.u32 %v1083, %v1084
        %v1086 = vshll.u32 920167782, %v1071
        %v1087 = vshrl.u32 1326507024, %v1072
        %v1088 = vor.u32 %v1086, %v1087
        %vm1089 = vcmp.lt.s32.totalorder %v1070, 1
        %vm1090 = vcmp.lt.s32.totalorder %v1070, 2
        %vm1091 = vcmp.lt.s32.totalorder %v1070, 3
        %vm1092 = vcmp.lt.s32.totalorder %v1070, 4
        %v1093 = vsel %vm1089, %v1073, %v1076
        %v1094 = vsel %vm1092, %v1082, 2102212464
        %v1095 = vsel %vm1091, %v1079, %v1094
        %v1096 = vsel %vm1090, %v1093, %v1095
        %v1097 = vsel %vm1089, %v1076, %v1079
        %v1098 = vsel %vm1092, %v1085, 920167782
        %v1099 = vsel %vm1091, %v1082, %v1098
        %v1100 = vsel %vm1090, %v1097, %v1099
        %v1101 = vsel %vm1089, %v1079, %v1082
        %v1102 = vsel %vm1092, %v1088, 1326507024
        %v1103 = vsel %vm1091, %v1085, %v1102
        %v1104 = vsel %vm1090, %v1101, %v1103
        %v1105 = vshll.u32 %v1065, 8
        %v1106 = vand.u32 %v1105, 65535
        %v1107 = vshrl.u32 %v1105, 16
        %v1108 = vand.u32 %v1104, 65535
        %v1109 = vshrl.u32 %v1104, 16
        %v1110 = vmul.u32 %v1106, %v1108
        %v1111 = vmul.u32 %v1106, %v1109
        %v1112 = vmul.u32 %v1107, %v1108
        %v1113 = vmul.u32 %v1107, %v1109
        %v1114 = vshll.u32 %v1111, 16
        %v1115 = vshrl.u32 %v1111, 16
        %v1116 = vshll.u32 %v1112, 16
        %v1117 = vshrl.u32 %v1112, 16
        %vm1118 = vc.u32 %v1110, %v1114
        %v1119 = vsel %vm1118, 1, 0
        %v1120 = vadd.s32 %v1110, %v1114
        %v1121 = vadd.s32 %v1113, %v1119
        %vm1122 = vc.u32 %v1120, %v1116
        %v1123 = vsel %vm1122, 1, 0
        %v1124 = vadd.s32 %v1120, %v1116
        %v1125 = vadd.s32 %v1121, %v1123
        %v1126 = vadd.s32 %v1125, %v1115
        %v1127 = vadd.s32 %v1126, %v1117
        %v1128 = vand.u32 %v1105, 65535
        %v1129 = vshrl.u32 %v1105, 16
        %v1130 = vand.u32 %v1100, 65535
        %v1131 = vshrl.u32 %v1100, 16
        %v1132 = vmul.u32 %v1128, %v1130
        %v1133 = vmul.u32 %v1128, %v1131
        %v1134 = vmul.u32 %v1129, %v1130
        %v1135 = vmul.u32 %v1129, %v1131
        %v1136 = vshll.u32 %v1133, 16
        %v1137 = vshrl.u32 %v1133, 16
        %v1138 = vshll.u32 %v1134, 16
        %v1139 = vshrl.u32 %v1134, 16
        %vm1140 = vc.u32 %v1132, %v1136
        %v1141 = vsel %vm1140, 1, 0
        %v1142 = vadd.s32 %v1132, %v1136
        %v1143 = vadd.s32 %v1135, %v1141
        %vm1144 = vc.u32 %v1142, %v1138
        %v1145 = vsel %vm1144, 1, 0
        %v1146 = vadd.s32 %v1142, %v1138
        %v1147 = vadd.s32 %v1143, %v1145
        %v1148 = vadd.s32 %v1147, %v1137
        %v1149 = vadd.s32 %v1148, %v1139
        %v1150 = vmul.u32 %v1105, %v1096
        %v1151 = vadd.s32 %v1127, %v1146
        %vm1152 = vc.u32 %v1127, %v1146
        %v1153 = vadd.s32 %v1149, 1
        %v1154 = vsel %vm1152, %v1153, %v1149
        %v1155 = vadd.s32 %v1150, %v1154
        %v1156 = vadd.s32 %v1155, 536870912
        %v1157 = vshrl.u32 %v1156, 30
        %v1158 = vshll.u32 %v1157, 30
        %v1159 = vsub.s32 %v1155, %v1158
        %vm1160 = vcmp.lt.s32.totalorder %v1159, 0
        %v1161 = vsub.s32 0, %v1159
        %v1162 = vsel %vm1160, %v1161, %v1159
        %v1163 = vclz %v1162
        %v1164 = vsub.s32 %v1163, 2
        %vm1165 = vcmp.gt.s32.totalorder 0, %v1164
        %v1166 = vsel %vm1165, 0, %v1164
        %v1167 = vsub.s32 32, %v1166
        %v1168 = vshll.u32 %v1159, %v1166
        %v1169 = vshrl.u32 %v1151, %v1167
        %v1170 = vor.u32 %v1168, %v1169
        %v1171 = vsub.s32 4294967266, %v1166
        %v1172 = vadd.s32 %v1171, 127
        %v1173 = vshll.u32 %v1172, 23
        %v1174 = vor.u32 4788187, %v1173
        %v1175 = vand.u32 2147483647, %v1174
        %v1177 = vcvt.s32.f32 %v1170
        %v1178 = vmul.f32 %v1177, %v1175
        %v1179 = vxor.u32 %v1178, 2147483648
        %v1180 = vsel %vm1059, %v1179, %v1178
        %v1181 = vsub.s32 4, %v1157
        %v1182 = vsel %vm1059, %v1181, %v1157
        %v1183 = vsel %vm1058, %v425, %v1180
        %v1184 = vsel %vm1058, 0, %v1182
        %v1185 = vmul.f32 %v1183, %v1183
        %v1186 = vmul.f32 %v1185, -0.001358992
        %v1187 = vadd.f32 %v1186, 0.041655596
        %v1188 = vmul.f32 %v1185, %v1187
        %v1189 = vadd.f32 %v1188, -0.4999988
        %v1190 = vmul.f32 %v1185, %v1189
        %v1191 = vadd.f32 1.0, %v1190
        %v1192 = vmul.f32 %v1183, %v1183
        %v1193 = vmul.f32 %v1192, -0.00019511016
        %v1194 = vadd.f32 %v1193, 0.008332121
        %v1195 = vmul.f32 %v1192, %v1194
        %v1196 = vadd.f32 %v1195, -0.16666654
        %v1197 = vmul.f32 %v1192, %v1196
        %v1198 = vadd.f32 %v1197, 1.0
        %v1199 = vmul.f32 %v1198, %v1183
        %vm1200 = vweird.f32 %v425
        %v1201 = vadd.s32 %v1184, 3
        %v1202 = vand.u32 %v1201, 3
        %vm1203 = vcmp.lt.s32.totalorder %v1202, 2
        %vm1204 = vcmp.eq.s32.totalorder %v1202, 0
        %v1205 = vxor.u32 %v1199, 2147483648
        %v1206 = vsel %vm1204, %v1191, %v1205
        %vm1207 = vcmp.eq.s32.totalorder %v1202, 2
        %v1208 = vxor.u32 %v1191, 2147483648
        %v1209 = vsel %vm1207, %v1208, %v1199
        %v1210 = vsel %vm1203, %v1206, %v1209
        %v1211 = vsel %vm1200, nan, %v1210
        %v1212 = vand.u32 2147483647, %v426
        %vm1213 = vcmp.le.f32.partialorder %v1212, 0.7853982
        %vm1214 = vcmp.lt.s32.totalorder %v426, 0
        %v1215 = vand.u32 %v426, 2139095040
        %v1216 = vshrl.u32 %v1215, 23
        %v1217 = vsub.s32 %v1216, 127
        %v1218 = vand.u32 2147483647, %v426
        %v1219 = vand.u32 %v1218, 8388607
        %v1220 = vor.u32 %v1219, 8388608
        %v1221 = vsub.s32 0, %v1220
        %v1222 = vadd.s32 %v1217, 1
        %vm1223 = vcmp.gt.s32.totalorder %v1222, 0
        %v1224 = vsel %vm1223, %v1222, 0
        %v1225 = vshrl.u32 %v1224, 5
        %v1226 = vand.u32 %v1224, 31
        %v1227 = vsub.s32 32, %v1226
        %v1228 = vshrl.u32 683565275, %v1227
        %v1229 = vshll.u32 683565275, %v1226
        %v1230 = vshrl.u32 2475754826, %v1227
        %v1231 = vor.u32 %v1229, %v1230
        %v1232 = vshll.u32 2475754826, %v1226
        %v1233 = vshrl.u32 2131351028, %v1227
        %v1234 = vor.u32 %v1232, %v1233
        %v1235 = vshll.u32 2131351028, %v1226
        %v1236 = vshrl.u32 2102212464, %v1227
        %v1237 = vor.u32 %v1235, %v1236
        %v1238 = vshll.u32 2102212464, %v1226
        %v1239 = vshrl.u32 920167782, %v1227
        %v1240 = vor.u32 %v1238, %v1239
        %v1241 = vshll.u32 920167782, %v1226
        %v1242 = vshrl.u32 1326507024, %v1227
        %v1243 = vor.u32 %v1241, %v1242
        %vm1244 = vcmp.lt.s32.totalorder %v1225, 1
        %vm1245 = vcmp.lt.s32.totalorder %v1225, 2
        %vm1246 = vcmp.lt.s32.totalorder %v1225, 3
        %vm1247 = vcmp.lt.s32.totalorder %v1225, 4
        %v1248 = vsel %vm1244, %v1228, %v1231
        %v1249 = vsel %vm1247, %v1237, 2102212464
        %v1250 = vsel %vm1246, %v1234, %v1249
        %v1251 = vsel %vm1245, %v1248, %v1250
        %v1252 = vsel %vm1244, %v1231, %v1234
        %v1253 = vsel %vm1247, %v1240, 920167782
        %v1254 = vsel %vm1246, %v1237, %v1253
        %v1255 = vsel %vm1245, %v1252, %v1254
        %v1256 = vsel %vm1244, %v1234, %v1237
        %v1257 = vsel %vm1247, %v1243, 1326507024
        %v1258 = vsel %vm1246, %v1240, %v1257
        %v1259 = vsel %vm1245, %v1256, %v1258
        %v1260 = vshll.u32 %v1220, 8
        %v1261 = vand.u32 %v1260, 65535
        %v1262 = vshrl.u32 %v1260, 16
        %v1263 = vand.u32 %v1259, 65535
        %v1264 = vshrl.u32 %v1259, 16
        %v1265 = vmul.u32 %v1261, %v1263
        %v1266 = vmul.u32 %v1261, %v1264
        %v1267 = vmul.u32 %v1262, %v1263
        %v1268 = vmul.u32 %v1262, %v1264
        %v1269 = vshll.u32 %v1266, 16
        %v1270 = vshrl.u32 %v1266, 16
        %v1271 = vshll.u32 %v1267, 16
        %v1272 = vshrl.u32 %v1267, 16
        %vm1273 = vc.u32 %v1265, %v1269
        %v1274 = vsel %vm1273, 1, 0
        %v1275 = vadd.s32 %v1265, %v1269
        %v1276 = vadd.s32 %v1268, %v1274
        %vm1277 = vc.u32 %v1275, %v1271
        %v1278 = vsel %vm1277, 1, 0
        %v1279 = vadd.s32 %v1275, %v1271
        %v1280 = vadd.s32 %v1276, %v1278
        %v1281 = vadd.s32 %v1280, %v1270
        %v1282 = vadd.s32 %v1281, %v1272
        %v1283 = vand.u32 %v1260, 65535
        %v1284 = vshrl.u32 %v1260, 16
        %v1285 = vand.u32 %v1255, 65535
        %v1286 = vshrl.u32 %v1255, 16
        %v1287 = vmul.u32 %v1283, %v1285
        %v1288 = vmul.u32 %v1283, %v1286
        %v1289 = vmul.u32 %v1284, %v1285
        %v1290 = vmul.u32 %v1284, %v1286
        %v1291 = vshll.u32 %v1288, 16
        %v1292 = vshrl.u32 %v1288, 16
        %v1293 = vshll.u32 %v1289, 16
        %v1294 = vshrl.u32 %v1289, 16
        %vm1295 = vc.u32 %v1287, %v1291
        %v1296 = vsel %vm1295, 1, 0
        %v1297 = vadd.s32 %v1287, %v1291
        %v1298 = vadd.s32 %v1290, %v1296
        %vm1299 = vc.u32 %v1297, %v1293
        %v1300 = vsel %vm1299, 1, 0
        %v1301 = vadd.s32 %v1297, %v1293
        %v1302 = vadd.s32 %v1298, %v1300
        %v1303 = vadd.s32 %v1302, %v1292
        %v1304 = vadd.s32 %v1303, %v1294
        %v1305 = vmul.u32 %v1260, %v1251
        %v1306 = vadd.s32 %v1282, %v1301
        %vm1307 = vc.u32 %v1282, %v1301
        %v1308 = vadd.s32 %v1304, 1
        %v1309 = vsel %vm1307, %v1308, %v1304
        %v1310 = vadd.s32 %v1305, %v1309
        %v1311 = vadd.s32 %v1310, 536870912
        %v1312 = vshrl.u32 %v1311, 30
        %v1313 = vshll.u32 %v1312, 30
        %v1314 = vsub.s32 %v1310, %v1313
        %vm1315 = vcmp.lt.s32.totalorder %v1314, 0
        %v1316 = vsub.s32 0, %v1314
        %v1317 = vsel %vm1315, %v1316, %v1314
        %v1318 = vclz %v1317
        %v1319 = vsub.s32 %v1318, 2
        %vm1320 = vcmp.gt.s32.totalorder 0, %v1319
        %v1321 = vsel %vm1320, 0, %v1319
        %v1322 = vsub.s32 32, %v1321
        %v1323 = vshll.u32 %v1314, %v1321
        %v1324 = vshrl.u32 %v1306, %v1322
        %v1325 = vor.u32 %v1323, %v1324
        %v1326 = vsub.s32 4294967266, %v1321
        %v1327 = vadd.s32 %v1326, 127
        %v1328 = vshll.u32 %v1327, 23
        %v1329 = vor.u32 4788187, %v1328
        %v1330 = vand.u32 2147483647, %v1329
        %v1332 = vcvt.s32.f32 %v1325
        %v1333 = vmul.f32 %v1332, %v1330
        %v1334 = vxor.u32 %v1333, 2147483648
        %v1335 = vsel %vm1214, %v1334, %v1333
        %v1336 = vsub.s32 4, %v1312
        %v1337 = vsel %vm1214, %v1336, %v1312
        %v1338 = vsel %vm1213, %v426, %v1335
        %v1339 = vsel %vm1213, 0, %v1337
        %v1340 = vmul.f32 %v1338, %v1338
        %v1341 = vmul.f32 %v1340, -0.001358992
        %v1342 = vadd.f32 %v1341, 0.041655596
        %v1343 = vmul.f32 %v1340, %v1342
        %v1344 = vadd.f32 %v1343, -0.4999988
        %v1345 = vmul.f32 %v1340, %v1344
        %v1346 = vadd.f32 1.0, %v1345
        %v1347 = vmul.f32 %v1338, %v1338
        %v1348 = vmul.f32 %v1347, -0.00019511016
        %v1349 = vadd.f32 %v1348, 0.008332121
        %v1350 = vmul.f32 %v1347, %v1349
        %v1351 = vadd.f32 %v1350, -0.16666654
        %v1352 = vmul.f32 %v1347, %v1351
        %v1353 = vadd.f32 %v1352, 1.0
        %v1354 = vmul.f32 %v1353, %v1338
        %vm1355 = vweird.f32 %v426
        %v1356 = vadd.s32 %v1339, 3
        %v1357 = vand.u32 %v1356, 3
        %vm1358 = vcmp.lt.s32.totalorder %v1357, 2
        %vm1359 = vcmp.eq.s32.totalorder %v1357, 0
        %v1360 = vxor.u32 %v1354, 2147483648
        %v1361 = vsel %vm1359, %v1346, %v1360
        %vm1362 = vcmp.eq.s32.totalorder %v1357, 2
        %v1363 = vxor.u32 %v1346, 2147483648
        %v1364 = vsel %vm1362, %v1363, %v1354
        %v1365 = vsel %vm1358, %v1361, %v1364
        %v1366 = vsel %vm1355, nan, %v1365
        %v1367 = vand.u32 2147483647, %v427
        %vm1368 = vcmp.le.f32.partialorder %v1367, 0.7853982
        %vm1369 = vcmp.lt.s32.totalorder %v427, 0
        %v1370 = vand.u32 %v427, 2139095040
        %v1371 = vshrl.u32 %v1370, 23
        %v1372 = vsub.s32 %v1371, 127
        %v1373 = vand.u32 2147483647, %v427
        %v1374 = vand.u32 %v1373, 8388607
        %v1375 = vor.u32 %v1374, 8388608
        %v1376 = vsub.s32 0, %v1375
        %v1377 = vadd.s32 %v1372, 1
        %vm1378 = vcmp.gt.s32.totalorder %v1377, 0
        %v1379 = vsel %vm1378, %v1377, 0
        %v1380 = vshrl.u32 %v1379, 5
        %v1381 = vand.u32 %v1379, 31
        %v1382 = vsub.s32 32, %v1381
        %v1383 = vshrl.u32 683565275, %v1382
        %v1384 = vshll.u32 683565275, %v1381
        %v1385 = vshrl.u32 2475754826, %v1382
        %v1386 = vor.u32 %v1384, %v1385
        %v1387 = vshll.u32 2475754826, %v1381
        %v1388 = vshrl.u32 2131351028, %v1382
        %v1389 = vor.u32 %v1387, %v1388
        %v1390 = vshll.u32 2131351028, %v1381
        %v1391 = vshrl.u32 2102212464, %v1382
        %v1392 = vor.u32 %v1390, %v1391
        %v1393 = vshll.u32 2102212464, %v1381
        %v1394 = vshrl.u32 920167782, %v1382
        %v1395 = vor.u32 %v1393, %v1394
        %v1396 = vshll.u32 920167782, %v1381
        %v1397 = vshrl.u32 1326507024, %v1382
        %v1398 = vor.u32 %v1396, %v1397
        %vm1399 = vcmp.lt.s32.totalorder %v1380, 1
        %vm1400 = vcmp.lt.s32.totalorder %v1380, 2
        %vm1401 = vcmp.lt.s32.totalorder %v1380, 3
        %vm1402 = vcmp.lt.s32.totalorder %v1380, 4
        %v1403 = vsel %vm1399, %v1383, %v1386
        %v1404 = vsel %vm1402, %v1392, 2102212464
        %v1405 = vsel %vm1401, %v1389, %v1404
        %v1406 = vsel %vm1400, %v1403, %v1405
        %v1407 = vsel %vm1399, %v1386, %v1389
        %v1408 = vsel %vm1402, %v1395, 920167782
        %v1409 = vsel %vm1401, %v1392, %v1408
        %v1410 = vsel %vm1400, %v1407, %v1409
        %v1411 = vsel %vm1399, %v1389, %v1392
        %v1412 = vsel %vm1402, %v1398, 1326507024
        %v1413 = vsel %vm1401, %v1395, %v1412
        %v1414 = vsel %vm1400, %v1411, %v1413
        %v1415 = vshll.u32 %v1375, 8
        %v1416 = vand.u32 %v1415, 65535
        %v1417 = vshrl.u32 %v1415, 16
        %v1418 = vand.u32 %v1414, 65535
        %v1419 = vshrl.u32 %v1414, 16
        %v1420 = vmul.u32 %v1416, %v1418
        %v1421 = vmul.u32 %v1416, %v1419
        %v1422 = vmul.u32 %v1417, %v1418
        %v1423 = vmul.u32 %v1417, %v1419
        %v1424 = vshll.u32 %v1421, 16
        %v1425 = vshrl.u32 %v1421, 16
        %v1426 = vshll.u32 %v1422, 16
        %v1427 = vshrl.u32 %v1422, 16
        %vm1428 = vc.u32 %v1420, %v1424
        %v1429 = vsel %vm1428, 1, 0
        %v1430 = vadd.s32 %v1420, %v1424
        %v1431 = vadd.s32 %v1423, %v1429
        %vm1432 = vc.u32 %v1430, %v1426
        %v1433 = vsel %vm1432, 1, 0
        %v1434 = vadd.s32 %v1430, %v1426
        %v1435 = vadd.s32 %v1431, %v1433
        %v1436 = vadd.s32 %v1435, %v1425
        %v1437 = vadd.s32 %v1436, %v1427
        %v1438 = vand.u32 %v1415, 65535
        %v1439 = vshrl.u32 %v1415, 16
        %v1440 = vand.u32 %v1410, 65535
        %v1441 = vshrl.u32 %v1410, 16
        %v1442 = vmul.u32 %v1438, %v1440
        %v1443 = vmul.u32 %v1438, %v1441
        %v1444 = vmul.u32 %v1439, %v1440
        %v1445 = vmul.u32 %v1439, %v1441
        %v1446 = vshll.u32 %v1443, 16
        %v1447 = vshrl.u32 %v1443, 16
        %v1448 = vshll.u32 %v1444, 16
        %v1449 = vshrl.u32 %v1444, 16
        %vm1450 = vc.u32 %v1442, %v1446
        %v1451 = vsel %vm1450, 1, 0
        %v1452 = vadd.s32 %v1442, %v1446
        %v1453 = vadd.s32 %v1445, %v1451
        %vm1454 = vc.u32 %v1452, %v1448
        %v1455 = vsel %vm1454, 1, 0
        %v1456 = vadd.s32 %v1452, %v1448
        %v1457 = vadd.s32 %v1453, %v1455
        %v1458 = vadd.s32 %v1457, %v1447
        %v1459 = vadd.s32 %v1458, %v1449
        %v1460 = vmul.u32 %v1415, %v1406
        %v1461 = vadd.s32 %v1437, %v1456
        %vm1462 = vc.u32 %v1437, %v1456
        %v1463 = vadd.s32 %v1459, 1
        %v1464 = vsel %vm1462, %v1463, %v1459
        %v1465 = vadd.s32 %v1460, %v1464
        %v1466 = vadd.s32 %v1465, 536870912
        %v1467 = vshrl.u32 %v1466, 30
        %v1468 = vshll.u32 %v1467, 30
        %v1469 = vsub.s32 %v1465, %v1468
        %vm1470 = vcmp.lt.s32.totalorder %v1469, 0
        %v1471 = vsub.s32 0, %v1469
        %v1472 = vsel %vm1470, %v1471, %v1469
        %v1473 = vclz %v1472
        %v1474 = vsub.s32 %v1473, 2
        %vm1475 = vcmp.gt.s32.totalorder 0, %v1474
        %v1476 = vsel %vm1475, 0, %v1474
        %v1477 = vsub.s32 32, %v1476
        %v1478 = vshll.u32 %v1469, %v1476
        %v1479 = vshrl.u32 %v1461, %v1477
        %v1480 = vor.u32 %v1478, %v1479
        %v1481 = vsub.s32 4294967266, %v1476
        %v1482 = vadd.s32 %v1481, 127
        %v1483 = vshll.u32 %v1482, 23
        %v1484 = vor.u32 4788187, %v1483
        %v1485 = vand.u32 2147483647, %v1484
        %v1487 = vcvt.s32.f32 %v1480
        %v1488 = vmul.f32 %v1487, %v1485
        %v1489 = vxor.u32 %v1488, 2147483648
        %v1490 = vsel %vm1369, %v1489, %v1488
        %v1491 = vsub.s32 4, %v1467
        %v1492 = vsel %vm1369, %v1491, %v1467
        %v1493 = vsel %vm1368, %v427, %v1490
        %v1494 = vsel %vm1368, 0, %v1492
        %v1495 = vmul.f32 %v1493, %v1493
        %v1496 = vmul.f32 %v1495, -0.001358992
        %v1497 = vadd.f32 %v1496, 0.041655596
        %v1498 = vmul.f32 %v1495, %v1497
        %v1499 = vadd.f32 %v1498, -0.4999988
        %v1500 = vmul.f32 %v1495, %v1499
        %v1501 = vadd.f32 1.0, %v1500
        %v1502 = vmul.f32 %v1493, %v1493
        %v1503 = vmul.f32 %v1502, -0.00019511016
        %v1504 = vadd.f32 %v1503, 0.008332121
        %v1505 = vmul.f32 %v1502, %v1504
        %v1506 = vadd.f32 %v1505, -0.16666654
        %v1507 = vmul.f32 %v1502, %v1506
        %v1508 = vadd.f32 %v1507, 1.0
        %v1509 = vmul.f32 %v1508, %v1493
        %vm1510 = vweird.f32 %v427
        %v1511 = vadd.s32 %v1494, 3
        %v1512 = vand.u32 %v1511, 3
        %vm1513 = vcmp.lt.s32.totalorder %v1512, 2
        %vm1514 = vcmp.eq.s32.totalorder %v1512, 0
        %v1515 = vxor.u32 %v1509, 2147483648
        %v1516 = vsel %vm1514, %v1501, %v1515
        %vm1517 = vcmp.eq.s32.totalorder %v1512, 2
        %v1518 = vxor.u32 %v1501, 2147483648
        %v1519 = vsel %vm1517, %v1518, %v1509
        %v1520 = vsel %vm1513, %v1516, %v1519
        %v1521 = vsel %vm1510, nan, %v1520
        %v1522 = vand.u32 2147483647, %v428
        %vm1523 = vcmp.le.f32.partialorder %v1522, 0.7853982
        %vm1524 = vcmp.lt.s32.totalorder %v428, 0
        %v1525 = vand.u32 %v428, 2139095040
        %v1526 = vshrl.u32 %v1525, 23
        %v1527 = vsub.s32 %v1526, 127
        %v1528 = vand.u32 2147483647, %v428
        %v1529 = vand.u32 %v1528, 8388607
        %v1530 = vor.u32 %v1529, 8388608
        %v1531 = vsub.s32 0, %v1530
        %v1532 = vadd.s32 %v1527, 1
        %vm1533 = vcmp.gt.s32.totalorder %v1532, 0
        %v1534 = vsel %vm1533, %v1532, 0
        %v1535 = vshrl.u32 %v1534, 5
        %v1536 = vand.u32 %v1534, 31
        %v1537 = vsub.s32 32, %v1536
        %v1538 = vshrl.u32 683565275, %v1537
        %v1539 = vshll.u32 683565275, %v1536
        %v1540 = vshrl.u32 2475754826, %v1537
        %v1541 = vor.u32 %v1539, %v1540
        %v1542 = vshll.u32 2475754826, %v1536
        %v1543 = vshrl.u32 2131351028, %v1537
        %v1544 = vor.u32 %v1542, %v1543
        %v1545 = vshll.u32 2131351028, %v1536
        %v1546 = vshrl.u32 2102212464, %v1537
        %v1547 = vor.u32 %v1545, %v1546
        %v1548 = vshll.u32 2102212464, %v1536
        %v1549 = vshrl.u32 920167782, %v1537
        %v1550 = vor.u32 %v1548, %v1549
        %v1551 = vshll.u32 920167782, %v1536
        %v1552 = vshrl.u32 1326507024, %v1537
        %v1553 = vor.u32 %v1551, %v1552
        %vm1554 = vcmp.lt.s32.totalorder %v1535, 1
        %vm1555 = vcmp.lt.s32.totalorder %v1535, 2
        %vm1556 = vcmp.lt.s32.totalorder %v1535, 3
        %vm1557 = vcmp.lt.s32.totalorder %v1535, 4
        %v1558 = vsel %vm1554, %v1538, %v1541
        %v1559 = vsel %vm1557, %v1547, 2102212464
        %v1560 = vsel %vm1556, %v1544, %v1559
        %v1561 = vsel %vm1555, %v1558, %v1560
        %v1562 = vsel %vm1554, %v1541, %v1544
        %v1563 = vsel %vm1557, %v1550, 920167782
        %v1564 = vsel %vm1556, %v1547, %v1563
        %v1565 = vsel %vm1555, %v1562, %v1564
        %v1566 = vsel %vm1554, %v1544, %v1547
        %v1567 = vsel %vm1557, %v1553, 1326507024
        %v1568 = vsel %vm1556, %v1550, %v1567
        %v1569 = vsel %vm1555, %v1566, %v1568
        %v1570 = vshll.u32 %v1530, 8
        %v1571 = vand.u32 %v1570, 65535
        %v1572 = vshrl.u32 %v1570, 16
        %v1573 = vand.u32 %v1569, 65535
        %v1574 = vshrl.u32 %v1569, 16
        %v1575 = vmul.u32 %v1571, %v1573
        %v1576 = vmul.u32 %v1571, %v1574
        %v1577 = vmul.u32 %v1572, %v1573
        %v1578 = vmul.u32 %v1572, %v1574
        %v1579 = vshll.u32 %v1576, 16
        %v1580 = vshrl.u32 %v1576, 16
        %v1581 = vshll.u32 %v1577, 16
        %v1582 = vshrl.u32 %v1577, 16
        %vm1583 = vc.u32 %v1575, %v1579
        %v1584 = vsel %vm1583, 1, 0
        %v1585 = vadd.s32 %v1575, %v1579
        %v1586 = vadd.s32 %v1578, %v1584
        %vm1587 = vc.u32 %v1585, %v1581
        %v1588 = vsel %vm1587, 1, 0
        %v1589 = vadd.s32 %v1585, %v1581
        %v1590 = vadd.s32 %v1586, %v1588
        %v1591 = vadd.s32 %v1590, %v1580
        %v1592 = vadd.s32 %v1591, %v1582
        %v1593 = vand.u32 %v1570, 65535
        %v1594 = vshrl.u32 %v1570, 16
        %v1595 = vand.u32 %v1565, 65535
        %v1596 = vshrl.u32 %v1565, 16
        %v1597 = vmul.u32 %v1593, %v1595
        %v1598 = vmul.u32 %v1593, %v1596
        %v1599 = vmul.u32 %v1594, %v1595
        %v1600 = vmul.u32 %v1594, %v1596
        %v1601 = vshll.u32 %v1598, 16
        %v1602 = vshrl.u32 %v1598, 16
        %v1603 = vshll.u32 %v1599, 16
        %v1604 = vshrl.u32 %v1599, 16
        %vm1605 = vc.u32 %v1597, %v1601
        %v1606 = vsel %vm1605, 1, 0
        %v1607 = vadd.s32 %v1597, %v1601
        %v1608 = vadd.s32 %v1600, %v1606
        %vm1609 = vc.u32 %v1607, %v1603
        %v1610 = vsel %vm1609, 1, 0
        %v1611 = vadd.s32 %v1607, %v1603
        %v1612 = vadd.s32 %v1608, %v1610
        %v1613 = vadd.s32 %v1612, %v1602
        %v1614 = vadd.s32 %v1613, %v1604
        %v1615 = vmul.u32 %v1570, %v1561
        %v1616 = vadd.s32 %v1592, %v1611
        %vm1617 = vc.u32 %v1592, %v1611
        %v1618 = vadd.s32 %v1614, 1
        %v1619 = vsel %vm1617, %v1618, %v1614
        %v1620 = vadd.s32 %v1615, %v1619
        %v1621 = vadd.s32 %v1620, 536870912
        %v1622 = vshrl.u32 %v1621, 30
        %v1623 = vshll.u32 %v1622, 30
        %v1624 = vsub.s32 %v1620, %v1623
        %vm1625 = vcmp.lt.s32.totalorder %v1624, 0
        %v1626 = vsub.s32 0, %v1624
        %v1627 = vsel %vm1625, %v1626, %v1624
        %v1628 = vclz %v1627
        %v1629 = vsub.s32 %v1628, 2
        %vm1630 = vcmp.gt.s32.totalorder 0, %v1629
        %v1631 = vsel %vm1630, 0, %v1629
        %v1632 = vsub.s32 32, %v1631
        %v1633 = vshll.u32 %v1624, %v1631
        %v1634 = vshrl.u32 %v1616, %v1632
        %v1635 = vor.u32 %v1633, %v1634
        %v1636 = vsub.s32 4294967266, %v1631
        %v1637 = vadd.s32 %v1636, 127
        %v1638 = vshll.u32 %v1637, 23
        %v1639 = vor.u32 4788187, %v1638
        %v1640 = vand.u32 2147483647, %v1639
        %v1642 = vcvt.s32.f32 %v1635
        %v1643 = vmul.f32 %v1642, %v1640
        %v1644 = vxor.u32 %v1643, 2147483648
        %v1645 = vsel %vm1524, %v1644, %v1643
        %v1646 = vsub.s32 4, %v1622
        %v1647 = vsel %vm1524, %v1646, %v1622
        %v1648 = vsel %vm1523, %v428, %v1645
        %v1649 = vsel %vm1523, 0, %v1647
        %v1650 = vmul.f32 %v1648, %v1648
        %v1651 = vmul.f32 %v1650, -0.001358992
        %v1652 = vadd.f32 %v1651, 0.041655596
        %v1653 = vmul.f32 %v1650, %v1652
        %v1654 = vadd.f32 %v1653, -0.4999988
        %v1655 = vmul.f32 %v1650, %v1654
        %v1656 = vadd.f32 1.0, %v1655
        %v1657 = vmul.f32 %v1648, %v1648
        %v1658 = vmul.f32 %v1657, -0.00019511016
        %v1659 = vadd.f32 %v1658, 0.008332121
        %v1660 = vmul.f32 %v1657, %v1659
        %v1661 = vadd.f32 %v1660, -0.16666654
        %v1662 = vmul.f32 %v1657, %v1661
        %v1663 = vadd.f32 %v1662, 1.0
        %v1664 = vmul.f32 %v1663, %v1648
        %vm1665 = vweird.f32 %v428
        %v1666 = vadd.s32 %v1649, 3
        %v1667 = vand.u32 %v1666, 3
        %vm1668 = vcmp.lt.s32.totalorder %v1667, 2
        %vm1669 = vcmp.eq.s32.totalorder %v1667, 0
        %v1670 = vxor.u32 %v1664, 2147483648
        %v1671 = vsel %vm1669, %v1656, %v1670
        %vm1672 = vcmp.eq.s32.totalorder %v1667, 2
        %v1673 = vxor.u32 %v1656, 2147483648
        %v1674 = vsel %vm1672, %v1673, %v1664
        %v1675 = vsel %vm1668, %v1671, %v1674
        %v1676 = vsel %vm1665, nan, %v1675
        %v1677 = vand.u32 2147483647, %v429
        %vm1678 = vcmp.le.f32.partialorder %v1677, 0.7853982
        %vm1679 = vcmp.lt.s32.totalorder %v429, 0
        %v1680 = vand.u32 %v429, 2139095040
        %v1681 = vshrl.u32 %v1680, 23
        %v1682 = vsub.s32 %v1681, 127
        %v1683 = vand.u32 2147483647, %v429
        %v1684 = vand.u32 %v1683, 8388607
        %v1685 = vor.u32 %v1684, 8388608
        %v1686 = vsub.s32 0, %v1685
        %v1687 = vadd.s32 %v1682, 1
        %vm1688 = vcmp.gt.s32.totalorder %v1687, 0
        %v1689 = vsel %vm1688, %v1687, 0
        %v1690 = vshrl.u32 %v1689, 5
        %v1691 = vand.u32 %v1689, 31
        %v1692 = vsub.s32 32, %v1691
        %v1693 = vshrl.u32 683565275, %v1692
        %v1694 = vshll.u32 683565275, %v1691
        %v1695 = vshrl.u32 2475754826, %v1692
        %v1696 = vor.u32 %v1694, %v1695
        %v1697 = vshll.u32 2475754826, %v1691
        %v1698 = vshrl.u32 2131351028, %v1692
        %v1699 = vor.u32 %v1697, %v1698
        %v1700 = vshll.u32 2131351028, %v1691
        %v1701 = vshrl.u32 2102212464, %v1692
        %v1702 = vor.u32 %v1700, %v1701
        %v1703 = vshll.u32 2102212464, %v1691
        %v1704 = vshrl.u32 920167782, %v1692
        %v1705 = vor.u32 %v1703, %v1704
        %v1706 = vshll.u32 920167782, %v1691
        %v1707 = vshrl.u32 1326507024, %v1692
        %v1708 = vor.u32 %v1706, %v1707
        %vm1709 = vcmp.lt.s32.totalorder %v1690, 1
        %vm1710 = vcmp.lt.s32.totalorder %v1690, 2
        %vm1711 = vcmp.lt.s32.totalorder %v1690, 3
        %vm1712 = vcmp.lt.s32.totalorder %v1690, 4
        %v1713 = vsel %vm1709, %v1693, %v1696
        %v1714 = vsel %vm1712, %v1702, 2102212464
        %v1715 = vsel %vm1711, %v1699, %v1714
        %v1716 = vsel %vm1710, %v1713, %v1715
        %v1717 = vsel %vm1709, %v1696, %v1699
        %v1718 = vsel %vm1712, %v1705, 920167782
        %v1719 = vsel %vm1711, %v1702, %v1718
        %v1720 = vsel %vm1710, %v1717, %v1719
        %v1721 = vsel %vm1709, %v1699, %v1702
        %v1722 = vsel %vm1712, %v1708, 1326507024
        %v1723 = vsel %vm1711, %v1705, %v1722
        %v1724 = vsel %vm1710, %v1721, %v1723
        %v1725 = vshll.u32 %v1685, 8
        %v1726 = vand.u32 %v1725, 65535
        %v1727 = vshrl.u32 %v1725, 16
        %v1728 = vand.u32 %v1724, 65535
        %v1729 = vshrl.u32 %v1724, 16
        %v1730 = vmul.u32 %v1726, %v1728
        %v1731 = vmul.u32 %v1726, %v1729
        %v1732 = vmul.u32 %v1727, %v1728
        %v1733 = vmul.u32 %v1727, %v1729
        %v1734 = vshll.u32 %v1731, 16
        %v1735 = vshrl.u32 %v1731, 16
        %v1736 = vshll.u32 %v1732, 16
        %v1737 = vshrl.u32 %v1732, 16
        %vm1738 = vc.u32 %v1730, %v1734
        %v1739 = vsel %vm1738, 1, 0
        %v1740 = vadd.s32 %v1730, %v1734
        %v1741 = vadd.s32 %v1733, %v1739
        %vm1742 = vc.u32 %v1740, %v1736
        %v1743 = vsel %vm1742, 1, 0
        %v1744 = vadd.s32 %v1740, %v1736
        %v1745 = vadd.s32 %v1741, %v1743
        %v1746 = vadd.s32 %v1745, %v1735
        %v1747 = vadd.s32 %v1746, %v1737
        %v1748 = vand.u32 %v1725, 65535
        %v1749 = vshrl.u32 %v1725, 16
        %v1750 = vand.u32 %v1720, 65535
        %v1751 = vshrl.u32 %v1720, 16
        %v1752 = vmul.u32 %v1748, %v1750
        %v1753 = vmul.u32 %v1748, %v1751
        %v1754 = vmul.u32 %v1749, %v1750
        %v1755 = vmul.u32 %v1749, %v1751
        %v1756 = vshll.u32 %v1753, 16
        %v1757 = vshrl.u32 %v1753, 16
        %v1758 = vshll.u32 %v1754, 16
        %v1759 = vshrl.u32 %v1754, 16
        %vm1760 = vc.u32 %v1752, %v1756
        %v1761 = vsel %vm1760, 1, 0
        %v1762 = vadd.s32 %v1752, %v1756
        %v1763 = vadd.s32 %v1755, %v1761
        %vm1764 = vc.u32 %v1762, %v1758
        %v1765 = vsel %vm1764, 1, 0
        %v1766 = vadd.s32 %v1762, %v1758
        %v1767 = vadd.s32 %v1763, %v1765
        %v1768 = vadd.s32 %v1767, %v1757
        %v1769 = vadd.s32 %v1768, %v1759
        %v1770 = vmul.u32 %v1725, %v1716
        %v1771 = vadd.s32 %v1747, %v1766
        %vm1772 = vc.u32 %v1747, %v1766
        %v1773 = vadd.s32 %v1769, 1
        %v1774 = vsel %vm1772, %v1773, %v1769
        %v1775 = vadd.s32 %v1770, %v1774
        %v1776 = vadd.s32 %v1775, 536870912
        %v1777 = vshrl.u32 %v1776, 30
        %v1778 = vshll.u32 %v1777, 30
        %v1779 = vsub.s32 %v1775, %v1778
        %vm1780 = vcmp.lt.s32.totalorder %v1779, 0
        %v1781 = vsub.s32 0, %v1779
        %v1782 = vsel %vm1780, %v1781, %v1779
        %v1783 = vclz %v1782
        %v1784 = vsub.s32 %v1783, 2
        %vm1785 = vcmp.gt.s32.totalorder 0, %v1784
        %v1786 = vsel %vm1785, 0, %v1784
        %v1787 = vsub.s32 32, %v1786
        %v1788 = vshll.u32 %v1779, %v1786
        %v1789 = vshrl.u32 %v1771, %v1787
        %v1790 = vor.u32 %v1788, %v1789
        %v1791 = vsub.s32 4294967266, %v1786
        %v1792 = vadd.s32 %v1791, 127
        %v1793 = vshll.u32 %v1792, 23
        %v1794 = vor.u32 4788187, %v1793
        %v1795 = vand.u32 2147483647, %v1794
        %v1797 = vcvt.s32.f32 %v1790
        %v1798 = vmul.f32 %v1797, %v1795
        %v1799 = vxor.u32 %v1798, 2147483648
        %v1800 = vsel %vm1679, %v1799, %v1798
        %v1801 = vsub.s32 4, %v1777
        %v1802 = vsel %vm1679, %v1801, %v1777
        %v1803 = vsel %vm1678, %v429, %v1800
        %v1804 = vsel %vm1678, 0, %v1802
        %v1805 = vmul.f32 %v1803, %v1803
        %v1806 = vmul.f32 %v1805, -0.001358992
        %v1807 = vadd.f32 %v1806, 0.041655596
        %v1808 = vmul.f32 %v1805, %v1807
        %v1809 = vadd.f32 %v1808, -0.4999988
        %v1810 = vmul.f32 %v1805, %v1809
        %v1811 = vadd.f32 1.0, %v1810
        %v1812 = vmul.f32 %v1803, %v1803
        %v1813 = vmul.f32 %v1812, -0.00019511016
        %v1814 = vadd.f32 %v1813, 0.008332121
        %v1815 = vmul.f32 %v1812, %v1814
        %v1816 = vadd.f32 %v1815, -0.16666654
        %v1817 = vmul.f32 %v1812, %v1816
        %v1818 = vadd.f32 %v1817, 1.0
        %v1819 = vmul.f32 %v1818, %v1803
        %vm1820 = vweird.f32 %v429
        %v1821 = vadd.s32 %v1804, 3
        %v1822 = vand.u32 %v1821, 3
        %vm1823 = vcmp.lt.s32.totalorder %v1822, 2
        %vm1824 = vcmp.eq.s32.totalorder %v1822, 0
        %v1825 = vxor.u32 %v1819, 2147483648
        %v1826 = vsel %vm1824, %v1811, %v1825
        %vm1827 = vcmp.eq.s32.totalorder %v1822, 2
        %v1828 = vxor.u32 %v1811, 2147483648
        %v1829 = vsel %vm1827, %v1828, %v1819
        %v1830 = vsel %vm1823, %v1826, %v1829
        %v1831 = vsel %vm1820, nan, %v1830
        %v1832 = vand.u32 2147483647, %v430
        %vm1833 = vcmp.le.f32.partialorder %v1832, 0.7853982
        %vm1834 = vcmp.lt.s32.totalorder %v430, 0
        %v1835 = vand.u32 %v430, 2139095040
        %v1836 = vshrl.u32 %v1835, 23
        %v1837 = vsub.s32 %v1836, 127
        %v1838 = vand.u32 2147483647, %v430
        %v1839 = vand.u32 %v1838, 8388607
        %v1840 = vor.u32 %v1839, 8388608
        %v1841 = vsub.s32 0, %v1840
        %v1842 = vadd.s32 %v1837, 1
        %vm1843 = vcmp.gt.s32.totalorder %v1842, 0
        %v1844 = vsel %vm1843, %v1842, 0
        %v1845 = vshrl.u32 %v1844, 5
        %v1846 = vand.u32 %v1844, 31
        %v1847 = vsub.s32 32, %v1846
        %v1848 = vshrl.u32 683565275, %v1847
        %v1849 = vshll.u32 683565275, %v1846
        %v1850 = vshrl.u32 2475754826, %v1847
        %v1851 = vor.u32 %v1849, %v1850
        %v1852 = vshll.u32 2475754826, %v1846
        %v1853 = vshrl.u32 2131351028, %v1847
        %v1854 = vor.u32 %v1852, %v1853
        %v1855 = vshll.u32 2131351028, %v1846
        %v1856 = vshrl.u32 2102212464, %v1847
        %v1857 = vor.u32 %v1855, %v1856
        %v1858 = vshll.u32 2102212464, %v1846
        %v1859 = vshrl.u32 920167782, %v1847
        %v1860 = vor.u32 %v1858, %v1859
        %v1861 = vshll.u32 920167782, %v1846
        %v1862 = vshrl.u32 1326507024, %v1847
        %v1863 = vor.u32 %v1861, %v1862
        %vm1864 = vcmp.lt.s32.totalorder %v1845, 1
        %vm1865 = vcmp.lt.s32.totalorder %v1845, 2
        %vm1866 = vcmp.lt.s32.totalorder %v1845, 3
        %vm1867 = vcmp.lt.s32.totalorder %v1845, 4
        %v1868 = vsel %vm1864, %v1848, %v1851
        %v1869 = vsel %vm1867, %v1857, 2102212464
        %v1870 = vsel %vm1866, %v1854, %v1869
        %v1871 = vsel %vm1865, %v1868, %v1870
        %v1872 = vsel %vm1864, %v1851, %v1854
        %v1873 = vsel %vm1867, %v1860, 920167782
        %v1874 = vsel %vm1866, %v1857, %v1873
        %v1875 = vsel %vm1865, %v1872, %v1874
        %v1876 = vsel %vm1864, %v1854, %v1857
        %v1877 = vsel %vm1867, %v1863, 1326507024
        %v1878 = vsel %vm1866, %v1860, %v1877
        %v1879 = vsel %vm1865, %v1876, %v1878
        %v1880 = vshll.u32 %v1840, 8
        %v1881 = vand.u32 %v1880, 65535
        %v1882 = vshrl.u32 %v1880, 16
        %v1883 = vand.u32 %v1879, 65535
        %v1884 = vshrl.u32 %v1879, 16
        %v1885 = vmul.u32 %v1881, %v1883
        %v1886 = vmul.u32 %v1881, %v1884
        %v1887 = vmul.u32 %v1882, %v1883
        %v1888 = vmul.u32 %v1882, %v1884
        %v1889 = vshll.u32 %v1886, 16
        %v1890 = vshrl.u32 %v1886, 16
        %v1891 = vshll.u32 %v1887, 16
        %v1892 = vshrl.u32 %v1887, 16
        %vm1893 = vc.u32 %v1885, %v1889
        %v1894 = vsel %vm1893, 1, 0
        %v1895 = vadd.s32 %v1885, %v1889
        %v1896 = vadd.s32 %v1888, %v1894
        %vm1897 = vc.u32 %v1895, %v1891
        %v1898 = vsel %vm1897, 1, 0
        %v1899 = vadd.s32 %v1895, %v1891
        %v1900 = vadd.s32 %v1896, %v1898
        %v1901 = vadd.s32 %v1900, %v1890
        %v1902 = vadd.s32 %v1901, %v1892
        %v1903 = vand.u32 %v1880, 65535
        %v1904 = vshrl.u32 %v1880, 16
        %v1905 = vand.u32 %v1875, 65535
        %v1906 = vshrl.u32 %v1875, 16
        %v1907 = vmul.u32 %v1903, %v1905
        %v1908 = vmul.u32 %v1903, %v1906
        %v1909 = vmul.u32 %v1904, %v1905
        %v1910 = vmul.u32 %v1904, %v1906
        %v1911 = vshll.u32 %v1908, 16
        %v1912 = vshrl.u32 %v1908, 16
        %v1913 = vshll.u32 %v1909, 16
        %v1914 = vshrl.u32 %v1909, 16
        %vm1915 = vc.u32 %v1907, %v1911
        %v1916 = vsel %vm1915, 1, 0
        %v1917 = vadd.s32 %v1907, %v1911
        %v1918 = vadd.s32 %v1910, %v1916
        %vm1919 = vc.u32 %v1917, %v1913
        %v1920 = vsel %vm1919, 1, 0
        %v1921 = vadd.s32 %v1917, %v1913
        %v1922 = vadd.s32 %v1918, %v1920
        %v1923 = vadd.s32 %v1922, %v1912
        %v1924 = vadd.s32 %v1923, %v1914
        %v1925 = vmul.u32 %v1880, %v1871
        %v1926 = vadd.s32 %v1902, %v1921
        %vm1927 = vc.u32 %v1902, %v1921
        %v1928 = vadd.s32 %v1924, 1
        %v1929 = vsel %vm1927, %v1928, %v1924
        %v1930 = vadd.s32 %v1925, %v1929
        %v1931 = vadd.s32 %v1930, 536870912
        %v1932 = vshrl.u32 %v1931, 30
        %v1933 = vshll.u32 %v1932, 30
        %v1934 = vsub.s32 %v1930, %v1933
        %vm1935 = vcmp.lt.s32.totalorder %v1934, 0
        %v1936 = vsub.s32 0, %v1934
        %v1937 = vsel %vm1935, %v1936, %v1934
        %v1938 = vclz %v1937
        %v1939 = vsub.s32 %v1938, 2
        %vm1940 = vcmp.gt.s32.totalorder 0, %v1939
        %v1941 = vsel %vm1940, 0, %v1939
        %v1942 = vsub.s32 32, %v1941
        %v1943 = vshll.u32 %v1934, %v1941
        %v1944 = vshrl.u32 %v1926, %v1942
        %v1945 = vor.u32 %v1943, %v1944
        %v1946 = vsub.s32 4294967266, %v1941
        %v1947 = vadd.s32 %v1946, 127
        %v1948 = vshll.u32 %v1947, 23
        %v1949 = vor.u32 4788187, %v1948
        %v1950 = vand.u32 2147483647, %v1949
        %v1952 = vcvt.s32.f32 %v1945
        %v1953 = vmul.f32 %v1952, %v1950
        %v1954 = vxor.u32 %v1953, 2147483648
        %v1955 = vsel %vm1834, %v1954, %v1953
        %v1956 = vsub.s32 4, %v1932
        %v1957 = vsel %vm1834, %v1956, %v1932
        %v1958 = vsel %vm1833, %v430, %v1955
        %v1959 = vsel %vm1833, 0, %v1957
        %v1960 = vmul.f32 %v1958, %v1958
        %v1961 = vmul.f32 %v1960, -0.001358992
        %v1962 = vadd.f32 %v1961, 0.041655596
        %v1963 = vmul.f32 %v1960, %v1962
        %v1964 = vadd.f32 %v1963, -0.4999988
        %v1965 = vmul.f32 %v1960, %v1964
        %v1966 = vadd.f32 1.0, %v1965
        %v1967 = vmul.f32 %v1958, %v1958
        %v1968 = vmul.f32 %v1967, -0.00019511016
        %v1969 = vadd.f32 %v1968, 0.008332121
        %v1970 = vmul.f32 %v1967, %v1969
        %v1971 = vadd.f32 %v1970, -0.16666654
        %v1972 = vmul.f32 %v1967, %v1971
        %v1973 = vadd.f32 %v1972, 1.0
        %v1974 = vmul.f32 %v1973, %v1958
        %vm1975 = vweird.f32 %v430
        %v1976 = vadd.s32 %v1959, 3
        %v1977 = vand.u32 %v1976, 3
        %vm1978 = vcmp.lt.s32.totalorder %v1977, 2
        %vm1979 = vcmp.eq.s32.totalorder %v1977, 0
        %v1980 = vxor.u32 %v1974, 2147483648
        %v1981 = vsel %vm1979, %v1966, %v1980
        %vm1982 = vcmp.eq.s32.totalorder %v1977, 2
        %v1983 = vxor.u32 %v1966, 2147483648
        %v1984 = vsel %vm1982, %v1983, %v1974
        %v1985 = vsel %vm1978, %v1981, %v1984
        %v1986 = vsel %vm1975, nan, %v1985
        %v1987 = vand.u32 2147483647, %v431
        %vm1988 = vcmp.le.f32.partialorder %v1987, 0.7853982
        %vm1989 = vcmp.lt.s32.totalorder %v431, 0
        %v1990 = vand.u32 %v431, 2139095040
        %v1991 = vshrl.u32 %v1990, 23
        %v1992 = vsub.s32 %v1991, 127
        %v1993 = vand.u32 2147483647, %v431
        %v1994 = vand.u32 %v1993, 8388607
        %v1995 = vor.u32 %v1994, 8388608
        %v1996 = vsub.s32 0, %v1995
        %v1997 = vadd.s32 %v1992, 1
        %vm1998 = vcmp.gt.s32.totalorder %v1997, 0
        %v1999 = vsel %vm1998, %v1997, 0
        %v2000 = vshrl.u32 %v1999, 5
        %v2001 = vand.u32 %v1999, 31
        %v2002 = vsub.s32 32, %v2001
        %v2003 = vshrl.u32 683565275, %v2002
        %v2004 = vshll.u32 683565275, %v2001
        %v2005 = vshrl.u32 2475754826, %v2002
        %v2006 = vor.u32 %v2004, %v2005
        %v2007 = vshll.u32 2475754826, %v2001
        %v2008 = vshrl.u32 2131351028, %v2002
        %v2009 = vor.u32 %v2007, %v2008
        %v2010 = vshll.u32 2131351028, %v2001
        %v2011 = vshrl.u32 2102212464, %v2002
        %v2012 = vor.u32 %v2010, %v2011
        %v2013 = vshll.u32 2102212464, %v2001
        %v2014 = vshrl.u32 920167782, %v2002
        %v2015 = vor.u32 %v2013, %v2014
        %v2016 = vshll.u32 920167782, %v2001
        %v2017 = vshrl.u32 1326507024, %v2002
        %v2018 = vor.u32 %v2016, %v2017
        %vm2019 = vcmp.lt.s32.totalorder %v2000, 1
        %vm2020 = vcmp.lt.s32.totalorder %v2000, 2
        %vm2021 = vcmp.lt.s32.totalorder %v2000, 3
        %vm2022 = vcmp.lt.s32.totalorder %v2000, 4
        %v2023 = vsel %vm2019, %v2003, %v2006
        %v2024 = vsel %vm2022, %v2012, 2102212464
        %v2025 = vsel %vm2021, %v2009, %v2024
        %v2026 = vsel %vm2020, %v2023, %v2025
        %v2027 = vsel %vm2019, %v2006, %v2009
        %v2028 = vsel %vm2022, %v2015, 920167782
        %v2029 = vsel %vm2021, %v2012, %v2028
        %v2030 = vsel %vm2020, %v2027, %v2029
        %v2031 = vsel %vm2019, %v2009, %v2012
        %v2032 = vsel %vm2022, %v2018, 1326507024
        %v2033 = vsel %vm2021, %v2015, %v2032
        %v2034 = vsel %vm2020, %v2031, %v2033
        %v2035 = vshll.u32 %v1995, 8
        %v2036 = vand.u32 %v2035, 65535
        %v2037 = vshrl.u32 %v2035, 16
        %v2038 = vand.u32 %v2034, 65535
        %v2039 = vshrl.u32 %v2034, 16
        %v2040 = vmul.u32 %v2036, %v2038
        %v2041 = vmul.u32 %v2036, %v2039
        %v2042 = vmul.u32 %v2037, %v2038
        %v2043 = vmul.u32 %v2037, %v2039
        %v2044 = vshll.u32 %v2041, 16
        %v2045 = vshrl.u32 %v2041, 16
        %v2046 = vshll.u32 %v2042, 16
        %v2047 = vshrl.u32 %v2042, 16
        %vm2048 = vc.u32 %v2040, %v2044
        %v2049 = vsel %vm2048, 1, 0
        %v2050 = vadd.s32 %v2040, %v2044
        %v2051 = vadd.s32 %v2043, %v2049
        %vm2052 = vc.u32 %v2050, %v2046
        %v2053 = vsel %vm2052, 1, 0
        %v2054 = vadd.s32 %v2050, %v2046
        %v2055 = vadd.s32 %v2051, %v2053
        %v2056 = vadd.s32 %v2055, %v2045
        %v2057 = vadd.s32 %v2056, %v2047
        %v2058 = vand.u32 %v2035, 65535
        %v2059 = vshrl.u32 %v2035, 16
        %v2060 = vand.u32 %v2030, 65535
        %v2061 = vshrl.u32 %v2030, 16
        %v2062 = vmul.u32 %v2058, %v2060
        %v2063 = vmul.u32 %v2058, %v2061
        %v2064 = vmul.u32 %v2059, %v2060
        %v2065 = vmul.u32 %v2059, %v2061
        %v2066 = vshll.u32 %v2063, 16
        %v2067 = vshrl.u32 %v2063, 16
        %v2068 = vshll.u32 %v2064, 16
        %v2069 = vshrl.u32 %v2064, 16
        %vm2070 = vc.u32 %v2062, %v2066
        %v2071 = vsel %vm2070, 1, 0
        %v2072 = vadd.s32 %v2062, %v2066
        %v2073 = vadd.s32 %v2065, %v2071
        %vm2074 = vc.u32 %v2072, %v2068
        %v2075 = vsel %vm2074, 1, 0
        %v2076 = vadd.s32 %v2072, %v2068
        %v2077 = vadd.s32 %v2073, %v2075
        %v2078 = vadd.s32 %v2077, %v2067
        %v2079 = vadd.s32 %v2078, %v2069
        %v2080 = vmul.u32 %v2035, %v2026
        %v2081 = vadd.s32 %v2057, %v2076
        %vm2082 = vc.u32 %v2057, %v2076
        %v2083 = vadd.s32 %v2079, 1
        %v2084 = vsel %vm2082, %v2083, %v2079
        %v2085 = vadd.s32 %v2080, %v2084
        %v2086 = vadd.s32 %v2085, 536870912
        %v2087 = vshrl.u32 %v2086, 30
        %v2088 = vshll.u32 %v2087, 30
        %v2089 = vsub.s32 %v2085, %v2088
        %vm2090 = vcmp.lt.s32.totalorder %v2089, 0
        %v2091 = vsub.s32 0, %v2089
        %v2092 = vsel %vm2090, %v2091, %v2089
        %v2093 = vclz %v2092
        %v2094 = vsub.s32 %v2093, 2
        %vm2095 = vcmp.gt.s32.totalorder 0, %v2094
        %v2096 = vsel %vm2095, 0, %v2094
        %v2097 = vsub.s32 32, %v2096
        %v2098 = vshll.u32 %v2089, %v2096
        %v2099 = vshrl.u32 %v2081, %v2097
        %v2100 = vor.u32 %v2098, %v2099
        %v2101 = vsub.s32 4294967266, %v2096
        %v2102 = vadd.s32 %v2101, 127
        %v2103 = vshll.u32 %v2102, 23
        %v2104 = vor.u32 4788187, %v2103
        %v2105 = vand.u32 2147483647, %v2104
        %v2107 = vcvt.s32.f32 %v2100
        %v2108 = vmul.f32 %v2107, %v2105
        %v2109 = vxor.u32 %v2108, 2147483648
        %v2110 = vsel %vm1989, %v2109, %v2108
        %v2111 = vsub.s32 4, %v2087
        %v2112 = vsel %vm1989, %v2111, %v2087
        %v2113 = vsel %vm1988, %v431, %v2110
        %v2114 = vsel %vm1988, 0, %v2112
        %v2115 = vmul.f32 %v2113, %v2113
        %v2116 = vmul.f32 %v2115, -0.001358992
        %v2117 = vadd.f32 %v2116, 0.041655596
        %v2118 = vmul.f32 %v2115, %v2117
        %v2119 = vadd.f32 %v2118, -0.4999988
        %v2120 = vmul.f32 %v2115, %v2119
        %v2121 = vadd.f32 1.0, %v2120
        %v2122 = vmul.f32 %v2113, %v2113
        %v2123 = vmul.f32 %v2122, -0.00019511016
        %v2124 = vadd.f32 %v2123, 0.008332121
        %v2125 = vmul.f32 %v2122, %v2124
        %v2126 = vadd.f32 %v2125, -0.16666654
        %v2127 = vmul.f32 %v2122, %v2126
        %v2128 = vadd.f32 %v2127, 1.0
        %v2129 = vmul.f32 %v2128, %v2113
        %vm2130 = vweird.f32 %v431
        %v2131 = vadd.s32 %v2114, 3
        %v2132 = vand.u32 %v2131, 3
        %vm2133 = vcmp.lt.s32.totalorder %v2132, 2
        %vm2134 = vcmp.eq.s32.totalorder %v2132, 0
        %v2135 = vxor.u32 %v2129, 2147483648
        %v2136 = vsel %vm2134, %v2121, %v2135
        %vm2137 = vcmp.eq.s32.totalorder %v2132, 2
        %v2138 = vxor.u32 %v2121, 2147483648
        %v2139 = vsel %vm2137, %v2138, %v2129
        %v2140 = vsel %vm2133, %v2136, %v2139
        %v2141 = vsel %vm2130, nan, %v2140
        %v2142 = vand.u32 2147483647, %v432
        %vm2143 = vcmp.le.f32.partialorder %v2142, 0.7853982
        %vm2144 = vcmp.lt.s32.totalorder %v432, 0
        %v2145 = vand.u32 %v432, 2139095040
        %v2146 = vshrl.u32 %v2145, 23
        %v2147 = vsub.s32 %v2146, 127
        %v2148 = vand.u32 2147483647, %v432
        %v2149 = vand.u32 %v2148, 8388607
        %v2150 = vor.u32 %v2149, 8388608
        %v2151 = vsub.s32 0, %v2150
        %v2152 = vadd.s32 %v2147, 1
        %vm2153 = vcmp.gt.s32.totalorder %v2152, 0
        %v2154 = vsel %vm2153, %v2152, 0
        %v2155 = vshrl.u32 %v2154, 5
        %v2156 = vand.u32 %v2154, 31
        %v2157 = vsub.s32 32, %v2156
        %v2158 = vshrl.u32 683565275, %v2157
        %v2159 = vshll.u32 683565275, %v2156
        %v2160 = vshrl.u32 2475754826, %v2157
        %v2161 = vor.u32 %v2159, %v2160
        %v2162 = vshll.u32 2475754826, %v2156
        %v2163 = vshrl.u32 2131351028, %v2157
        %v2164 = vor.u32 %v2162, %v2163
        %v2165 = vshll.u32 2131351028, %v2156
        %v2166 = vshrl.u32 2102212464, %v2157
        %v2167 = vor.u32 %v2165, %v2166
        %v2168 = vshll.u32 2102212464, %v2156
        %v2169 = vshrl.u32 920167782, %v2157
        %v2170 = vor.u32 %v2168, %v2169
        %v2171 = vshll.u32 920167782, %v2156
        %v2172 = vshrl.u32 1326507024, %v2157
        %v2173 = vor.u32 %v2171, %v2172
        %vm2174 = vcmp.lt.s32.totalorder %v2155, 1
        %vm2175 = vcmp.lt.s32.totalorder %v2155, 2
        %vm2176 = vcmp.lt.s32.totalorder %v2155, 3
        %vm2177 = vcmp.lt.s32.totalorder %v2155, 4
        %v2178 = vsel %vm2174, %v2158, %v2161
        %v2179 = vsel %vm2177, %v2167, 2102212464
        %v2180 = vsel %vm2176, %v2164, %v2179
        %v2181 = vsel %vm2175, %v2178, %v2180
        %v2182 = vsel %vm2174, %v2161, %v2164
        %v2183 = vsel %vm2177, %v2170, 920167782
        %v2184 = vsel %vm2176, %v2167, %v2183
        %v2185 = vsel %vm2175, %v2182, %v2184
        %v2186 = vsel %vm2174, %v2164, %v2167
        %v2187 = vsel %vm2177, %v2173, 1326507024
        %v2188 = vsel %vm2176, %v2170, %v2187
        %v2189 = vsel %vm2175, %v2186, %v2188
        %v2190 = vshll.u32 %v2150, 8
        %v2191 = vand.u32 %v2190, 65535
        %v2192 = vshrl.u32 %v2190, 16
        %v2193 = vand.u32 %v2189, 65535
        %v2194 = vshrl.u32 %v2189, 16
        %v2195 = vmul.u32 %v2191, %v2193
        %v2196 = vmul.u32 %v2191, %v2194
        %v2197 = vmul.u32 %v2192, %v2193
        %v2198 = vmul.u32 %v2192, %v2194
        %v2199 = vshll.u32 %v2196, 16
        %v2200 = vshrl.u32 %v2196, 16
        %v2201 = vshll.u32 %v2197, 16
        %v2202 = vshrl.u32 %v2197, 16
        %vm2203 = vc.u32 %v2195, %v2199
        %v2204 = vsel %vm2203, 1, 0
        %v2205 = vadd.s32 %v2195, %v2199
        %v2206 = vadd.s32 %v2198, %v2204
        %vm2207 = vc.u32 %v2205, %v2201
        %v2208 = vsel %vm2207, 1, 0
        %v2209 = vadd.s32 %v2205, %v2201
        %v2210 = vadd.s32 %v2206, %v2208
        %v2211 = vadd.s32 %v2210, %v2200
        %v2212 = vadd.s32 %v2211, %v2202
        %v2213 = vand.u32 %v2190, 65535
        %v2214 = vshrl.u32 %v2190, 16
        %v2215 = vand.u32 %v2185, 65535
        %v2216 = vshrl.u32 %v2185, 16
        %v2217 = vmul.u32 %v2213, %v2215
        %v2218 = vmul.u32 %v2213, %v2216
        %v2219 = vmul.u32 %v2214, %v2215
        %v2220 = vmul.u32 %v2214, %v2216
        %v2221 = vshll.u32 %v2218, 16
        %v2222 = vshrl.u32 %v2218, 16
        %v2223 = vshll.u32 %v2219, 16
        %v2224 = vshrl.u32 %v2219, 16
        %vm2225 = vc.u32 %v2217, %v2221
        %v2226 = vsel %vm2225, 1, 0
        %v2227 = vadd.s32 %v2217, %v2221
        %v2228 = vadd.s32 %v2220, %v2226
        %vm2229 = vc.u32 %v2227, %v2223
        %v2230 = vsel %vm2229, 1, 0
        %v2231 = vadd.s32 %v2227, %v2223
        %v2232 = vadd.s32 %v2228, %v2230
        %v2233 = vadd.s32 %v2232, %v2222
        %v2234 = vadd.s32 %v2233, %v2224
        %v2235 = vmul.u32 %v2190, %v2181
        %v2236 = vadd.s32 %v2212, %v2231
        %vm2237 = vc.u32 %v2212, %v2231
        %v2238 = vadd.s32 %v2234, 1
        %v2239 = vsel %vm2237, %v2238, %v2234
        %v2240 = vadd.s32 %v2235, %v2239
        %v2241 = vadd.s32 %v2240, 536870912
        %v2242 = vshrl.u32 %v2241, 30
        %v2243 = vshll.u32 %v2242, 30
        %v2244 = vsub.s32 %v2240, %v2243
        %vm2245 = vcmp.lt.s32.totalorder %v2244, 0
        %v2246 = vsub.s32 0, %v2244
        %v2247 = vsel %vm2245, %v2246, %v2244
        %v2248 = vclz %v2247
        %v2249 = vsub.s32 %v2248, 2
        %vm2250 = vcmp.gt.s32.totalorder 0, %v2249
        %v2251 = vsel %vm2250, 0, %v2249
        %v2252 = vsub.s32 32, %v2251
        %v2253 = vshll.u32 %v2244, %v2251
        %v2254 = vshrl.u32 %v2236, %v2252
        %v2255 = vor.u32 %v2253, %v2254
        %v2256 = vsub.s32 4294967266, %v2251
        %v2257 = vadd.s32 %v2256, 127
        %v2258 = vshll.u32 %v2257, 23
        %v2259 = vor.u32 4788187, %v2258
        %v2260 = vand.u32 2147483647, %v2259
        %v2262 = vcvt.s32.f32 %v2255
        %v2263 = vmul.f32 %v2262, %v2260
        %v2264 = vxor.u32 %v2263, 2147483648
        %v2265 = vsel %vm2144, %v2264, %v2263
        %v2266 = vsub.s32 4, %v2242
        %v2267 = vsel %vm2144, %v2266, %v2242
        %v2268 = vsel %vm2143, %v432, %v2265
        %v2269 = vsel %vm2143, 0, %v2267
        %v2270 = vmul.f32 %v2268, %v2268
        %v2271 = vmul.f32 %v2270, -0.001358992
        %v2272 = vadd.f32 %v2271, 0.041655596
        %v2273 = vmul.f32 %v2270, %v2272
        %v2274 = vadd.f32 %v2273, -0.4999988
        %v2275 = vmul.f32 %v2270, %v2274
        %v2276 = vadd.f32 1.0, %v2275
        %v2277 = vmul.f32 %v2268, %v2268
        %v2278 = vmul.f32 %v2277, -0.00019511016
        %v2279 = vadd.f32 %v2278, 0.008332121
        %v2280 = vmul.f32 %v2277, %v2279
        %v2281 = vadd.f32 %v2280, -0.16666654
        %v2282 = vmul.f32 %v2277, %v2281
        %v2283 = vadd.f32 %v2282, 1.0
        %v2284 = vmul.f32 %v2283, %v2268
        %vm2285 = vweird.f32 %v432
        %v2286 = vadd.s32 %v2269, 3
        %v2287 = vand.u32 %v2286, 3
        %vm2288 = vcmp.lt.s32.totalorder %v2287, 2
        %vm2289 = vcmp.eq.s32.totalorder %v2287, 0
        %v2290 = vxor.u32 %v2284, 2147483648
        %v2291 = vsel %vm2289, %v2276, %v2290
        %vm2292 = vcmp.eq.s32.totalorder %v2287, 2
        %v2293 = vxor.u32 %v2276, 2147483648
        %v2294 = vsel %vm2292, %v2293, %v2284
        %v2295 = vsel %vm2288, %v2291, %v2294
        %v2296 = vsel %vm2285, nan, %v2295
        %v2297 = vand.u32 2147483647, %v433
        %vm2298 = vcmp.le.f32.partialorder %v2297, 0.7853982
        %vm2299 = vcmp.lt.s32.totalorder %v433, 0
        %v2300 = vand.u32 %v433, 2139095040
        %v2301 = vshrl.u32 %v2300, 23
        %v2302 = vsub.s32 %v2301, 127
        %v2303 = vand.u32 2147483647, %v433
        %v2304 = vand.u32 %v2303, 8388607
        %v2305 = vor.u32 %v2304, 8388608
        %v2306 = vsub.s32 0, %v2305
        %v2307 = vadd.s32 %v2302, 1
        %vm2308 = vcmp.gt.s32.totalorder %v2307, 0
        %v2309 = vsel %vm2308, %v2307, 0
        %v2310 = vshrl.u32 %v2309, 5
        %v2311 = vand.u32 %v2309, 31
        %v2312 = vsub.s32 32, %v2311
        %v2313 = vshrl.u32 683565275, %v2312
        %v2314 = vshll.u32 683565275, %v2311
        %v2315 = vshrl.u32 2475754826, %v2312
        %v2316 = vor.u32 %v2314, %v2315
        %v2317 = vshll.u32 2475754826, %v2311
        %v2318 = vshrl.u32 2131351028, %v2312
        %v2319 = vor.u32 %v2317, %v2318
        %v2320 = vshll.u32 2131351028, %v2311
        %v2321 = vshrl.u32 2102212464, %v2312
        %v2322 = vor.u32 %v2320, %v2321
        %v2323 = vshll.u32 2102212464, %v2311
        %v2324 = vshrl.u32 920167782, %v2312
        %v2325 = vor.u32 %v2323, %v2324
        %v2326 = vshll.u32 920167782, %v2311
        %v2327 = vshrl.u32 1326507024, %v2312
        %v2328 = vor.u32 %v2326, %v2327
        %vm2329 = vcmp.lt.s32.totalorder %v2310, 1
        %vm2330 = vcmp.lt.s32.totalorder %v2310, 2
        %vm2331 = vcmp.lt.s32.totalorder %v2310, 3
        %vm2332 = vcmp.lt.s32.totalorder %v2310, 4
        %v2333 = vsel %vm2329, %v2313, %v2316
        %v2334 = vsel %vm2332, %v2322, 2102212464
        %v2335 = vsel %vm2331, %v2319, %v2334
        %v2336 = vsel %vm2330, %v2333, %v2335
        %v2337 = vsel %vm2329, %v2316, %v2319
        %v2338 = vsel %vm2332, %v2325, 920167782
        %v2339 = vsel %vm2331, %v2322, %v2338
        %v2340 = vsel %vm2330, %v2337, %v2339
        %v2341 = vsel %vm2329, %v2319, %v2322
        %v2342 = vsel %vm2332, %v2328, 1326507024
        %v2343 = vsel %vm2331, %v2325, %v2342
        %v2344 = vsel %vm2330, %v2341, %v2343
        %v2345 = vshll.u32 %v2305, 8
        %v2346 = vand.u32 %v2345, 65535
        %v2347 = vshrl.u32 %v2345, 16
        %v2348 = vand.u32 %v2344, 65535
        %v2349 = vshrl.u32 %v2344, 16
        %v2350 = vmul.u32 %v2346, %v2348
        %v2351 = vmul.u32 %v2346, %v2349
        %v2352 = vmul.u32 %v2347, %v2348
        %v2353 = vmul.u32 %v2347, %v2349
        %v2354 = vshll.u32 %v2351, 16
        %v2355 = vshrl.u32 %v2351, 16
        %v2356 = vshll.u32 %v2352, 16
        %v2357 = vshrl.u32 %v2352, 16
        %vm2358 = vc.u32 %v2350, %v2354
        %v2359 = vsel %vm2358, 1, 0
        %v2360 = vadd.s32 %v2350, %v2354
        %v2361 = vadd.s32 %v2353, %v2359
        %vm2362 = vc.u32 %v2360, %v2356
        %v2363 = vsel %vm2362, 1, 0
        %v2364 = vadd.s32 %v2360, %v2356
        %v2365 = vadd.s32 %v2361, %v2363
        %v2366 = vadd.s32 %v2365, %v2355
        %v2367 = vadd.s32 %v2366, %v2357
        %v2368 = vand.u32 %v2345, 65535
        %v2369 = vshrl.u32 %v2345, 16
        %v2370 = vand.u32 %v2340, 65535
        %v2371 = vshrl.u32 %v2340, 16
        %v2372 = vmul.u32 %v2368, %v2370
        %v2373 = vmul.u32 %v2368, %v2371
        %v2374 = vmul.u32 %v2369, %v2370
        %v2375 = vmul.u32 %v2369, %v2371
        %v2376 = vshll.u32 %v2373, 16
        %v2377 = vshrl.u32 %v2373, 16
        %v2378 = vshll.u32 %v2374, 16
        %v2379 = vshrl.u32 %v2374, 16
        %vm2380 = vc.u32 %v2372, %v2376
        %v2381 = vsel %vm2380, 1, 0
        %v2382 = vadd.s32 %v2372, %v2376
        %v2383 = vadd.s32 %v2375, %v2381
        %vm2384 = vc.u32 %v2382, %v2378
        %v2385 = vsel %vm2384, 1, 0
        %v2386 = vadd.s32 %v2382, %v2378
        %v2387 = vadd.s32 %v2383, %v2385
        %v2388 = vadd.s32 %v2387, %v2377
        %v2389 = vadd.s32 %v2388, %v2379
        %v2390 = vmul.u32 %v2345, %v2336
        %v2391 = vadd.s32 %v2367, %v2386
        %vm2392 = vc.u32 %v2367, %v2386
        %v2393 = vadd.s32 %v2389, 1
        %v2394 = vsel %vm2392, %v2393, %v2389
        %v2395 = vadd.s32 %v2390, %v2394
        %v2396 = vadd.s32 %v2395, 536870912
        %v2397 = vshrl.u32 %v2396, 30
        %v2398 = vshll.u32 %v2397, 30
        %v2399 = vsub.s32 %v2395, %v2398
        %vm2400 = vcmp.lt.s32.totalorder %v2399, 0
        %v2401 = vsub.s32 0, %v2399
        %v2402 = vsel %vm2400, %v2401, %v2399
        %v2403 = vclz %v2402
        %v2404 = vsub.s32 %v2403, 2
        %vm2405 = vcmp.gt.s32.totalorder 0, %v2404
        %v2406 = vsel %vm2405, 0, %v2404
        %v2407 = vsub.s32 32, %v2406
        %v2408 = vshll.u32 %v2399, %v2406
        %v2409 = vshrl.u32 %v2391, %v2407
        %v2410 = vor.u32 %v2408, %v2409
        %v2411 = vsub.s32 4294967266, %v2406
        %v2412 = vadd.s32 %v2411, 127
        %v2413 = vshll.u32 %v2412, 23
        %v2414 = vor.u32 4788187, %v2413
        %v2415 = vand.u32 2147483647, %v2414
        %v2417 = vcvt.s32.f32 %v2410
        %v2418 = vmul.f32 %v2417, %v2415
        %v2419 = vxor.u32 %v2418, 2147483648
        %v2420 = vsel %vm2299, %v2419, %v2418
        %v2421 = vsub.s32 4, %v2397
        %v2422 = vsel %vm2299, %v2421, %v2397
        %v2423 = vsel %vm2298, %v433, %v2420
        %v2424 = vsel %vm2298, 0, %v2422
        %v2425 = vmul.f32 %v2423, %v2423
        %v2426 = vmul.f32 %v2425, -0.001358992
        %v2427 = vadd.f32 %v2426, 0.041655596
        %v2428 = vmul.f32 %v2425, %v2427
        %v2429 = vadd.f32 %v2428, -0.4999988
        %v2430 = vmul.f32 %v2425, %v2429
        %v2431 = vadd.f32 1.0, %v2430
        %v2432 = vmul.f32 %v2423, %v2423
        %v2433 = vmul.f32 %v2432, -0.00019511016
        %v2434 = vadd.f32 %v2433, 0.008332121
        %v2435 = vmul.f32 %v2432, %v2434
        %v2436 = vadd.f32 %v2435, -0.16666654
        %v2437 = vmul.f32 %v2432, %v2436
        %v2438 = vadd.f32 %v2437, 1.0
        %v2439 = vmul.f32 %v2438, %v2423
        %vm2440 = vweird.f32 %v433
        %v2441 = vadd.s32 %v2424, 3
        %v2442 = vand.u32 %v2441, 3
        %vm2443 = vcmp.lt.s32.totalorder %v2442, 2
        %vm2444 = vcmp.eq.s32.totalorder %v2442, 0
        %v2445 = vxor.u32 %v2439, 2147483648
        %v2446 = vsel %vm2444, %v2431, %v2445
        %vm2447 = vcmp.eq.s32.totalorder %v2442, 2
        %v2448 = vxor.u32 %v2431, 2147483648
        %v2449 = vsel %vm2447, %v2448, %v2439
        %v2450 = vsel %vm2443, %v2446, %v2449
        %v2451 = vsel %vm2440, nan, %v2450
        %v2452 = vand.u32 2147483647, %v434
        %vm2453 = vcmp.le.f32.partialorder %v2452, 0.7853982
        %vm2454 = vcmp.lt.s32.totalorder %v434, 0
        %v2455 = vand.u32 %v434, 2139095040
        %v2456 = vshrl.u32 %v2455, 23
        %v2457 = vsub.s32 %v2456, 127
        %v2458 = vand.u32 2147483647, %v434
        %v2459 = vand.u32 %v2458, 8388607
        %v2460 = vor.u32 %v2459, 8388608
        %v2461 = vsub.s32 0, %v2460
        %v2462 = vadd.s32 %v2457, 1
        %vm2463 = vcmp.gt.s32.totalorder %v2462, 0
        %v2464 = vsel %vm2463, %v2462, 0
        %v2465 = vshrl.u32 %v2464, 5
        %v2466 = vand.u32 %v2464, 31
        %v2467 = vsub.s32 32, %v2466
        %v2468 = vshrl.u32 683565275, %v2467
        %v2469 = vshll.u32 683565275, %v2466
        %v2470 = vshrl.u32 2475754826, %v2467
        %v2471 = vor.u32 %v2469, %v2470
        %v2472 = vshll.u32 2475754826, %v2466
        %v2473 = vshrl.u32 2131351028, %v2467
        %v2474 = vor.u32 %v2472, %v2473
        %v2475 = vshll.u32 2131351028, %v2466
        %v2476 = vshrl.u32 2102212464, %v2467
        %v2477 = vor.u32 %v2475, %v2476
        %v2478 = vshll.u32 2102212464, %v2466
        %v2479 = vshrl.u32 920167782, %v2467
        %v2480 = vor.u32 %v2478, %v2479
        %v2481 = vshll.u32 920167782, %v2466
        %v2482 = vshrl.u32 1326507024, %v2467
        %v2483 = vor.u32 %v2481, %v2482
        %vm2484 = vcmp.lt.s32.totalorder %v2465, 1
        %vm2485 = vcmp.lt.s32.totalorder %v2465, 2
        %vm2486 = vcmp.lt.s32.totalorder %v2465, 3
        %vm2487 = vcmp.lt.s32.totalorder %v2465, 4
        %v2488 = vsel %vm2484, %v2468, %v2471
        %v2489 = vsel %vm2487, %v2477, 2102212464
        %v2490 = vsel %vm2486, %v2474, %v2489
        %v2491 = vsel %vm2485, %v2488, %v2490
        %v2492 = vsel %vm2484, %v2471, %v2474
        %v2493 = vsel %vm2487, %v2480, 920167782
        %v2494 = vsel %vm2486, %v2477, %v2493
        %v2495 = vsel %vm2485, %v2492, %v2494
        %v2496 = vsel %vm2484, %v2474, %v2477
        %v2497 = vsel %vm2487, %v2483, 1326507024
        %v2498 = vsel %vm2486, %v2480, %v2497
        %v2499 = vsel %vm2485, %v2496, %v2498
        %v2500 = vshll.u32 %v2460, 8
        %v2501 = vand.u32 %v2500, 65535
        %v2502 = vshrl.u32 %v2500, 16
        %v2503 = vand.u32 %v2499, 65535
        %v2504 = vshrl.u32 %v2499, 16
        %v2505 = vmul.u32 %v2501, %v2503
        %v2506 = vmul.u32 %v2501, %v2504
        %v2507 = vmul.u32 %v2502, %v2503
        %v2508 = vmul.u32 %v2502, %v2504
        %v2509 = vshll.u32 %v2506, 16
        %v2510 = vshrl.u32 %v2506, 16
        %v2511 = vshll.u32 %v2507, 16
        %v2512 = vshrl.u32 %v2507, 16
        %vm2513 = vc.u32 %v2505, %v2509
        %v2514 = vsel %vm2513, 1, 0
        %v2515 = vadd.s32 %v2505, %v2509
        %v2516 = vadd.s32 %v2508, %v2514
        %vm2517 = vc.u32 %v2515, %v2511
        %v2518 = vsel %vm2517, 1, 0
        %v2519 = vadd.s32 %v2515, %v2511
        %v2520 = vadd.s32 %v2516, %v2518
        %v2521 = vadd.s32 %v2520, %v2510
        %v2522 = vadd.s32 %v2521, %v2512
        %v2523 = vand.u32 %v2500, 65535
        %v2524 = vshrl.u32 %v2500, 16
        %v2525 = vand.u32 %v2495, 65535
        %v2526 = vshrl.u32 %v2495, 16
        %v2527 = vmul.u32 %v2523, %v2525
        %v2528 = vmul.u32 %v2523, %v2526
        %v2529 = vmul.u32 %v2524, %v2525
        %v2530 = vmul.u32 %v2524, %v2526
        %v2531 = vshll.u32 %v2528, 16
        %v2532 = vshrl.u32 %v2528, 16
        %v2533 = vshll.u32 %v2529, 16
        %v2534 = vshrl.u32 %v2529, 16
        %vm2535 = vc.u32 %v2527, %v2531
        %v2536 = vsel %vm2535, 1, 0
        %v2537 = vadd.s32 %v2527, %v2531
        %v2538 = vadd.s32 %v2530, %v2536
        %vm2539 = vc.u32 %v2537, %v2533
        %v2540 = vsel %vm2539, 1, 0
        %v2541 = vadd.s32 %v2537, %v2533
        %v2542 = vadd.s32 %v2538, %v2540
        %v2543 = vadd.s32 %v2542, %v2532
        %v2544 = vadd.s32 %v2543, %v2534
        %v2545 = vmul.u32 %v2500, %v2491
        %v2546 = vadd.s32 %v2522, %v2541
        %vm2547 = vc.u32 %v2522, %v2541
        %v2548 = vadd.s32 %v2544, 1
        %v2549 = vsel %vm2547, %v2548, %v2544
        %v2550 = vadd.s32 %v2545, %v2549
        %v2551 = vadd.s32 %v2550, 536870912
        %v2552 = vshrl.u32 %v2551, 30
        %v2553 = vshll.u32 %v2552, 30
        %v2554 = vsub.s32 %v2550, %v2553
        %vm2555 = vcmp.lt.s32.totalorder %v2554, 0
        %v2556 = vsub.s32 0, %v2554
        %v2557 = vsel %vm2555, %v2556, %v2554
        %v2558 = vclz %v2557
        %v2559 = vsub.s32 %v2558, 2
        %vm2560 = vcmp.gt.s32.totalorder 0, %v2559
        %v2561 = vsel %vm2560, 0, %v2559
        %v2562 = vsub.s32 32, %v2561
        %v2563 = vshll.u32 %v2554, %v2561
        %v2564 = vshrl.u32 %v2546, %v2562
        %v2565 = vor.u32 %v2563, %v2564
        %v2566 = vsub.s32 4294967266, %v2561
        %v2567 = vadd.s32 %v2566, 127
        %v2568 = vshll.u32 %v2567, 23
        %v2569 = vor.u32 4788187, %v2568
        %v2570 = vand.u32 2147483647, %v2569
        %v2572 = vcvt.s32.f32 %v2565
        %v2573 = vmul.f32 %v2572, %v2570
        %v2574 = vxor.u32 %v2573, 2147483648
        %v2575 = vsel %vm2454, %v2574, %v2573
        %v2576 = vsub.s32 4, %v2552
        %v2577 = vsel %vm2454, %v2576, %v2552
        %v2578 = vsel %vm2453, %v434, %v2575
        %v2579 = vsel %vm2453, 0, %v2577
        %v2580 = vmul.f32 %v2578, %v2578
        %v2581 = vmul.f32 %v2580, -0.001358992
        %v2582 = vadd.f32 %v2581, 0.041655596
        %v2583 = vmul.f32 %v2580, %v2582
        %v2584 = vadd.f32 %v2583, -0.4999988
        %v2585 = vmul.f32 %v2580, %v2584
        %v2586 = vadd.f32 1.0, %v2585
        %v2587 = vmul.f32 %v2578, %v2578
        %v2588 = vmul.f32 %v2587, -0.00019511016
        %v2589 = vadd.f32 %v2588, 0.008332121
        %v2590 = vmul.f32 %v2587, %v2589
        %v2591 = vadd.f32 %v2590, -0.16666654
        %v2592 = vmul.f32 %v2587, %v2591
        %v2593 = vadd.f32 %v2592, 1.0
        %v2594 = vmul.f32 %v2593, %v2578
        %vm2595 = vweird.f32 %v434
        %v2596 = vadd.s32 %v2579, 3
        %v2597 = vand.u32 %v2596, 3
        %vm2598 = vcmp.lt.s32.totalorder %v2597, 2
        %vm2599 = vcmp.eq.s32.totalorder %v2597, 0
        %v2600 = vxor.u32 %v2594, 2147483648
        %v2601 = vsel %vm2599, %v2586, %v2600
        %vm2602 = vcmp.eq.s32.totalorder %v2597, 2
        %v2603 = vxor.u32 %v2586, 2147483648
        %v2604 = vsel %vm2602, %v2603, %v2594
        %v2605 = vsel %vm2598, %v2601, %v2604
        %v2606 = vsel %vm2595, nan, %v2605
        %v2607 = vand.u32 2147483647, %v435
        %vm2608 = vcmp.le.f32.partialorder %v2607, 0.7853982
        %vm2609 = vcmp.lt.s32.totalorder %v435, 0
        %v2610 = vand.u32 %v435, 2139095040
        %v2611 = vshrl.u32 %v2610, 23
        %v2612 = vsub.s32 %v2611, 127
        %v2613 = vand.u32 2147483647, %v435
        %v2614 = vand.u32 %v2613, 8388607
        %v2615 = vor.u32 %v2614, 8388608
        %v2616 = vsub.s32 0, %v2615
        %v2617 = vadd.s32 %v2612, 1
        %vm2618 = vcmp.gt.s32.totalorder %v2617, 0
        %v2619 = vsel %vm2618, %v2617, 0
        %v2620 = vshrl.u32 %v2619, 5
        %v2621 = vand.u32 %v2619, 31
        %v2622 = vsub.s32 32, %v2621
        %v2623 = vshrl.u32 683565275, %v2622
        %v2624 = vshll.u32 683565275, %v2621
        %v2625 = vshrl.u32 2475754826, %v2622
        %v2626 = vor.u32 %v2624, %v2625
        %v2627 = vshll.u32 2475754826, %v2621
        %v2628 = vshrl.u32 2131351028, %v2622
        %v2629 = vor.u32 %v2627, %v2628
        %v2630 = vshll.u32 2131351028, %v2621
        %v2631 = vshrl.u32 2102212464, %v2622
        %v2632 = vor.u32 %v2630, %v2631
        %v2633 = vshll.u32 2102212464, %v2621
        %v2634 = vshrl.u32 920167782, %v2622
        %v2635 = vor.u32 %v2633, %v2634
        %v2636 = vshll.u32 920167782, %v2621
        %v2637 = vshrl.u32 1326507024, %v2622
        %v2638 = vor.u32 %v2636, %v2637
        %vm2639 = vcmp.lt.s32.totalorder %v2620, 1
        %vm2640 = vcmp.lt.s32.totalorder %v2620, 2
        %vm2641 = vcmp.lt.s32.totalorder %v2620, 3
        %vm2642 = vcmp.lt.s32.totalorder %v2620, 4
        %v2643 = vsel %vm2639, %v2623, %v2626
        %v2644 = vsel %vm2642, %v2632, 2102212464
        %v2645 = vsel %vm2641, %v2629, %v2644
        %v2646 = vsel %vm2640, %v2643, %v2645
        %v2647 = vsel %vm2639, %v2626, %v2629
        %v2648 = vsel %vm2642, %v2635, 920167782
        %v2649 = vsel %vm2641, %v2632, %v2648
        %v2650 = vsel %vm2640, %v2647, %v2649
        %v2651 = vsel %vm2639, %v2629, %v2632
        %v2652 = vsel %vm2642, %v2638, 1326507024
        %v2653 = vsel %vm2641, %v2635, %v2652
        %v2654 = vsel %vm2640, %v2651, %v2653
        %v2655 = vshll.u32 %v2615, 8
        %v2656 = vand.u32 %v2655, 65535
        %v2657 = vshrl.u32 %v2655, 16
        %v2658 = vand.u32 %v2654, 65535
        %v2659 = vshrl.u32 %v2654, 16
        %v2660 = vmul.u32 %v2656, %v2658
        %v2661 = vmul.u32 %v2656, %v2659
        %v2662 = vmul.u32 %v2657, %v2658
        %v2663 = vmul.u32 %v2657, %v2659
        %v2664 = vshll.u32 %v2661, 16
        %v2665 = vshrl.u32 %v2661, 16
        %v2666 = vshll.u32 %v2662, 16
        %v2667 = vshrl.u32 %v2662, 16
        %vm2668 = vc.u32 %v2660, %v2664
        %v2669 = vsel %vm2668, 1, 0
        %v2670 = vadd.s32 %v2660, %v2664
        %v2671 = vadd.s32 %v2663, %v2669
        %vm2672 = vc.u32 %v2670, %v2666
        %v2673 = vsel %vm2672, 1, 0
        %v2674 = vadd.s32 %v2670, %v2666
        %v2675 = vadd.s32 %v2671, %v2673
        %v2676 = vadd.s32 %v2675, %v2665
        %v2677 = vadd.s32 %v2676, %v2667
        %v2678 = vand.u32 %v2655, 65535
        %v2679 = vshrl.u32 %v2655, 16
        %v2680 = vand.u32 %v2650, 65535
        %v2681 = vshrl.u32 %v2650, 16
        %v2682 = vmul.u32 %v2678, %v2680
        %v2683 = vmul.u32 %v2678, %v2681
        %v2684 = vmul.u32 %v2679, %v2680
        %v2685 = vmul.u32 %v2679, %v2681
        %v2686 = vshll.u32 %v2683, 16
        %v2687 = vshrl.u32 %v2683, 16
        %v2688 = vshll.u32 %v2684, 16
        %v2689 = vshrl.u32 %v2684, 16
        %vm2690 = vc.u32 %v2682, %v2686
        %v2691 = vsel %vm2690, 1, 0
        %v2692 = vadd.s32 %v2682, %v2686
        %v2693 = vadd.s32 %v2685, %v2691
        %vm2694 = vc.u32 %v2692, %v2688
        %v2695 = vsel %vm2694, 1, 0
        %v2696 = vadd.s32 %v2692, %v2688
        %v2697 = vadd.s32 %v2693, %v2695
        %v2698 = vadd.s32 %v2697, %v2687
        %v2699 = vadd.s32 %v2698, %v2689
        %v2700 = vmul.u32 %v2655, %v2646
        %v2701 = vadd.s32 %v2677, %v2696
        %vm2702 = vc.u32 %v2677, %v2696
        %v2703 = vadd.s32 %v2699, 1
        %v2704 = vsel %vm2702, %v2703, %v2699
        %v2705 = vadd.s32 %v2700, %v2704
        %v2706 = vadd.s32 %v2705, 536870912
        %v2707 = vshrl.u32 %v2706, 30
        %v2708 = vshll.u32 %v2707, 30
        %v2709 = vsub.s32 %v2705, %v2708
        %vm2710 = vcmp.lt.s32.totalorder %v2709, 0
        %v2711 = vsub.s32 0, %v2709
        %v2712 = vsel %vm2710, %v2711, %v2709
        %v2713 = vclz %v2712
        %v2714 = vsub.s32 %v2713, 2
        %vm2715 = vcmp.gt.s32.totalorder 0, %v2714
        %v2716 = vsel %vm2715, 0, %v2714
        %v2717 = vsub.s32 32, %v2716
        %v2718 = vshll.u32 %v2709, %v2716
        %v2719 = vshrl.u32 %v2701, %v2717
        %v2720 = vor.u32 %v2718, %v2719
        %v2721 = vsub.s32 4294967266, %v2716
        %v2722 = vadd.s32 %v2721, 127
        %v2723 = vshll.u32 %v2722, 23
        %v2724 = vor.u32 4788187, %v2723
        %v2725 = vand.u32 2147483647, %v2724
        %v2727 = vcvt.s32.f32 %v2720
        %v2728 = vmul.f32 %v2727, %v2725
        %v2729 = vxor.u32 %v2728, 2147483648
        %v2730 = vsel %vm2609, %v2729, %v2728
        %v2731 = vsub.s32 4, %v2707
        %v2732 = vsel %vm2609, %v2731, %v2707
        %v2733 = vsel %vm2608, %v435, %v2730
        %v2734 = vsel %vm2608, 0, %v2732
        %v2735 = vmul.f32 %v2733, %v2733
        %v2736 = vmul.f32 %v2735, -0.001358992
        %v2737 = vadd.f32 %v2736, 0.041655596
        %v2738 = vmul.f32 %v2735, %v2737
        %v2739 = vadd.f32 %v2738, -0.4999988
        %v2740 = vmul.f32 %v2735, %v2739
        %v2741 = vadd.f32 1.0, %v2740
        %v2742 = vmul.f32 %v2733, %v2733
        %v2743 = vmul.f32 %v2742, -0.00019511016
        %v2744 = vadd.f32 %v2743, 0.008332121
        %v2745 = vmul.f32 %v2742, %v2744
        %v2746 = vadd.f32 %v2745, -0.16666654
        %v2747 = vmul.f32 %v2742, %v2746
        %v2748 = vadd.f32 %v2747, 1.0
        %v2749 = vmul.f32 %v2748, %v2733
        %vm2750 = vweird.f32 %v435
        %v2751 = vadd.s32 %v2734, 3
        %v2752 = vand.u32 %v2751, 3
        %vm2753 = vcmp.lt.s32.totalorder %v2752, 2
        %vm2754 = vcmp.eq.s32.totalorder %v2752, 0
        %v2755 = vxor.u32 %v2749, 2147483648
        %v2756 = vsel %vm2754, %v2741, %v2755
        %vm2757 = vcmp.eq.s32.totalorder %v2752, 2
        %v2758 = vxor.u32 %v2741, 2147483648
        %v2759 = vsel %vm2757, %v2758, %v2749
        %v2760 = vsel %vm2753, %v2756, %v2759
        %v2761 = vsel %vm2750, nan, %v2760
        %v2762 = vand.u32 2147483647, %v436
        %vm2763 = vcmp.le.f32.partialorder %v2762, 0.7853982
        %vm2764 = vcmp.lt.s32.totalorder %v436, 0
        %v2765 = vand.u32 %v436, 2139095040
        %v2766 = vshrl.u32 %v2765, 23
        %v2767 = vsub.s32 %v2766, 127
        %v2768 = vand.u32 2147483647, %v436
        %v2769 = vand.u32 %v2768, 8388607
        %v2770 = vor.u32 %v2769, 8388608
        %v2771 = vsub.s32 0, %v2770
        %v2772 = vadd.s32 %v2767, 1
        %vm2773 = vcmp.gt.s32.totalorder %v2772, 0
        %v2774 = vsel %vm2773, %v2772, 0
        %v2775 = vshrl.u32 %v2774, 5
        %v2776 = vand.u32 %v2774, 31
        %v2777 = vsub.s32 32, %v2776
        %v2778 = vshrl.u32 683565275, %v2777
        %v2779 = vshll.u32 683565275, %v2776
        %v2780 = vshrl.u32 2475754826, %v2777
        %v2781 = vor.u32 %v2779, %v2780
        %v2782 = vshll.u32 2475754826, %v2776
        %v2783 = vshrl.u32 2131351028, %v2777
        %v2784 = vor.u32 %v2782, %v2783
        %v2785 = vshll.u32 2131351028, %v2776
        %v2786 = vshrl.u32 2102212464, %v2777
        %v2787 = vor.u32 %v2785, %v2786
        %v2788 = vshll.u32 2102212464, %v2776
        %v2789 = vshrl.u32 920167782, %v2777
        %v2790 = vor.u32 %v2788, %v2789
        %v2791 = vshll.u32 920167782, %v2776
        %v2792 = vshrl.u32 1326507024, %v2777
        %v2793 = vor.u32 %v2791, %v2792
        %vm2794 = vcmp.lt.s32.totalorder %v2775, 1
        %vm2795 = vcmp.lt.s32.totalorder %v2775, 2
        %vm2796 = vcmp.lt.s32.totalorder %v2775, 3
        %vm2797 = vcmp.lt.s32.totalorder %v2775, 4
        %v2798 = vsel %vm2794, %v2778, %v2781
        %v2799 = vsel %vm2797, %v2787, 2102212464
        %v2800 = vsel %vm2796, %v2784, %v2799
        %v2801 = vsel %vm2795, %v2798, %v2800
        %v2802 = vsel %vm2794, %v2781, %v2784
        %v2803 = vsel %vm2797, %v2790, 920167782
        %v2804 = vsel %vm2796, %v2787, %v2803
        %v2805 = vsel %vm2795, %v2802, %v2804
        %v2806 = vsel %vm2794, %v2784, %v2787
        %v2807 = vsel %vm2797, %v2793, 1326507024
        %v2808 = vsel %vm2796, %v2790, %v2807
        %v2809 = vsel %vm2795, %v2806, %v2808
        %v2810 = vshll.u32 %v2770, 8
        %v2811 = vand.u32 %v2810, 65535
        %v2812 = vshrl.u32 %v2810, 16
        %v2813 = vand.u32 %v2809, 65535
        %v2814 = vshrl.u32 %v2809, 16
        %v2815 = vmul.u32 %v2811, %v2813
        %v2816 = vmul.u32 %v2811, %v2814
        %v2817 = vmul.u32 %v2812, %v2813
        %v2818 = vmul.u32 %v2812, %v2814
        %v2819 = vshll.u32 %v2816, 16
        %v2820 = vshrl.u32 %v2816, 16
        %v2821 = vshll.u32 %v2817, 16
        %v2822 = vshrl.u32 %v2817, 16
        %vm2823 = vc.u32 %v2815, %v2819
        %v2824 = vsel %vm2823, 1, 0
        %v2825 = vadd.s32 %v2815, %v2819
        %v2826 = vadd.s32 %v2818, %v2824
        %vm2827 = vc.u32 %v2825, %v2821
        %v2828 = vsel %vm2827, 1, 0
        %v2829 = vadd.s32 %v2825, %v2821
        %v2830 = vadd.s32 %v2826, %v2828
        %v2831 = vadd.s32 %v2830, %v2820
        %v2832 = vadd.s32 %v2831, %v2822
        %v2833 = vand.u32 %v2810, 65535
        %v2834 = vshrl.u32 %v2810, 16
        %v2835 = vand.u32 %v2805, 65535
        %v2836 = vshrl.u32 %v2805, 16
        %v2837 = vmul.u32 %v2833, %v2835
        %v2838 = vmul.u32 %v2833, %v2836
        %v2839 = vmul.u32 %v2834, %v2835
        %v2840 = vmul.u32 %v2834, %v2836
        %v2841 = vshll.u32 %v2838, 16
        %v2842 = vshrl.u32 %v2838, 16
        %v2843 = vshll.u32 %v2839, 16
        %v2844 = vshrl.u32 %v2839, 16
        %vm2845 = vc.u32 %v2837, %v2841
        %v2846 = vsel %vm2845, 1, 0
        %v2847 = vadd.s32 %v2837, %v2841
        %v2848 = vadd.s32 %v2840, %v2846
        %vm2849 = vc.u32 %v2847, %v2843
        %v2850 = vsel %vm2849, 1, 0
        %v2851 = vadd.s32 %v2847, %v2843
        %v2852 = vadd.s32 %v2848, %v2850
        %v2853 = vadd.s32 %v2852, %v2842
        %v2854 = vadd.s32 %v2853, %v2844
        %v2855 = vmul.u32 %v2810, %v2801
        %v2856 = vadd.s32 %v2832, %v2851
        %vm2857 = vc.u32 %v2832, %v2851
        %v2858 = vadd.s32 %v2854, 1
        %v2859 = vsel %vm2857, %v2858, %v2854
        %v2860 = vadd.s32 %v2855, %v2859
        %v2861 = vadd.s32 %v2860, 536870912
        %v2862 = vshrl.u32 %v2861, 30
        %v2863 = vshll.u32 %v2862, 30
        %v2864 = vsub.s32 %v2860, %v2863
        %vm2865 = vcmp.lt.s32.totalorder %v2864, 0
        %v2866 = vsub.s32 0, %v2864
        %v2867 = vsel %vm2865, %v2866, %v2864
        %v2868 = vclz %v2867
        %v2869 = vsub.s32 %v2868, 2
        %vm2870 = vcmp.gt.s32.totalorder 0, %v2869
        %v2871 = vsel %vm2870, 0, %v2869
        %v2872 = vsub.s32 32, %v2871
        %v2873 = vshll.u32 %v2864, %v2871
        %v2874 = vshrl.u32 %v2856, %v2872
        %v2875 = vor.u32 %v2873, %v2874
        %v2876 = vsub.s32 4294967266, %v2871
        %v2877 = vadd.s32 %v2876, 127
        %v2878 = vshll.u32 %v2877, 23
        %v2879 = vor.u32 4788187, %v2878
        %v2880 = vand.u32 2147483647, %v2879
        %v2882 = vcvt.s32.f32 %v2875
        %v2883 = vmul.f32 %v2882, %v2880
        %v2884 = vxor.u32 %v2883, 2147483648
        %v2885 = vsel %vm2764, %v2884, %v2883
        %v2886 = vsub.s32 4, %v2862
        %v2887 = vsel %vm2764, %v2886, %v2862
        %v2888 = vsel %vm2763, %v436, %v2885
        %v2889 = vsel %vm2763, 0, %v2887
        %v2890 = vmul.f32 %v2888, %v2888
        %v2891 = vmul.f32 %v2890, -0.001358992
        %v2892 = vadd.f32 %v2891, 0.041655596
        %v2893 = vmul.f32 %v2890, %v2892
        %v2894 = vadd.f32 %v2893, -0.4999988
        %v2895 = vmul.f32 %v2890, %v2894
        %v2896 = vadd.f32 1.0, %v2895
        %v2897 = vmul.f32 %v2888, %v2888
        %v2898 = vmul.f32 %v2897, -0.00019511016
        %v2899 = vadd.f32 %v2898, 0.008332121
        %v2900 = vmul.f32 %v2897, %v2899
        %v2901 = vadd.f32 %v2900, -0.16666654
        %v2902 = vmul.f32 %v2897, %v2901
        %v2903 = vadd.f32 %v2902, 1.0
        %v2904 = vmul.f32 %v2903, %v2888
        %vm2905 = vweird.f32 %v436
        %v2906 = vadd.s32 %v2889, 3
        %v2907 = vand.u32 %v2906, 3
        %vm2908 = vcmp.lt.s32.totalorder %v2907, 2
        %vm2909 = vcmp.eq.s32.totalorder %v2907, 0
        %v2910 = vxor.u32 %v2904, 2147483648
        %v2911 = vsel %vm2909, %v2896, %v2910
        %vm2912 = vcmp.eq.s32.totalorder %v2907, 2
        %v2913 = vxor.u32 %v2896, 2147483648
        %v2914 = vsel %vm2912, %v2913, %v2904
        %v2915 = vsel %vm2908, %v2911, %v2914
        %v2916 = vsel %vm2905, nan, %v2915
        %v2917 = vand.u32 2147483647, %v421
        %vm2918 = vcmp.le.f32.partialorder %v2917, 0.7853982
        %vm2919 = vcmp.lt.s32.totalorder %v421, 0
        %v2920 = vand.u32 %v421, 2139095040
        %v2921 = vshrl.u32 %v2920, 23
        %v2922 = vsub.s32 %v2921, 127
        %v2923 = vand.u32 2147483647, %v421
        %v2924 = vand.u32 %v2923, 8388607
        %v2925 = vor.u32 %v2924, 8388608
        %v2926 = vsub.s32 0, %v2925
        %v2927 = vadd.s32 %v2922, 1
        %vm2928 = vcmp.gt.s32.totalorder %v2927, 0
        %v2929 = vsel %vm2928, %v2927, 0
        %v2930 = vshrl.u32 %v2929, 5
        %v2931 = vand.u32 %v2929, 31
        %v2932 = vsub.s32 32, %v2931
        %v2933 = vshrl.u32 683565275, %v2932
        %v2934 = vshll.u32 683565275, %v2931
        %v2935 = vshrl.u32 2475754826, %v2932
        %v2936 = vor.u32 %v2934, %v2935
        %v2937 = vshll.u32 2475754826, %v2931
        %v2938 = vshrl.u32 2131351028, %v2932
        %v2939 = vor.u32 %v2937, %v2938
        %v2940 = vshll.u32 2131351028, %v2931
        %v2941 = vshrl.u32 2102212464, %v2932
        %v2942 = vor.u32 %v2940, %v2941
        %v2943 = vshll.u32 2102212464, %v2931
        %v2944 = vshrl.u32 920167782, %v2932
        %v2945 = vor.u32 %v2943, %v2944
        %v2946 = vshll.u32 920167782, %v2931
        %v2947 = vshrl.u32 1326507024, %v2932
        %v2948 = vor.u32 %v2946, %v2947
        %vm2949 = vcmp.lt.s32.totalorder %v2930, 1
        %vm2950 = vcmp.lt.s32.totalorder %v2930, 2
        %vm2951 = vcmp.lt.s32.totalorder %v2930, 3
        %vm2952 = vcmp.lt.s32.totalorder %v2930, 4
        %v2953 = vsel %vm2949, %v2933, %v2936
        %v2954 = vsel %vm2952, %v2942, 2102212464
        %v2955 = vsel %vm2951, %v2939, %v2954
        %v2956 = vsel %vm2950, %v2953, %v2955
        %v2957 = vsel %vm2949, %v2936, %v2939
        %v2958 = vsel %vm2952, %v2945, 920167782
        %v2959 = vsel %vm2951, %v2942, %v2958
        %v2960 = vsel %vm2950, %v2957, %v2959
        %v2961 = vsel %vm2949, %v2939, %v2942
        %v2962 = vsel %vm2952, %v2948, 1326507024
        %v2963 = vsel %vm2951, %v2945, %v2962
        %v2964 = vsel %vm2950, %v2961, %v2963
        %v2965 = vshll.u32 %v2925, 8
        %v2966 = vand.u32 %v2965, 65535
        %v2967 = vshrl.u32 %v2965, 16
        %v2968 = vand.u32 %v2964, 65535
        %v2969 = vshrl.u32 %v2964, 16
        %v2970 = vmul.u32 %v2966, %v2968
        %v2971 = vmul.u32 %v2966, %v2969
        %v2972 = vmul.u32 %v2967, %v2968
        %v2973 = vmul.u32 %v2967, %v2969
        %v2974 = vshll.u32 %v2971, 16
        %v2975 = vshrl.u32 %v2971, 16
        %v2976 = vshll.u32 %v2972, 16
        %v2977 = vshrl.u32 %v2972, 16
        %vm2978 = vc.u32 %v2970, %v2974
        %v2979 = vsel %vm2978, 1, 0
        %v2980 = vadd.s32 %v2970, %v2974
        %v2981 = vadd.s32 %v2973, %v2979
        %vm2982 = vc.u32 %v2980, %v2976
        %v2983 = vsel %vm2982, 1, 0
        %v2984 = vadd.s32 %v2980, %v2976
        %v2985 = vadd.s32 %v2981, %v2983
        %v2986 = vadd.s32 %v2985, %v2975
        %v2987 = vadd.s32 %v2986, %v2977
        %v2988 = vand.u32 %v2965, 65535
        %v2989 = vshrl.u32 %v2965, 16
        %v2990 = vand.u32 %v2960, 65535
        %v2991 = vshrl.u32 %v2960, 16
        %v2992 = vmul.u32 %v2988, %v2990
        %v2993 = vmul.u32 %v2988, %v2991
        %v2994 = vmul.u32 %v2989, %v2990
        %v2995 = vmul.u32 %v2989, %v2991
        %v2996 = vshll.u32 %v2993, 16
        %v2997 = vshrl.u32 %v2993, 16
        %v2998 = vshll.u32 %v2994, 16
        %v2999 = vshrl.u32 %v2994, 16
        %vm3000 = vc.u32 %v2992, %v2996
        %v3001 = vsel %vm3000, 1, 0
        %v3002 = vadd.s32 %v2992, %v2996
        %v3003 = vadd.s32 %v2995, %v3001
        %vm3004 = vc.u32 %v3002, %v2998
        %v3005 = vsel %vm3004, 1, 0
        %v3006 = vadd.s32 %v3002, %v2998
        %v3007 = vadd.s32 %v3003, %v3005
        %v3008 = vadd.s32 %v3007, %v2997
        %v3009 = vadd.s32 %v3008, %v2999
        %v3010 = vmul.u32 %v2965, %v2956
        %v3011 = vadd.s32 %v2987, %v3006
        %vm3012 = vc.u32 %v2987, %v3006
        %v3013 = vadd.s32 %v3009, 1
        %v3014 = vsel %vm3012, %v3013, %v3009
        %v3015 = vadd.s32 %v3010, %v3014
        %v3016 = vadd.s32 %v3015, 536870912
        %v3017 = vshrl.u32 %v3016, 30
        %v3018 = vshll.u32 %v3017, 30
        %v3019 = vsub.s32 %v3015, %v3018
        %vm3020 = vcmp.lt.s32.totalorder %v3019, 0
        %v3021 = vsub.s32 0, %v3019
        %v3022 = vsel %vm3020, %v3021, %v3019
        %v3023 = vclz %v3022
        %v3024 = vsub.s32 %v3023, 2
        %vm3025 = vcmp.gt.s32.totalorder 0, %v3024
        %v3026 = vsel %vm3025, 0, %v3024
        %v3027 = vsub.s32 32, %v3026
        %v3028 = vshll.u32 %v3019, %v3026
        %v3029 = vshrl.u32 %v3011, %v3027
        %v3030 = vor.u32 %v3028, %v3029
        %v3031 = vsub.s32 4294967266, %v3026
        %v3032 = vadd.s32 %v3031, 127
        %v3033 = vshll.u32 %v3032, 23
        %v3034 = vor.u32 4788187, %v3033
        %v3035 = vand.u32 2147483647, %v3034
        %v3037 = vcvt.s32.f32 %v3030
        %v3038 = vmul.f32 %v3037, %v3035
        %v3039 = vxor.u32 %v3038, 2147483648
        %v3040 = vsel %vm2919, %v3039, %v3038
        %v3041 = vsub.s32 4, %v3017
        %v3042 = vsel %vm2919, %v3041, %v3017
        %v3043 = vsel %vm2918, %v421, %v3040
        %v3044 = vsel %vm2918, 0, %v3042
        %v3045 = vmul.f32 %v3043, %v3043
        %v3046 = vmul.f32 %v3045, -0.001358992
        %v3047 = vadd.f32 %v3046, 0.041655596
        %v3048 = vmul.f32 %v3045, %v3047
        %v3049 = vadd.f32 %v3048, -0.4999988
        %v3050 = vmul.f32 %v3045, %v3049
        %v3051 = vadd.f32 1.0, %v3050
        %v3052 = vmul.f32 %v3043, %v3043
        %v3053 = vmul.f32 %v3052, -0.00019511016
        %v3054 = vadd.f32 %v3053, 0.008332121
        %v3055 = vmul.f32 %v3052, %v3054
        %v3056 = vadd.f32 %v3055, -0.16666654
        %v3057 = vmul.f32 %v3052, %v3056
        %v3058 = vadd.f32 %v3057, 1.0
        %v3059 = vmul.f32 %v3058, %v3043
        %vm3060 = vweird.f32 %v421
        %v3061 = vand.u32 %v3044, 3
        %vm3062 = vcmp.lt.s32.totalorder %v3061, 2
        %vm3063 = vcmp.eq.s32.totalorder %v3061, 0
        %v3064 = vxor.u32 %v3059, 2147483648
        %v3065 = vsel %vm3063, %v3051, %v3064
        %vm3066 = vcmp.eq.s32.totalorder %v3061, 2
        %v3067 = vxor.u32 %v3051, 2147483648
        %v3068 = vsel %vm3066, %v3067, %v3059
        %v3069 = vsel %vm3062, %v3065, %v3068
        %v3070 = vsel %vm3060, nan, %v3069
        %v3071 = vand.u32 2147483647, %v422
        %vm3072 = vcmp.le.f32.partialorder %v3071, 0.7853982
        %vm3073 = vcmp.lt.s32.totalorder %v422, 0
        %v3074 = vand.u32 %v422, 2139095040
        %v3075 = vshrl.u32 %v3074, 23
        %v3076 = vsub.s32 %v3075, 127
        %v3077 = vand.u32 2147483647, %v422
        %v3078 = vand.u32 %v3077, 8388607
        %v3079 = vor.u32 %v3078, 8388608
        %v3080 = vsub.s32 0, %v3079
        %v3081 = vadd.s32 %v3076, 1
        %vm3082 = vcmp.gt.s32.totalorder %v3081, 0
        %v3083 = vsel %vm3082, %v3081, 0
        %v3084 = vshrl.u32 %v3083, 5
        %v3085 = vand.u32 %v3083, 31
        %v3086 = vsub.s32 32, %v3085
        %v3087 = vshrl.u32 683565275, %v3086
        %v3088 = vshll.u32 683565275, %v3085
        %v3089 = vshrl.u32 2475754826, %v3086
        %v3090 = vor.u32 %v3088, %v3089
        %v3091 = vshll.u32 2475754826, %v3085
        %v3092 = vshrl.u32 2131351028, %v3086
        %v3093 = vor.u32 %v3091, %v3092
        %v3094 = vshll.u32 2131351028, %v3085
        %v3095 = vshrl.u32 2102212464, %v3086
        %v3096 = vor.u32 %v3094, %v3095
        %v3097 = vshll.u32 2102212464, %v3085
        %v3098 = vshrl.u32 920167782, %v3086
        %v3099 = vor.u32 %v3097, %v3098
        %v3100 = vshll.u32 920167782, %v3085
        %v3101 = vshrl.u32 1326507024, %v3086
        %v3102 = vor.u32 %v3100, %v3101
        %vm3103 = vcmp.lt.s32.totalorder %v3084, 1
        %vm3104 = vcmp.lt.s32.totalorder %v3084, 2
        %vm3105 = vcmp.lt.s32.totalorder %v3084, 3
        %vm3106 = vcmp.lt.s32.totalorder %v3084, 4
        %v3107 = vsel %vm3103, %v3087, %v3090
        %v3108 = vsel %vm3106, %v3096, 2102212464
        %v3109 = vsel %vm3105, %v3093, %v3108
        %v3110 = vsel %vm3104, %v3107, %v3109
        %v3111 = vsel %vm3103, %v3090, %v3093
        %v3112 = vsel %vm3106, %v3099, 920167782
        %v3113 = vsel %vm3105, %v3096, %v3112
        %v3114 = vsel %vm3104, %v3111, %v3113
        %v3115 = vsel %vm3103, %v3093, %v3096
        %v3116 = vsel %vm3106, %v3102, 1326507024
        %v3117 = vsel %vm3105, %v3099, %v3116
        %v3118 = vsel %vm3104, %v3115, %v3117
        %v3119 = vshll.u32 %v3079, 8
        %v3120 = vand.u32 %v3119, 65535
        %v3121 = vshrl.u32 %v3119, 16
        %v3122 = vand.u32 %v3118, 65535
        %v3123 = vshrl.u32 %v3118, 16
        %v3124 = vmul.u32 %v3120, %v3122
        %v3125 = vmul.u32 %v3120, %v3123
        %v3126 = vmul.u32 %v3121, %v3122
        %v3127 = vmul.u32 %v3121, %v3123
        %v3128 = vshll.u32 %v3125, 16
        %v3129 = vshrl.u32 %v3125, 16
        %v3130 = vshll.u32 %v3126, 16
        %v3131 = vshrl.u32 %v3126, 16
        %vm3132 = vc.u32 %v3124, %v3128
        %v3133 = vsel %vm3132, 1, 0
        %v3134 = vadd.s32 %v3124, %v3128
        %v3135 = vadd.s32 %v3127, %v3133
        %vm3136 = vc.u32 %v3134, %v3130
        %v3137 = vsel %vm3136, 1, 0
        %v3138 = vadd.s32 %v3134, %v3130
        %v3139 = vadd.s32 %v3135, %v3137
        %v3140 = vadd.s32 %v3139, %v3129
        %v3141 = vadd.s32 %v3140, %v3131
        %v3142 = vand.u32 %v3119, 65535
        %v3143 = vshrl.u32 %v3119, 16
        %v3144 = vand.u32 %v3114, 65535
        %v3145 = vshrl.u32 %v3114, 16
        %v3146 = vmul.u32 %v3142, %v3144
        %v3147 = vmul.u32 %v3142, %v3145
        %v3148 = vmul.u32 %v3143, %v3144
        %v3149 = vmul.u32 %v3143, %v3145
        %v3150 = vshll.u32 %v3147, 16
        %v3151 = vshrl.u32 %v3147, 16
        %v3152 = vshll.u32 %v3148, 16
        %v3153 = vshrl.u32 %v3148, 16
        %vm3154 = vc.u32 %v3146, %v3150
        %v3155 = vsel %vm3154, 1, 0
        %v3156 = vadd.s32 %v3146, %v3150
        %v3157 = vadd.s32 %v3149, %v3155
        %vm3158 = vc.u32 %v3156, %v3152
        %v3159 = vsel %vm3158, 1, 0
        %v3160 = vadd.s32 %v3156, %v3152
        %v3161 = vadd.s32 %v3157, %v3159
        %v3162 = vadd.s32 %v3161, %v3151
        %v3163 = vadd.s32 %v3162, %v3153
        %v3164 = vmul.u32 %v3119, %v3110
        %v3165 = vadd.s32 %v3141, %v3160
        %vm3166 = vc.u32 %v3141, %v3160
        %v3167 = vadd.s32 %v3163, 1
        %v3168 = vsel %vm3166, %v3167, %v3163
        %v3169 = vadd.s32 %v3164, %v3168
        %v3170 = vadd.s32 %v3169, 536870912
        %v3171 = vshrl.u32 %v3170, 30
        %v3172 = vshll.u32 %v3171, 30
        %v3173 = vsub.s32 %v3169, %v3172
        %vm3174 = vcmp.lt.s32.totalorder %v3173, 0
        %v3175 = vsub.s32 0, %v3173
        %v3176 = vsel %vm3174, %v3175, %v3173
        %v3177 = vclz %v3176
        %v3178 = vsub.s32 %v3177, 2
        %vm3179 = vcmp.gt.s32.totalorder 0, %v3178
        %v3180 = vsel %vm3179, 0, %v3178
        %v3181 = vsub.s32 32, %v3180
        %v3182 = vshll.u32 %v3173, %v3180
        %v3183 = vshrl.u32 %v3165, %v3181
        %v3184 = vor.u32 %v3182, %v3183
        %v3185 = vsub.s32 4294967266, %v3180
        %v3186 = vadd.s32 %v3185, 127
        %v3187 = vshll.u32 %v3186, 23
        %v3188 = vor.u32 4788187, %v3187
        %v3189 = vand.u32 2147483647, %v3188
        %v3191 = vcvt.s32.f32 %v3184
        %v3192 = vmul.f32 %v3191, %v3189
        %v3193 = vxor.u32 %v3192, 2147483648
        %v3194 = vsel %vm3073, %v3193, %v3192
        %v3195 = vsub.s32 4, %v3171
        %v3196 = vsel %vm3073, %v3195, %v3171
        %v3197 = vsel %vm3072, %v422, %v3194
        %v3198 = vsel %vm3072, 0, %v3196
        %v3199 = vmul.f32 %v3197, %v3197
        %v3200 = vmul.f32 %v3199, -0.001358992
        %v3201 = vadd.f32 %v3200, 0.041655596
        %v3202 = vmul.f32 %v3199, %v3201
        %v3203 = vadd.f32 %v3202, -0.4999988
        %v3204 = vmul.f32 %v3199, %v3203
        %v3205 = vadd.f32 1.0, %v3204
        %v3206 = vmul.f32 %v3197, %v3197
        %v3207 = vmul.f32 %v3206, -0.00019511016
        %v3208 = vadd.f32 %v3207, 0.008332121
        %v3209 = vmul.f32 %v3206, %v3208
        %v3210 = vadd.f32 %v3209, -0.16666654
        %v3211 = vmul.f32 %v3206, %v3210
        %v3212 = vadd.f32 %v3211, 1.0
        %v3213 = vmul.f32 %v3212, %v3197
        %vm3214 = vweird.f32 %v422
        %v3215 = vand.u32 %v3198, 3
        %vm3216 = vcmp.lt.s32.totalorder %v3215, 2
        %vm3217 = vcmp.eq.s32.totalorder %v3215, 0
        %v3218 = vxor.u32 %v3213, 2147483648
        %v3219 = vsel %vm3217, %v3205, %v3218
        %vm3220 = vcmp.eq.s32.totalorder %v3215, 2
        %v3221 = vxor.u32 %v3205, 2147483648
        %v3222 = vsel %vm3220, %v3221, %v3213
        %v3223 = vsel %vm3216, %v3219, %v3222
        %v3224 = vsel %vm3214, nan, %v3223
        %v3225 = vand.u32 2147483647, %v423
        %vm3226 = vcmp.le.f32.partialorder %v3225, 0.7853982
        %vm3227 = vcmp.lt.s32.totalorder %v423, 0
        %v3228 = vand.u32 %v423, 2139095040
        %v3229 = vshrl.u32 %v3228, 23
        %v3230 = vsub.s32 %v3229, 127
        %v3231 = vand.u32 2147483647, %v423
        %v3232 = vand.u32 %v3231, 8388607
        %v3233 = vor.u32 %v3232, 8388608
        %v3234 = vsub.s32 0, %v3233
        %v3235 = vadd.s32 %v3230, 1
        %vm3236 = vcmp.gt.s32.totalorder %v3235, 0
        %v3237 = vsel %vm3236, %v3235, 0
        %v3238 = vshrl.u32 %v3237, 5
        %v3239 = vand.u32 %v3237, 31
        %v3240 = vsub.s32 32, %v3239
        %v3241 = vshrl.u32 683565275, %v3240
        %v3242 = vshll.u32 683565275, %v3239
        %v3243 = vshrl.u32 2475754826, %v3240
        %v3244 = vor.u32 %v3242, %v3243
        %v3245 = vshll.u32 2475754826, %v3239
        %v3246 = vshrl.u32 2131351028, %v3240
        %v3247 = vor.u32 %v3245, %v3246
        %v3248 = vshll.u32 2131351028, %v3239
        %v3249 = vshrl.u32 2102212464, %v3240
        %v3250 = vor.u32 %v3248, %v3249
        %v3251 = vshll.u32 2102212464, %v3239
        %v3252 = vshrl.u32 920167782, %v3240
        %v3253 = vor.u32 %v3251, %v3252
        %v3254 = vshll.u32 920167782, %v3239
        %v3255 = vshrl.u32 1326507024, %v3240
        %v3256 = vor.u32 %v3254, %v3255
        %vm3257 = vcmp.lt.s32.totalorder %v3238, 1
        %vm3258 = vcmp.lt.s32.totalorder %v3238, 2
        %vm3259 = vcmp.lt.s32.totalorder %v3238, 3
        %vm3260 = vcmp.lt.s32.totalorder %v3238, 4
        %v3261 = vsel %vm3257, %v3241, %v3244
        %v3262 = vsel %vm3260, %v3250, 2102212464
        %v3263 = vsel %vm3259, %v3247, %v3262
        %v3264 = vsel %vm3258, %v3261, %v3263
        %v3265 = vsel %vm3257, %v3244, %v3247
        %v3266 = vsel %vm3260, %v3253, 920167782
        %v3267 = vsel %vm3259, %v3250, %v3266
        %v3268 = vsel %vm3258, %v3265, %v3267
        %v3269 = vsel %vm3257, %v3247, %v3250
        %v3270 = vsel %vm3260, %v3256, 1326507024
        %v3271 = vsel %vm3259, %v3253, %v3270
        %v3272 = vsel %vm3258, %v3269, %v3271
        %v3273 = vshll.u32 %v3233, 8
        %v3274 = vand.u32 %v3273, 65535
        %v3275 = vshrl.u32 %v3273, 16
        %v3276 = vand.u32 %v3272, 65535
        %v3277 = vshrl.u32 %v3272, 16
        %v3278 = vmul.u32 %v3274, %v3276
        %v3279 = vmul.u32 %v3274, %v3277
        %v3280 = vmul.u32 %v3275, %v3276
        %v3281 = vmul.u32 %v3275, %v3277
        %v3282 = vshll.u32 %v3279, 16
        %v3283 = vshrl.u32 %v3279, 16
        %v3284 = vshll.u32 %v3280, 16
        %v3285 = vshrl.u32 %v3280, 16
        %vm3286 = vc.u32 %v3278, %v3282
        %v3287 = vsel %vm3286, 1, 0
        %v3288 = vadd.s32 %v3278, %v3282
        %v3289 = vadd.s32 %v3281, %v3287
        %vm3290 = vc.u32 %v3288, %v3284
        %v3291 = vsel %vm3290, 1, 0
        %v3292 = vadd.s32 %v3288, %v3284
        %v3293 = vadd.s32 %v3289, %v3291
        %v3294 = vadd.s32 %v3293, %v3283
        %v3295 = vadd.s32 %v3294, %v3285
        %v3296 = vand.u32 %v3273, 65535
        %v3297 = vshrl.u32 %v3273, 16
        %v3298 = vand.u32 %v3268, 65535
        %v3299 = vshrl.u32 %v3268, 16
        %v3300 = vmul.u32 %v3296, %v3298
        %v3301 = vmul.u32 %v3296, %v3299
        %v3302 = vmul.u32 %v3297, %v3298
        %v3303 = vmul.u32 %v3297, %v3299
        %v3304 = vshll.u32 %v3301, 16
        %v3305 = vshrl.u32 %v3301, 16
        %v3306 = vshll.u32 %v3302, 16
        %v3307 = vshrl.u32 %v3302, 16
        %vm3308 = vc.u32 %v3300, %v3304
        %v3309 = vsel %vm3308, 1, 0
        %v3310 = vadd.s32 %v3300, %v3304
        %v3311 = vadd.s32 %v3303, %v3309
        %vm3312 = vc.u32 %v3310, %v3306
        %v3313 = vsel %vm3312, 1, 0
        %v3314 = vadd.s32 %v3310, %v3306
        %v3315 = vadd.s32 %v3311, %v3313
        %v3316 = vadd.s32 %v3315, %v3305
        %v3317 = vadd.s32 %v3316, %v3307
        %v3318 = vmul.u32 %v3273, %v3264
        %v3319 = vadd.s32 %v3295, %v3314
        %vm3320 = vc.u32 %v3295, %v3314
        %v3321 = vadd.s32 %v3317, 1
        %v3322 = vsel %vm3320, %v3321, %v3317
        %v3323 = vadd.s32 %v3318, %v3322
        %v3324 = vadd.s32 %v3323, 536870912
        %v3325 = vshrl.u32 %v3324, 30
        %v3326 = vshll.u32 %v3325, 30
        %v3327 = vsub.s32 %v3323, %v3326
        %vm3328 = vcmp.lt.s32.totalorder %v3327, 0
        %v3329 = vsub.s32 0, %v3327
        %v3330 = vsel %vm3328, %v3329, %v3327
        %v3331 = vclz %v3330
        %v3332 = vsub.s32 %v3331, 2
        %vm3333 = vcmp.gt.s32.totalorder 0, %v3332
        %v3334 = vsel %vm3333, 0, %v3332
        %v3335 = vsub.s32 32, %v3334
        %v3336 = vshll.u32 %v3327, %v3334
        %v3337 = vshrl.u32 %v3319, %v3335
        %v3338 = vor.u32 %v3336, %v3337
        %v3339 = vsub.s32 4294967266, %v3334
        %v3340 = vadd.s32 %v3339, 127
        %v3341 = vshll.u32 %v3340, 23
        %v3342 = vor.u32 4788187, %v3341
        %v3343 = vand.u32 2147483647, %v3342
        %v3345 = vcvt.s32.f32 %v3338
        %v3346 = vmul.f32 %v3345, %v3343
        %v3347 = vxor.u32 %v3346, 2147483648
        %v3348 = vsel %vm3227, %v3347, %v3346
        %v3349 = vsub.s32 4, %v3325
        %v3350 = vsel %vm3227, %v3349, %v3325
        %v3351 = vsel %vm3226, %v423, %v3348
        %v3352 = vsel %vm3226, 0, %v3350
        %v3353 = vmul.f32 %v3351, %v3351
        %v3354 = vmul.f32 %v3353, -0.001358992
        %v3355 = vadd.f32 %v3354, 0.041655596
        %v3356 = vmul.f32 %v3353, %v3355
        %v3357 = vadd.f32 %v3356, -0.4999988
        %v3358 = vmul.f32 %v3353, %v3357
        %v3359 = vadd.f32 1.0, %v3358
        %v3360 = vmul.f32 %v3351, %v3351
        %v3361 = vmul.f32 %v3360, -0.00019511016
        %v3362 = vadd.f32 %v3361, 0.008332121
        %v3363 = vmul.f32 %v3360, %v3362
        %v3364 = vadd.f32 %v3363, -0.16666654
        %v3365 = vmul.f32 %v3360, %v3364
        %v3366 = vadd.f32 %v3365, 1.0
        %v3367 = vmul.f32 %v3366, %v3351
        %vm3368 = vweird.f32 %v423
        %v3369 = vand.u32 %v3352, 3
        %vm3370 = vcmp.lt.s32.totalorder %v3369, 2
        %vm3371 = vcmp.eq.s32.totalorder %v3369, 0
        %v3372 = vxor.u32 %v3367, 2147483648
        %v3373 = vsel %vm3371, %v3359, %v3372
        %vm3374 = vcmp.eq.s32.totalorder %v3369, 2
        %v3375 = vxor.u32 %v3359, 2147483648
        %v3376 = vsel %vm3374, %v3375, %v3367
        %v3377 = vsel %vm3370, %v3373, %v3376
        %v3378 = vsel %vm3368, nan, %v3377
        %v3379 = vand.u32 2147483647, %v424
        %vm3380 = vcmp.le.f32.partialorder %v3379, 0.7853982
        %vm3381 = vcmp.lt.s32.totalorder %v424, 0
        %v3382 = vand.u32 %v424, 2139095040
        %v3383 = vshrl.u32 %v3382, 23
        %v3384 = vsub.s32 %v3383, 127
        %v3385 = vand.u32 2147483647, %v424
        %v3386 = vand.u32 %v3385, 8388607
        %v3387 = vor.u32 %v3386, 8388608
        %v3388 = vsub.s32 0, %v3387
        %v3389 = vadd.s32 %v3384, 1
        %vm3390 = vcmp.gt.s32.totalorder %v3389, 0
        %v3391 = vsel %vm3390, %v3389, 0
        %v3392 = vshrl.u32 %v3391, 5
        %v3393 = vand.u32 %v3391, 31
        %v3394 = vsub.s32 32, %v3393
        %v3395 = vshrl.u32 683565275, %v3394
        %v3396 = vshll.u32 683565275, %v3393
        %v3397 = vshrl.u32 2475754826, %v3394
        %v3398 = vor.u32 %v3396, %v3397
        %v3399 = vshll.u32 2475754826, %v3393
        %v3400 = vshrl.u32 2131351028, %v3394
        %v3401 = vor.u32 %v3399, %v3400
        %v3402 = vshll.u32 2131351028, %v3393
        %v3403 = vshrl.u32 2102212464, %v3394
        %v3404 = vor.u32 %v3402, %v3403
        %v3405 = vshll.u32 2102212464, %v3393
        %v3406 = vshrl.u32 920167782, %v3394
        %v3407 = vor.u32 %v3405, %v3406
        %v3408 = vshll.u32 920167782, %v3393
        %v3409 = vshrl.u32 1326507024, %v3394
        %v3410 = vor.u32 %v3408, %v3409
        %vm3411 = vcmp.lt.s32.totalorder %v3392, 1
        %vm3412 = vcmp.lt.s32.totalorder %v3392, 2
        %vm3413 = vcmp.lt.s32.totalorder %v3392, 3
        %vm3414 = vcmp.lt.s32.totalorder %v3392, 4
        %v3415 = vsel %vm3411, %v3395, %v3398
        %v3416 = vsel %vm3414, %v3404, 2102212464
        %v3417 = vsel %vm3413, %v3401, %v3416
        %v3418 = vsel %vm3412, %v3415, %v3417
        %v3419 = vsel %vm3411, %v3398, %v3401
        %v3420 = vsel %vm3414, %v3407, 920167782
        %v3421 = vsel %vm3413, %v3404, %v3420
        %v3422 = vsel %vm3412, %v3419, %v3421
        %v3423 = vsel %vm3411, %v3401, %v3404
        %v3424 = vsel %vm3414, %v3410, 1326507024
        %v3425 = vsel %vm3413, %v3407, %v3424
        %v3426 = vsel %vm3412, %v3423, %v3425
        %v3427 = vshll.u32 %v3387, 8
        %v3428 = vand.u32 %v3427, 65535
        %v3429 = vshrl.u32 %v3427, 16
        %v3430 = vand.u32 %v3426, 65535
        %v3431 = vshrl.u32 %v3426, 16
        %v3432 = vmul.u32 %v3428, %v3430
        %v3433 = vmul.u32 %v3428, %v3431
        %v3434 = vmul.u32 %v3429, %v3430
        %v3435 = vmul.u32 %v3429, %v3431
        %v3436 = vshll.u32 %v3433, 16
        %v3437 = vshrl.u32 %v3433, 16
        %v3438 = vshll.u32 %v3434, 16
        %v3439 = vshrl.u32 %v3434, 16
        %vm3440 = vc.u32 %v3432, %v3436
        %v3441 = vsel %vm3440, 1, 0
        %v3442 = vadd.s32 %v3432, %v3436
        %v3443 = vadd.s32 %v3435, %v3441
        %vm3444 = vc.u32 %v3442, %v3438
        %v3445 = vsel %vm3444, 1, 0
        %v3446 = vadd.s32 %v3442, %v3438
        %v3447 = vadd.s32 %v3443, %v3445
        %v3448 = vadd.s32 %v3447, %v3437
        %v3449 = vadd.s32 %v3448, %v3439
        %v3450 = vand.u32 %v3427, 65535
        %v3451 = vshrl.u32 %v3427, 16
        %v3452 = vand.u32 %v3422, 65535
        %v3453 = vshrl.u32 %v3422, 16
        %v3454 = vmul.u32 %v3450, %v3452
        %v3455 = vmul.u32 %v3450, %v3453
        %v3456 = vmul.u32 %v3451, %v3452
        %v3457 = vmul.u32 %v3451, %v3453
        %v3458 = vshll.u32 %v3455, 16
        %v3459 = vshrl.u32 %v3455, 16
        %v3460 = vshll.u32 %v3456, 16
        %v3461 = vshrl.u32 %v3456, 16
        %vm3462 = vc.u32 %v3454, %v3458
        %v3463 = vsel %vm3462, 1, 0
        %v3464 = vadd.s32 %v3454, %v3458
        %v3465 = vadd.s32 %v3457, %v3463
        %vm3466 = vc.u32 %v3464, %v3460
        %v3467 = vsel %vm3466, 1, 0
        %v3468 = vadd.s32 %v3464, %v3460
        %v3469 = vadd.s32 %v3465, %v3467
        %v3470 = vadd.s32 %v3469, %v3459
        %v3471 = vadd.s32 %v3470, %v3461
        %v3472 = vmul.u32 %v3427, %v3418
        %v3473 = vadd.s32 %v3449, %v3468
        %vm3474 = vc.u32 %v3449, %v3468
        %v3475 = vadd.s32 %v3471, 1
        %v3476 = vsel %vm3474, %v3475, %v3471
        %v3477 = vadd.s32 %v3472, %v3476
        %v3478 = vadd.s32 %v3477, 536870912
        %v3479 = vshrl.u32 %v3478, 30
        %v3480 = vshll.u32 %v3479, 30
        %v3481 = vsub.s32 %v3477, %v3480
        %vm3482 = vcmp.lt.s32.totalorder %v3481, 0
        %v3483 = vsub.s32 0, %v3481
        %v3484 = vsel %vm3482, %v3483, %v3481
        %v3485 = vclz %v3484
        %v3486 = vsub.s32 %v3485, 2
        %vm3487 = vcmp.gt.s32.totalorder 0, %v3486
        %v3488 = vsel %vm3487, 0, %v3486
        %v3489 = vsub.s32 32, %v3488
        %v3490 = vshll.u32 %v3481, %v3488
        %v3491 = vshrl.u32 %v3473, %v3489
        %v3492 = vor.u32 %v3490, %v3491
        %v3493 = vsub.s32 4294967266, %v3488
        %v3494 = vadd.s32 %v3493, 127
        %v3495 = vshll.u32 %v3494, 23
        %v3496 = vor.u32 4788187, %v3495
        %v3497 = vand.u32 2147483647, %v3496
        %v3499 = vcvt.s32.f32 %v3492
        %v3500 = vmul.f32 %v3499, %v3497
        %v3501 = vxor.u32 %v3500, 2147483648
        %v3502 = vsel %vm3381, %v3501, %v3500
        %v3503 = vsub.s32 4, %v3479
        %v3504 = vsel %vm3381, %v3503, %v3479
        %v3505 = vsel %vm3380, %v424, %v3502
        %v3506 = vsel %vm3380, 0, %v3504
        %v3507 = vmul.f32 %v3505, %v3505
        %v3508 = vmul.f32 %v3507, -0.001358992
        %v3509 = vadd.f32 %v3508, 0.041655596
        %v3510 = vmul.f32 %v3507, %v3509
        %v3511 = vadd.f32 %v3510, -0.4999988
        %v3512 = vmul.f32 %v3507, %v3511
        %v3513 = vadd.f32 1.0, %v3512
        %v3514 = vmul.f32 %v3505, %v3505
        %v3515 = vmul.f32 %v3514, -0.00019511016
        %v3516 = vadd.f32 %v3515, 0.008332121
        %v3517 = vmul.f32 %v3514, %v3516
        %v3518 = vadd.f32 %v3517, -0.16666654
        %v3519 = vmul.f32 %v3514, %v3518
        %v3520 = vadd.f32 %v3519, 1.0
        %v3521 = vmul.f32 %v3520, %v3505
        %vm3522 = vweird.f32 %v424
        %v3523 = vand.u32 %v3506, 3
        %vm3524 = vcmp.lt.s32.totalorder %v3523, 2
        %vm3525 = vcmp.eq.s32.totalorder %v3523, 0
        %v3526 = vxor.u32 %v3521, 2147483648
        %v3527 = vsel %vm3525, %v3513, %v3526
        %vm3528 = vcmp.eq.s32.totalorder %v3523, 2
        %v3529 = vxor.u32 %v3513, 2147483648
        %v3530 = vsel %vm3528, %v3529, %v3521
        %v3531 = vsel %vm3524, %v3527, %v3530
        %v3532 = vsel %vm3522, nan, %v3531
        %v3533 = vand.u32 2147483647, %v425
        %vm3534 = vcmp.le.f32.partialorder %v3533, 0.7853982
        %vm3535 = vcmp.lt.s32.totalorder %v425, 0
        %v3536 = vand.u32 %v425, 2139095040
        %v3537 = vshrl.u32 %v3536, 23
        %v3538 = vsub.s32 %v3537, 127
        %v3539 = vand.u32 2147483647, %v425
        %v3540 = vand.u32 %v3539, 8388607
        %v3541 = vor.u32 %v3540, 8388608
        %v3542 = vsub.s32 0, %v3541
        %v3543 = vadd.s32 %v3538, 1
        %vm3544 = vcmp.gt.s32.totalorder %v3543, 0
        %v3545 = vsel %vm3544, %v3543, 0
        %v3546 = vshrl.u32 %v3545, 5
        %v3547 = vand.u32 %v3545, 31
        %v3548 = vsub.s32 32, %v3547
        %v3549 = vshrl.u32 683565275, %v3548
        %v3550 = vshll.u32 683565275, %v3547
        %v3551 = vshrl.u32 2475754826, %v3548
        %v3552 = vor.u32 %v3550, %v3551
        %v3553 = vshll.u32 2475754826, %v3547
        %v3554 = vshrl.u32 2131351028, %v3548
        %v3555 = vor.u32 %v3553, %v3554
        %v3556 = vshll.u32 2131351028, %v3547
        %v3557 = vshrl.u32 2102212464, %v3548
        %v3558 = vor.u32 %v3556, %v3557
        %v3559 = vshll.u32 2102212464, %v3547
        %v3560 = vshrl.u32 920167782, %v3548
        %v3561 = vor.u32 %v3559, %v3560
        %v3562 = vshll.u32 920167782, %v3547
        %v3563 = vshrl.u32 1326507024, %v3548
        %v3564 = vor.u32 %v3562, %v3563
        %vm3565 = vcmp.lt.s32.totalorder %v3546, 1
        %vm3566 = vcmp.lt.s32.totalorder %v3546, 2
        %vm3567 = vcmp.lt.s32.totalorder %v3546, 3
        %vm3568 = vcmp.lt.s32.totalorder %v3546, 4
        %v3569 = vsel %vm3565, %v3549, %v3552
        %v3570 = vsel %vm3568, %v3558, 2102212464
        %v3571 = vsel %vm3567, %v3555, %v3570
        %v3572 = vsel %vm3566, %v3569, %v3571
        %v3573 = vsel %vm3565, %v3552, %v3555
        %v3574 = vsel %vm3568, %v3561, 920167782
        %v3575 = vsel %vm3567, %v3558, %v3574
        %v3576 = vsel %vm3566, %v3573, %v3575
        %v3577 = vsel %vm3565, %v3555, %v3558
        %v3578 = vsel %vm3568, %v3564, 1326507024
        %v3579 = vsel %vm3567, %v3561, %v3578
        %v3580 = vsel %vm3566, %v3577, %v3579
        %v3581 = vshll.u32 %v3541, 8
        %v3582 = vand.u32 %v3581, 65535
        %v3583 = vshrl.u32 %v3581, 16
        %v3584 = vand.u32 %v3580, 65535
        %v3585 = vshrl.u32 %v3580, 16
        %v3586 = vmul.u32 %v3582, %v3584
        %v3587 = vmul.u32 %v3582, %v3585
        %v3588 = vmul.u32 %v3583, %v3584
        %v3589 = vmul.u32 %v3583, %v3585
        %v3590 = vshll.u32 %v3587, 16
        %v3591 = vshrl.u32 %v3587, 16
        %v3592 = vshll.u32 %v3588, 16
        %v3593 = vshrl.u32 %v3588, 16
        %vm3594 = vc.u32 %v3586, %v3590
        %v3595 = vsel %vm3594, 1, 0
        %v3596 = vadd.s32 %v3586, %v3590
        %v3597 = vadd.s32 %v3589, %v3595
        %vm3598 = vc.u32 %v3596, %v3592
        %v3599 = vsel %vm3598, 1, 0
        %v3600 = vadd.s32 %v3596, %v3592
        %v3601 = vadd.s32 %v3597, %v3599
        %v3602 = vadd.s32 %v3601, %v3591
        %v3603 = vadd.s32 %v3602, %v3593
        %v3604 = vand.u32 %v3581, 65535
        %v3605 = vshrl.u32 %v3581, 16
        %v3606 = vand.u32 %v3576, 65535
        %v3607 = vshrl.u32 %v3576, 16
        %v3608 = vmul.u32 %v3604, %v3606
        %v3609 = vmul.u32 %v3604, %v3607
        %v3610 = vmul.u32 %v3605, %v3606
        %v3611 = vmul.u32 %v3605, %v3607
        %v3612 = vshll.u32 %v3609, 16
        %v3613 = vshrl.u32 %v3609, 16
        %v3614 = vshll.u32 %v3610, 16
        %v3615 = vshrl.u32 %v3610, 16
        %vm3616 = vc.u32 %v3608, %v3612
        %v3617 = vsel %vm3616, 1, 0
        %v3618 = vadd.s32 %v3608, %v3612
        %v3619 = vadd.s32 %v3611, %v3617
        %vm3620 = vc.u32 %v3618, %v3614
        %v3621 = vsel %vm3620, 1, 0
        %v3622 = vadd.s32 %v3618, %v3614
        %v3623 = vadd.s32 %v3619, %v3621
        %v3624 = vadd.s32 %v3623, %v3613
        %v3625 = vadd.s32 %v3624, %v3615
        %v3626 = vmul.u32 %v3581, %v3572
        %v3627 = vadd.s32 %v3603, %v3622
        %vm3628 = vc.u32 %v3603, %v3622
        %v3629 = vadd.s32 %v3625, 1
        %v3630 = vsel %vm3628, %v3629, %v3625
        %v3631 = vadd.s32 %v3626, %v3630
        %v3632 = vadd.s32 %v3631, 536870912
        %v3633 = vshrl.u32 %v3632, 30
        %v3634 = vshll.u32 %v3633, 30
        %v3635 = vsub.s32 %v3631, %v3634
        %vm3636 = vcmp.lt.s32.totalorder %v3635, 0
        %v3637 = vsub.s32 0, %v3635
        %v3638 = vsel %vm3636, %v3637, %v3635
        %v3639 = vclz %v3638
        %v3640 = vsub.s32 %v3639, 2
        %vm3641 = vcmp.gt.s32.totalorder 0, %v3640
        %v3642 = vsel %vm3641, 0, %v3640
        %v3643 = vsub.s32 32, %v3642
        %v3644 = vshll.u32 %v3635, %v3642
        %v3645 = vshrl.u32 %v3627, %v3643
        %v3646 = vor.u32 %v3644, %v3645
        %v3647 = vsub.s32 4294967266, %v3642
        %v3648 = vadd.s32 %v3647, 127
        %v3649 = vshll.u32 %v3648, 23
        %v3650 = vor.u32 4788187, %v3649
        %v3651 = vand.u32 2147483647, %v3650
        %v3653 = vcvt.s32.f32 %v3646
        %v3654 = vmul.f32 %v3653, %v3651
        %v3655 = vxor.u32 %v3654, 2147483648
        %v3656 = vsel %vm3535, %v3655, %v3654
        %v3657 = vsub.s32 4, %v3633
        %v3658 = vsel %vm3535, %v3657, %v3633
        %v3659 = vsel %vm3534, %v425, %v3656
        %v3660 = vsel %vm3534, 0, %v3658
        %v3661 = vmul.f32 %v3659, %v3659
        %v3662 = vmul.f32 %v3661, -0.001358992
        %v3663 = vadd.f32 %v3662, 0.041655596
        %v3664 = vmul.f32 %v3661, %v3663
        %v3665 = vadd.f32 %v3664, -0.4999988
        %v3666 = vmul.f32 %v3661, %v3665
        %v3667 = vadd.f32 1.0, %v3666
        %v3668 = vmul.f32 %v3659, %v3659
        %v3669 = vmul.f32 %v3668, -0.00019511016
        %v3670 = vadd.f32 %v3669, 0.008332121
        %v3671 = vmul.f32 %v3668, %v3670
        %v3672 = vadd.f32 %v3671, -0.16666654
        %v3673 = vmul.f32 %v3668, %v3672
        %v3674 = vadd.f32 %v3673, 1.0
        %v3675 = vmul.f32 %v3674, %v3659
        %vm3676 = vweird.f32 %v425
        %v3677 = vand.u32 %v3660, 3
        %vm3678 = vcmp.lt.s32.totalorder %v3677, 2
        %vm3679 = vcmp.eq.s32.totalorder %v3677, 0
        %v3680 = vxor.u32 %v3675, 2147483648
        %v3681 = vsel %vm3679, %v3667, %v3680
        %vm3682 = vcmp.eq.s32.totalorder %v3677, 2
        %v3683 = vxor.u32 %v3667, 2147483648
        %v3684 = vsel %vm3682, %v3683, %v3675
        %v3685 = vsel %vm3678, %v3681, %v3684
        %v3686 = vsel %vm3676, nan, %v3685
        %v3687 = vand.u32 2147483647, %v426
        %vm3688 = vcmp.le.f32.partialorder %v3687, 0.7853982
        %vm3689 = vcmp.lt.s32.totalorder %v426, 0
        %v3690 = vand.u32 %v426, 2139095040
        %v3691 = vshrl.u32 %v3690, 23
        %v3692 = vsub.s32 %v3691, 127
        %v3693 = vand.u32 2147483647, %v426
        %v3694 = vand.u32 %v3693, 8388607
        %v3695 = vor.u32 %v3694, 8388608
        %v3696 = vsub.s32 0, %v3695
        %v3697 = vadd.s32 %v3692, 1
        %vm3698 = vcmp.gt.s32.totalorder %v3697, 0
        %v3699 = vsel %vm3698, %v3697, 0
        %v3700 = vshrl.u32 %v3699, 5
        %v3701 = vand.u32 %v3699, 31
        %v3702 = vsub.s32 32, %v3701
        %v3703 = vshrl.u32 683565275, %v3702
        %v3704 = vshll.u32 683565275, %v3701
        %v3705 = vshrl.u32 2475754826, %v3702
        %v3706 = vor.u32 %v3704, %v3705
        %v3707 = vshll.u32 2475754826, %v3701
        %v3708 = vshrl.u32 2131351028, %v3702
        %v3709 = vor.u32 %v3707, %v3708
        %v3710 = vshll.u32 2131351028, %v3701
        %v3711 = vshrl.u32 2102212464, %v3702
        %v3712 = vor.u32 %v3710, %v3711
        %v3713 = vshll.u32 2102212464, %v3701
        %v3714 = vshrl.u32 920167782, %v3702
        %v3715 = vor.u32 %v3713, %v3714
        %v3716 = vshll.u32 920167782, %v3701
        %v3717 = vshrl.u32 1326507024, %v3702
        %v3718 = vor.u32 %v3716, %v3717
        %vm3719 = vcmp.lt.s32.totalorder %v3700, 1
        %vm3720 = vcmp.lt.s32.totalorder %v3700, 2
        %vm3721 = vcmp.lt.s32.totalorder %v3700, 3
        %vm3722 = vcmp.lt.s32.totalorder %v3700, 4
        %v3723 = vsel %vm3719, %v3703, %v3706
        %v3724 = vsel %vm3722, %v3712, 2102212464
        %v3725 = vsel %vm3721, %v3709, %v3724
        %v3726 = vsel %vm3720, %v3723, %v3725
        %v3727 = vsel %vm3719, %v3706, %v3709
        %v3728 = vsel %vm3722, %v3715, 920167782
        %v3729 = vsel %vm3721, %v3712, %v3728
        %v3730 = vsel %vm3720, %v3727, %v3729
        %v3731 = vsel %vm3719, %v3709, %v3712
        %v3732 = vsel %vm3722, %v3718, 1326507024
        %v3733 = vsel %vm3721, %v3715, %v3732
        %v3734 = vsel %vm3720, %v3731, %v3733
        %v3735 = vshll.u32 %v3695, 8
        %v3736 = vand.u32 %v3735, 65535
        %v3737 = vshrl.u32 %v3735, 16
        %v3738 = vand.u32 %v3734, 65535
        %v3739 = vshrl.u32 %v3734, 16
        %v3740 = vmul.u32 %v3736, %v3738
        %v3741 = vmul.u32 %v3736, %v3739
        %v3742 = vmul.u32 %v3737, %v3738
        %v3743 = vmul.u32 %v3737, %v3739
        %v3744 = vshll.u32 %v3741, 16
        %v3745 = vshrl.u32 %v3741, 16
        %v3746 = vshll.u32 %v3742, 16
        %v3747 = vshrl.u32 %v3742, 16
        %vm3748 = vc.u32 %v3740, %v3744
        %v3749 = vsel %vm3748, 1, 0
        %v3750 = vadd.s32 %v3740, %v3744
        %v3751 = vadd.s32 %v3743, %v3749
        %vm3752 = vc.u32 %v3750, %v3746
        %v3753 = vsel %vm3752, 1, 0
        %v3754 = vadd.s32 %v3750, %v3746
        %v3755 = vadd.s32 %v3751, %v3753
        %v3756 = vadd.s32 %v3755, %v3745
        %v3757 = vadd.s32 %v3756, %v3747
        %v3758 = vand.u32 %v3735, 65535
        %v3759 = vshrl.u32 %v3735, 16
        %v3760 = vand.u32 %v3730, 65535
        %v3761 = vshrl.u32 %v3730, 16
        %v3762 = vmul.u32 %v3758, %v3760
        %v3763 = vmul.u32 %v3758, %v3761
        %v3764 = vmul.u32 %v3759, %v3760
        %v3765 = vmul.u32 %v3759, %v3761
        %v3766 = vshll.u32 %v3763, 16
        %v3767 = vshrl.u32 %v3763, 16
        %v3768 = vshll.u32 %v3764, 16
        %v3769 = vshrl.u32 %v3764, 16
        %vm3770 = vc.u32 %v3762, %v3766
        %v3771 = vsel %vm3770, 1, 0
        %v3772 = vadd.s32 %v3762, %v3766
        %v3773 = vadd.s32 %v3765, %v3771
        %vm3774 = vc.u32 %v3772, %v3768
        %v3775 = vsel %vm3774, 1, 0
        %v3776 = vadd.s32 %v3772, %v3768
        %v3777 = vadd.s32 %v3773, %v3775
        %v3778 = vadd.s32 %v3777, %v3767
        %v3779 = vadd.s32 %v3778, %v3769
        %v3780 = vmul.u32 %v3735, %v3726
        %v3781 = vadd.s32 %v3757, %v3776
        %vm3782 = vc.u32 %v3757, %v3776
        %v3783 = vadd.s32 %v3779, 1
        %v3784 = vsel %vm3782, %v3783, %v3779
        %v3785 = vadd.s32 %v3780, %v3784
        %v3786 = vadd.s32 %v3785, 536870912
        %v3787 = vshrl.u32 %v3786, 30
        %v3788 = vshll.u32 %v3787, 30
        %v3789 = vsub.s32 %v3785, %v3788
        %vm3790 = vcmp.lt.s32.totalorder %v3789, 0
        %v3791 = vsub.s32 0, %v3789
        %v3792 = vsel %vm3790, %v3791, %v3789
        %v3793 = vclz %v3792
        %v3794 = vsub.s32 %v3793, 2
        %vm3795 = vcmp.gt.s32.totalorder 0, %v3794
        %v3796 = vsel %vm3795, 0, %v3794
        %v3797 = vsub.s32 32, %v3796
        %v3798 = vshll.u32 %v3789, %v3796
        %v3799 = vshrl.u32 %v3781, %v3797
        %v3800 = vor.u32 %v3798, %v3799
        %v3801 = vsub.s32 4294967266, %v3796
        %v3802 = vadd.s32 %v3801, 127
        %v3803 = vshll.u32 %v3802, 23
        %v3804 = vor.u32 4788187, %v3803
        %v3805 = vand.u32 2147483647, %v3804
        %v3807 = vcvt.s32.f32 %v3800
        %v3808 = vmul.f32 %v3807, %v3805
        %v3809 = vxor.u32 %v3808, 2147483648
        %v3810 = vsel %vm3689, %v3809, %v3808
        %v3811 = vsub.s32 4, %v3787
        %v3812 = vsel %vm3689, %v3811, %v3787
        %v3813 = vsel %vm3688, %v426, %v3810
        %v3814 = vsel %vm3688, 0, %v3812
        %v3815 = vmul.f32 %v3813, %v3813
        %v3816 = vmul.f32 %v3815, -0.001358992
        %v3817 = vadd.f32 %v3816, 0.041655596
        %v3818 = vmul.f32 %v3815, %v3817
        %v3819 = vadd.f32 %v3818, -0.4999988
        %v3820 = vmul.f32 %v3815, %v3819
        %v3821 = vadd.f32 1.0, %v3820
        %v3822 = vmul.f32 %v3813, %v3813
        %v3823 = vmul.f32 %v3822, -0.00019511016
        %v3824 = vadd.f32 %v3823, 0.008332121
        %v3825 = vmul.f32 %v3822, %v3824
        %v3826 = vadd.f32 %v3825, -0.16666654
        %v3827 = vmul.f32 %v3822, %v3826
        %v3828 = vadd.f32 %v3827, 1.0
        %v3829 = vmul.f32 %v3828, %v3813
        %vm3830 = vweird.f32 %v426
        %v3831 = vand.u32 %v3814, 3
        %vm3832 = vcmp.lt.s32.totalorder %v3831, 2
        %vm3833 = vcmp.eq.s32.totalorder %v3831, 0
        %v3834 = vxor.u32 %v3829, 2147483648
        %v3835 = vsel %vm3833, %v3821, %v3834
        %vm3836 = vcmp.eq.s32.totalorder %v3831, 2
        %v3837 = vxor.u32 %v3821, 2147483648
        %v3838 = vsel %vm3836, %v3837, %v3829
        %v3839 = vsel %vm3832, %v3835, %v3838
        %v3840 = vsel %vm3830, nan, %v3839
        %v3841 = vand.u32 2147483647, %v427
        %vm3842 = vcmp.le.f32.partialorder %v3841, 0.7853982
        %vm3843 = vcmp.lt.s32.totalorder %v427, 0
        %v3844 = vand.u32 %v427, 2139095040
        %v3845 = vshrl.u32 %v3844, 23
        %v3846 = vsub.s32 %v3845, 127
        %v3847 = vand.u32 2147483647, %v427
        %v3848 = vand.u32 %v3847, 8388607
        %v3849 = vor.u32 %v3848, 8388608
        %v3850 = vsub.s32 0, %v3849
        %v3851 = vadd.s32 %v3846, 1
        %vm3852 = vcmp.gt.s32.totalorder %v3851, 0
        %v3853 = vsel %vm3852, %v3851, 0
        %v3854 = vshrl.u32 %v3853, 5
        %v3855 = vand.u32 %v3853, 31
        %v3856 = vsub.s32 32, %v3855
        %v3857 = vshrl.u32 683565275, %v3856
        %v3858 = vshll.u32 683565275, %v3855
        %v3859 = vshrl.u32 2475754826, %v3856
        %v3860 = vor.u32 %v3858, %v3859
        %v3861 = vshll.u32 2475754826, %v3855
        %v3862 = vshrl.u32 2131351028, %v3856
        %v3863 = vor.u32 %v3861, %v3862
        %v3864 = vshll.u32 2131351028, %v3855
        %v3865 = vshrl.u32 2102212464, %v3856
        %v3866 = vor.u32 %v3864, %v3865
        %v3867 = vshll.u32 2102212464, %v3855
        %v3868 = vshrl.u32 920167782, %v3856
        %v3869 = vor.u32 %v3867, %v3868
        %v3870 = vshll.u32 920167782, %v3855
        %v3871 = vshrl.u32 1326507024, %v3856
        %v3872 = vor.u32 %v3870, %v3871
        %vm3873 = vcmp.lt.s32.totalorder %v3854, 1
        %vm3874 = vcmp.lt.s32.totalorder %v3854, 2
        %vm3875 = vcmp.lt.s32.totalorder %v3854, 3
        %vm3876 = vcmp.lt.s32.totalorder %v3854, 4
        %v3877 = vsel %vm3873, %v3857, %v3860
        %v3878 = vsel %vm3876, %v3866, 2102212464
        %v3879 = vsel %vm3875, %v3863, %v3878
        %v3880 = vsel %vm3874, %v3877, %v3879
        %v3881 = vsel %vm3873, %v3860, %v3863
        %v3882 = vsel %vm3876, %v3869, 920167782
        %v3883 = vsel %vm3875, %v3866, %v3882
        %v3884 = vsel %vm3874, %v3881, %v3883
        %v3885 = vsel %vm3873, %v3863, %v3866
        %v3886 = vsel %vm3876, %v3872, 1326507024
        %v3887 = vsel %vm3875, %v3869, %v3886
        %v3888 = vsel %vm3874, %v3885, %v3887
        %v3889 = vshll.u32 %v3849, 8
        %v3890 = vand.u32 %v3889, 65535
        %v3891 = vshrl.u32 %v3889, 16
        %v3892 = vand.u32 %v3888, 65535
        %v3893 = vshrl.u32 %v3888, 16
        %v3894 = vmul.u32 %v3890, %v3892
        %v3895 = vmul.u32 %v3890, %v3893
        %v3896 = vmul.u32 %v3891, %v3892
        %v3897 = vmul.u32 %v3891, %v3893
        %v3898 = vshll.u32 %v3895, 16
        %v3899 = vshrl.u32 %v3895, 16
        %v3900 = vshll.u32 %v3896, 16
        %v3901 = vshrl.u32 %v3896, 16
        %vm3902 = vc.u32 %v3894, %v3898
        %v3903 = vsel %vm3902, 1, 0
        %v3904 = vadd.s32 %v3894, %v3898
        %v3905 = vadd.s32 %v3897, %v3903
        %vm3906 = vc.u32 %v3904, %v3900
        %v3907 = vsel %vm3906, 1, 0
        %v3908 = vadd.s32 %v3904, %v3900
        %v3909 = vadd.s32 %v3905, %v3907
        %v3910 = vadd.s32 %v3909, %v3899
        %v3911 = vadd.s32 %v3910, %v3901
        %v3912 = vand.u32 %v3889, 65535
        %v3913 = vshrl.u32 %v3889, 16
        %v3914 = vand.u32 %v3884, 65535
        %v3915 = vshrl.u32 %v3884, 16
        %v3916 = vmul.u32 %v3912, %v3914
        %v3917 = vmul.u32 %v3912, %v3915
        %v3918 = vmul.u32 %v3913, %v3914
        %v3919 = vmul.u32 %v3913, %v3915
        %v3920 = vshll.u32 %v3917, 16
        %v3921 = vshrl.u32 %v3917, 16
        %v3922 = vshll.u32 %v3918, 16
        %v3923 = vshrl.u32 %v3918, 16
        %vm3924 = vc.u32 %v3916, %v3920
        %v3925 = vsel %vm3924, 1, 0
        %v3926 = vadd.s32 %v3916, %v3920
        %v3927 = vadd.s32 %v3919, %v3925
        %vm3928 = vc.u32 %v3926, %v3922
        %v3929 = vsel %vm3928, 1, 0
        %v3930 = vadd.s32 %v3926, %v3922
        %v3931 = vadd.s32 %v3927, %v3929
        %v3932 = vadd.s32 %v3931, %v3921
        %v3933 = vadd.s32 %v3932, %v3923
        %v3934 = vmul.u32 %v3889, %v3880
        %v3935 = vadd.s32 %v3911, %v3930
        %vm3936 = vc.u32 %v3911, %v3930
        %v3937 = vadd.s32 %v3933, 1
        %v3938 = vsel %vm3936, %v3937, %v3933
        %v3939 = vadd.s32 %v3934, %v3938
        %v3940 = vadd.s32 %v3939, 536870912
        %v3941 = vshrl.u32 %v3940, 30
        %v3942 = vshll.u32 %v3941, 30
        %v3943 = vsub.s32 %v3939, %v3942
        %vm3944 = vcmp.lt.s32.totalorder %v3943, 0
        %v3945 = vsub.s32 0, %v3943
        %v3946 = vsel %vm3944, %v3945, %v3943
        %v3947 = vclz %v3946
        %v3948 = vsub.s32 %v3947, 2
        %vm3949 = vcmp.gt.s32.totalorder 0, %v3948
        %v3950 = vsel %vm3949, 0, %v3948
        %v3951 = vsub.s32 32, %v3950
        %v3952 = vshll.u32 %v3943, %v3950
        %v3953 = vshrl.u32 %v3935, %v3951
        %v3954 = vor.u32 %v3952, %v3953
        %v3955 = vsub.s32 4294967266, %v3950
        %v3956 = vadd.s32 %v3955, 127
        %v3957 = vshll.u32 %v3956, 23
        %v3958 = vor.u32 4788187, %v3957
        %v3959 = vand.u32 2147483647, %v3958
        %v3961 = vcvt.s32.f32 %v3954
        %v3962 = vmul.f32 %v3961, %v3959
        %v3963 = vxor.u32 %v3962, 2147483648
        %v3964 = vsel %vm3843, %v3963, %v3962
        %v3965 = vsub.s32 4, %v3941
        %v3966 = vsel %vm3843, %v3965, %v3941
        %v3967 = vsel %vm3842, %v427, %v3964
        %v3968 = vsel %vm3842, 0, %v3966
        %v3969 = vmul.f32 %v3967, %v3967
        %v3970 = vmul.f32 %v3969, -0.001358992
        %v3971 = vadd.f32 %v3970, 0.041655596
        %v3972 = vmul.f32 %v3969, %v3971
        %v3973 = vadd.f32 %v3972, -0.4999988
        %v3974 = vmul.f32 %v3969, %v3973
        %v3975 = vadd.f32 1.0, %v3974
        %v3976 = vmul.f32 %v3967, %v3967
        %v3977 = vmul.f32 %v3976, -0.00019511016
        %v3978 = vadd.f32 %v3977, 0.008332121
        %v3979 = vmul.f32 %v3976, %v3978
        %v3980 = vadd.f32 %v3979, -0.16666654
        %v3981 = vmul.f32 %v3976, %v3980
        %v3982 = vadd.f32 %v3981, 1.0
        %v3983 = vmul.f32 %v3982, %v3967
        %vm3984 = vweird.f32 %v427
        %v3985 = vand.u32 %v3968, 3
        %vm3986 = vcmp.lt.s32.totalorder %v3985, 2
        %vm3987 = vcmp.eq.s32.totalorder %v3985, 0
        %v3988 = vxor.u32 %v3983, 2147483648
        %v3989 = vsel %vm3987, %v3975, %v3988
        %vm3990 = vcmp.eq.s32.totalorder %v3985, 2
        %v3991 = vxor.u32 %v3975, 2147483648
        %v3992 = vsel %vm3990, %v3991, %v3983
        %v3993 = vsel %vm3986, %v3989, %v3992
        %v3994 = vsel %vm3984, nan, %v3993
        %v3995 = vand.u32 2147483647, %v428
        %vm3996 = vcmp.le.f32.partialorder %v3995, 0.7853982
        %vm3997 = vcmp.lt.s32.totalorder %v428, 0
        %v3998 = vand.u32 %v428, 2139095040
        %v3999 = vshrl.u32 %v3998, 23
        %v4000 = vsub.s32 %v3999, 127
        %v4001 = vand.u32 2147483647, %v428
        %v4002 = vand.u32 %v4001, 8388607
        %v4003 = vor.u32 %v4002, 8388608
        %v4004 = vsub.s32 0, %v4003
        %v4005 = vadd.s32 %v4000, 1
        %vm4006 = vcmp.gt.s32.totalorder %v4005, 0
        %v4007 = vsel %vm4006, %v4005, 0
        %v4008 = vshrl.u32 %v4007, 5
        %v4009 = vand.u32 %v4007, 31
        %v4010 = vsub.s32 32, %v4009
        %v4011 = vshrl.u32 683565275, %v4010
        %v4012 = vshll.u32 683565275, %v4009
        %v4013 = vshrl.u32 2475754826, %v4010
        %v4014 = vor.u32 %v4012, %v4013
        %v4015 = vshll.u32 2475754826, %v4009
        %v4016 = vshrl.u32 2131351028, %v4010
        %v4017 = vor.u32 %v4015, %v4016
        %v4018 = vshll.u32 2131351028, %v4009
        %v4019 = vshrl.u32 2102212464, %v4010
        %v4020 = vor.u32 %v4018, %v4019
        %v4021 = vshll.u32 2102212464, %v4009
        %v4022 = vshrl.u32 920167782, %v4010
        %v4023 = vor.u32 %v4021, %v4022
        %v4024 = vshll.u32 920167782, %v4009
        %v4025 = vshrl.u32 1326507024, %v4010
        %v4026 = vor.u32 %v4024, %v4025
        %vm4027 = vcmp.lt.s32.totalorder %v4008, 1
        %vm4028 = vcmp.lt.s32.totalorder %v4008, 2
        %vm4029 = vcmp.lt.s32.totalorder %v4008, 3
        %vm4030 = vcmp.lt.s32.totalorder %v4008, 4
        %v4031 = vsel %vm4027, %v4011, %v4014
        %v4032 = vsel %vm4030, %v4020, 2102212464
        %v4033 = vsel %vm4029, %v4017, %v4032
        %v4034 = vsel %vm4028, %v4031, %v4033
        %v4035 = vsel %vm4027, %v4014, %v4017
        %v4036 = vsel %vm4030, %v4023, 920167782
        %v4037 = vsel %vm4029, %v4020, %v4036
        %v4038 = vsel %vm4028, %v4035, %v4037
        %v4039 = vsel %vm4027, %v4017, %v4020
        %v4040 = vsel %vm4030, %v4026, 1326507024
        %v4041 = vsel %vm4029, %v4023, %v4040
        %v4042 = vsel %vm4028, %v4039, %v4041
        %v4043 = vshll.u32 %v4003, 8
        %v4044 = vand.u32 %v4043, 65535
        %v4045 = vshrl.u32 %v4043, 16
        %v4046 = vand.u32 %v4042, 65535
        %v4047 = vshrl.u32 %v4042, 16
        %v4048 = vmul.u32 %v4044, %v4046
        %v4049 = vmul.u32 %v4044, %v4047
        %v4050 = vmul.u32 %v4045, %v4046
        %v4051 = vmul.u32 %v4045, %v4047
        %v4052 = vshll.u32 %v4049, 16
        %v4053 = vshrl.u32 %v4049, 16
        %v4054 = vshll.u32 %v4050, 16
        %v4055 = vshrl.u32 %v4050, 16
        %vm4056 = vc.u32 %v4048, %v4052
        %v4057 = vsel %vm4056, 1, 0
        %v4058 = vadd.s32 %v4048, %v4052
        %v4059 = vadd.s32 %v4051, %v4057
        %vm4060 = vc.u32 %v4058, %v4054
        %v4061 = vsel %vm4060, 1, 0
        %v4062 = vadd.s32 %v4058, %v4054
        %v4063 = vadd.s32 %v4059, %v4061
        %v4064 = vadd.s32 %v4063, %v4053
        %v4065 = vadd.s32 %v4064, %v4055
        %v4066 = vand.u32 %v4043, 65535
        %v4067 = vshrl.u32 %v4043, 16
        %v4068 = vand.u32 %v4038, 65535
        %v4069 = vshrl.u32 %v4038, 16
        %v4070 = vmul.u32 %v4066, %v4068
        %v4071 = vmul.u32 %v4066, %v4069
        %v4072 = vmul.u32 %v4067, %v4068
        %v4073 = vmul.u32 %v4067, %v4069
        %v4074 = vshll.u32 %v4071, 16
        %v4075 = vshrl.u32 %v4071, 16
        %v4076 = vshll.u32 %v4072, 16
        %v4077 = vshrl.u32 %v4072, 16
        %vm4078 = vc.u32 %v4070, %v4074
        %v4079 = vsel %vm4078, 1, 0
        %v4080 = vadd.s32 %v4070, %v4074
        %v4081 = vadd.s32 %v4073, %v4079
        %vm4082 = vc.u32 %v4080, %v4076
        %v4083 = vsel %vm4082, 1, 0
        %v4084 = vadd.s32 %v4080, %v4076
        %v4085 = vadd.s32 %v4081, %v4083
        %v4086 = vadd.s32 %v4085, %v4075
        %v4087 = vadd.s32 %v4086, %v4077
        %v4088 = vmul.u32 %v4043, %v4034
        %v4089 = vadd.s32 %v4065, %v4084
        %vm4090 = vc.u32 %v4065, %v4084
        %v4091 = vadd.s32 %v4087, 1
        %v4092 = vsel %vm4090, %v4091, %v4087
        %v4093 = vadd.s32 %v4088, %v4092
        %v4094 = vadd.s32 %v4093, 536870912
        %v4095 = vshrl.u32 %v4094, 30
        %v4096 = vshll.u32 %v4095, 30
        %v4097 = vsub.s32 %v4093, %v4096
        %vm4098 = vcmp.lt.s32.totalorder %v4097, 0
        %v4099 = vsub.s32 0, %v4097
        %v4100 = vsel %vm4098, %v4099, %v4097
        %v4101 = vclz %v4100
        %v4102 = vsub.s32 %v4101, 2
        %vm4103 = vcmp.gt.s32.totalorder 0, %v4102
        %v4104 = vsel %vm4103, 0, %v4102
        %v4105 = vsub.s32 32, %v4104
        %v4106 = vshll.u32 %v4097, %v4104
        %v4107 = vshrl.u32 %v4089, %v4105
        %v4108 = vor.u32 %v4106, %v4107
        %v4109 = vsub.s32 4294967266, %v4104
        %v4110 = vadd.s32 %v4109, 127
        %v4111 = vshll.u32 %v4110, 23
        %v4112 = vor.u32 4788187, %v4111
        %v4113 = vand.u32 2147483647, %v4112
        %v4115 = vcvt.s32.f32 %v4108
        %v4116 = vmul.f32 %v4115, %v4113
        %v4117 = vxor.u32 %v4116, 2147483648
        %v4118 = vsel %vm3997, %v4117, %v4116
        %v4119 = vsub.s32 4, %v4095
        %v4120 = vsel %vm3997, %v4119, %v4095
        %v4121 = vsel %vm3996, %v428, %v4118
        %v4122 = vsel %vm3996, 0, %v4120
        %v4123 = vmul.f32 %v4121, %v4121
        %v4124 = vmul.f32 %v4123, -0.001358992
        %v4125 = vadd.f32 %v4124, 0.041655596
        %v4126 = vmul.f32 %v4123, %v4125
        %v4127 = vadd.f32 %v4126, -0.4999988
        %v4128 = vmul.f32 %v4123, %v4127
        %v4129 = vadd.f32 1.0, %v4128
        %v4130 = vmul.f32 %v4121, %v4121
        %v4131 = vmul.f32 %v4130, -0.00019511016
        %v4132 = vadd.f32 %v4131, 0.008332121
        %v4133 = vmul.f32 %v4130, %v4132
        %v4134 = vadd.f32 %v4133, -0.16666654
        %v4135 = vmul.f32 %v4130, %v4134
        %v4136 = vadd.f32 %v4135, 1.0
        %v4137 = vmul.f32 %v4136, %v4121
        %vm4138 = vweird.f32 %v428
        %v4139 = vand.u32 %v4122, 3
        %vm4140 = vcmp.lt.s32.totalorder %v4139, 2
        %vm4141 = vcmp.eq.s32.totalorder %v4139, 0
        %v4142 = vxor.u32 %v4137, 2147483648
        %v4143 = vsel %vm4141, %v4129, %v4142
        %vm4144 = vcmp.eq.s32.totalorder %v4139, 2
        %v4145 = vxor.u32 %v4129, 2147483648
        %v4146 = vsel %vm4144, %v4145, %v4137
        %v4147 = vsel %vm4140, %v4143, %v4146
        %v4148 = vsel %vm4138, nan, %v4147
        %v4149 = vand.u32 2147483647, %v429
        %vm4150 = vcmp.le.f32.partialorder %v4149, 0.7853982
        %vm4151 = vcmp.lt.s32.totalorder %v429, 0
        %v4152 = vand.u32 %v429, 2139095040
        %v4153 = vshrl.u32 %v4152, 23
        %v4154 = vsub.s32 %v4153, 127
        %v4155 = vand.u32 2147483647, %v429
        %v4156 = vand.u32 %v4155, 8388607
        %v4157 = vor.u32 %v4156, 8388608
        %v4158 = vsub.s32 0, %v4157
        %v4159 = vadd.s32 %v4154, 1
        %vm4160 = vcmp.gt.s32.totalorder %v4159, 0
        %v4161 = vsel %vm4160, %v4159, 0
        %v4162 = vshrl.u32 %v4161, 5
        %v4163 = vand.u32 %v4161, 31
        %v4164 = vsub.s32 32, %v4163
        %v4165 = vshrl.u32 683565275, %v4164
        %v4166 = vshll.u32 683565275, %v4163
        %v4167 = vshrl.u32 2475754826, %v4164
        %v4168 = vor.u32 %v4166, %v4167
        %v4169 = vshll.u32 2475754826, %v4163
        %v4170 = vshrl.u32 2131351028, %v4164
        %v4171 = vor.u32 %v4169, %v4170
        %v4172 = vshll.u32 2131351028, %v4163
        %v4173 = vshrl.u32 2102212464, %v4164
        %v4174 = vor.u32 %v4172, %v4173
        %v4175 = vshll.u32 2102212464, %v4163
        %v4176 = vshrl.u32 920167782, %v4164
        %v4177 = vor.u32 %v4175, %v4176
        %v4178 = vshll.u32 920167782, %v4163
        %v4179 = vshrl.u32 1326507024, %v4164
        %v4180 = vor.u32 %v4178, %v4179
        %vm4181 = vcmp.lt.s32.totalorder %v4162, 1
        %vm4182 = vcmp.lt.s32.totalorder %v4162, 2
        %vm4183 = vcmp.lt.s32.totalorder %v4162, 3
        %vm4184 = vcmp.lt.s32.totalorder %v4162, 4
        %v4185 = vsel %vm4181, %v4165, %v4168
        %v4186 = vsel %vm4184, %v4174, 2102212464
        %v4187 = vsel %vm4183, %v4171, %v4186
        %v4188 = vsel %vm4182, %v4185, %v4187
        %v4189 = vsel %vm4181, %v4168, %v4171
        %v4190 = vsel %vm4184, %v4177, 920167782
        %v4191 = vsel %vm4183, %v4174, %v4190
        %v4192 = vsel %vm4182, %v4189, %v4191
        %v4193 = vsel %vm4181, %v4171, %v4174
        %v4194 = vsel %vm4184, %v4180, 1326507024
        %v4195 = vsel %vm4183, %v4177, %v4194
        %v4196 = vsel %vm4182, %v4193, %v4195
        %v4197 = vshll.u32 %v4157, 8
        %v4198 = vand.u32 %v4197, 65535
        %v4199 = vshrl.u32 %v4197, 16
        %v4200 = vand.u32 %v4196, 65535
        %v4201 = vshrl.u32 %v4196, 16
        %v4202 = vmul.u32 %v4198, %v4200
        %v4203 = vmul.u32 %v4198, %v4201
        %v4204 = vmul.u32 %v4199, %v4200
        %v4205 = vmul.u32 %v4199, %v4201
        %v4206 = vshll.u32 %v4203, 16
        %v4207 = vshrl.u32 %v4203, 16
        %v4208 = vshll.u32 %v4204, 16
        %v4209 = vshrl.u32 %v4204, 16
        %vm4210 = vc.u32 %v4202, %v4206
        %v4211 = vsel %vm4210, 1, 0
        %v4212 = vadd.s32 %v4202, %v4206
        %v4213 = vadd.s32 %v4205, %v4211
        %vm4214 = vc.u32 %v4212, %v4208
        %v4215 = vsel %vm4214, 1, 0
        %v4216 = vadd.s32 %v4212, %v4208
        %v4217 = vadd.s32 %v4213, %v4215
        %v4218 = vadd.s32 %v4217, %v4207
        %v4219 = vadd.s32 %v4218, %v4209
        %v4220 = vand.u32 %v4197, 65535
        %v4221 = vshrl.u32 %v4197, 16
        %v4222 = vand.u32 %v4192, 65535
        %v4223 = vshrl.u32 %v4192, 16
        %v4224 = vmul.u32 %v4220, %v4222
        %v4225 = vmul.u32 %v4220, %v4223
        %v4226 = vmul.u32 %v4221, %v4222
        %v4227 = vmul.u32 %v4221, %v4223
        %v4228 = vshll.u32 %v4225, 16
        %v4229 = vshrl.u32 %v4225, 16
        %v4230 = vshll.u32 %v4226, 16
        %v4231 = vshrl.u32 %v4226, 16
        %vm4232 = vc.u32 %v4224, %v4228
        %v4233 = vsel %vm4232, 1, 0
        %v4234 = vadd.s32 %v4224, %v4228
        %v4235 = vadd.s32 %v4227, %v4233
        %vm4236 = vc.u32 %v4234, %v4230
        %v4237 = vsel %vm4236, 1, 0
        %v4238 = vadd.s32 %v4234, %v4230
        %v4239 = vadd.s32 %v4235, %v4237
        %v4240 = vadd.s32 %v4239, %v4229
        %v4241 = vadd.s32 %v4240, %v4231
        %v4242 = vmul.u32 %v4197, %v4188
        %v4243 = vadd.s32 %v4219, %v4238
        %vm4244 = vc.u32 %v4219, %v4238
        %v4245 = vadd.s32 %v4241, 1
        %v4246 = vsel %vm4244, %v4245, %v4241
        %v4247 = vadd.s32 %v4242, %v4246
        %v4248 = vadd.s32 %v4247, 536870912
        %v4249 = vshrl.u32 %v4248, 30
        %v4250 = vshll.u32 %v4249, 30
        %v4251 = vsub.s32 %v4247, %v4250
        %vm4252 = vcmp.lt.s32.totalorder %v4251, 0
        %v4253 = vsub.s32 0, %v4251
        %v4254 = vsel %vm4252, %v4253, %v4251
        %v4255 = vclz %v4254
        %v4256 = vsub.s32 %v4255, 2
        %vm4257 = vcmp.gt.s32.totalorder 0, %v4256
        %v4258 = vsel %vm4257, 0, %v4256
        %v4259 = vsub.s32 32, %v4258
        %v4260 = vshll.u32 %v4251, %v4258
        %v4261 = vshrl.u32 %v4243, %v4259
        %v4262 = vor.u32 %v4260, %v4261
        %v4263 = vsub.s32 4294967266, %v4258
        %v4264 = vadd.s32 %v4263, 127
        %v4265 = vshll.u32 %v4264, 23
        %v4266 = vor.u32 4788187, %v4265
        %v4267 = vand.u32 2147483647, %v4266
        %v4269 = vcvt.s32.f32 %v4262
        %v4270 = vmul.f32 %v4269, %v4267
        %v4271 = vxor.u32 %v4270, 2147483648
        %v4272 = vsel %vm4151, %v4271, %v4270
        %v4273 = vsub.s32 4, %v4249
        %v4274 = vsel %vm4151, %v4273, %v4249
        %v4275 = vsel %vm4150, %v429, %v4272
        %v4276 = vsel %vm4150, 0, %v4274
        %v4277 = vmul.f32 %v4275, %v4275
        %v4278 = vmul.f32 %v4277, -0.001358992
        %v4279 = vadd.f32 %v4278, 0.041655596
        %v4280 = vmul.f32 %v4277, %v4279
        %v4281 = vadd.f32 %v4280, -0.4999988
        %v4282 = vmul.f32 %v4277, %v4281
        %v4283 = vadd.f32 1.0, %v4282
        %v4284 = vmul.f32 %v4275, %v4275
        %v4285 = vmul.f32 %v4284, -0.00019511016
        %v4286 = vadd.f32 %v4285, 0.008332121
        %v4287 = vmul.f32 %v4284, %v4286
        %v4288 = vadd.f32 %v4287, -0.16666654
        %v4289 = vmul.f32 %v4284, %v4288
        %v4290 = vadd.f32 %v4289, 1.0
        %v4291 = vmul.f32 %v4290, %v4275
        %vm4292 = vweird.f32 %v429
        %v4293 = vand.u32 %v4276, 3
        %vm4294 = vcmp.lt.s32.totalorder %v4293, 2
        %vm4295 = vcmp.eq.s32.totalorder %v4293, 0
        %v4296 = vxor.u32 %v4291, 2147483648
        %v4297 = vsel %vm4295, %v4283, %v4296
        %vm4298 = vcmp.eq.s32.totalorder %v4293, 2
        %v4299 = vxor.u32 %v4283, 2147483648
        %v4300 = vsel %vm4298, %v4299, %v4291
        %v4301 = vsel %vm4294, %v4297, %v4300
        %v4302 = vsel %vm4292, nan, %v4301
        %v4303 = vand.u32 2147483647, %v430
        %vm4304 = vcmp.le.f32.partialorder %v4303, 0.7853982
        %vm4305 = vcmp.lt.s32.totalorder %v430, 0
        %v4306 = vand.u32 %v430, 2139095040
        %v4307 = vshrl.u32 %v4306, 23
        %v4308 = vsub.s32 %v4307, 127
        %v4309 = vand.u32 2147483647, %v430
        %v4310 = vand.u32 %v4309, 8388607
        %v4311 = vor.u32 %v4310, 8388608
        %v4312 = vsub.s32 0, %v4311
        %v4313 = vadd.s32 %v4308, 1
        %vm4314 = vcmp.gt.s32.totalorder %v4313, 0
        %v4315 = vsel %vm4314, %v4313, 0
        %v4316 = vshrl.u32 %v4315, 5
        %v4317 = vand.u32 %v4315, 31
        %v4318 = vsub.s32 32, %v4317
        %v4319 = vshrl.u32 683565275, %v4318
        %v4320 = vshll.u32 683565275, %v4317
        %v4321 = vshrl.u32 2475754826, %v4318
        %v4322 = vor.u32 %v4320, %v4321
        %v4323 = vshll.u32 2475754826, %v4317
        %v4324 = vshrl.u32 2131351028, %v4318
        %v4325 = vor.u32 %v4323, %v4324
        %v4326 = vshll.u32 2131351028, %v4317
        %v4327 = vshrl.u32 2102212464, %v4318
        %v4328 = vor.u32 %v4326, %v4327
        %v4329 = vshll.u32 2102212464, %v4317
        %v4330 = vshrl.u32 920167782, %v4318
        %v4331 = vor.u32 %v4329, %v4330
        %v4332 = vshll.u32 920167782, %v4317
        %v4333 = vshrl.u32 1326507024, %v4318
        %v4334 = vor.u32 %v4332, %v4333
        %vm4335 = vcmp.lt.s32.totalorder %v4316, 1
        %vm4336 = vcmp.lt.s32.totalorder %v4316, 2
        %vm4337 = vcmp.lt.s32.totalorder %v4316, 3
        %vm4338 = vcmp.lt.s32.totalorder %v4316, 4
        %v4339 = vsel %vm4335, %v4319, %v4322
        %v4340 = vsel %vm4338, %v4328, 2102212464
        %v4341 = vsel %vm4337, %v4325, %v4340
        %v4342 = vsel %vm4336, %v4339, %v4341
        %v4343 = vsel %vm4335, %v4322, %v4325
        %v4344 = vsel %vm4338, %v4331, 920167782
        %v4345 = vsel %vm4337, %v4328, %v4344
        %v4346 = vsel %vm4336, %v4343, %v4345
        %v4347 = vsel %vm4335, %v4325, %v4328
        %v4348 = vsel %vm4338, %v4334, 1326507024
        %v4349 = vsel %vm4337, %v4331, %v4348
        %v4350 = vsel %vm4336, %v4347, %v4349
        %v4351 = vshll.u32 %v4311, 8
        %v4352 = vand.u32 %v4351, 65535
        %v4353 = vshrl.u32 %v4351, 16
        %v4354 = vand.u32 %v4350, 65535
        %v4355 = vshrl.u32 %v4350, 16
        %v4356 = vmul.u32 %v4352, %v4354
        %v4357 = vmul.u32 %v4352, %v4355
        %v4358 = vmul.u32 %v4353, %v4354
        %v4359 = vmul.u32 %v4353, %v4355
        %v4360 = vshll.u32 %v4357, 16
        %v4361 = vshrl.u32 %v4357, 16
        %v4362 = vshll.u32 %v4358, 16
        %v4363 = vshrl.u32 %v4358, 16
        %vm4364 = vc.u32 %v4356, %v4360
        %v4365 = vsel %vm4364, 1, 0
        %v4366 = vadd.s32 %v4356, %v4360
        %v4367 = vadd.s32 %v4359, %v4365
        %vm4368 = vc.u32 %v4366, %v4362
        %v4369 = vsel %vm4368, 1, 0
        %v4370 = vadd.s32 %v4366, %v4362
        %v4371 = vadd.s32 %v4367, %v4369
        %v4372 = vadd.s32 %v4371, %v4361
        %v4373 = vadd.s32 %v4372, %v4363
        %v4374 = vand.u32 %v4351, 65535
        %v4375 = vshrl.u32 %v4351, 16
        %v4376 = vand.u32 %v4346, 65535
        %v4377 = vshrl.u32 %v4346, 16
        %v4378 = vmul.u32 %v4374, %v4376
        %v4379 = vmul.u32 %v4374, %v4377
        %v4380 = vmul.u32 %v4375, %v4376
        %v4381 = vmul.u32 %v4375, %v4377
        %v4382 = vshll.u32 %v4379, 16
        %v4383 = vshrl.u32 %v4379, 16
        %v4384 = vshll.u32 %v4380, 16
        %v4385 = vshrl.u32 %v4380, 16
        %vm4386 = vc.u32 %v4378, %v4382
        %v4387 = vsel %vm4386, 1, 0
        %v4388 = vadd.s32 %v4378, %v4382
        %v4389 = vadd.s32 %v4381, %v4387
        %vm4390 = vc.u32 %v4388, %v4384
        %v4391 = vsel %vm4390, 1, 0
        %v4392 = vadd.s32 %v4388, %v4384
        %v4393 = vadd.s32 %v4389, %v4391
        %v4394 = vadd.s32 %v4393, %v4383
        %v4395 = vadd.s32 %v4394, %v4385
        %v4396 = vmul.u32 %v4351, %v4342
        %v4397 = vadd.s32 %v4373, %v4392
        %vm4398 = vc.u32 %v4373, %v4392
        %v4399 = vadd.s32 %v4395, 1
        %v4400 = vsel %vm4398, %v4399, %v4395
        %v4401 = vadd.s32 %v4396, %v4400
        %v4402 = vadd.s32 %v4401, 536870912
        %v4403 = vshrl.u32 %v4402, 30
        %v4404 = vshll.u32 %v4403, 30
        %v4405 = vsub.s32 %v4401, %v4404
        %vm4406 = vcmp.lt.s32.totalorder %v4405, 0
        %v4407 = vsub.s32 0, %v4405
        %v4408 = vsel %vm4406, %v4407, %v4405
        %v4409 = vclz %v4408
        %v4410 = vsub.s32 %v4409, 2
        %vm4411 = vcmp.gt.s32.totalorder 0, %v4410
        %v4412 = vsel %vm4411, 0, %v4410
        %v4413 = vsub.s32 32, %v4412
        %v4414 = vshll.u32 %v4405, %v4412
        %v4415 = vshrl.u32 %v4397, %v4413
        %v4416 = vor.u32 %v4414, %v4415
        %v4417 = vsub.s32 4294967266, %v4412
        %v4418 = vadd.s32 %v4417, 127
        %v4419 = vshll.u32 %v4418, 23
        %v4420 = vor.u32 4788187, %v4419
        %v4421 = vand.u32 2147483647, %v4420
        %v4423 = vcvt.s32.f32 %v4416
        %v4424 = vmul.f32 %v4423, %v4421
        %v4425 = vxor.u32 %v4424, 2147483648
        %v4426 = vsel %vm4305, %v4425, %v4424
        %v4427 = vsub.s32 4, %v4403
        %v4428 = vsel %vm4305, %v4427, %v4403
        %v4429 = vsel %vm4304, %v430, %v4426
        %v4430 = vsel %vm4304, 0, %v4428
        %v4431 = vmul.f32 %v4429, %v4429
        %v4432 = vmul.f32 %v4431, -0.001358992
        %v4433 = vadd.f32 %v4432, 0.041655596
        %v4434 = vmul.f32 %v4431, %v4433
        %v4435 = vadd.f32 %v4434, -0.4999988
        %v4436 = vmul.f32 %v4431, %v4435
        %v4437 = vadd.f32 1.0, %v4436
        %v4438 = vmul.f32 %v4429, %v4429
        %v4439 = vmul.f32 %v4438, -0.00019511016
        %v4440 = vadd.f32 %v4439, 0.008332121
        %v4441 = vmul.f32 %v4438, %v4440
        %v4442 = vadd.f32 %v4441, -0.16666654
        %v4443 = vmul.f32 %v4438, %v4442
        %v4444 = vadd.f32 %v4443, 1.0
        %v4445 = vmul.f32 %v4444, %v4429
        %vm4446 = vweird.f32 %v430
        %v4447 = vand.u32 %v4430, 3
        %vm4448 = vcmp.lt.s32.totalorder %v4447, 2
        %vm4449 = vcmp.eq.s32.totalorder %v4447, 0
        %v4450 = vxor.u32 %v4445, 2147483648
        %v4451 = vsel %vm4449, %v4437, %v4450
        %vm4452 = vcmp.eq.s32.totalorder %v4447, 2
        %v4453 = vxor.u32 %v4437, 2147483648
        %v4454 = vsel %vm4452, %v4453, %v4445
        %v4455 = vsel %vm4448, %v4451, %v4454
        %v4456 = vsel %vm4446, nan, %v4455
        %v4457 = vand.u32 2147483647, %v431
        %vm4458 = vcmp.le.f32.partialorder %v4457, 0.7853982
        %vm4459 = vcmp.lt.s32.totalorder %v431, 0
        %v4460 = vand.u32 %v431, 2139095040
        %v4461 = vshrl.u32 %v4460, 23
        %v4462 = vsub.s32 %v4461, 127
        %v4463 = vand.u32 2147483647, %v431
        %v4464 = vand.u32 %v4463, 8388607
        %v4465 = vor.u32 %v4464, 8388608
        %v4466 = vsub.s32 0, %v4465
        %v4467 = vadd.s32 %v4462, 1
        %vm4468 = vcmp.gt.s32.totalorder %v4467, 0
        %v4469 = vsel %vm4468, %v4467, 0
        %v4470 = vshrl.u32 %v4469, 5
        %v4471 = vand.u32 %v4469, 31
        %v4472 = vsub.s32 32, %v4471
        %v4473 = vshrl.u32 683565275, %v4472
        %v4474 = vshll.u32 683565275, %v4471
        %v4475 = vshrl.u32 2475754826, %v4472
        %v4476 = vor.u32 %v4474, %v4475
        %v4477 = vshll.u32 2475754826, %v4471
        %v4478 = vshrl.u32 2131351028, %v4472
        %v4479 = vor.u32 %v4477, %v4478
        %v4480 = vshll.u32 2131351028, %v4471
        %v4481 = vshrl.u32 2102212464, %v4472
        %v4482 = vor.u32 %v4480, %v4481
        %v4483 = vshll.u32 2102212464, %v4471
        %v4484 = vshrl.u32 920167782, %v4472
        %v4485 = vor.u32 %v4483, %v4484
        %v4486 = vshll.u32 920167782, %v4471
        %v4487 = vshrl.u32 1326507024, %v4472
        %v4488 = vor.u32 %v4486, %v4487
        %vm4489 = vcmp.lt.s32.totalorder %v4470, 1
        %vm4490 = vcmp.lt.s32.totalorder %v4470, 2
        %vm4491 = vcmp.lt.s32.totalorder %v4470, 3
        %vm4492 = vcmp.lt.s32.totalorder %v4470, 4
        %v4493 = vsel %vm4489, %v4473, %v4476
        %v4494 = vsel %vm4492, %v4482, 2102212464
        %v4495 = vsel %vm4491, %v4479, %v4494
        %v4496 = vsel %vm4490, %v4493, %v4495
        %v4497 = vsel %vm4489, %v4476, %v4479
        %v4498 = vsel %vm4492, %v4485, 920167782
        %v4499 = vsel %vm4491, %v4482, %v4498
        %v4500 = vsel %vm4490, %v4497, %v4499
        %v4501 = vsel %vm4489, %v4479, %v4482
        %v4502 = vsel %vm4492, %v4488, 1326507024
        %v4503 = vsel %vm4491, %v4485, %v4502
        %v4504 = vsel %vm4490, %v4501, %v4503
        %v4505 = vshll.u32 %v4465, 8
        %v4506 = vand.u32 %v4505, 65535
        %v4507 = vshrl.u32 %v4505, 16
        %v4508 = vand.u32 %v4504, 65535
        %v4509 = vshrl.u32 %v4504, 16
        %v4510 = vmul.u32 %v4506, %v4508
        %v4511 = vmul.u32 %v4506, %v4509
        %v4512 = vmul.u32 %v4507, %v4508
        %v4513 = vmul.u32 %v4507, %v4509
        %v4514 = vshll.u32 %v4511, 16
        %v4515 = vshrl.u32 %v4511, 16
        %v4516 = vshll.u32 %v4512, 16
        %v4517 = vshrl.u32 %v4512, 16
        %vm4518 = vc.u32 %v4510, %v4514
        %v4519 = vsel %vm4518, 1, 0
        %v4520 = vadd.s32 %v4510, %v4514
        %v4521 = vadd.s32 %v4513, %v4519
        %vm4522 = vc.u32 %v4520, %v4516
        %v4523 = vsel %vm4522, 1, 0
        %v4524 = vadd.s32 %v4520, %v4516
        %v4525 = vadd.s32 %v4521, %v4523
        %v4526 = vadd.s32 %v4525, %v4515
        %v4527 = vadd.s32 %v4526, %v4517
        %v4528 = vand.u32 %v4505, 65535
        %v4529 = vshrl.u32 %v4505, 16
        %v4530 = vand.u32 %v4500, 65535
        %v4531 = vshrl.u32 %v4500, 16
        %v4532 = vmul.u32 %v4528, %v4530
        %v4533 = vmul.u32 %v4528, %v4531
        %v4534 = vmul.u32 %v4529, %v4530
        %v4535 = vmul.u32 %v4529, %v4531
        %v4536 = vshll.u32 %v4533, 16
        %v4537 = vshrl.u32 %v4533, 16
        %v4538 = vshll.u32 %v4534, 16
        %v4539 = vshrl.u32 %v4534, 16
        %vm4540 = vc.u32 %v4532, %v4536
        %v4541 = vsel %vm4540, 1, 0
        %v4542 = vadd.s32 %v4532, %v4536
        %v4543 = vadd.s32 %v4535, %v4541
        %vm4544 = vc.u32 %v4542, %v4538
        %v4545 = vsel %vm4544, 1, 0
        %v4546 = vadd.s32 %v4542, %v4538
        %v4547 = vadd.s32 %v4543, %v4545
        %v4548 = vadd.s32 %v4547, %v4537
        %v4549 = vadd.s32 %v4548, %v4539
        %v4550 = vmul.u32 %v4505, %v4496
        %v4551 = vadd.s32 %v4527, %v4546
        %vm4552 = vc.u32 %v4527, %v4546
        %v4553 = vadd.s32 %v4549, 1
        %v4554 = vsel %vm4552, %v4553, %v4549
        %v4555 = vadd.s32 %v4550, %v4554
        %v4556 = vadd.s32 %v4555, 536870912
        %v4557 = vshrl.u32 %v4556, 30
        %v4558 = vshll.u32 %v4557, 30
        %v4559 = vsub.s32 %v4555, %v4558
        %vm4560 = vcmp.lt.s32.totalorder %v4559, 0
        %v4561 = vsub.s32 0, %v4559
        %v4562 = vsel %vm4560, %v4561, %v4559
        %v4563 = vclz %v4562
        %v4564 = vsub.s32 %v4563, 2
        %vm4565 = vcmp.gt.s32.totalorder 0, %v4564
        %v4566 = vsel %vm4565, 0, %v4564
        %v4567 = vsub.s32 32, %v4566
        %v4568 = vshll.u32 %v4559, %v4566
        %v4569 = vshrl.u32 %v4551, %v4567
        %v4570 = vor.u32 %v4568, %v4569
        %v4571 = vsub.s32 4294967266, %v4566
        %v4572 = vadd.s32 %v4571, 127
        %v4573 = vshll.u32 %v4572, 23
        %v4574 = vor.u32 4788187, %v4573
        %v4575 = vand.u32 2147483647, %v4574
        %v4577 = vcvt.s32.f32 %v4570
        %v4578 = vmul.f32 %v4577, %v4575
        %v4579 = vxor.u32 %v4578, 2147483648
        %v4580 = vsel %vm4459, %v4579, %v4578
        %v4581 = vsub.s32 4, %v4557
        %v4582 = vsel %vm4459, %v4581, %v4557
        %v4583 = vsel %vm4458, %v431, %v4580
        %v4584 = vsel %vm4458, 0, %v4582
        %v4585 = vmul.f32 %v4583, %v4583
        %v4586 = vmul.f32 %v4585, -0.001358992
        %v4587 = vadd.f32 %v4586, 0.041655596
        %v4588 = vmul.f32 %v4585, %v4587
        %v4589 = vadd.f32 %v4588, -0.4999988
        %v4590 = vmul.f32 %v4585, %v4589
        %v4591 = vadd.f32 1.0, %v4590
        %v4592 = vmul.f32 %v4583, %v4583
        %v4593 = vmul.f32 %v4592, -0.00019511016
        %v4594 = vadd.f32 %v4593, 0.008332121
        %v4595 = vmul.f32 %v4592, %v4594
        %v4596 = vadd.f32 %v4595, -0.16666654
        %v4597 = vmul.f32 %v4592, %v4596
        %v4598 = vadd.f32 %v4597, 1.0
        %v4599 = vmul.f32 %v4598, %v4583
        %vm4600 = vweird.f32 %v431
        %v4601 = vand.u32 %v4584, 3
        %vm4602 = vcmp.lt.s32.totalorder %v4601, 2
        %vm4603 = vcmp.eq.s32.totalorder %v4601, 0
        %v4604 = vxor.u32 %v4599, 2147483648
        %v4605 = vsel %vm4603, %v4591, %v4604
        %vm4606 = vcmp.eq.s32.totalorder %v4601, 2
        %v4607 = vxor.u32 %v4591, 2147483648
        %v4608 = vsel %vm4606, %v4607, %v4599
        %v4609 = vsel %vm4602, %v4605, %v4608
        %v4610 = vsel %vm4600, nan, %v4609
        %v4611 = vand.u32 2147483647, %v432
        %vm4612 = vcmp.le.f32.partialorder %v4611, 0.7853982
        %vm4613 = vcmp.lt.s32.totalorder %v432, 0
        %v4614 = vand.u32 %v432, 2139095040
        %v4615 = vshrl.u32 %v4614, 23
        %v4616 = vsub.s32 %v4615, 127
        %v4617 = vand.u32 2147483647, %v432
        %v4618 = vand.u32 %v4617, 8388607
        %v4619 = vor.u32 %v4618, 8388608
        %v4620 = vsub.s32 0, %v4619
        %v4621 = vadd.s32 %v4616, 1
        %vm4622 = vcmp.gt.s32.totalorder %v4621, 0
        %v4623 = vsel %vm4622, %v4621, 0
        %v4624 = vshrl.u32 %v4623, 5
        %v4625 = vand.u32 %v4623, 31
        %v4626 = vsub.s32 32, %v4625
        %v4627 = vshrl.u32 683565275, %v4626
        %v4628 = vshll.u32 683565275, %v4625
        %v4629 = vshrl.u32 2475754826, %v4626
        %v4630 = vor.u32 %v4628, %v4629
        %v4631 = vshll.u32 2475754826, %v4625
        %v4632 = vshrl.u32 2131351028, %v4626
        %v4633 = vor.u32 %v4631, %v4632
        %v4634 = vshll.u32 2131351028, %v4625
        %v4635 = vshrl.u32 2102212464, %v4626
        %v4636 = vor.u32 %v4634, %v4635
        %v4637 = vshll.u32 2102212464, %v4625
        %v4638 = vshrl.u32 920167782, %v4626
        %v4639 = vor.u32 %v4637, %v4638
        %v4640 = vshll.u32 920167782, %v4625
        %v4641 = vshrl.u32 1326507024, %v4626
        %v4642 = vor.u32 %v4640, %v4641
        %vm4643 = vcmp.lt.s32.totalorder %v4624, 1
        %vm4644 = vcmp.lt.s32.totalorder %v4624, 2
        %vm4645 = vcmp.lt.s32.totalorder %v4624, 3
        %vm4646 = vcmp.lt.s32.totalorder %v4624, 4
        %v4647 = vsel %vm4643, %v4627, %v4630
        %v4648 = vsel %vm4646, %v4636, 2102212464
        %v4649 = vsel %vm4645, %v4633, %v4648
        %v4650 = vsel %vm4644, %v4647, %v4649
        %v4651 = vsel %vm4643, %v4630, %v4633
        %v4652 = vsel %vm4646, %v4639, 920167782
        %v4653 = vsel %vm4645, %v4636, %v4652
        %v4654 = vsel %vm4644, %v4651, %v4653
        %v4655 = vsel %vm4643, %v4633, %v4636
        %v4656 = vsel %vm4646, %v4642, 1326507024
        %v4657 = vsel %vm4645, %v4639, %v4656
        %v4658 = vsel %vm4644, %v4655, %v4657
        %v4659 = vshll.u32 %v4619, 8
        %v4660 = vand.u32 %v4659, 65535
        %v4661 = vshrl.u32 %v4659, 16
        %v4662 = vand.u32 %v4658, 65535
        %v4663 = vshrl.u32 %v4658, 16
        %v4664 = vmul.u32 %v4660, %v4662
        %v4665 = vmul.u32 %v4660, %v4663
        %v4666 = vmul.u32 %v4661, %v4662
        %v4667 = vmul.u32 %v4661, %v4663
        %v4668 = vshll.u32 %v4665, 16
        %v4669 = vshrl.u32 %v4665, 16
        %v4670 = vshll.u32 %v4666, 16
        %v4671 = vshrl.u32 %v4666, 16
        %vm4672 = vc.u32 %v4664, %v4668
        %v4673 = vsel %vm4672, 1, 0
        %v4674 = vadd.s32 %v4664, %v4668
        %v4675 = vadd.s32 %v4667, %v4673
        %vm4676 = vc.u32 %v4674, %v4670
        %v4677 = vsel %vm4676, 1, 0
        %v4678 = vadd.s32 %v4674, %v4670
        %v4679 = vadd.s32 %v4675, %v4677
        %v4680 = vadd.s32 %v4679, %v4669
        %v4681 = vadd.s32 %v4680, %v4671
        %v4682 = vand.u32 %v4659, 65535
        %v4683 = vshrl.u32 %v4659, 16
        %v4684 = vand.u32 %v4654, 65535
        %v4685 = vshrl.u32 %v4654, 16
        %v4686 = vmul.u32 %v4682, %v4684
        %v4687 = vmul.u32 %v4682, %v4685
        %v4688 = vmul.u32 %v4683, %v4684
        %v4689 = vmul.u32 %v4683, %v4685
        %v4690 = vshll.u32 %v4687, 16
        %v4691 = vshrl.u32 %v4687, 16
        %v4692 = vshll.u32 %v4688, 16
        %v4693 = vshrl.u32 %v4688, 16
        %vm4694 = vc.u32 %v4686, %v4690
        %v4695 = vsel %vm4694, 1, 0
        %v4696 = vadd.s32 %v4686, %v4690
        %v4697 = vadd.s32 %v4689, %v4695
        %vm4698 = vc.u32 %v4696, %v4692
        %v4699 = vsel %vm4698, 1, 0
        %v4700 = vadd.s32 %v4696, %v4692
        %v4701 = vadd.s32 %v4697, %v4699
        %v4702 = vadd.s32 %v4701, %v4691
        %v4703 = vadd.s32 %v4702, %v4693
        %v4704 = vmul.u32 %v4659, %v4650
        %v4705 = vadd.s32 %v4681, %v4700
        %vm4706 = vc.u32 %v4681, %v4700
        %v4707 = vadd.s32 %v4703, 1
        %v4708 = vsel %vm4706, %v4707, %v4703
        %v4709 = vadd.s32 %v4704, %v4708
        %v4710 = vadd.s32 %v4709, 536870912
        %v4711 = vshrl.u32 %v4710, 30
        %v4712 = vshll.u32 %v4711, 30
        %v4713 = vsub.s32 %v4709, %v4712
        %vm4714 = vcmp.lt.s32.totalorder %v4713, 0
        %v4715 = vsub.s32 0, %v4713
        %v4716 = vsel %vm4714, %v4715, %v4713
        %v4717 = vclz %v4716
        %v4718 = vsub.s32 %v4717, 2
        %vm4719 = vcmp.gt.s32.totalorder 0, %v4718
        %v4720 = vsel %vm4719, 0, %v4718
        %v4721 = vsub.s32 32, %v4720
        %v4722 = vshll.u32 %v4713, %v4720
        %v4723 = vshrl.u32 %v4705, %v4721
        %v4724 = vor.u32 %v4722, %v4723
        %v4725 = vsub.s32 4294967266, %v4720
        %v4726 = vadd.s32 %v4725, 127
        %v4727 = vshll.u32 %v4726, 23
        %v4728 = vor.u32 4788187, %v4727
        %v4729 = vand.u32 2147483647, %v4728
        %v4731 = vcvt.s32.f32 %v4724
        %v4732 = vmul.f32 %v4731, %v4729
        %v4733 = vxor.u32 %v4732, 2147483648
        %v4734 = vsel %vm4613, %v4733, %v4732
        %v4735 = vsub.s32 4, %v4711
        %v4736 = vsel %vm4613, %v4735, %v4711
        %v4737 = vsel %vm4612, %v432, %v4734
        %v4738 = vsel %vm4612, 0, %v4736
        %v4739 = vmul.f32 %v4737, %v4737
        %v4740 = vmul.f32 %v4739, -0.001358992
        %v4741 = vadd.f32 %v4740, 0.041655596
        %v4742 = vmul.f32 %v4739, %v4741
        %v4743 = vadd.f32 %v4742, -0.4999988
        %v4744 = vmul.f32 %v4739, %v4743
        %v4745 = vadd.f32 1.0, %v4744
        %v4746 = vmul.f32 %v4737, %v4737
        %v4747 = vmul.f32 %v4746, -0.00019511016
        %v4748 = vadd.f32 %v4747, 0.008332121
        %v4749 = vmul.f32 %v4746, %v4748
        %v4750 = vadd.f32 %v4749, -0.16666654
        %v4751 = vmul.f32 %v4746, %v4750
        %v4752 = vadd.f32 %v4751, 1.0
        %v4753 = vmul.f32 %v4752, %v4737
        %vm4754 = vweird.f32 %v432
        %v4755 = vand.u32 %v4738, 3
        %vm4756 = vcmp.lt.s32.totalorder %v4755, 2
        %vm4757 = vcmp.eq.s32.totalorder %v4755, 0
        %v4758 = vxor.u32 %v4753, 2147483648
        %v4759 = vsel %vm4757, %v4745, %v4758
        %vm4760 = vcmp.eq.s32.totalorder %v4755, 2
        %v4761 = vxor.u32 %v4745, 2147483648
        %v4762 = vsel %vm4760, %v4761, %v4753
        %v4763 = vsel %vm4756, %v4759, %v4762
        %v4764 = vsel %vm4754, nan, %v4763
        %v4765 = vand.u32 2147483647, %v433
        %vm4766 = vcmp.le.f32.partialorder %v4765, 0.7853982
        %vm4767 = vcmp.lt.s32.totalorder %v433, 0
        %v4768 = vand.u32 %v433, 2139095040
        %v4769 = vshrl.u32 %v4768, 23
        %v4770 = vsub.s32 %v4769, 127
        %v4771 = vand.u32 2147483647, %v433
        %v4772 = vand.u32 %v4771, 8388607
        %v4773 = vor.u32 %v4772, 8388608
        %v4774 = vsub.s32 0, %v4773
        %v4775 = vadd.s32 %v4770, 1
        %vm4776 = vcmp.gt.s32.totalorder %v4775, 0
        %v4777 = vsel %vm4776, %v4775, 0
        %v4778 = vshrl.u32 %v4777, 5
        %v4779 = vand.u32 %v4777, 31
        %v4780 = vsub.s32 32, %v4779
        %v4781 = vshrl.u32 683565275, %v4780
        %v4782 = vshll.u32 683565275, %v4779
        %v4783 = vshrl.u32 2475754826, %v4780
        %v4784 = vor.u32 %v4782, %v4783
        %v4785 = vshll.u32 2475754826, %v4779
        %v4786 = vshrl.u32 2131351028, %v4780
        %v4787 = vor.u32 %v4785, %v4786
        %v4788 = vshll.u32 2131351028, %v4779
        %v4789 = vshrl.u32 2102212464, %v4780
        %v4790 = vor.u32 %v4788, %v4789
        %v4791 = vshll.u32 2102212464, %v4779
        %v4792 = vshrl.u32 920167782, %v4780
        %v4793 = vor.u32 %v4791, %v4792
        %v4794 = vshll.u32 920167782, %v4779
        %v4795 = vshrl.u32 1326507024, %v4780
        %v4796 = vor.u32 %v4794, %v4795
        %vm4797 = vcmp.lt.s32.totalorder %v4778, 1
        %vm4798 = vcmp.lt.s32.totalorder %v4778, 2
        %vm4799 = vcmp.lt.s32.totalorder %v4778, 3
        %vm4800 = vcmp.lt.s32.totalorder %v4778, 4
        %v4801 = vsel %vm4797, %v4781, %v4784
        %v4802 = vsel %vm4800, %v4790, 2102212464
        %v4803 = vsel %vm4799, %v4787, %v4802
        %v4804 = vsel %vm4798, %v4801, %v4803
        %v4805 = vsel %vm4797, %v4784, %v4787
        %v4806 = vsel %vm4800, %v4793, 920167782
        %v4807 = vsel %vm4799, %v4790, %v4806
        %v4808 = vsel %vm4798, %v4805, %v4807
        %v4809 = vsel %vm4797, %v4787, %v4790
        %v4810 = vsel %vm4800, %v4796, 1326507024
        %v4811 = vsel %vm4799, %v4793, %v4810
        %v4812 = vsel %vm4798, %v4809, %v4811
        %v4813 = vshll.u32 %v4773, 8
        %v4814 = vand.u32 %v4813, 65535
        %v4815 = vshrl.u32 %v4813, 16
        %v4816 = vand.u32 %v4812, 65535
        %v4817 = vshrl.u32 %v4812, 16
        %v4818 = vmul.u32 %v4814, %v4816
        %v4819 = vmul.u32 %v4814, %v4817
        %v4820 = vmul.u32 %v4815, %v4816
        %v4821 = vmul.u32 %v4815, %v4817
        %v4822 = vshll.u32 %v4819, 16
        %v4823 = vshrl.u32 %v4819, 16
        %v4824 = vshll.u32 %v4820, 16
        %v4825 = vshrl.u32 %v4820, 16
        %vm4826 = vc.u32 %v4818, %v4822
        %v4827 = vsel %vm4826, 1, 0
        %v4828 = vadd.s32 %v4818, %v4822
        %v4829 = vadd.s32 %v4821, %v4827
        %vm4830 = vc.u32 %v4828, %v4824
        %v4831 = vsel %vm4830, 1, 0
        %v4832 = vadd.s32 %v4828, %v4824
        %v4833 = vadd.s32 %v4829, %v4831
        %v4834 = vadd.s32 %v4833, %v4823
        %v4835 = vadd.s32 %v4834, %v4825
        %v4836 = vand.u32 %v4813, 65535
        %v4837 = vshrl.u32 %v4813, 16
        %v4838 = vand.u32 %v4808, 65535
        %v4839 = vshrl.u32 %v4808, 16
        %v4840 = vmul.u32 %v4836, %v4838
        %v4841 = vmul.u32 %v4836, %v4839
        %v4842 = vmul.u32 %v4837, %v4838
        %v4843 = vmul.u32 %v4837, %v4839
        %v4844 = vshll.u32 %v4841, 16
        %v4845 = vshrl.u32 %v4841, 16
        %v4846 = vshll.u32 %v4842, 16
        %v4847 = vshrl.u32 %v4842, 16
        %vm4848 = vc.u32 %v4840, %v4844
        %v4849 = vsel %vm4848, 1, 0
        %v4850 = vadd.s32 %v4840, %v4844
        %v4851 = vadd.s32 %v4843, %v4849
        %vm4852 = vc.u32 %v4850, %v4846
        %v4853 = vsel %vm4852, 1, 0
        %v4854 = vadd.s32 %v4850, %v4846
        %v4855 = vadd.s32 %v4851, %v4853
        %v4856 = vadd.s32 %v4855, %v4845
        %v4857 = vadd.s32 %v4856, %v4847
        %v4858 = vmul.u32 %v4813, %v4804
        %v4859 = vadd.s32 %v4835, %v4854
        %vm4860 = vc.u32 %v4835, %v4854
        %v4861 = vadd.s32 %v4857, 1
        %v4862 = vsel %vm4860, %v4861, %v4857
        %v4863 = vadd.s32 %v4858, %v4862
        %v4864 = vadd.s32 %v4863, 536870912
        %v4865 = vshrl.u32 %v4864, 30
        %v4866 = vshll.u32 %v4865, 30
        %v4867 = vsub.s32 %v4863, %v4866
        %vm4868 = vcmp.lt.s32.totalorder %v4867, 0
        %v4869 = vsub.s32 0, %v4867
        %v4870 = vsel %vm4868, %v4869, %v4867
        %v4871 = vclz %v4870
        %v4872 = vsub.s32 %v4871, 2
        %vm4873 = vcmp.gt.s32.totalorder 0, %v4872
        %v4874 = vsel %vm4873, 0, %v4872
        %v4875 = vsub.s32 32, %v4874
        %v4876 = vshll.u32 %v4867, %v4874
        %v4877 = vshrl.u32 %v4859, %v4875
        %v4878 = vor.u32 %v4876, %v4877
        %v4879 = vsub.s32 4294967266, %v4874
        %v4880 = vadd.s32 %v4879, 127
        %v4881 = vshll.u32 %v4880, 23
        %v4882 = vor.u32 4788187, %v4881
        %v4883 = vand.u32 2147483647, %v4882
        %v4885 = vcvt.s32.f32 %v4878
        %v4886 = vmul.f32 %v4885, %v4883
        %v4887 = vxor.u32 %v4886, 2147483648
        %v4888 = vsel %vm4767, %v4887, %v4886
        %v4889 = vsub.s32 4, %v4865
        %v4890 = vsel %vm4767, %v4889, %v4865
        %v4891 = vsel %vm4766, %v433, %v4888
        %v4892 = vsel %vm4766, 0, %v4890
        %v4893 = vmul.f32 %v4891, %v4891
        %v4894 = vmul.f32 %v4893, -0.001358992
        %v4895 = vadd.f32 %v4894, 0.041655596
        %v4896 = vmul.f32 %v4893, %v4895
        %v4897 = vadd.f32 %v4896, -0.4999988
        %v4898 = vmul.f32 %v4893, %v4897
        %v4899 = vadd.f32 1.0, %v4898
        %v4900 = vmul.f32 %v4891, %v4891
        %v4901 = vmul.f32 %v4900, -0.00019511016
        %v4902 = vadd.f32 %v4901, 0.008332121
        %v4903 = vmul.f32 %v4900, %v4902
        %v4904 = vadd.f32 %v4903, -0.16666654
        %v4905 = vmul.f32 %v4900, %v4904
        %v4906 = vadd.f32 %v4905, 1.0
        %v4907 = vmul.f32 %v4906, %v4891
        %vm4908 = vweird.f32 %v433
        %v4909 = vand.u32 %v4892, 3
        %vm4910 = vcmp.lt.s32.totalorder %v4909, 2
        %vm4911 = vcmp.eq.s32.totalorder %v4909, 0
        %v4912 = vxor.u32 %v4907, 2147483648
        %v4913 = vsel %vm4911, %v4899, %v4912
        %vm4914 = vcmp.eq.s32.totalorder %v4909, 2
        %v4915 = vxor.u32 %v4899, 2147483648
        %v4916 = vsel %vm4914, %v4915, %v4907
        %v4917 = vsel %vm4910, %v4913, %v4916
        %v4918 = vsel %vm4908, nan, %v4917
        %v4919 = vand.u32 2147483647, %v434
        %vm4920 = vcmp.le.f32.partialorder %v4919, 0.7853982
        %vm4921 = vcmp.lt.s32.totalorder %v434, 0
        %v4922 = vand.u32 %v434, 2139095040
        %v4923 = vshrl.u32 %v4922, 23
        %v4924 = vsub.s32 %v4923, 127
        %v4925 = vand.u32 2147483647, %v434
        %v4926 = vand.u32 %v4925, 8388607
        %v4927 = vor.u32 %v4926, 8388608
        %v4928 = vsub.s32 0, %v4927
        %v4929 = vadd.s32 %v4924, 1
        %vm4930 = vcmp.gt.s32.totalorder %v4929, 0
        %v4931 = vsel %vm4930, %v4929, 0
        %v4932 = vshrl.u32 %v4931, 5
        %v4933 = vand.u32 %v4931, 31
        %v4934 = vsub.s32 32, %v4933
        %v4935 = vshrl.u32 683565275, %v4934
        %v4936 = vshll.u32 683565275, %v4933
        %v4937 = vshrl.u32 2475754826, %v4934
        %v4938 = vor.u32 %v4936, %v4937
        %v4939 = vshll.u32 2475754826, %v4933
        %v4940 = vshrl.u32 2131351028, %v4934
        %v4941 = vor.u32 %v4939, %v4940
        %v4942 = vshll.u32 2131351028, %v4933
        %v4943 = vshrl.u32 2102212464, %v4934
        %v4944 = vor.u32 %v4942, %v4943
        %v4945 = vshll.u32 2102212464, %v4933
        %v4946 = vshrl.u32 920167782, %v4934
        %v4947 = vor.u32 %v4945, %v4946
        %v4948 = vshll.u32 920167782, %v4933
        %v4949 = vshrl.u32 1326507024, %v4934
        %v4950 = vor.u32 %v4948, %v4949
        %vm4951 = vcmp.lt.s32.totalorder %v4932, 1
        %vm4952 = vcmp.lt.s32.totalorder %v4932, 2
        %vm4953 = vcmp.lt.s32.totalorder %v4932, 3
        %vm4954 = vcmp.lt.s32.totalorder %v4932, 4
        %v4955 = vsel %vm4951, %v4935, %v4938
        %v4956 = vsel %vm4954, %v4944, 2102212464
        %v4957 = vsel %vm4953, %v4941, %v4956
        %v4958 = vsel %vm4952, %v4955, %v4957
        %v4959 = vsel %vm4951, %v4938, %v4941
        %v4960 = vsel %vm4954, %v4947, 920167782
        %v4961 = vsel %vm4953, %v4944, %v4960
        %v4962 = vsel %vm4952, %v4959, %v4961
        %v4963 = vsel %vm4951, %v4941, %v4944
        %v4964 = vsel %vm4954, %v4950, 1326507024
        %v4965 = vsel %vm4953, %v4947, %v4964
        %v4966 = vsel %vm4952, %v4963, %v4965
        %v4967 = vshll.u32 %v4927, 8
        %v4968 = vand.u32 %v4967, 65535
        %v4969 = vshrl.u32 %v4967, 16
        %v4970 = vand.u32 %v4966, 65535
        %v4971 = vshrl.u32 %v4966, 16
        %v4972 = vmul.u32 %v4968, %v4970
        %v4973 = vmul.u32 %v4968, %v4971
        %v4974 = vmul.u32 %v4969, %v4970
        %v4975 = vmul.u32 %v4969, %v4971
        %v4976 = vshll.u32 %v4973, 16
        %v4977 = vshrl.u32 %v4973, 16
        %v4978 = vshll.u32 %v4974, 16
        %v4979 = vshrl.u32 %v4974, 16
        %vm4980 = vc.u32 %v4972, %v4976
        %v4981 = vsel %vm4980, 1, 0
        %v4982 = vadd.s32 %v4972, %v4976
        %v4983 = vadd.s32 %v4975, %v4981
        %vm4984 = vc.u32 %v4982, %v4978
        %v4985 = vsel %vm4984, 1, 0
        %v4986 = vadd.s32 %v4982, %v4978
        %v4987 = vadd.s32 %v4983, %v4985
        %v4988 = vadd.s32 %v4987, %v4977
        %v4989 = vadd.s32 %v4988, %v4979
        %v4990 = vand.u32 %v4967, 65535
        %v4991 = vshrl.u32 %v4967, 16
        %v4992 = vand.u32 %v4962, 65535
        %v4993 = vshrl.u32 %v4962, 16
        %v4994 = vmul.u32 %v4990, %v4992
        %v4995 = vmul.u32 %v4990, %v4993
        %v4996 = vmul.u32 %v4991, %v4992
        %v4997 = vmul.u32 %v4991, %v4993
        %v4998 = vshll.u32 %v4995, 16
        %v4999 = vshrl.u32 %v4995, 16
        %v5000 = vshll.u32 %v4996, 16
        %v5001 = vshrl.u32 %v4996, 16
        %vm5002 = vc.u32 %v4994, %v4998
        %v5003 = vsel %vm5002, 1, 0
        %v5004 = vadd.s32 %v4994, %v4998
        %v5005 = vadd.s32 %v4997, %v5003
        %vm5006 = vc.u32 %v5004, %v5000
        %v5007 = vsel %vm5006, 1, 0
        %v5008 = vadd.s32 %v5004, %v5000
        %v5009 = vadd.s32 %v5005, %v5007
        %v5010 = vadd.s32 %v5009, %v4999
        %v5011 = vadd.s32 %v5010, %v5001
        %v5012 = vmul.u32 %v4967, %v4958
        %v5013 = vadd.s32 %v4989, %v5008
        %vm5014 = vc.u32 %v4989, %v5008
        %v5015 = vadd.s32 %v5011, 1
        %v5016 = vsel %vm5014, %v5015, %v5011
        %v5017 = vadd.s32 %v5012, %v5016
        %v5018 = vadd.s32 %v5017, 536870912
        %v5019 = vshrl.u32 %v5018, 30
        %v5020 = vshll.u32 %v5019, 30
        %v5021 = vsub.s32 %v5017, %v5020
        %vm5022 = vcmp.lt.s32.totalorder %v5021, 0
        %v5023 = vsub.s32 0, %v5021
        %v5024 = vsel %vm5022, %v5023, %v5021
        %v5025 = vclz %v5024
        %v5026 = vsub.s32 %v5025, 2
        %vm5027 = vcmp.gt.s32.totalorder 0, %v5026
        %v5028 = vsel %vm5027, 0, %v5026
        %v5029 = vsub.s32 32, %v5028
        %v5030 = vshll.u32 %v5021, %v5028
        %v5031 = vshrl.u32 %v5013, %v5029
        %v5032 = vor.u32 %v5030, %v5031
        %v5033 = vsub.s32 4294967266, %v5028
        %v5034 = vadd.s32 %v5033, 127
        %v5035 = vshll.u32 %v5034, 23
        %v5036 = vor.u32 4788187, %v5035
        %v5037 = vand.u32 2147483647, %v5036
        %v5039 = vcvt.s32.f32 %v5032
        %v5040 = vmul.f32 %v5039, %v5037
        %v5041 = vxor.u32 %v5040, 2147483648
        %v5042 = vsel %vm4921, %v5041, %v5040
        %v5043 = vsub.s32 4, %v5019
        %v5044 = vsel %vm4921, %v5043, %v5019
        %v5045 = vsel %vm4920, %v434, %v5042
        %v5046 = vsel %vm4920, 0, %v5044
        %v5047 = vmul.f32 %v5045, %v5045
        %v5048 = vmul.f32 %v5047, -0.001358992
        %v5049 = vadd.f32 %v5048, 0.041655596
        %v5050 = vmul.f32 %v5047, %v5049
        %v5051 = vadd.f32 %v5050, -0.4999988
        %v5052 = vmul.f32 %v5047, %v5051
        %v5053 = vadd.f32 1.0, %v5052
        %v5054 = vmul.f32 %v5045, %v5045
        %v5055 = vmul.f32 %v5054, -0.00019511016
        %v5056 = vadd.f32 %v5055, 0.008332121
        %v5057 = vmul.f32 %v5054, %v5056
        %v5058 = vadd.f32 %v5057, -0.16666654
        %v5059 = vmul.f32 %v5054, %v5058
        %v5060 = vadd.f32 %v5059, 1.0
        %v5061 = vmul.f32 %v5060, %v5045
        %vm5062 = vweird.f32 %v434
        %v5063 = vand.u32 %v5046, 3
        %vm5064 = vcmp.lt.s32.totalorder %v5063, 2
        %vm5065 = vcmp.eq.s32.totalorder %v5063, 0
        %v5066 = vxor.u32 %v5061, 2147483648
        %v5067 = vsel %vm5065, %v5053, %v5066
        %vm5068 = vcmp.eq.s32.totalorder %v5063, 2
        %v5069 = vxor.u32 %v5053, 2147483648
        %v5070 = vsel %vm5068, %v5069, %v5061
        %v5071 = vsel %vm5064, %v5067, %v5070
        %v5072 = vsel %vm5062, nan, %v5071
        %v5073 = vand.u32 2147483647, %v435
        %vm5074 = vcmp.le.f32.partialorder %v5073, 0.7853982
        %vm5075 = vcmp.lt.s32.totalorder %v435, 0
        %v5076 = vand.u32 %v435, 2139095040
        %v5077 = vshrl.u32 %v5076, 23
        %v5078 = vsub.s32 %v5077, 127
        %v5079 = vand.u32 2147483647, %v435
        %v5080 = vand.u32 %v5079, 8388607
        %v5081 = vor.u32 %v5080, 8388608
        %v5082 = vsub.s32 0, %v5081
        %v5083 = vadd.s32 %v5078, 1
        %vm5084 = vcmp.gt.s32.totalorder %v5083, 0
        %v5085 = vsel %vm5084, %v5083, 0
        %v5086 = vshrl.u32 %v5085, 5
        %v5087 = vand.u32 %v5085, 31
        %v5088 = vsub.s32 32, %v5087
        %v5089 = vshrl.u32 683565275, %v5088
        %v5090 = vshll.u32 683565275, %v5087
        %v5091 = vshrl.u32 2475754826, %v5088
        %v5092 = vor.u32 %v5090, %v5091
        %v5093 = vshll.u32 2475754826, %v5087
        %v5094 = vshrl.u32 2131351028, %v5088
        %v5095 = vor.u32 %v5093, %v5094
        %v5096 = vshll.u32 2131351028, %v5087
        %v5097 = vshrl.u32 2102212464, %v5088
        %v5098 = vor.u32 %v5096, %v5097
        %v5099 = vshll.u32 2102212464, %v5087
        %v5100 = vshrl.u32 920167782, %v5088
        %v5101 = vor.u32 %v5099, %v5100
        %v5102 = vshll.u32 920167782, %v5087
        %v5103 = vshrl.u32 1326507024, %v5088
        %v5104 = vor.u32 %v5102, %v5103
        %vm5105 = vcmp.lt.s32.totalorder %v5086, 1
        %vm5106 = vcmp.lt.s32.totalorder %v5086, 2
        %vm5107 = vcmp.lt.s32.totalorder %v5086, 3
        %vm5108 = vcmp.lt.s32.totalorder %v5086, 4
        %v5109 = vsel %vm5105, %v5089, %v5092
        %v5110 = vsel %vm5108, %v5098, 2102212464
        %v5111 = vsel %vm5107, %v5095, %v5110
        %v5112 = vsel %vm5106, %v5109, %v5111
        %v5113 = vsel %vm5105, %v5092, %v5095
        %v5114 = vsel %vm5108, %v5101, 920167782
        %v5115 = vsel %vm5107, %v5098, %v5114
        %v5116 = vsel %vm5106, %v5113, %v5115
        %v5117 = vsel %vm5105, %v5095, %v5098
        %v5118 = vsel %vm5108, %v5104, 1326507024
        %v5119 = vsel %vm5107, %v5101, %v5118
        %v5120 = vsel %vm5106, %v5117, %v5119
        %v5121 = vshll.u32 %v5081, 8
        %v5122 = vand.u32 %v5121, 65535
        %v5123 = vshrl.u32 %v5121, 16
        %v5124 = vand.u32 %v5120, 65535
        %v5125 = vshrl.u32 %v5120, 16
        %v5126 = vmul.u32 %v5122, %v5124
        %v5127 = vmul.u32 %v5122, %v5125
        %v5128 = vmul.u32 %v5123, %v5124
        %v5129 = vmul.u32 %v5123, %v5125
        %v5130 = vshll.u32 %v5127, 16
        %v5131 = vshrl.u32 %v5127, 16
        %v5132 = vshll.u32 %v5128, 16
        %v5133 = vshrl.u32 %v5128, 16
        %vm5134 = vc.u32 %v5126, %v5130
        %v5135 = vsel %vm5134, 1, 0
        %v5136 = vadd.s32 %v5126, %v5130
        %v5137 = vadd.s32 %v5129, %v5135
        %vm5138 = vc.u32 %v5136, %v5132
        %v5139 = vsel %vm5138, 1, 0
        %v5140 = vadd.s32 %v5136, %v5132
        %v5141 = vadd.s32 %v5137, %v5139
        %v5142 = vadd.s32 %v5141, %v5131
        %v5143 = vadd.s32 %v5142, %v5133
        %v5144 = vand.u32 %v5121, 65535
        %v5145 = vshrl.u32 %v5121, 16
        %v5146 = vand.u32 %v5116, 65535
        %v5147 = vshrl.u32 %v5116, 16
        %v5148 = vmul.u32 %v5144, %v5146
        %v5149 = vmul.u32 %v5144, %v5147
        %v5150 = vmul.u32 %v5145, %v5146
        %v5151 = vmul.u32 %v5145, %v5147
        %v5152 = vshll.u32 %v5149, 16
        %v5153 = vshrl.u32 %v5149, 16
        %v5154 = vshll.u32 %v5150, 16
        %v5155 = vshrl.u32 %v5150, 16
        %vm5156 = vc.u32 %v5148, %v5152
        %v5157 = vsel %vm5156, 1, 0
        %v5158 = vadd.s32 %v5148, %v5152
        %v5159 = vadd.s32 %v5151, %v5157
        %vm5160 = vc.u32 %v5158, %v5154
        %v5161 = vsel %vm5160, 1, 0
        %v5162 = vadd.s32 %v5158, %v5154
        %v5163 = vadd.s32 %v5159, %v5161
        %v5164 = vadd.s32 %v5163, %v5153
        %v5165 = vadd.s32 %v5164, %v5155
        %v5166 = vmul.u32 %v5121, %v5112
        %v5167 = vadd.s32 %v5143, %v5162
        %vm5168 = vc.u32 %v5143, %v5162
        %v5169 = vadd.s32 %v5165, 1
        %v5170 = vsel %vm5168, %v5169, %v5165
        %v5171 = vadd.s32 %v5166, %v5170
        %v5172 = vadd.s32 %v5171, 536870912
        %v5173 = vshrl.u32 %v5172, 30
        %v5174 = vshll.u32 %v5173, 30
        %v5175 = vsub.s32 %v5171, %v5174
        %vm5176 = vcmp.lt.s32.totalorder %v5175, 0
        %v5177 = vsub.s32 0, %v5175
        %v5178 = vsel %vm5176, %v5177, %v5175
        %v5179 = vclz %v5178
        %v5180 = vsub.s32 %v5179, 2
        %vm5181 = vcmp.gt.s32.totalorder 0, %v5180
        %v5182 = vsel %vm5181, 0, %v5180
        %v5183 = vsub.s32 32, %v5182
        %v5184 = vshll.u32 %v5175, %v5182
        %v5185 = vshrl.u32 %v5167, %v5183
        %v5186 = vor.u32 %v5184, %v5185
        %v5187 = vsub.s32 4294967266, %v5182
        %v5188 = vadd.s32 %v5187, 127
        %v5189 = vshll.u32 %v5188, 23
        %v5190 = vor.u32 4788187, %v5189
        %v5191 = vand.u32 2147483647, %v5190
        %v5193 = vcvt.s32.f32 %v5186
        %v5194 = vmul.f32 %v5193, %v5191
        %v5195 = vxor.u32 %v5194, 2147483648
        %v5196 = vsel %vm5075, %v5195, %v5194
        %v5197 = vsub.s32 4, %v5173
        %v5198 = vsel %vm5075, %v5197, %v5173
        %v5199 = vsel %vm5074, %v435, %v5196
        %v5200 = vsel %vm5074, 0, %v5198
        %v5201 = vmul.f32 %v5199, %v5199
        %v5202 = vmul.f32 %v5201, -0.001358992
        %v5203 = vadd.f32 %v5202, 0.041655596
        %v5204 = vmul.f32 %v5201, %v5203
        %v5205 = vadd.f32 %v5204, -0.4999988
        %v5206 = vmul.f32 %v5201, %v5205
        %v5207 = vadd.f32 1.0, %v5206
        %v5208 = vmul.f32 %v5199, %v5199
        %v5209 = vmul.f32 %v5208, -0.00019511016
        %v5210 = vadd.f32 %v5209, 0.008332121
        %v5211 = vmul.f32 %v5208, %v5210
        %v5212 = vadd.f32 %v5211, -0.16666654
        %v5213 = vmul.f32 %v5208, %v5212
        %v5214 = vadd.f32 %v5213, 1.0
        %v5215 = vmul.f32 %v5214, %v5199
        %vm5216 = vweird.f32 %v435
        %v5217 = vand.u32 %v5200, 3
        %vm5218 = vcmp.lt.s32.totalorder %v5217, 2
        %vm5219 = vcmp.eq.s32.totalorder %v5217, 0
        %v5220 = vxor.u32 %v5215, 2147483648
        %v5221 = vsel %vm5219, %v5207, %v5220
        %vm5222 = vcmp.eq.s32.totalorder %v5217, 2
        %v5223 = vxor.u32 %v5207, 2147483648
        %v5224 = vsel %vm5222, %v5223, %v5215
        %v5225 = vsel %vm5218, %v5221, %v5224
        %v5226 = vsel %vm5216, nan, %v5225
        %v5227 = vand.u32 2147483647, %v436
        %vm5228 = vcmp.le.f32.partialorder %v5227, 0.7853982
        %vm5229 = vcmp.lt.s32.totalorder %v436, 0
        %v5230 = vand.u32 %v436, 2139095040
        %v5231 = vshrl.u32 %v5230, 23
        %v5232 = vsub.s32 %v5231, 127
        %v5233 = vand.u32 2147483647, %v436
        %v5234 = vand.u32 %v5233, 8388607
        %v5235 = vor.u32 %v5234, 8388608
        %v5236 = vsub.s32 0, %v5235
        %v5237 = vadd.s32 %v5232, 1
        %vm5238 = vcmp.gt.s32.totalorder %v5237, 0
        %v5239 = vsel %vm5238, %v5237, 0
        %v5240 = vshrl.u32 %v5239, 5
        %v5241 = vand.u32 %v5239, 31
        %v5242 = vsub.s32 32, %v5241
        %v5243 = vshrl.u32 683565275, %v5242
        %v5244 = vshll.u32 683565275, %v5241
        %v5245 = vshrl.u32 2475754826, %v5242
        %v5246 = vor.u32 %v5244, %v5245
        %v5247 = vshll.u32 2475754826, %v5241
        %v5248 = vshrl.u32 2131351028, %v5242
        %v5249 = vor.u32 %v5247, %v5248
        %v5250 = vshll.u32 2131351028, %v5241
        %v5251 = vshrl.u32 2102212464, %v5242
        %v5252 = vor.u32 %v5250, %v5251
        %v5253 = vshll.u32 2102212464, %v5241
        %v5254 = vshrl.u32 920167782, %v5242
        %v5255 = vor.u32 %v5253, %v5254
        %v5256 = vshll.u32 920167782, %v5241
        %v5257 = vshrl.u32 1326507024, %v5242
        %v5258 = vor.u32 %v5256, %v5257
        %vm5259 = vcmp.lt.s32.totalorder %v5240, 1
        %vm5260 = vcmp.lt.s32.totalorder %v5240, 2
        %vm5261 = vcmp.lt.s32.totalorder %v5240, 3
        %vm5262 = vcmp.lt.s32.totalorder %v5240, 4
        %v5263 = vsel %vm5259, %v5243, %v5246
        %v5264 = vsel %vm5262, %v5252, 2102212464
        %v5265 = vsel %vm5261, %v5249, %v5264
        %v5266 = vsel %vm5260, %v5263, %v5265
        %v5267 = vsel %vm5259, %v5246, %v5249
        %v5268 = vsel %vm5262, %v5255, 920167782
        %v5269 = vsel %vm5261, %v5252, %v5268
        %v5270 = vsel %vm5260, %v5267, %v5269
        %v5271 = vsel %vm5259, %v5249, %v5252
        %v5272 = vsel %vm5262, %v5258, 1326507024
        %v5273 = vsel %vm5261, %v5255, %v5272
        %v5274 = vsel %vm5260, %v5271, %v5273
        %v5275 = vshll.u32 %v5235, 8
        %v5276 = vand.u32 %v5275, 65535
        %v5277 = vshrl.u32 %v5275, 16
        %v5278 = vand.u32 %v5274, 65535
        %v5279 = vshrl.u32 %v5274, 16
        %v5280 = vmul.u32 %v5276, %v5278
        %v5281 = vmul.u32 %v5276, %v5279
        %v5282 = vmul.u32 %v5277, %v5278
        %v5283 = vmul.u32 %v5277, %v5279
        %v5284 = vshll.u32 %v5281, 16
        %v5285 = vshrl.u32 %v5281, 16
        %v5286 = vshll.u32 %v5282, 16
        %v5287 = vshrl.u32 %v5282, 16
        %vm5288 = vc.u32 %v5280, %v5284
        %v5289 = vsel %vm5288, 1, 0
        %v5290 = vadd.s32 %v5280, %v5284
        %v5291 = vadd.s32 %v5283, %v5289
        %vm5292 = vc.u32 %v5290, %v5286
        %v5293 = vsel %vm5292, 1, 0
        %v5294 = vadd.s32 %v5290, %v5286
        %v5295 = vadd.s32 %v5291, %v5293
        %v5296 = vadd.s32 %v5295, %v5285
        %v5297 = vadd.s32 %v5296, %v5287
        %v5298 = vand.u32 %v5275, 65535
        %v5299 = vshrl.u32 %v5275, 16
        %v5300 = vand.u32 %v5270, 65535
        %v5301 = vshrl.u32 %v5270, 16
        %v5302 = vmul.u32 %v5298, %v5300
        %v5303 = vmul.u32 %v5298, %v5301
        %v5304 = vmul.u32 %v5299, %v5300
        %v5305 = vmul.u32 %v5299, %v5301
        %v5306 = vshll.u32 %v5303, 16
        %v5307 = vshrl.u32 %v5303, 16
        %v5308 = vshll.u32 %v5304, 16
        %v5309 = vshrl.u32 %v5304, 16
        %vm5310 = vc.u32 %v5302, %v5306
        %v5311 = vsel %vm5310, 1, 0
        %v5312 = vadd.s32 %v5302, %v5306
        %v5313 = vadd.s32 %v5305, %v5311
        %vm5314 = vc.u32 %v5312, %v5308
        %v5315 = vsel %vm5314, 1, 0
        %v5316 = vadd.s32 %v5312, %v5308
        %v5317 = vadd.s32 %v5313, %v5315
        %v5318 = vadd.s32 %v5317, %v5307
        %v5319 = vadd.s32 %v5318, %v5309
        %v5320 = vmul.u32 %v5275, %v5266
        %v5321 = vadd.s32 %v5297, %v5316
        %vm5322 = vc.u32 %v5297, %v5316
        %v5323 = vadd.s32 %v5319, 1
        %v5324 = vsel %vm5322, %v5323, %v5319
        %v5325 = vadd.s32 %v5320, %v5324
        %v5326 = vadd.s32 %v5325, 536870912
        %v5327 = vshrl.u32 %v5326, 30
        %v5328 = vshll.u32 %v5327, 30
        %v5329 = vsub.s32 %v5325, %v5328
        %vm5330 = vcmp.lt.s32.totalorder %v5329, 0
        %v5331 = vsub.s32 0, %v5329
        %v5332 = vsel %vm5330, %v5331, %v5329
        %v5333 = vclz %v5332
        %v5334 = vsub.s32 %v5333, 2
        %vm5335 = vcmp.gt.s32.totalorder 0, %v5334
        %v5336 = vsel %vm5335, 0, %v5334
        %v5337 = vsub.s32 32, %v5336
        %v5338 = vshll.u32 %v5329, %v5336
        %v5339 = vshrl.u32 %v5321, %v5337
        %v5340 = vor.u32 %v5338, %v5339
        %v5341 = vsub.s32 4294967266, %v5336
        %v5342 = vadd.s32 %v5341, 127
        %v5343 = vshll.u32 %v5342, 23
        %v5344 = vor.u32 4788187, %v5343
        %v5345 = vand.u32 2147483647, %v5344
        %v5347 = vcvt.s32.f32 %v5340
        %v5348 = vmul.f32 %v5347, %v5345
        %v5349 = vxor.u32 %v5348, 2147483648
        %v5350 = vsel %vm5229, %v5349, %v5348
        %v5351 = vsub.s32 4, %v5327
        %v5352 = vsel %vm5229, %v5351, %v5327
        %v5353 = vsel %vm5228, %v436, %v5350
        %v5354 = vsel %vm5228, 0, %v5352
        %v5355 = vmul.f32 %v5353, %v5353
        %v5356 = vmul.f32 %v5355, -0.001358992
        %v5357 = vadd.f32 %v5356, 0.041655596
        %v5358 = vmul.f32 %v5355, %v5357
        %v5359 = vadd.f32 %v5358, -0.4999988
        %v5360 = vmul.f32 %v5355, %v5359
        %v5361 = vadd.f32 1.0, %v5360
        %v5362 = vmul.f32 %v5353, %v5353
        %v5363 = vmul.f32 %v5362, -0.00019511016
        %v5364 = vadd.f32 %v5363, 0.008332121
        %v5365 = vmul.f32 %v5362, %v5364
        %v5366 = vadd.f32 %v5365, -0.16666654
        %v5367 = vmul.f32 %v5362, %v5366
        %v5368 = vadd.f32 %v5367, 1.0
        %v5369 = vmul.f32 %v5368, %v5353
        %vm5370 = vweird.f32 %v436
        %v5371 = vand.u32 %v5354, 3
        %vm5372 = vcmp.lt.s32.totalorder %v5371, 2
        %vm5373 = vcmp.eq.s32.totalorder %v5371, 0
        %v5374 = vxor.u32 %v5369, 2147483648
        %v5375 = vsel %vm5373, %v5361, %v5374
        %vm5376 = vcmp.eq.s32.totalorder %v5371, 2
        %v5377 = vxor.u32 %v5361, 2147483648
        %v5378 = vsel %vm5376, %v5377, %v5369
        %v5379 = vsel %vm5372, %v5375, %v5378
        %v5380 = vsel %vm5370, nan, %v5379
        %v5381 = vpack.c.bf16 %v746, %v591
        %v5382 = vpack.c.bf16 %v1056, %v901
        %v5383 = vpack.c.bf16 %v1366, %v1211
        %v5384 = vpack.c.bf16 %v1676, %v1521
        %v5385 = vpack.c.bf16 %v1986, %v1831
        %v5386 = vpack.c.bf16 %v2296, %v2141
        %v5387 = vpack.c.bf16 %v2606, %v2451
        %v5388 = vpack.c.bf16 %v2916, %v2761
        %v5389 = vld [vmem:[#allocation5] sm:$0xff]
        %v5390 = vld [vmem:[#allocation5 + $0x8] sm:$0xff]
        %v5391 = vld [vmem:[#allocation5 + $0x10] sm:$0xff]
        %v5392 = vld [vmem:[#allocation5 + $0x18] sm:$0xff]
        %v5393 = vld [vmem:[#allocation5 + $0x20] sm:$0xff]
        %v5394 = vld [vmem:[#allocation5 + $0x28] sm:$0xff]
        %v5395 = vld [vmem:[#allocation5 + $0x30] sm:$0xff]
        %v5396 = vld [vmem:[#allocation5 + $0x38] sm:$0xff]
        %v5397 = vld [vmem:[#allocation5 + $0x40] sm:$0xff]
        %v5398 = vld [vmem:[#allocation5 + $0x48] sm:$0xff]
        %v5399 = vld [vmem:[#allocation5 + $0x50] sm:$0xff]
        %v5400 = vld [vmem:[#allocation5 + $0x58] sm:$0xff]
        %v5401 = vld [vmem:[#allocation5 + $0x60] sm:$0xff]
        %v5402 = vld [vmem:[#allocation5 + $0x68] sm:$0xff]
        %v5403 = vld [vmem:[#allocation5 + $0x70] sm:$0xff]
        %v5404 = vld [vmem:[#allocation5 + $0x78] sm:$0xff]
        %v5405 = vld [vmem:[#allocation5 + $0x80] sm:$0xff]
        %v5406 = vld [vmem:[#allocation5 + $0x88] sm:$0xff]
        %v5407 = vld [vmem:[#allocation5 + $0x90] sm:$0xff]
        %v5408 = vld [vmem:[#allocation5 + $0x98] sm:$0xff]
        %v5409 = vld [vmem:[#allocation5 + $0xa0] sm:$0xff]
        %v5410 = vld [vmem:[#allocation5 + $0xa8] sm:$0xff]
        %v5411 = vld [vmem:[#allocation5 + $0xb0] sm:$0xff]
        %v5412 = vld [vmem:[#allocation5 + $0xb8] sm:$0xff]
        %v5413 = vld [vmem:[#allocation5 + $0xc0] sm:$0xff]
        %v5414 = vld [vmem:[#allocation5 + $0xc8] sm:$0xff]
        %v5415 = vld [vmem:[#allocation5 + $0xd0] sm:$0xff]
        %v5416 = vld [vmem:[#allocation5 + $0xd8] sm:$0xff]
        %v5417 = vld [vmem:[#allocation5 + $0xe0] sm:$0xff]
        %v5418 = vld [vmem:[#allocation5 + $0xe8] sm:$0xff]
        %v5419 = vld [vmem:[#allocation5 + $0xf0] sm:$0xff]
        %v5420 = vld [vmem:[#allocation5 + $0xf8] sm:$0xff]
        %v5421 = vld [vmem:[#allocation5 + $0x100] sm:$0xff]
        %v5422 = vld [vmem:[#allocation5 + $0x108] sm:$0xff]
        %v5423 = vld [vmem:[#allocation5 + $0x110] sm:$0xff]
        %v5424 = vld [vmem:[#allocation5 + $0x118] sm:$0xff]
        %v5425 = vld [vmem:[#allocation5 + $0x120] sm:$0xff]
        %v5426 = vld [vmem:[#allocation5 + $0x128] sm:$0xff]
        %v5427 = vld [vmem:[#allocation5 + $0x130] sm:$0xff]
        %v5428 = vld [vmem:[#allocation5 + $0x138] sm:$0xff]
        %v5429 = vld [vmem:[#allocation5 + $0x140] sm:$0xff]
        %v5430 = vld [vmem:[#allocation5 + $0x148] sm:$0xff]
        %v5431 = vld [vmem:[#allocation5 + $0x150] sm:$0xff]
        %v5432 = vld [vmem:[#allocation5 + $0x158] sm:$0xff]
        %v5433 = vld [vmem:[#allocation5 + $0x160] sm:$0xff]
        %v5434 = vld [vmem:[#allocation5 + $0x168] sm:$0xff]
        %v5435 = vld [vmem:[#allocation5 + $0x170] sm:$0xff]
        %v5436 = vld [vmem:[#allocation5 + $0x178] sm:$0xff]
        %v5437 = vld [vmem:[#allocation5 + $0x180] sm:$0xff]
        %v5438 = vld [vmem:[#allocation5 + $0x188] sm:$0xff]
        %v5439 = vld [vmem:[#allocation5 + $0x190] sm:$0xff]
        %v5440 = vld [vmem:[#allocation5 + $0x198] sm:$0xff]
        %v5441 = vld [vmem:[#allocation5 + $0x1a0] sm:$0xff]
        %v5442 = vld [vmem:[#allocation5 + $0x1a8] sm:$0xff]
        %v5443 = vld [vmem:[#allocation5 + $0x1b0] sm:$0xff]
        %v5444 = vld [vmem:[#allocation5 + $0x1b8] sm:$0xff]
        %v5445 = vld [vmem:[#allocation5 + $0x1c0] sm:$0xff]
        %v5446 = vld [vmem:[#allocation5 + $0x1c8] sm:$0xff]
        %v5447 = vld [vmem:[#allocation5 + $0x1d0] sm:$0xff]
        %v5448 = vld [vmem:[#allocation5 + $0x1d8] sm:$0xff]
        %v5449 = vld [vmem:[#allocation5 + $0x1e0] sm:$0xff]
        %v5450 = vld [vmem:[#allocation5 + $0x1e8] sm:$0xff]
        %v5451 = vld [vmem:[#allocation5 + $0x1f0] sm:$0xff]
        %v5452 = vld [vmem:[#allocation5 + $0x1f8] sm:$0xff]
        %v5453 = vpack.c.bf16 %v3224, %v3070
        %v5454 = vpack.c.bf16 %v3532, %v3378
        %v5455 = vpack.c.bf16 %v3840, %v3686
        %v5456 = vpack.c.bf16 %v4148, %v3994
        %v5457 = vpack.c.bf16 %v4456, %v4302
        %v5458 = vpack.c.bf16 %v4764, %v4610
        %v5459 = vpack.c.bf16 %v5072, %v4918
        %v5460 = vpack.c.bf16 %v5380, %v5226
        %v5461 = vld [vmem:[#allocation7] sm:$0xff]
        %v5462 = vld [vmem:[#allocation7 + $0x8] sm:$0xff]
        %v5463 = vld [vmem:[#allocation7 + $0x10] sm:$0xff]
        %v5464 = vld [vmem:[#allocation7 + $0x18] sm:$0xff]
        %v5465 = vld [vmem:[#allocation7 + $0x20] sm:$0xff]
        %v5466 = vld [vmem:[#allocation7 + $0x28] sm:$0xff]
        %v5467 = vld [vmem:[#allocation7 + $0x30] sm:$0xff]
        %v5468 = vld [vmem:[#allocation7 + $0x38] sm:$0xff]
        %v5469 = vld [vmem:[#allocation7 + $0x40] sm:$0xff]
        %v5470 = vld [vmem:[#allocation7 + $0x48] sm:$0xff]
        %v5471 = vld [vmem:[#allocation7 + $0x50] sm:$0xff]
        %v5472 = vld [vmem:[#allocation7 + $0x58] sm:$0xff]
        %v5473 = vld [vmem:[#allocation7 + $0x60] sm:$0xff]
        %v5474 = vld [vmem:[#allocation7 + $0x68] sm:$0xff]
        %v5475 = vld [vmem:[#allocation7 + $0x70] sm:$0xff]
        %v5476 = vld [vmem:[#allocation7 + $0x78] sm:$0xff]
        %v5477 = vld [vmem:[#allocation7 + $0x80] sm:$0xff]
        %v5478 = vld [vmem:[#allocation7 + $0x88] sm:$0xff]
        %v5479 = vld [vmem:[#allocation7 + $0x90] sm:$0xff]
        %v5480 = vld [vmem:[#allocation7 + $0x98] sm:$0xff]
        %v5481 = vld [vmem:[#allocation7 + $0xa0] sm:$0xff]
        %v5482 = vld [vmem:[#allocation7 + $0xa8] sm:$0xff]
        %v5483 = vld [vmem:[#allocation7 + $0xb0] sm:$0xff]
        %v5484 = vld [vmem:[#allocation7 + $0xb8] sm:$0xff]
        %v5485 = vld [vmem:[#allocation7 + $0xc0] sm:$0xff]
        %v5486 = vld [vmem:[#allocation7 + $0xc8] sm:$0xff]
        %v5487 = vld [vmem:[#allocation7 + $0xd0] sm:$0xff]
        %v5488 = vld [vmem:[#allocation7 + $0xd8] sm:$0xff]
        %v5489 = vld [vmem:[#allocation7 + $0xe0] sm:$0xff]
        %v5490 = vld [vmem:[#allocation7 + $0xe8] sm:$0xff]
        %v5491 = vld [vmem:[#allocation7 + $0xf0] sm:$0xff]
        %v5492 = vld [vmem:[#allocation7 + $0xf8] sm:$0xff]
        %v5493 = vld [vmem:[#allocation7 + $0x100] sm:$0xff]
        %v5494 = vld [vmem:[#allocation7 + $0x108] sm:$0xff]
        %v5495 = vld [vmem:[#allocation7 + $0x110] sm:$0xff]
        %v5496 = vld [vmem:[#allocation7 + $0x118] sm:$0xff]
        %v5497 = vld [vmem:[#allocation7 + $0x120] sm:$0xff]
        %v5498 = vld [vmem:[#allocation7 + $0x128] sm:$0xff]
        %v5499 = vld [vmem:[#allocation7 + $0x130] sm:$0xff]
        %v5500 = vld [vmem:[#allocation7 + $0x138] sm:$0xff]
        %v5501 = vld [vmem:[#allocation7 + $0x140] sm:$0xff]
        %v5502 = vld [vmem:[#allocation7 + $0x148] sm:$0xff]
        %v5503 = vld [vmem:[#allocation7 + $0x150] sm:$0xff]
        %v5504 = vld [vmem:[#allocation7 + $0x158] sm:$0xff]
        %v5505 = vld [vmem:[#allocation7 + $0x160] sm:$0xff]
        %v5506 = vld [vmem:[#allocation7 + $0x168] sm:$0xff]
        %v5507 = vld [vmem:[#allocation7 + $0x170] sm:$0xff]
        %v5508 = vld [vmem:[#allocation7 + $0x178] sm:$0xff]
        %v5509 = vld [vmem:[#allocation7 + $0x180] sm:$0xff]
        %v5510 = vld [vmem:[#allocation7 + $0x188] sm:$0xff]
        %v5511 = vld [vmem:[#allocation7 + $0x190] sm:$0xff]
        %v5512 = vld [vmem:[#allocation7 + $0x198] sm:$0xff]
        %v5513 = vld [vmem:[#allocation7 + $0x1a0] sm:$0xff]
        %v5514 = vld [vmem:[#allocation7 + $0x1a8] sm:$0xff]
        %v5515 = vld [vmem:[#allocation7 + $0x1b0] sm:$0xff]
        %v5516 = vld [vmem:[#allocation7 + $0x1b8] sm:$0xff]
        %v5517 = vld [vmem:[#allocation7 + $0x1c0] sm:$0xff]
        %v5518 = vld [vmem:[#allocation7 + $0x1c8] sm:$0xff]
        %v5519 = vld [vmem:[#allocation7 + $0x1d0] sm:$0xff]
        %v5520 = vld [vmem:[#allocation7 + $0x1d8] sm:$0xff]
        %v5521 = vld [vmem:[#allocation7 + $0x1e0] sm:$0xff]
        %v5522 = vld [vmem:[#allocation7 + $0x1e8] sm:$0xff]
        %v5523 = vld [vmem:[#allocation7 + $0x1f0] sm:$0xff]
        %v5524 = vld [vmem:[#allocation7 + $0x1f8] sm:$0xff]
        %v5589 = vunpack.c.l.b16 %v5461
        %v5590 = vunpack.c.h.b16 %v5461
        %v5591 = vunpack.c.l.b16 %v5462
        %v5592 = vunpack.c.h.b16 %v5462
        %v5593 = vunpack.c.l.b16 %v5463
        %v5594 = vunpack.c.h.b16 %v5463
        %v5595 = vunpack.c.l.b16 %v5464
        %v5596 = vunpack.c.h.b16 %v5464
        %v5597 = vunpack.c.l.b16 %v5465
        %v5598 = vunpack.c.h.b16 %v5465
        %v5599 = vunpack.c.l.b16 %v5466
        %v5600 = vunpack.c.h.b16 %v5466
        %v5601 = vunpack.c.l.b16 %v5467
        %v5602 = vunpack.c.h.b16 %v5467
        %v5603 = vunpack.c.l.b16 %v5468
        %v5604 = vunpack.c.h.b16 %v5468
        %v5605 = vunpack.c.l.b16 %v5469
        %v5606 = vunpack.c.h.b16 %v5469
        %v5607 = vunpack.c.l.b16 %v5470
        %v5608 = vunpack.c.h.b16 %v5470
        %v5609 = vunpack.c.l.b16 %v5471
        %v5610 = vunpack.c.h.b16 %v5471
        %v5611 = vunpack.c.l.b16 %v5472
        %v5612 = vunpack.c.h.b16 %v5472
        %v5613 = vunpack.c.l.b16 %v5473
        %v5614 = vunpack.c.h.b16 %v5473
        %v5615 = vunpack.c.l.b16 %v5474
        %v5616 = vunpack.c.h.b16 %v5474
        %v5617 = vunpack.c.l.b16 %v5475
        %v5618 = vunpack.c.h.b16 %v5475
        %v5619 = vunpack.c.l.b16 %v5476
        %v5620 = vunpack.c.h.b16 %v5476
        %v5621 = vunpack.c.l.b16 %v5477
        %v5622 = vunpack.c.h.b16 %v5477
        %v5623 = vunpack.c.l.b16 %v5478
        %v5624 = vunpack.c.h.b16 %v5478
        %v5625 = vunpack.c.l.b16 %v5479
        %v5626 = vunpack.c.h.b16 %v5479
        %v5627 = vunpack.c.l.b16 %v5480
        %v5628 = vunpack.c.h.b16 %v5480
        %v5629 = vunpack.c.l.b16 %v5481
        %v5630 = vunpack.c.h.b16 %v5481
        %v5631 = vunpack.c.l.b16 %v5482
        %v5632 = vunpack.c.h.b16 %v5482
        %v5633 = vunpack.c.l.b16 %v5483
        %v5634 = vunpack.c.h.b16 %v5483
        %v5635 = vunpack.c.l.b16 %v5484
        %v5636 = vunpack.c.h.b16 %v5484
        %v5637 = vunpack.c.l.b16 %v5485
        %v5638 = vunpack.c.h.b16 %v5485
        %v5639 = vunpack.c.l.b16 %v5486
        %v5640 = vunpack.c.h.b16 %v5486
        %v5641 = vunpack.c.l.b16 %v5487
        %v5642 = vunpack.c.h.b16 %v5487
        %v5643 = vunpack.c.l.b16 %v5488
        %v5644 = vunpack.c.h.b16 %v5488
        %v5645 = vunpack.c.l.b16 %v5489
        %v5646 = vunpack.c.h.b16 %v5489
        %v5647 = vunpack.c.l.b16 %v5490
        %v5648 = vunpack.c.h.b16 %v5490
        %v5649 = vunpack.c.l.b16 %v5491
        %v5650 = vunpack.c.h.b16 %v5491
        %v5651 = vunpack.c.l.b16 %v5492
        %v5652 = vunpack.c.h.b16 %v5492
        %v5653 = vunpack.c.l.b16 %v5493
        %v5654 = vunpack.c.h.b16 %v5493
        %v5655 = vunpack.c.l.b16 %v5494
        %v5656 = vunpack.c.h.b16 %v5494
        %v5657 = vunpack.c.l.b16 %v5495
        %v5658 = vunpack.c.h.b16 %v5495
        %v5659 = vunpack.c.l.b16 %v5496
        %v5660 = vunpack.c.h.b16 %v5496
        %v5661 = vunpack.c.l.b16 %v5497
        %v5662 = vunpack.c.h.b16 %v5497
        %v5663 = vunpack.c.l.b16 %v5498
        %v5664 = vunpack.c.h.b16 %v5498
        %v5665 = vunpack.c.l.b16 %v5499
        %v5666 = vunpack.c.h.b16 %v5499
        %v5667 = vunpack.c.l.b16 %v5500
        %v5668 = vunpack.c.h.b16 %v5500
        %v5669 = vunpack.c.l.b16 %v5501
        %v5670 = vunpack.c.h.b16 %v5501
        %v5671 = vunpack.c.l.b16 %v5502
        %v5672 = vunpack.c.h.b16 %v5502
        %v5673 = vunpack.c.l.b16 %v5503
        %v5674 = vunpack.c.h.b16 %v5503
        %v5675 = vunpack.c.l.b16 %v5504
        %v5676 = vunpack.c.h.b16 %v5504
        %v5677 = vunpack.c.l.b16 %v5505
        %v5678 = vunpack.c.h.b16 %v5505
        %v5679 = vunpack.c.l.b16 %v5506
        %v5680 = vunpack.c.h.b16 %v5506
        %v5681 = vunpack.c.l.b16 %v5507
        %v5682 = vunpack.c.h.b16 %v5507
        %v5683 = vunpack.c.l.b16 %v5508
        %v5684 = vunpack.c.h.b16 %v5508
        %v5685 = vunpack.c.l.b16 %v5509
        %v5686 = vunpack.c.h.b16 %v5509
        %v5687 = vunpack.c.l.b16 %v5510
        %v5688 = vunpack.c.h.b16 %v5510
        %v5689 = vunpack.c.l.b16 %v5511
        %v5690 = vunpack.c.h.b16 %v5511
        %v5691 = vunpack.c.l.b16 %v5512
        %v5692 = vunpack.c.h.b16 %v5512
        %v5693 = vunpack.c.l.b16 %v5513
        %v5694 = vunpack.c.h.b16 %v5513
        %v5695 = vunpack.c.l.b16 %v5514
        %v5696 = vunpack.c.h.b16 %v5514
        %v5697 = vunpack.c.l.b16 %v5515
        %v5698 = vunpack.c.h.b16 %v5515
        %v5699 = vunpack.c.l.b16 %v5516
        %v5700 = vunpack.c.h.b16 %v5516
        %v5701 = vunpack.c.l.b16 %v5517
        %v5702 = vunpack.c.h.b16 %v5517
        %v5703 = vunpack.c.l.b16 %v5518
        %v5704 = vunpack.c.h.b16 %v5518
        %v5705 = vunpack.c.l.b16 %v5519
        %v5706 = vunpack.c.h.b16 %v5519
        %v5707 = vunpack.c.l.b16 %v5520
        %v5708 = vunpack.c.h.b16 %v5520
        %v5709 = vunpack.c.l.b16 %v5521
        %v5710 = vunpack.c.h.b16 %v5521
        %v5711 = vunpack.c.l.b16 %v5522
        %v5712 = vunpack.c.h.b16 %v5522
        %v5713 = vunpack.c.l.b16 %v5523
        %v5714 = vunpack.c.h.b16 %v5523
        %v5715 = vunpack.c.l.b16 %v5524
        %v5716 = vunpack.c.h.b16 %v5524
        %v5717 = vpack.c.b16 %v5597, %v5589
        %v5718 = vpack.c.b16 %v5598, %v5590
        %v5719 = vpack.c.b16 %v5599, %v5591
        %v5720 = vpack.c.b16 %v5600, %v5592
        %v5721 = vpack.c.b16 %v5601, %v5593
        %v5722 = vpack.c.b16 %v5602, %v5594
        %v5723 = vpack.c.b16 %v5603, %v5595
        %v5724 = vpack.c.b16 %v5604, %v5596
        %v5725 = vpack.c.b16 %v5613, %v5605
        %v5726 = vpack.c.b16 %v5614, %v5606
        %v5727 = vpack.c.b16 %v5615, %v5607
        %v5728 = vpack.c.b16 %v5616, %v5608
        %v5729 = vpack.c.b16 %v5617, %v5609
        %v5730 = vpack.c.b16 %v5618, %v5610
        %v5731 = vpack.c.b16 %v5619, %v5611
        %v5732 = vpack.c.b16 %v5620, %v5612
        %v5733 = vpack.c.b16 %v5629, %v5621
        %v5734 = vpack.c.b16 %v5630, %v5622
        %v5735 = vpack.c.b16 %v5631, %v5623
        %v5736 = vpack.c.b16 %v5632, %v5624
        %v5737 = vpack.c.b16 %v5633, %v5625
        %v5738 = vpack.c.b16 %v5634, %v5626
        %v5739 = vpack.c.b16 %v5635, %v5627
        %v5740 = vpack.c.b16 %v5636, %v5628
        %v5741 = vpack.c.b16 %v5645, %v5637
        %v5742 = vpack.c.b16 %v5646, %v5638
        %v5743 = vpack.c.b16 %v5647, %v5639
        %v5744 = vpack.c.b16 %v5648, %v5640
        %v5745 = vpack.c.b16 %v5649, %v5641
        %v5746 = vpack.c.b16 %v5650, %v5642
        %v5747 = vpack.c.b16 %v5651, %v5643
        %v5748 = vpack.c.b16 %v5652, %v5644
        %v5749 = vpack.c.b16 %v5661, %v5653
        %v5750 = vpack.c.b16 %v5662, %v5654
        %v5751 = vpack.c.b16 %v5663, %v5655
        %v5752 = vpack.c.b16 %v5664, %v5656
        %v5753 = vpack.c.b16 %v5665, %v5657
        %v5754 = vpack.c.b16 %v5666, %v5658
        %v5755 = vpack.c.b16 %v5667, %v5659
        %v5756 = vpack.c.b16 %v5668, %v5660
        %v5757 = vpack.c.b16 %v5677, %v5669
        %v5758 = vpack.c.b16 %v5678, %v5670
        %v5759 = vpack.c.b16 %v5679, %v5671
        %v5760 = vpack.c.b16 %v5680, %v5672
        %v5761 = vpack.c.b16 %v5681, %v5673
        %v5762 = vpack.c.b16 %v5682, %v5674
        %v5763 = vpack.c.b16 %v5683, %v5675
        %v5764 = vpack.c.b16 %v5684, %v5676
        %v5765 = vpack.c.b16 %v5693, %v5685
        %v5766 = vpack.c.b16 %v5694, %v5686
        %v5767 = vpack.c.b16 %v5695, %v5687
        %v5768 = vpack.c.b16 %v5696, %v5688
        %v5769 = vpack.c.b16 %v5697, %v5689
        %v5770 = vpack.c.b16 %v5698, %v5690
        %v5771 = vpack.c.b16 %v5699, %v5691
        %v5772 = vpack.c.b16 %v5700, %v5692
        %v5773 = vpack.c.b16 %v5709, %v5701
        %v5774 = vpack.c.b16 %v5710, %v5702
        %v5775 = vpack.c.b16 %v5711, %v5703
        %v5776 = vpack.c.b16 %v5712, %v5704
        %v5777 = vpack.c.b16 %v5713, %v5705
        %v5778 = vpack.c.b16 %v5714, %v5706
        %v5779 = vpack.c.b16 %v5715, %v5707
        %v5780 = vpack.c.b16 %v5716, %v5708
        %5845 = vmatpush.bf16.msra.mxu0 %v5773
        %5846 = vmatpush.bf16.msra.mxu0 %v5765
        %5847 = vmatpush.bf16.msra.mxu0 %v5757
        %5848 = vmatpush.bf16.msra.mxu0 %v5749
        %5849 = vmatpush.bf16.msra.mxu0 %v5741
        %5850 = vmatpush.bf16.msra.mxu0 %v5733
        %5851 = vmatpush.bf16.msra.mxu0 %v5725
        %5852 = vmatpush.bf16.msra.mxu0 %v5717
        %5853 = vmatmul.bf16.gmra.mxu0 %v5453
        %v5854 = vpop.f32.mrf.mxu0
        %v5855 = vadd.f32 0.0, %v5854
        %v5856 = vpop.f32.mrf.mxu0
        %v5857 = vadd.f32 0.0, %v5856
        %5858 = vmatmul.bf16.gmra.mxu0 %v5454
        %v5859 = vpop.f32.mrf.mxu0
        %v5860 = vadd.f32 0.0, %v5859
        %v5861 = vpop.f32.mrf.mxu0
        %v5862 = vadd.f32 0.0, %v5861
        %5863 = vmatmul.bf16.gmra.mxu0 %v5455
        %v5864 = vpop.f32.mrf.mxu0
        %v5865 = vadd.f32 0.0, %v5864
        %v5866 = vpop.f32.mrf.mxu0
        %v5867 = vadd.f32 0.0, %v5866
        %5868 = vmatmul.bf16.gmra.mxu0 %v5456
        %v5869 = vpop.f32.mrf.mxu0
        %v5870 = vadd.f32 0.0, %v5869
        %v5871 = vpop.f32.mrf.mxu0
        %v5872 = vadd.f32 0.0, %v5871
        %5873 = vmatmul.bf16.gmra.mxu0 %v5457
        %v5874 = vpop.f32.mrf.mxu0
        %v5875 = vadd.f32 0.0, %v5874
        %v5876 = vpop.f32.mrf.mxu0
        %v5877 = vadd.f32 0.0, %v5876
        %5878 = vmatmul.bf16.gmra.mxu0 %v5458
        %v5879 = vpop.f32.mrf.mxu0
        %v5880 = vadd.f32 0.0, %v5879
        %v5881 = vpop.f32.mrf.mxu0
        %v5882 = vadd.f32 0.0, %v5881
        %5883 = vmatmul.bf16.gmra.mxu0 %v5459
        %v5884 = vpop.f32.mrf.mxu0
        %v5885 = vadd.f32 0.0, %v5884
        %v5886 = vpop.f32.mrf.mxu0
        %v5887 = vadd.f32 0.0, %v5886
        %5888 = vmatmul.bf16.gmra.mxu0 %v5460
        %v5889 = vpop.f32.mrf.mxu0
        %v5890 = vadd.f32 0.0, %v5889
        %v5891 = vpop.f32.mrf.mxu0
        %v5892 = vadd.f32 0.0, %v5891
        %5893 = vdwg.mxu0
        %5894 = vmatpush.bf16.msra.mxu0 %v5774
        %5895 = vmatpush.bf16.msra.mxu0 %v5766
        %5896 = vmatpush.bf16.msra.mxu0 %v5758
        %5897 = vmatpush.bf16.msra.mxu0 %v5750
        %5898 = vmatpush.bf16.msra.mxu0 %v5742
        %5899 = vmatpush.bf16.msra.mxu0 %v5734
        %5900 = vmatpush.bf16.msra.mxu0 %v5726
        %5901 = vmatpush.bf16.msra.mxu0 %v5718
        %5902 = vmatmul.bf16.gmra.mxu0 %v5453
        %v5903 = vpop.f32.mrf.mxu0
        %v5904 = vadd.f32 0.0, %v5903
        %v5905 = vpop.f32.mrf.mxu0
        %v5906 = vadd.f32 0.0, %v5905
        %5907 = vmatmul.bf16.gmra.mxu0 %v5454
        %v5908 = vpop.f32.mrf.mxu0
        %v5909 = vadd.f32 0.0, %v5908
        %v5910 = vpop.f32.mrf.mxu0
        %v5911 = vadd.f32 0.0, %v5910
        %5912 = vmatmul.bf16.gmra.mxu0 %v5455
        %v5913 = vpop.f32.mrf.mxu0
        %v5914 = vadd.f32 0.0, %v5913
        %v5915 = vpop.f32.mrf.mxu0
        %v5916 = vadd.f32 0.0, %v5915
        %5917 = vmatmul.bf16.gmra.mxu0 %v5456
        %v5918 = vpop.f32.mrf.mxu0
        %v5919 = vadd.f32 0.0, %v5918
        %v5920 = vpop.f32.mrf.mxu0
        %v5921 = vadd.f32 0.0, %v5920
        %5922 = vmatmul.bf16.gmra.mxu0 %v5457
        %v5923 = vpop.f32.mrf.mxu0
        %v5924 = vadd.f32 0.0, %v5923
        %v5925 = vpop.f32.mrf.mxu0
        %v5926 = vadd.f32 0.0, %v5925
        %5927 = vmatmul.bf16.gmra.mxu0 %v5458
        %v5928 = vpop.f32.mrf.mxu0
        %v5929 = vadd.f32 0.0, %v5928
        %v5930 = vpop.f32.mrf.mxu0
        %v5931 = vadd.f32 0.0, %v5930
        %5932 = vmatmul.bf16.gmra.mxu0 %v5459
        %v5933 = vpop.f32.mrf.mxu0
        %v5934 = vadd.f32 0.0, %v5933
        %v5935 = vpop.f32.mrf.mxu0
        %v5936 = vadd.f32 0.0, %v5935
        %5937 = vmatmul.bf16.gmra.mxu0 %v5460
        %v5938 = vpop.f32.mrf.mxu0
        %v5939 = vadd.f32 0.0, %v5938
        %v5940 = vpop.f32.mrf.mxu0
        %v5941 = vadd.f32 0.0, %v5940
        %5942 = vdwg.mxu0
        %5943 = vmatpush.bf16.msra.mxu0 %v5775
        %5944 = vmatpush.bf16.msra.mxu0 %v5767
        %5945 = vmatpush.bf16.msra.mxu0 %v5759
        %5946 = vmatpush.bf16.msra.mxu0 %v5751
        %5947 = vmatpush.bf16.msra.mxu0 %v5743
        %5948 = vmatpush.bf16.msra.mxu0 %v5735
        %5949 = vmatpush.bf16.msra.mxu0 %v5727
        %5950 = vmatpush.bf16.msra.mxu0 %v5719
        %5951 = vmatmul.bf16.gmra.mxu0 %v5453
        %v5952 = vpop.f32.mrf.mxu0
        %v5953 = vadd.f32 0.0, %v5952
        %v5954 = vpop.f32.mrf.mxu0
        %v5955 = vadd.f32 0.0, %v5954
        %5956 = vmatmul.bf16.gmra.mxu0 %v5454
        %v5957 = vpop.f32.mrf.mxu0
        %v5958 = vadd.f32 0.0, %v5957
        %v5959 = vpop.f32.mrf.mxu0
        %v5960 = vadd.f32 0.0, %v5959
        %5961 = vmatmul.bf16.gmra.mxu0 %v5455
        %v5962 = vpop.f32.mrf.mxu0
        %v5963 = vadd.f32 0.0, %v5962
        %v5964 = vpop.f32.mrf.mxu0
        %v5965 = vadd.f32 0.0, %v5964
        %5966 = vmatmul.bf16.gmra.mxu0 %v5456
        %v5967 = vpop.f32.mrf.mxu0
        %v5968 = vadd.f32 0.0, %v5967
        %v5969 = vpop.f32.mrf.mxu0
        %v5970 = vadd.f32 0.0, %v5969
        %5971 = vmatmul.bf16.gmra.mxu0 %v5457
        %v5972 = vpop.f32.mrf.mxu0
        %v5973 = vadd.f32 0.0, %v5972
        %v5974 = vpop.f32.mrf.mxu0
        %v5975 = vadd.f32 0.0, %v5974
        %5976 = vmatmul.bf16.gmra.mxu0 %v5458
        %v5977 = vpop.f32.mrf.mxu0
        %v5978 = vadd.f32 0.0, %v5977
        %v5979 = vpop.f32.mrf.mxu0
        %v5980 = vadd.f32 0.0, %v5979
        %5981 = vmatmul.bf16.gmra.mxu0 %v5459
        %v5982 = vpop.f32.mrf.mxu0
        %v5983 = vadd.f32 0.0, %v5982
        %v5984 = vpop.f32.mrf.mxu0
        %v5985 = vadd.f32 0.0, %v5984
        %5986 = vmatmul.bf16.gmra.mxu0 %v5460
        %v5987 = vpop.f32.mrf.mxu0
        %v5988 = vadd.f32 0.0, %v5987
        %v5989 = vpop.f32.mrf.mxu0
        %v5990 = vadd.f32 0.0, %v5989
        %5991 = vdwg.mxu0
        %5992 = vmatpush.bf16.msra.mxu0 %v5776
        %5993 = vmatpush.bf16.msra.mxu0 %v5768
        %5994 = vmatpush.bf16.msra.mxu0 %v5760
        %5995 = vmatpush.bf16.msra.mxu0 %v5752
        %5996 = vmatpush.bf16.msra.mxu0 %v5744
        %5997 = vmatpush.bf16.msra.mxu0 %v5736
        %5998 = vmatpush.bf16.msra.mxu0 %v5728
        %5999 = vmatpush.bf16.msra.mxu0 %v5720
        %6000 = vmatmul.bf16.gmra.mxu0 %v5453
        %v6001 = vpop.f32.mrf.mxu0
        %v6002 = vadd.f32 0.0, %v6001
        %v6003 = vpop.f32.mrf.mxu0
        %v6004 = vadd.f32 0.0, %v6003
        %6005 = vmatmul.bf16.gmra.mxu0 %v5454
        %v6006 = vpop.f32.mrf.mxu0
        %v6007 = vadd.f32 0.0, %v6006
        %v6008 = vpop.f32.mrf.mxu0
        %v6009 = vadd.f32 0.0, %v6008
        %6010 = vmatmul.bf16.gmra.mxu0 %v5455
        %v6011 = vpop.f32.mrf.mxu0
        %v6012 = vadd.f32 0.0, %v6011
        %v6013 = vpop.f32.mrf.mxu0
        %v6014 = vadd.f32 0.0, %v6013
        %6015 = vmatmul.bf16.gmra.mxu0 %v5456
        %v6016 = vpop.f32.mrf.mxu0
        %v6017 = vadd.f32 0.0, %v6016
        %v6018 = vpop.f32.mrf.mxu0
        %v6019 = vadd.f32 0.0, %v6018
        %6020 = vmatmul.bf16.gmra.mxu0 %v5457
        %v6021 = vpop.f32.mrf.mxu0
        %v6022 = vadd.f32 0.0, %v6021
        %v6023 = vpop.f32.mrf.mxu0
        %v6024 = vadd.f32 0.0, %v6023
        %6025 = vmatmul.bf16.gmra.mxu0 %v5458
        %v6026 = vpop.f32.mrf.mxu0
        %v6027 = vadd.f32 0.0, %v6026
        %v6028 = vpop.f32.mrf.mxu0
        %v6029 = vadd.f32 0.0, %v6028
        %6030 = vmatmul.bf16.gmra.mxu0 %v5459
        %v6031 = vpop.f32.mrf.mxu0
        %v6032 = vadd.f32 0.0, %v6031
        %v6033 = vpop.f32.mrf.mxu0
        %v6034 = vadd.f32 0.0, %v6033
        %6035 = vmatmul.bf16.gmra.mxu0 %v5460
        %v6036 = vpop.f32.mrf.mxu0
        %v6037 = vadd.f32 0.0, %v6036
        %v6038 = vpop.f32.mrf.mxu0
        %v6039 = vadd.f32 0.0, %v6038
        %6040 = vdwg.mxu0
        %6041 = vmatpush.bf16.msra.mxu0 %v5777
        %6042 = vmatpush.bf16.msra.mxu0 %v5769
        %6043 = vmatpush.bf16.msra.mxu0 %v5761
        %6044 = vmatpush.bf16.msra.mxu0 %v5753
        %6045 = vmatpush.bf16.msra.mxu0 %v5745
        %6046 = vmatpush.bf16.msra.mxu0 %v5737
        %6047 = vmatpush.bf16.msra.mxu0 %v5729
        %6048 = vmatpush.bf16.msra.mxu0 %v5721
        %6049 = vmatmul.bf16.gmra.mxu0 %v5453
        %v6050 = vpop.f32.mrf.mxu0
        %v6051 = vadd.f32 0.0, %v6050
        %v6052 = vpop.f32.mrf.mxu0
        %v6053 = vadd.f32 0.0, %v6052
        %6054 = vmatmul.bf16.gmra.mxu0 %v5454
        %v6055 = vpop.f32.mrf.mxu0
        %v6056 = vadd.f32 0.0, %v6055
        %v6057 = vpop.f32.mrf.mxu0
        %v6058 = vadd.f32 0.0, %v6057
        %6059 = vmatmul.bf16.gmra.mxu0 %v5455
        %v6060 = vpop.f32.mrf.mxu0
        %v6061 = vadd.f32 0.0, %v6060
        %v6062 = vpop.f32.mrf.mxu0
        %v6063 = vadd.f32 0.0, %v6062
        %6064 = vmatmul.bf16.gmra.mxu0 %v5456
        %v6065 = vpop.f32.mrf.mxu0
        %v6066 = vadd.f32 0.0, %v6065
        %v6067 = vpop.f32.mrf.mxu0
        %v6068 = vadd.f32 0.0, %v6067
        %6069 = vmatmul.bf16.gmra.mxu0 %v5457
        %v6070 = vpop.f32.mrf.mxu0
        %v6071 = vadd.f32 0.0, %v6070
        %v6072 = vpop.f32.mrf.mxu0
        %v6073 = vadd.f32 0.0, %v6072
        %6074 = vmatmul.bf16.gmra.mxu0 %v5458
        %v6075 = vpop.f32.mrf.mxu0
        %v6076 = vadd.f32 0.0, %v6075
        %v6077 = vpop.f32.mrf.mxu0
        %v6078 = vadd.f32 0.0, %v6077
        %6079 = vmatmul.bf16.gmra.mxu0 %v5459
        %v6080 = vpop.f32.mrf.mxu0
        %v6081 = vadd.f32 0.0, %v6080
        %v6082 = vpop.f32.mrf.mxu0
        %v6083 = vadd.f32 0.0, %v6082
        %6084 = vmatmul.bf16.gmra.mxu0 %v5460
        %v6085 = vpop.f32.mrf.mxu0
        %v6086 = vadd.f32 0.0, %v6085
        %v6087 = vpop.f32.mrf.mxu0
        %v6088 = vadd.f32 0.0, %v6087
        %6089 = vdwg.mxu0
        %6090 = vmatpush.bf16.msra.mxu0 %v5778
        %6091 = vmatpush.bf16.msra.mxu0 %v5770
        %6092 = vmatpush.bf16.msra.mxu0 %v5762
        %6093 = vmatpush.bf16.msra.mxu0 %v5754
        %6094 = vmatpush.bf16.msra.mxu0 %v5746
        %6095 = vmatpush.bf16.msra.mxu0 %v5738
        %6096 = vmatpush.bf16.msra.mxu0 %v5730
        %6097 = vmatpush.bf16.msra.mxu0 %v5722
        %6098 = vmatmul.bf16.gmra.mxu0 %v5453
        %v6099 = vpop.f32.mrf.mxu0
        %v6100 = vadd.f32 0.0, %v6099
        %v6101 = vpop.f32.mrf.mxu0
        %v6102 = vadd.f32 0.0, %v6101
        %6103 = vmatmul.bf16.gmra.mxu0 %v5454
        %v6104 = vpop.f32.mrf.mxu0
        %v6105 = vadd.f32 0.0, %v6104
        %v6106 = vpop.f32.mrf.mxu0
        %v6107 = vadd.f32 0.0, %v6106
        %6108 = vmatmul.bf16.gmra.mxu0 %v5455
        %v6109 = vpop.f32.mrf.mxu0
        %v6110 = vadd.f32 0.0, %v6109
        %v6111 = vpop.f32.mrf.mxu0
        %v6112 = vadd.f32 0.0, %v6111
        %6113 = vmatmul.bf16.gmra.mxu0 %v5456
        %v6114 = vpop.f32.mrf.mxu0
        %v6115 = vadd.f32 0.0, %v6114
        %v6116 = vpop.f32.mrf.mxu0
        %v6117 = vadd.f32 0.0, %v6116
        %6118 = vmatmul.bf16.gmra.mxu0 %v5457
        %v6119 = vpop.f32.mrf.mxu0
        %v6120 = vadd.f32 0.0, %v6119
        %v6121 = vpop.f32.mrf.mxu0
        %v6122 = vadd.f32 0.0, %v6121
        %6123 = vmatmul.bf16.gmra.mxu0 %v5458
        %v6124 = vpop.f32.mrf.mxu0
        %v6125 = vadd.f32 0.0, %v6124
        %v6126 = vpop.f32.mrf.mxu0
        %v6127 = vadd.f32 0.0, %v6126
        %6128 = vmatmul.bf16.gmra.mxu0 %v5459
        %v6129 = vpop.f32.mrf.mxu0
        %v6130 = vadd.f32 0.0, %v6129
        %v6131 = vpop.f32.mrf.mxu0
        %v6132 = vadd.f32 0.0, %v6131
        %6133 = vmatmul.bf16.gmra.mxu0 %v5460
        %v6134 = vpop.f32.mrf.mxu0
        %v6135 = vadd.f32 0.0, %v6134
        %v6136 = vpop.f32.mrf.mxu0
        %v6137 = vadd.f32 0.0, %v6136
        %6138 = vdwg.mxu0
        %6139 = vmatpush.bf16.msra.mxu0 %v5779
        %6140 = vmatpush.bf16.msra.mxu0 %v5771
        %6141 = vmatpush.bf16.msra.mxu0 %v5763
        %6142 = vmatpush.bf16.msra.mxu0 %v5755
        %6143 = vmatpush.bf16.msra.mxu0 %v5747
        %6144 = vmatpush.bf16.msra.mxu0 %v5739
        %6145 = vmatpush.bf16.msra.mxu0 %v5731
        %6146 = vmatpush.bf16.msra.mxu0 %v5723
        %6147 = vmatmul.bf16.gmra.mxu0 %v5453
        %v6148 = vpop.f32.mrf.mxu0
        %v6149 = vadd.f32 0.0, %v6148
        %v6150 = vpop.f32.mrf.mxu0
        %v6151 = vadd.f32 0.0, %v6150
        %6152 = vmatmul.bf16.gmra.mxu0 %v5454
        %v6153 = vpop.f32.mrf.mxu0
        %v6154 = vadd.f32 0.0, %v6153
        %v6155 = vpop.f32.mrf.mxu0
        %v6156 = vadd.f32 0.0, %v6155
        %6157 = vmatmul.bf16.gmra.mxu0 %v5455
        %v6158 = vpop.f32.mrf.mxu0
        %v6159 = vadd.f32 0.0, %v6158
        %v6160 = vpop.f32.mrf.mxu0
        %v6161 = vadd.f32 0.0, %v6160
        %6162 = vmatmul.bf16.gmra.mxu0 %v5456
        %v6163 = vpop.f32.mrf.mxu0
        %v6164 = vadd.f32 0.0, %v6163
        %v6165 = vpop.f32.mrf.mxu0
        %v6166 = vadd.f32 0.0, %v6165
        %6167 = vmatmul.bf16.gmra.mxu0 %v5457
        %v6168 = vpop.f32.mrf.mxu0
        %v6169 = vadd.f32 0.0, %v6168
        %v6170 = vpop.f32.mrf.mxu0
        %v6171 = vadd.f32 0.0, %v6170
        %6172 = vmatmul.bf16.gmra.mxu0 %v5458
        %v6173 = vpop.f32.mrf.mxu0
        %v6174 = vadd.f32 0.0, %v6173
        %v6175 = vpop.f32.mrf.mxu0
        %v6176 = vadd.f32 0.0, %v6175
        %6177 = vmatmul.bf16.gmra.mxu0 %v5459
        %v6178 = vpop.f32.mrf.mxu0
        %v6179 = vadd.f32 0.0, %v6178
        %v6180 = vpop.f32.mrf.mxu0
        %v6181 = vadd.f32 0.0, %v6180
        %6182 = vmatmul.bf16.gmra.mxu0 %v5460
        %v6183 = vpop.f32.mrf.mxu0
        %v6184 = vadd.f32 0.0, %v6183
        %v6185 = vpop.f32.mrf.mxu0
        %v6186 = vadd.f32 0.0, %v6185
        %6187 = vdwg.mxu0
        %6188 = vmatpush.bf16.msra.mxu0 %v5780
        %6189 = vmatpush.bf16.msra.mxu0 %v5772
        %6190 = vmatpush.bf16.msra.mxu0 %v5764
        %6191 = vmatpush.bf16.msra.mxu0 %v5756
        %6192 = vmatpush.bf16.msra.mxu0 %v5748
        %6193 = vmatpush.bf16.msra.mxu0 %v5740
        %6194 = vmatpush.bf16.msra.mxu0 %v5732
        %6195 = vmatpush.bf16.msra.mxu0 %v5724
        %6196 = vmatmul.bf16.gmra.mxu0 %v5453
        %v6197 = vpop.f32.mrf.mxu0
        %v6198 = vadd.f32 0.0, %v6197
        %v6199 = vpop.f32.mrf.mxu0
        %v6200 = vadd.f32 0.0, %v6199
        %6201 = vmatmul.bf16.gmra.mxu0 %v5454
        %v6202 = vpop.f32.mrf.mxu0
        %v6203 = vadd.f32 0.0, %v6202
        %v6204 = vpop.f32.mrf.mxu0
        %v6205 = vadd.f32 0.0, %v6204
        %6206 = vmatmul.bf16.gmra.mxu0 %v5455
        %v6207 = vpop.f32.mrf.mxu0
        %v6208 = vadd.f32 0.0, %v6207
        %v6209 = vpop.f32.mrf.mxu0
        %v6210 = vadd.f32 0.0, %v6209
        %6211 = vmatmul.bf16.gmra.mxu0 %v5456
        %v6212 = vpop.f32.mrf.mxu0
        %v6213 = vadd.f32 0.0, %v6212
        %v6214 = vpop.f32.mrf.mxu0
        %v6215 = vadd.f32 0.0, %v6214
        %6216 = vmatmul.bf16.gmra.mxu0 %v5457
        %v6217 = vpop.f32.mrf.mxu0
        %v6218 = vadd.f32 0.0, %v6217
        %v6219 = vpop.f32.mrf.mxu0
        %v6220 = vadd.f32 0.0, %v6219
        %6221 = vmatmul.bf16.gmra.mxu0 %v5458
        %v6222 = vpop.f32.mrf.mxu0
        %v6223 = vadd.f32 0.0, %v6222
        %v6224 = vpop.f32.mrf.mxu0
        %v6225 = vadd.f32 0.0, %v6224
        %6226 = vmatmul.bf16.gmra.mxu0 %v5459
        %v6227 = vpop.f32.mrf.mxu0
        %v6228 = vadd.f32 0.0, %v6227
        %v6229 = vpop.f32.mrf.mxu0
        %v6230 = vadd.f32 0.0, %v6229
        %6231 = vmatmul.bf16.gmra.mxu0 %v5460
        %v6232 = vpop.f32.mrf.mxu0
        %v6233 = vadd.f32 0.0, %v6232
        %v6234 = vpop.f32.mrf.mxu0
        %v6235 = vadd.f32 0.0, %v6234
        %6236 = vdwg.mxu0
        %v6301 = vunpack.c.l.b16 %v5389
        %v6302 = vunpack.c.h.b16 %v5389
        %v6303 = vunpack.c.l.b16 %v5390
        %v6304 = vunpack.c.h.b16 %v5390
        %v6305 = vunpack.c.l.b16 %v5391
        %v6306 = vunpack.c.h.b16 %v5391
        %v6307 = vunpack.c.l.b16 %v5392
        %v6308 = vunpack.c.h.b16 %v5392
        %v6309 = vunpack.c.l.b16 %v5393
        %v6310 = vunpack.c.h.b16 %v5393
        %v6311 = vunpack.c.l.b16 %v5394
        %v6312 = vunpack.c.h.b16 %v5394
        %v6313 = vunpack.c.l.b16 %v5395
        %v6314 = vunpack.c.h.b16 %v5395
        %v6315 = vunpack.c.l.b16 %v5396
        %v6316 = vunpack.c.h.b16 %v5396
        %v6317 = vunpack.c.l.b16 %v5397
        %v6318 = vunpack.c.h.b16 %v5397
        %v6319 = vunpack.c.l.b16 %v5398
        %v6320 = vunpack.c.h.b16 %v5398
        %v6321 = vunpack.c.l.b16 %v5399
        %v6322 = vunpack.c.h.b16 %v5399
        %v6323 = vunpack.c.l.b16 %v5400
        %v6324 = vunpack.c.h.b16 %v5400
        %v6325 = vunpack.c.l.b16 %v5401
        %v6326 = vunpack.c.h.b16 %v5401
        %v6327 = vunpack.c.l.b16 %v5402
        %v6328 = vunpack.c.h.b16 %v5402
        %v6329 = vunpack.c.l.b16 %v5403
        %v6330 = vunpack.c.h.b16 %v5403
        %v6331 = vunpack.c.l.b16 %v5404
        %v6332 = vunpack.c.h.b16 %v5404
        %v6333 = vunpack.c.l.b16 %v5405
        %v6334 = vunpack.c.h.b16 %v5405
        %v6335 = vunpack.c.l.b16 %v5406
        %v6336 = vunpack.c.h.b16 %v5406
        %v6337 = vunpack.c.l.b16 %v5407
        %v6338 = vunpack.c.h.b16 %v5407
        %v6339 = vunpack.c.l.b16 %v5408
        %v6340 = vunpack.c.h.b16 %v5408
        %v6341 = vunpack.c.l.b16 %v5409
        %v6342 = vunpack.c.h.b16 %v5409
        %v6343 = vunpack.c.l.b16 %v5410
        %v6344 = vunpack.c.h.b16 %v5410
        %v6345 = vunpack.c.l.b16 %v5411
        %v6346 = vunpack.c.h.b16 %v5411
        %v6347 = vunpack.c.l.b16 %v5412
        %v6348 = vunpack.c.h.b16 %v5412
        %v6349 = vunpack.c.l.b16 %v5413
        %v6350 = vunpack.c.h.b16 %v5413
        %v6351 = vunpack.c.l.b16 %v5414
        %v6352 = vunpack.c.h.b16 %v5414
        %v6353 = vunpack.c.l.b16 %v5415
        %v6354 = vunpack.c.h.b16 %v5415
        %v6355 = vunpack.c.l.b16 %v5416
        %v6356 = vunpack.c.h.b16 %v5416
        %v6357 = vunpack.c.l.b16 %v5417
        %v6358 = vunpack.c.h.b16 %v5417
        %v6359 = vunpack.c.l.b16 %v5418
        %v6360 = vunpack.c.h.b16 %v5418
        %v6361 = vunpack.c.l.b16 %v5419
        %v6362 = vunpack.c.h.b16 %v5419
        %v6363 = vunpack.c.l.b16 %v5420
        %v6364 = vunpack.c.h.b16 %v5420
        %v6365 = vunpack.c.l.b16 %v5421
        %v6366 = vunpack.c.h.b16 %v5421
        %v6367 = vunpack.c.l.b16 %v5422
        %v6368 = vunpack.c.h.b16 %v5422
        %v6369 = vunpack.c.l.b16 %v5423
        %v6370 = vunpack.c.h.b16 %v5423
        %v6371 = vunpack.c.l.b16 %v5424
        %v6372 = vunpack.c.h.b16 %v5424
        %v6373 = vunpack.c.l.b16 %v5425
        %v6374 = vunpack.c.h.b16 %v5425
        %v6375 = vunpack.c.l.b16 %v5426
        %v6376 = vunpack.c.h.b16 %v5426
        %v6377 = vunpack.c.l.b16 %v5427
        %v6378 = vunpack.c.h.b16 %v5427
        %v6379 = vunpack.c.l.b16 %v5428
        %v6380 = vunpack.c.h.b16 %v5428
        %v6381 = vunpack.c.l.b16 %v5429
        %v6382 = vunpack.c.h.b16 %v5429
        %v6383 = vunpack.c.l.b16 %v5430
        %v6384 = vunpack.c.h.b16 %v5430
        %v6385 = vunpack.c.l.b16 %v5431
        %v6386 = vunpack.c.h.b16 %v5431
        %v6387 = vunpack.c.l.b16 %v5432
        %v6388 = vunpack.c.h.b16 %v5432
        %v6389 = vunpack.c.l.b16 %v5433
        %v6390 = vunpack.c.h.b16 %v5433
        %v6391 = vunpack.c.l.b16 %v5434
        %v6392 = vunpack.c.h.b16 %v5434
        %v6393 = vunpack.c.l.b16 %v5435
        %v6394 = vunpack.c.h.b16 %v5435
        %v6395 = vunpack.c.l.b16 %v5436
        %v6396 = vunpack.c.h.b16 %v5436
        %v6397 = vunpack.c.l.b16 %v5437
        %v6398 = vunpack.c.h.b16 %v5437
        %v6399 = vunpack.c.l.b16 %v5438
        %v6400 = vunpack.c.h.b16 %v5438
        %v6401 = vunpack.c.l.b16 %v5439
        %v6402 = vunpack.c.h.b16 %v5439
        %v6403 = vunpack.c.l.b16 %v5440
        %v6404 = vunpack.c.h.b16 %v5440
        %v6405 = vunpack.c.l.b16 %v5441
        %v6406 = vunpack.c.h.b16 %v5441
        %v6407 = vunpack.c.l.b16 %v5442
        %v6408 = vunpack.c.h.b16 %v5442
        %v6409 = vunpack.c.l.b16 %v5443
        %v6410 = vunpack.c.h.b16 %v5443
        %v6411 = vunpack.c.l.b16 %v5444
        %v6412 = vunpack.c.h.b16 %v5444
        %v6413 = vunpack.c.l.b16 %v5445
        %v6414 = vunpack.c.h.b16 %v5445
        %v6415 = vunpack.c.l.b16 %v5446
        %v6416 = vunpack.c.h.b16 %v5446
        %v6417 = vunpack.c.l.b16 %v5447
        %v6418 = vunpack.c.h.b16 %v5447
        %v6419 = vunpack.c.l.b16 %v5448
        %v6420 = vunpack.c.h.b16 %v5448
        %v6421 = vunpack.c.l.b16 %v5449
        %v6422 = vunpack.c.h.b16 %v5449
        %v6423 = vunpack.c.l.b16 %v5450
        %v6424 = vunpack.c.h.b16 %v5450
        %v6425 = vunpack.c.l.b16 %v5451
        %v6426 = vunpack.c.h.b16 %v5451
        %v6427 = vunpack.c.l.b16 %v5452
        %v6428 = vunpack.c.h.b16 %v5452
        %v6429 = vpack.c.b16 %v6309, %v6301
        %v6430 = vpack.c.b16 %v6310, %v6302
        %v6431 = vpack.c.b16 %v6311, %v6303
        %v6432 = vpack.c.b16 %v6312, %v6304
        %v6433 = vpack.c.b16 %v6313, %v6305
        %v6434 = vpack.c.b16 %v6314, %v6306
        %v6435 = vpack.c.b16 %v6315, %v6307
        %v6436 = vpack.c.b16 %v6316, %v6308
        %v6437 = vpack.c.b16 %v6325, %v6317
        %v6438 = vpack.c.b16 %v6326, %v6318
        %v6439 = vpack.c.b16 %v6327, %v6319
        %v6440 = vpack.c.b16 %v6328, %v6320
        %v6441 = vpack.c.b16 %v6329, %v6321
        %v6442 = vpack.c.b16 %v6330, %v6322
        %v6443 = vpack.c.b16 %v6331, %v6323
        %v6444 = vpack.c.b16 %v6332, %v6324
        %v6445 = vpack.c.b16 %v6341, %v6333
        %v6446 = vpack.c.b16 %v6342, %v6334
        %v6447 = vpack.c.b16 %v6343, %v6335
        %v6448 = vpack.c.b16 %v6344, %v6336
        %v6449 = vpack.c.b16 %v6345, %v6337
        %v6450 = vpack.c.b16 %v6346, %v6338
        %v6451 = vpack.c.b16 %v6347, %v6339
        %v6452 = vpack.c.b16 %v6348, %v6340
        %v6453 = vpack.c.b16 %v6357, %v6349
        %v6454 = vpack.c.b16 %v6358, %v6350
        %v6455 = vpack.c.b16 %v6359, %v6351
        %v6456 = vpack.c.b16 %v6360, %v6352
        %v6457 = vpack.c.b16 %v6361, %v6353
        %v6458 = vpack.c.b16 %v6362, %v6354
        %v6459 = vpack.c.b16 %v6363, %v6355
        %v6460 = vpack.c.b16 %v6364, %v6356
        %v6461 = vpack.c.b16 %v6373, %v6365
        %v6462 = vpack.c.b16 %v6374, %v6366
        %v6463 = vpack.c.b16 %v6375, %v6367
        %v6464 = vpack.c.b16 %v6376, %v6368
        %v6465 = vpack.c.b16 %v6377, %v6369
        %v6466 = vpack.c.b16 %v6378, %v6370
        %v6467 = vpack.c.b16 %v6379, %v6371
        %v6468 = vpack.c.b16 %v6380, %v6372
        %v6469 = vpack.c.b16 %v6389, %v6381
        %v6470 = vpack.c.b16 %v6390, %v6382
        %v6471 = vpack.c.b16 %v6391, %v6383
        %v6472 = vpack.c.b16 %v6392, %v6384
        %v6473 = vpack.c.b16 %v6393, %v6385
        %v6474 = vpack.c.b16 %v6394, %v6386
        %v6475 = vpack.c.b16 %v6395, %v6387
        %v6476 = vpack.c.b16 %v6396, %v6388
        %v6477 = vpack.c.b16 %v6405, %v6397
        %v6478 = vpack.c.b16 %v6406, %v6398
        %v6479 = vpack.c.b16 %v6407, %v6399
        %v6480 = vpack.c.b16 %v6408, %v6400
        %v6481 = vpack.c.b16 %v6409, %v6401
        %v6482 = vpack.c.b16 %v6410, %v6402
        %v6483 = vpack.c.b16 %v6411, %v6403
        %v6484 = vpack.c.b16 %v6412, %v6404
        %v6485 = vpack.c.b16 %v6421, %v6413
        %v6486 = vpack.c.b16 %v6422, %v6414
        %v6487 = vpack.c.b16 %v6423, %v6415
        %v6488 = vpack.c.b16 %v6424, %v6416
        %v6489 = vpack.c.b16 %v6425, %v6417
        %v6490 = vpack.c.b16 %v6426, %v6418
        %v6491 = vpack.c.b16 %v6427, %v6419
        %v6492 = vpack.c.b16 %v6428, %v6420
        %6557 = vmatpush.bf16.msra.mxu0 %v6485
        %6558 = vmatpush.bf16.msra.mxu0 %v6477
        %6559 = vmatpush.bf16.msra.mxu0 %v6469
        %6560 = vmatpush.bf16.msra.mxu0 %v6461
        %6561 = vmatpush.bf16.msra.mxu0 %v6453
        %6562 = vmatpush.bf16.msra.mxu0 %v6445
        %6563 = vmatpush.bf16.msra.mxu0 %v6437
        %6564 = vmatpush.bf16.msra.mxu0 %v6429
        %6565 = vmatmul.bf16.gmra.mxu0 %v5381
        %v6566 = vpop.f32.mrf.mxu0
        %v6567 = vadd.f32 %v5855, %v6566
        %v6568 = vpop.f32.mrf.mxu0
        %v6569 = vadd.f32 %v5857, %v6568
        %6570 = vmatmul.bf16.gmra.mxu0 %v5382
        %v6571 = vpop.f32.mrf.mxu0
        %v6572 = vadd.f32 %v5860, %v6571
        %v6573 = vpop.f32.mrf.mxu0
        %v6574 = vadd.f32 %v5862, %v6573
        %6575 = vmatmul.bf16.gmra.mxu0 %v5383
        %v6576 = vpop.f32.mrf.mxu0
        %v6577 = vadd.f32 %v5865, %v6576
        %v6578 = vpop.f32.mrf.mxu0
        %v6579 = vadd.f32 %v5867, %v6578
        %6580 = vmatmul.bf16.gmra.mxu0 %v5384
        %v6581 = vpop.f32.mrf.mxu0
        %v6582 = vadd.f32 %v5870, %v6581
        %v6583 = vpop.f32.mrf.mxu0
        %v6584 = vadd.f32 %v5872, %v6583
        %6585 = vmatmul.bf16.gmra.mxu0 %v5385
        %v6586 = vpop.f32.mrf.mxu0
        %v6587 = vadd.f32 %v5875, %v6586
        %v6588 = vpop.f32.mrf.mxu0
        %v6589 = vadd.f32 %v5877, %v6588
        %6590 = vmatmul.bf16.gmra.mxu0 %v5386
        %v6591 = vpop.f32.mrf.mxu0
        %v6592 = vadd.f32 %v5880, %v6591
        %v6593 = vpop.f32.mrf.mxu0
        %v6594 = vadd.f32 %v5882, %v6593
        %6595 = vmatmul.bf16.gmra.mxu0 %v5387
        %v6596 = vpop.f32.mrf.mxu0
        %v6597 = vadd.f32 %v5885, %v6596
        %v6598 = vpop.f32.mrf.mxu0
        %v6599 = vadd.f32 %v5887, %v6598
        %6600 = vmatmul.bf16.gmra.mxu0 %v5388
        %v6601 = vpop.f32.mrf.mxu0
        %v6602 = vadd.f32 %v5890, %v6601
        %v6603 = vpop.f32.mrf.mxu0
        %v6604 = vadd.f32 %v5892, %v6603
        %6605 = vdwg.mxu0
        %6606 = vmatpush.bf16.msra.mxu0 %v6486
        %6607 = vmatpush.bf16.msra.mxu0 %v6478
        %6608 = vmatpush.bf16.msra.mxu0 %v6470
        %6609 = vmatpush.bf16.msra.mxu0 %v6462
        %6610 = vmatpush.bf16.msra.mxu0 %v6454
        %6611 = vmatpush.bf16.msra.mxu0 %v6446
        %6612 = vmatpush.bf16.msra.mxu0 %v6438
        %6613 = vmatpush.bf16.msra.mxu0 %v6430
        %6614 = vmatmul.bf16.gmra.mxu0 %v5381
        %v6615 = vpop.f32.mrf.mxu0
        %v6616 = vadd.f32 %v5904, %v6615
        %v6617 = vpop.f32.mrf.mxu0
        %v6618 = vadd.f32 %v5906, %v6617
        %6619 = vmatmul.bf16.gmra.mxu0 %v5382
        %v6620 = vpop.f32.mrf.mxu0
        %v6621 = vadd.f32 %v5909, %v6620
        %v6622 = vpop.f32.mrf.mxu0
        %v6623 = vadd.f32 %v5911, %v6622
        %6624 = vmatmul.bf16.gmra.mxu0 %v5383
        %v6625 = vpop.f32.mrf.mxu0
        %v6626 = vadd.f32 %v5914, %v6625
        %v6627 = vpop.f32.mrf.mxu0
        %v6628 = vadd.f32 %v5916, %v6627
        %6629 = vmatmul.bf16.gmra.mxu0 %v5384
        %v6630 = vpop.f32.mrf.mxu0
        %v6631 = vadd.f32 %v5919, %v6630
        %v6632 = vpop.f32.mrf.mxu0
        %v6633 = vadd.f32 %v5921, %v6632
        %6634 = vmatmul.bf16.gmra.mxu0 %v5385
        %v6635 = vpop.f32.mrf.mxu0
        %v6636 = vadd.f32 %v5924, %v6635
        %v6637 = vpop.f32.mrf.mxu0
        %v6638 = vadd.f32 %v5926, %v6637
        %6639 = vmatmul.bf16.gmra.mxu0 %v5386
        %v6640 = vpop.f32.mrf.mxu0
        %v6641 = vadd.f32 %v5929, %v6640
        %v6642 = vpop.f32.mrf.mxu0
        %v6643 = vadd.f32 %v5931, %v6642
        %6644 = vmatmul.bf16.gmra.mxu0 %v5387
        %v6645 = vpop.f32.mrf.mxu0
        %v6646 = vadd.f32 %v5934, %v6645
        %v6647 = vpop.f32.mrf.mxu0
        %v6648 = vadd.f32 %v5936, %v6647
        %6649 = vmatmul.bf16.gmra.mxu0 %v5388
        %v6650 = vpop.f32.mrf.mxu0
        %v6651 = vadd.f32 %v5939, %v6650
        %v6652 = vpop.f32.mrf.mxu0
        %v6653 = vadd.f32 %v5941, %v6652
        %6654 = vdwg.mxu0
        %6655 = vmatpush.bf16.msra.mxu0 %v6487
        %6656 = vmatpush.bf16.msra.mxu0 %v6479
        %6657 = vmatpush.bf16.msra.mxu0 %v6471
        %6658 = vmatpush.bf16.msra.mxu0 %v6463
        %6659 = vmatpush.bf16.msra.mxu0 %v6455
        %6660 = vmatpush.bf16.msra.mxu0 %v6447
        %6661 = vmatpush.bf16.msra.mxu0 %v6439
        %6662 = vmatpush.bf16.msra.mxu0 %v6431
        %6663 = vmatmul.bf16.gmra.mxu0 %v5381
        %v6664 = vpop.f32.mrf.mxu0
        %v6665 = vadd.f32 %v5953, %v6664
        %v6666 = vpop.f32.mrf.mxu0
        %v6667 = vadd.f32 %v5955, %v6666
        %6668 = vmatmul.bf16.gmra.mxu0 %v5382
        %v6669 = vpop.f32.mrf.mxu0
        %v6670 = vadd.f32 %v5958, %v6669
        %v6671 = vpop.f32.mrf.mxu0
        %v6672 = vadd.f32 %v5960, %v6671
        %6673 = vmatmul.bf16.gmra.mxu0 %v5383
        %v6674 = vpop.f32.mrf.mxu0
        %v6675 = vadd.f32 %v5963, %v6674
        %v6676 = vpop.f32.mrf.mxu0
        %v6677 = vadd.f32 %v5965, %v6676
        %6678 = vmatmul.bf16.gmra.mxu0 %v5384
        %v6679 = vpop.f32.mrf.mxu0
        %v6680 = vadd.f32 %v5968, %v6679
        %v6681 = vpop.f32.mrf.mxu0
        %v6682 = vadd.f32 %v5970, %v6681
        %6683 = vmatmul.bf16.gmra.mxu0 %v5385
        %v6684 = vpop.f32.mrf.mxu0
        %v6685 = vadd.f32 %v5973, %v6684
        %v6686 = vpop.f32.mrf.mxu0
        %v6687 = vadd.f32 %v5975, %v6686
        %6688 = vmatmul.bf16.gmra.mxu0 %v5386
        %v6689 = vpop.f32.mrf.mxu0
        %v6690 = vadd.f32 %v5978, %v6689
        %v6691 = vpop.f32.mrf.mxu0
        %v6692 = vadd.f32 %v5980, %v6691
        %6693 = vmatmul.bf16.gmra.mxu0 %v5387
        %v6694 = vpop.f32.mrf.mxu0
        %v6695 = vadd.f32 %v5983, %v6694
        %v6696 = vpop.f32.mrf.mxu0
        %v6697 = vadd.f32 %v5985, %v6696
        %6698 = vmatmul.bf16.gmra.mxu0 %v5388
        %v6699 = vpop.f32.mrf.mxu0
        %v6700 = vadd.f32 %v5988, %v6699
        %v6701 = vpop.f32.mrf.mxu0
        %v6702 = vadd.f32 %v5990, %v6701
        %6703 = vdwg.mxu0
        %6704 = vmatpush.bf16.msra.mxu0 %v6488
        %6705 = vmatpush.bf16.msra.mxu0 %v6480
        %6706 = vmatpush.bf16.msra.mxu0 %v6472
        %6707 = vmatpush.bf16.msra.mxu0 %v6464
        %6708 = vmatpush.bf16.msra.mxu0 %v6456
        %6709 = vmatpush.bf16.msra.mxu0 %v6448
        %6710 = vmatpush.bf16.msra.mxu0 %v6440
        %6711 = vmatpush.bf16.msra.mxu0 %v6432
        %6712 = vmatmul.bf16.gmra.mxu0 %v5381
        %v6713 = vpop.f32.mrf.mxu0
        %v6714 = vadd.f32 %v6002, %v6713
        %v6715 = vpop.f32.mrf.mxu0
        %v6716 = vadd.f32 %v6004, %v6715
        %6717 = vmatmul.bf16.gmra.mxu0 %v5382
        %v6718 = vpop.f32.mrf.mxu0
        %v6719 = vadd.f32 %v6007, %v6718
        %v6720 = vpop.f32.mrf.mxu0
        %v6721 = vadd.f32 %v6009, %v6720
        %6722 = vmatmul.bf16.gmra.mxu0 %v5383
        %v6723 = vpop.f32.mrf.mxu0
        %v6724 = vadd.f32 %v6012, %v6723
        %v6725 = vpop.f32.mrf.mxu0
        %v6726 = vadd.f32 %v6014, %v6725
        %6727 = vmatmul.bf16.gmra.mxu0 %v5384
        %v6728 = vpop.f32.mrf.mxu0
        %v6729 = vadd.f32 %v6017, %v6728
        %v6730 = vpop.f32.mrf.mxu0
        %v6731 = vadd.f32 %v6019, %v6730
        %6732 = vmatmul.bf16.gmra.mxu0 %v5385
        %v6733 = vpop.f32.mrf.mxu0
        %v6734 = vadd.f32 %v6022, %v6733
        %v6735 = vpop.f32.mrf.mxu0
        %v6736 = vadd.f32 %v6024, %v6735
        %6737 = vmatmul.bf16.gmra.mxu0 %v5386
        %v6738 = vpop.f32.mrf.mxu0
        %v6739 = vadd.f32 %v6027, %v6738
        %v6740 = vpop.f32.mrf.mxu0
        %v6741 = vadd.f32 %v6029, %v6740
        %6742 = vmatmul.bf16.gmra.mxu0 %v5387
        %v6743 = vpop.f32.mrf.mxu0
        %v6744 = vadd.f32 %v6032, %v6743
        %v6745 = vpop.f32.mrf.mxu0
        %v6746 = vadd.f32 %v6034, %v6745
        %6747 = vmatmul.bf16.gmra.mxu0 %v5388
        %v6748 = vpop.f32.mrf.mxu0
        %v6749 = vadd.f32 %v6037, %v6748
        %v6750 = vpop.f32.mrf.mxu0
        %v6751 = vadd.f32 %v6039, %v6750
        %6752 = vdwg.mxu0
        %6753 = vmatpush.bf16.msra.mxu0 %v6489
        %6754 = vmatpush.bf16.msra.mxu0 %v6481
        %6755 = vmatpush.bf16.msra.mxu0 %v6473
        %6756 = vmatpush.bf16.msra.mxu0 %v6465
        %6757 = vmatpush.bf16.msra.mxu0 %v6457
        %6758 = vmatpush.bf16.msra.mxu0 %v6449
        %6759 = vmatpush.bf16.msra.mxu0 %v6441
        %6760 = vmatpush.bf16.msra.mxu0 %v6433
        %6761 = vmatmul.bf16.gmra.mxu0 %v5381
        %v6762 = vpop.f32.mrf.mxu0
        %v6763 = vadd.f32 %v6051, %v6762
        %v6764 = vpop.f32.mrf.mxu0
        %v6765 = vadd.f32 %v6053, %v6764
        %6766 = vmatmul.bf16.gmra.mxu0 %v5382
        %v6767 = vpop.f32.mrf.mxu0
        %v6768 = vadd.f32 %v6056, %v6767
        %v6769 = vpop.f32.mrf.mxu0
        %v6770 = vadd.f32 %v6058, %v6769
        %6771 = vmatmul.bf16.gmra.mxu0 %v5383
        %v6772 = vpop.f32.mrf.mxu0
        %v6773 = vadd.f32 %v6061, %v6772
        %v6774 = vpop.f32.mrf.mxu0
        %v6775 = vadd.f32 %v6063, %v6774
        %6776 = vmatmul.bf16.gmra.mxu0 %v5384
        %v6777 = vpop.f32.mrf.mxu0
        %v6778 = vadd.f32 %v6066, %v6777
        %v6779 = vpop.f32.mrf.mxu0
        %v6780 = vadd.f32 %v6068, %v6779
        %6781 = vmatmul.bf16.gmra.mxu0 %v5385
        %v6782 = vpop.f32.mrf.mxu0
        %v6783 = vadd.f32 %v6071, %v6782
        %v6784 = vpop.f32.mrf.mxu0
        %v6785 = vadd.f32 %v6073, %v6784
        %6786 = vmatmul.bf16.gmra.mxu0 %v5386
        %v6787 = vpop.f32.mrf.mxu0
        %v6788 = vadd.f32 %v6076, %v6787
        %v6789 = vpop.f32.mrf.mxu0
        %v6790 = vadd.f32 %v6078, %v6789
        %6791 = vmatmul.bf16.gmra.mxu0 %v5387
        %v6792 = vpop.f32.mrf.mxu0
        %v6793 = vadd.f32 %v6081, %v6792
        %v6794 = vpop.f32.mrf.mxu0
        %v6795 = vadd.f32 %v6083, %v6794
        %6796 = vmatmul.bf16.gmra.mxu0 %v5388
        %v6797 = vpop.f32.mrf.mxu0
        %v6798 = vadd.f32 %v6086, %v6797
        %v6799 = vpop.f32.mrf.mxu0
        %v6800 = vadd.f32 %v6088, %v6799
        %6801 = vdwg.mxu0
        %6802 = vmatpush.bf16.msra.mxu0 %v6490
        %6803 = vmatpush.bf16.msra.mxu0 %v6482
        %6804 = vmatpush.bf16.msra.mxu0 %v6474
        %6805 = vmatpush.bf16.msra.mxu0 %v6466
        %6806 = vmatpush.bf16.msra.mxu0 %v6458
        %6807 = vmatpush.bf16.msra.mxu0 %v6450
        %6808 = vmatpush.bf16.msra.mxu0 %v6442
        %6809 = vmatpush.bf16.msra.mxu0 %v6434
        %6810 = vmatmul.bf16.gmra.mxu0 %v5381
        %v6811 = vpop.f32.mrf.mxu0
        %v6812 = vadd.f32 %v6100, %v6811
        %v6813 = vpop.f32.mrf.mxu0
        %v6814 = vadd.f32 %v6102, %v6813
        %6815 = vmatmul.bf16.gmra.mxu0 %v5382
        %v6816 = vpop.f32.mrf.mxu0
        %v6817 = vadd.f32 %v6105, %v6816
        %v6818 = vpop.f32.mrf.mxu0
        %v6819 = vadd.f32 %v6107, %v6818
        %6820 = vmatmul.bf16.gmra.mxu0 %v5383
        %v6821 = vpop.f32.mrf.mxu0
        %v6822 = vadd.f32 %v6110, %v6821
        %v6823 = vpop.f32.mrf.mxu0
        %v6824 = vadd.f32 %v6112, %v6823
        %6825 = vmatmul.bf16.gmra.mxu0 %v5384
        %v6826 = vpop.f32.mrf.mxu0
        %v6827 = vadd.f32 %v6115, %v6826
        %v6828 = vpop.f32.mrf.mxu0
        %v6829 = vadd.f32 %v6117, %v6828
        %6830 = vmatmul.bf16.gmra.mxu0 %v5385
        %v6831 = vpop.f32.mrf.mxu0
        %v6832 = vadd.f32 %v6120, %v6831
        %v6833 = vpop.f32.mrf.mxu0
        %v6834 = vadd.f32 %v6122, %v6833
        %6835 = vmatmul.bf16.gmra.mxu0 %v5386
        %v6836 = vpop.f32.mrf.mxu0
        %v6837 = vadd.f32 %v6125, %v6836
        %v6838 = vpop.f32.mrf.mxu0
        %v6839 = vadd.f32 %v6127, %v6838
        %6840 = vmatmul.bf16.gmra.mxu0 %v5387
        %v6841 = vpop.f32.mrf.mxu0
        %v6842 = vadd.f32 %v6130, %v6841
        %v6843 = vpop.f32.mrf.mxu0
        %v6844 = vadd.f32 %v6132, %v6843
        %6845 = vmatmul.bf16.gmra.mxu0 %v5388
        %v6846 = vpop.f32.mrf.mxu0
        %v6847 = vadd.f32 %v6135, %v6846
        %v6848 = vpop.f32.mrf.mxu0
        %v6849 = vadd.f32 %v6137, %v6848
        %6850 = vdwg.mxu0
        %6851 = vmatpush.bf16.msra.mxu0 %v6491
        %6852 = vmatpush.bf16.msra.mxu0 %v6483
        %6853 = vmatpush.bf16.msra.mxu0 %v6475
        %6854 = vmatpush.bf16.msra.mxu0 %v6467
        %6855 = vmatpush.bf16.msra.mxu0 %v6459
        %6856 = vmatpush.bf16.msra.mxu0 %v6451
        %6857 = vmatpush.bf16.msra.mxu0 %v6443
        %6858 = vmatpush.bf16.msra.mxu0 %v6435
        %6859 = vmatmul.bf16.gmra.mxu0 %v5381
        %v6860 = vpop.f32.mrf.mxu0
        %v6861 = vadd.f32 %v6149, %v6860
        %v6862 = vpop.f32.mrf.mxu0
        %v6863 = vadd.f32 %v6151, %v6862
        %6864 = vmatmul.bf16.gmra.mxu0 %v5382
        %v6865 = vpop.f32.mrf.mxu0
        %v6866 = vadd.f32 %v6154, %v6865
        %v6867 = vpop.f32.mrf.mxu0
        %v6868 = vadd.f32 %v6156, %v6867
        %6869 = vmatmul.bf16.gmra.mxu0 %v5383
        %v6870 = vpop.f32.mrf.mxu0
        %v6871 = vadd.f32 %v6159, %v6870
        %v6872 = vpop.f32.mrf.mxu0
        %v6873 = vadd.f32 %v6161, %v6872
        %6874 = vmatmul.bf16.gmra.mxu0 %v5384
        %v6875 = vpop.f32.mrf.mxu0
        %v6876 = vadd.f32 %v6164, %v6875
        %v6877 = vpop.f32.mrf.mxu0
        %v6878 = vadd.f32 %v6166, %v6877
        %6879 = vmatmul.bf16.gmra.mxu0 %v5385
        %v6880 = vpop.f32.mrf.mxu0
        %v6881 = vadd.f32 %v6169, %v6880
        %v6882 = vpop.f32.mrf.mxu0
        %v6883 = vadd.f32 %v6171, %v6882
        %6884 = vmatmul.bf16.gmra.mxu0 %v5386
        %v6885 = vpop.f32.mrf.mxu0
        %v6886 = vadd.f32 %v6174, %v6885
        %v6887 = vpop.f32.mrf.mxu0
        %v6888 = vadd.f32 %v6176, %v6887
        %6889 = vmatmul.bf16.gmra.mxu0 %v5387
        %v6890 = vpop.f32.mrf.mxu0
        %v6891 = vadd.f32 %v6179, %v6890
        %v6892 = vpop.f32.mrf.mxu0
        %v6893 = vadd.f32 %v6181, %v6892
        %6894 = vmatmul.bf16.gmra.mxu0 %v5388
        %v6895 = vpop.f32.mrf.mxu0
        %v6896 = vadd.f32 %v6184, %v6895
        %v6897 = vpop.f32.mrf.mxu0
        %v6898 = vadd.f32 %v6186, %v6897
        %6899 = vdwg.mxu0
        %6900 = vmatpush.bf16.msra.mxu0 %v6492
        %6901 = vmatpush.bf16.msra.mxu0 %v6484
        %6902 = vmatpush.bf16.msra.mxu0 %v6476
        %6903 = vmatpush.bf16.msra.mxu0 %v6468
        %6904 = vmatpush.bf16.msra.mxu0 %v6460
        %6905 = vmatpush.bf16.msra.mxu0 %v6452
        %6906 = vmatpush.bf16.msra.mxu0 %v6444
        %6907 = vmatpush.bf16.msra.mxu0 %v6436
        %6908 = vmatmul.bf16.gmra.mxu0 %v5381
        %v6909 = vpop.f32.mrf.mxu0
        %v6910 = vadd.f32 %v6198, %v6909
        %v6911 = vpop.f32.mrf.mxu0
        %v6912 = vadd.f32 %v6200, %v6911
        %6913 = vmatmul.bf16.gmra.mxu0 %v5382
        %v6914 = vpop.f32.mrf.mxu0
        %v6915 = vadd.f32 %v6203, %v6914
        %v6916 = vpop.f32.mrf.mxu0
        %v6917 = vadd.f32 %v6205, %v6916
        %6918 = vmatmul.bf16.gmra.mxu0 %v5383
        %v6919 = vpop.f32.mrf.mxu0
        %v6920 = vadd.f32 %v6208, %v6919
        %v6921 = vpop.f32.mrf.mxu0
        %v6922 = vadd.f32 %v6210, %v6921
        %6923 = vmatmul.bf16.gmra.mxu0 %v5384
        %v6924 = vpop.f32.mrf.mxu0
        %v6925 = vadd.f32 %v6213, %v6924
        %v6926 = vpop.f32.mrf.mxu0
        %v6927 = vadd.f32 %v6215, %v6926
        %6928 = vmatmul.bf16.gmra.mxu0 %v5385
        %v6929 = vpop.f32.mrf.mxu0
        %v6930 = vadd.f32 %v6218, %v6929
        %v6931 = vpop.f32.mrf.mxu0
        %v6932 = vadd.f32 %v6220, %v6931
        %6933 = vmatmul.bf16.gmra.mxu0 %v5386
        %v6934 = vpop.f32.mrf.mxu0
        %v6935 = vadd.f32 %v6223, %v6934
        %v6936 = vpop.f32.mrf.mxu0
        %v6937 = vadd.f32 %v6225, %v6936
        %6938 = vmatmul.bf16.gmra.mxu0 %v5387
        %v6939 = vpop.f32.mrf.mxu0
        %v6940 = vadd.f32 %v6228, %v6939
        %v6941 = vpop.f32.mrf.mxu0
        %v6942 = vadd.f32 %v6230, %v6941
        %6943 = vmatmul.bf16.gmra.mxu0 %v5388
        %v6944 = vpop.f32.mrf.mxu0
        %v6945 = vadd.f32 %v6233, %v6944
        %v6946 = vpop.f32.mrf.mxu0
        %v6947 = vadd.f32 %v6235, %v6946
        %6948 = vdwg.mxu0
        %v6950 = vperm.slane %v319, 0
        %v6951 = vperm.slane %v319, 1
        %v6952 = vperm.slane %v319, 2
        %v6953 = vperm.slane %v319, 3
        %v6954 = vperm.slane %v319, 4
        %v6955 = vperm.slane %v319, 5
        %v6956 = vperm.slane %v319, 6
        %v6957 = vperm.slane %v319, 7
        %v6966 = vadd.f32 %v6567, %v6950
        %v6967 = vadd.f32 %v6616, %v6951
        %v6968 = vadd.f32 %v6665, %v6952
        %v6969 = vadd.f32 %v6714, %v6953
        %v6970 = vadd.f32 %v6763, %v6954
        %v6971 = vadd.f32 %v6812, %v6955
        %v6972 = vadd.f32 %v6861, %v6956
        %v6973 = vadd.f32 %v6910, %v6957
        %v6974 = vadd.f32 %v6569, %v6950
        %v6975 = vadd.f32 %v6618, %v6951
        %v6976 = vadd.f32 %v6667, %v6952
        %v6977 = vadd.f32 %v6716, %v6953
        %v6978 = vadd.f32 %v6765, %v6954
        %v6979 = vadd.f32 %v6814, %v6955
        %v6980 = vadd.f32 %v6863, %v6956
        %v6981 = vadd.f32 %v6912, %v6957
        %v6982 = vadd.f32 %v6572, %v6950
        %v6983 = vadd.f32 %v6621, %v6951
        %v6984 = vadd.f32 %v6670, %v6952
        %v6985 = vadd.f32 %v6719, %v6953
        %v6986 = vadd.f32 %v6768, %v6954
        %v6987 = vadd.f32 %v6817, %v6955
        %v6988 = vadd.f32 %v6866, %v6956
        %v6989 = vadd.f32 %v6915, %v6957
        %v6990 = vadd.f32 %v6574, %v6950
        %v6991 = vadd.f32 %v6623, %v6951
        %v6992 = vadd.f32 %v6672, %v6952
        %v6993 = vadd.f32 %v6721, %v6953
        %v6994 = vadd.f32 %v6770, %v6954
        %v6995 = vadd.f32 %v6819, %v6955
        %v6996 = vadd.f32 %v6868, %v6956
        %v6997 = vadd.f32 %v6917, %v6957
        %v6998 = vadd.f32 %v6577, %v6950
        %v6999 = vadd.f32 %v6626, %v6951
        %v7000 = vadd.f32 %v6675, %v6952
        %v7001 = vadd.f32 %v6724, %v6953
        %v7002 = vadd.f32 %v6773, %v6954
        %v7003 = vadd.f32 %v6822, %v6955
        %v7004 = vadd.f32 %v6871, %v6956
        %v7005 = vadd.f32 %v6920, %v6957
        %v7006 = vadd.f32 %v6579, %v6950
        %v7007 = vadd.f32 %v6628, %v6951
        %v7008 = vadd.f32 %v6677, %v6952
        %v7009 = vadd.f32 %v6726, %v6953
        %v7010 = vadd.f32 %v6775, %v6954
        %v7011 = vadd.f32 %v6824, %v6955
        %v7012 = vadd.f32 %v6873, %v6956
        %v7013 = vadd.f32 %v6922, %v6957
        %v7014 = vadd.f32 %v6582, %v6950
        %v7015 = vadd.f32 %v6631, %v6951
        %v7016 = vadd.f32 %v6680, %v6952
        %v7017 = vadd.f32 %v6729, %v6953
        %v7018 = vadd.f32 %v6778, %v6954
        %v7019 = vadd.f32 %v6827, %v6955
        %v7020 = vadd.f32 %v6876, %v6956
        %v7021 = vadd.f32 %v6925, %v6957
        %v7022 = vadd.f32 %v6584, %v6950
        %v7023 = vadd.f32 %v6633, %v6951
        %v7024 = vadd.f32 %v6682, %v6952
        %v7025 = vadd.f32 %v6731, %v6953
        %v7026 = vadd.f32 %v6780, %v6954
        %v7027 = vadd.f32 %v6829, %v6955
        %v7028 = vadd.f32 %v6878, %v6956
        %v7029 = vadd.f32 %v6927, %v6957
        %v7030 = vadd.f32 %v6587, %v6950
        %v7031 = vadd.f32 %v6636, %v6951
        %v7032 = vadd.f32 %v6685, %v6952
        %v7033 = vadd.f32 %v6734, %v6953
        %v7034 = vadd.f32 %v6783, %v6954
        %v7035 = vadd.f32 %v6832, %v6955
        %v7036 = vadd.f32 %v6881, %v6956
        %v7037 = vadd.f32 %v6930, %v6957
        %v7038 = vadd.f32 %v6589, %v6950
        %v7039 = vadd.f32 %v6638, %v6951
        %v7040 = vadd.f32 %v6687, %v6952
        %v7041 = vadd.f32 %v6736, %v6953
        %v7042 = vadd.f32 %v6785, %v6954
        %v7043 = vadd.f32 %v6834, %v6955
        %v7044 = vadd.f32 %v6883, %v6956
        %v7045 = vadd.f32 %v6932, %v6957
        %v7046 = vadd.f32 %v6592, %v6950
        %v7047 = vadd.f32 %v6641, %v6951
        %v7048 = vadd.f32 %v6690, %v6952
        %v7049 = vadd.f32 %v6739, %v6953
        %v7050 = vadd.f32 %v6788, %v6954
        %v7051 = vadd.f32 %v6837, %v6955
        %v7052 = vadd.f32 %v6886, %v6956
        %v7053 = vadd.f32 %v6935, %v6957
        %v7054 = vadd.f32 %v6594, %v6950
        %v7055 = vadd.f32 %v6643, %v6951
        %v7056 = vadd.f32 %v6692, %v6952
        %v7057 = vadd.f32 %v6741, %v6953
        %v7058 = vadd.f32 %v6790, %v6954
        %v7059 = vadd.f32 %v6839, %v6955
        %v7060 = vadd.f32 %v6888, %v6956
        %v7061 = vadd.f32 %v6937, %v6957
        %v7062 = vadd.f32 %v6597, %v6950
        %v7063 = vadd.f32 %v6646, %v6951
        %v7064 = vadd.f32 %v6695, %v6952
        %v7065 = vadd.f32 %v6744, %v6953
        %v7066 = vadd.f32 %v6793, %v6954
        %v7067 = vadd.f32 %v6842, %v6955
        %v7068 = vadd.f32 %v6891, %v6956
        %v7069 = vadd.f32 %v6940, %v6957
        %v7070 = vadd.f32 %v6599, %v6950
        %v7071 = vadd.f32 %v6648, %v6951
        %v7072 = vadd.f32 %v6697, %v6952
        %v7073 = vadd.f32 %v6746, %v6953
        %v7074 = vadd.f32 %v6795, %v6954
        %v7075 = vadd.f32 %v6844, %v6955
        %v7076 = vadd.f32 %v6893, %v6956
        %v7077 = vadd.f32 %v6942, %v6957
        %v7078 = vadd.f32 %v6602, %v6950
        %v7079 = vadd.f32 %v6651, %v6951
        %v7080 = vadd.f32 %v6700, %v6952
        %v7081 = vadd.f32 %v6749, %v6953
        %v7082 = vadd.f32 %v6798, %v6954
        %v7083 = vadd.f32 %v6847, %v6955
        %v7084 = vadd.f32 %v6896, %v6956
        %v7085 = vadd.f32 %v6945, %v6957
        %v7086 = vadd.f32 %v6604, %v6950
        %v7087 = vadd.f32 %v6653, %v6951
        %v7088 = vadd.f32 %v6702, %v6952
        %v7089 = vadd.f32 %v6751, %v6953
        %v7090 = vadd.f32 %v6800, %v6954
        %v7091 = vadd.f32 %v6849, %v6955
        %v7092 = vadd.f32 %v6898, %v6956
        %v7093 = vadd.f32 %v6947, %v6957
        %v7094 = vmul.f32 %v6966, 0.5
        %v7095 = vmul.f32 %v6967, 0.5
        %v7096 = vmul.f32 %v6968, 0.5
        %v7097 = vmul.f32 %v6969, 0.5
        %v7098 = vmul.f32 %v6970, 0.5
        %v7099 = vmul.f32 %v6971, 0.5
        %v7100 = vmul.f32 %v6972, 0.5
        %v7101 = vmul.f32 %v6973, 0.5
        %v7102 = vmul.f32 %v6974, 0.5
        %v7103 = vmul.f32 %v6975, 0.5
        %v7104 = vmul.f32 %v6976, 0.5
        %v7105 = vmul.f32 %v6977, 0.5
        %v7106 = vmul.f32 %v6978, 0.5
        %v7107 = vmul.f32 %v6979, 0.5
        %v7108 = vmul.f32 %v6980, 0.5
        %v7109 = vmul.f32 %v6981, 0.5
        %v7110 = vmul.f32 %v6982, 0.5
        %v7111 = vmul.f32 %v6983, 0.5
        %v7112 = vmul.f32 %v6984, 0.5
        %v7113 = vmul.f32 %v6985, 0.5
        %v7114 = vmul.f32 %v6986, 0.5
        %v7115 = vmul.f32 %v6987, 0.5
        %v7116 = vmul.f32 %v6988, 0.5
        %v7117 = vmul.f32 %v6989, 0.5
        %v7118 = vmul.f32 %v6990, 0.5
        %v7119 = vmul.f32 %v6991, 0.5
        %v7120 = vmul.f32 %v6992, 0.5
        %v7121 = vmul.f32 %v6993, 0.5
        %v7122 = vmul.f32 %v6994, 0.5
        %v7123 = vmul.f32 %v6995, 0.5
        %v7124 = vmul.f32 %v6996, 0.5
        %v7125 = vmul.f32 %v6997, 0.5
        %v7126 = vmul.f32 %v6998, 0.5
        %v7127 = vmul.f32 %v6999, 0.5
        %v7128 = vmul.f32 %v7000, 0.5
        %v7129 = vmul.f32 %v7001, 0.5
        %v7130 = vmul.f32 %v7002, 0.5
        %v7131 = vmul.f32 %v7003, 0.5
        %v7132 = vmul.f32 %v7004, 0.5
        %v7133 = vmul.f32 %v7005, 0.5
        %v7134 = vmul.f32 %v7006, 0.5
        %v7135 = vmul.f32 %v7007, 0.5
        %v7136 = vmul.f32 %v7008, 0.5
        %v7137 = vmul.f32 %v7009, 0.5
        %v7138 = vmul.f32 %v7010, 0.5
        %v7139 = vmul.f32 %v7011, 0.5
        %v7140 = vmul.f32 %v7012, 0.5
        %v7141 = vmul.f32 %v7013, 0.5
        %v7142 = vmul.f32 %v7014, 0.5
        %v7143 = vmul.f32 %v7015, 0.5
        %v7144 = vmul.f32 %v7016, 0.5
        %v7145 = vmul.f32 %v7017, 0.5
        %v7146 = vmul.f32 %v7018, 0.5
        %v7147 = vmul.f32 %v7019, 0.5
        %v7148 = vmul.f32 %v7020, 0.5
        %v7149 = vmul.f32 %v7021, 0.5
        %v7150 = vmul.f32 %v7022, 0.5
        %v7151 = vmul.f32 %v7023, 0.5
        %v7152 = vmul.f32 %v7024, 0.5
        %v7153 = vmul.f32 %v7025, 0.5
        %v7154 = vmul.f32 %v7026, 0.5
        %v7155 = vmul.f32 %v7027, 0.5
        %v7156 = vmul.f32 %v7028, 0.5
        %v7157 = vmul.f32 %v7029, 0.5
        %v7158 = vmul.f32 %v7030, 0.5
        %v7159 = vmul.f32 %v7031, 0.5
        %v7160 = vmul.f32 %v7032, 0.5
        %v7161 = vmul.f32 %v7033, 0.5
        %v7162 = vmul.f32 %v7034, 0.5
        %v7163 = vmul.f32 %v7035, 0.5
        %v7164 = vmul.f32 %v7036, 0.5
        %v7165 = vmul.f32 %v7037, 0.5
        %v7166 = vmul.f32 %v7038, 0.5
        %v7167 = vmul.f32 %v7039, 0.5
        %v7168 = vmul.f32 %v7040, 0.5
        %v7169 = vmul.f32 %v7041, 0.5
        %v7170 = vmul.f32 %v7042, 0.5
        %v7171 = vmul.f32 %v7043, 0.5
        %v7172 = vmul.f32 %v7044, 0.5
        %v7173 = vmul.f32 %v7045, 0.5
        %v7174 = vmul.f32 %v7046, 0.5
        %v7175 = vmul.f32 %v7047, 0.5
        %v7176 = vmul.f32 %v7048, 0.5
        %v7177 = vmul.f32 %v7049, 0.5
        %v7178 = vmul.f32 %v7050, 0.5
        %v7179 = vmul.f32 %v7051, 0.5
        %v7180 = vmul.f32 %v7052, 0.5
        %v7181 = vmul.f32 %v7053, 0.5
        %v7182 = vmul.f32 %v7054, 0.5
        %v7183 = vmul.f32 %v7055, 0.5
        %v7184 = vmul.f32 %v7056, 0.5
        %v7185 = vmul.f32 %v7057, 0.5
        %v7186 = vmul.f32 %v7058, 0.5
        %v7187 = vmul.f32 %v7059, 0.5
        %v7188 = vmul.f32 %v7060, 0.5
        %v7189 = vmul.f32 %v7061, 0.5
        %v7190 = vmul.f32 %v7062, 0.5
        %v7191 = vmul.f32 %v7063, 0.5
        %v7192 = vmul.f32 %v7064, 0.5
        %v7193 = vmul.f32 %v7065, 0.5
        %v7194 = vmul.f32 %v7066, 0.5
        %v7195 = vmul.f32 %v7067, 0.5
        %v7196 = vmul.f32 %v7068, 0.5
        %v7197 = vmul.f32 %v7069, 0.5
        %v7198 = vmul.f32 %v7070, 0.5
        %v7199 = vmul.f32 %v7071, 0.5
        %v7200 = vmul.f32 %v7072, 0.5
        %v7201 = vmul.f32 %v7073, 0.5
        %v7202 = vmul.f32 %v7074, 0.5
        %v7203 = vmul.f32 %v7075, 0.5
        %v7204 = vmul.f32 %v7076, 0.5
        %v7205 = vmul.f32 %v7077, 0.5
        %v7206 = vmul.f32 %v7078, 0.5
        %v7207 = vmul.f32 %v7079, 0.5
        %v7208 = vmul.f32 %v7080, 0.5
        %v7209 = vmul.f32 %v7081, 0.5
        %v7210 = vmul.f32 %v7082, 0.5
        %v7211 = vmul.f32 %v7083, 0.5
        %v7212 = vmul.f32 %v7084, 0.5
        %v7213 = vmul.f32 %v7085, 0.5
        %v7214 = vmul.f32 %v7086, 0.5
        %v7215 = vmul.f32 %v7087, 0.5
        %v7216 = vmul.f32 %v7088, 0.5
        %v7217 = vmul.f32 %v7089, 0.5
        %v7218 = vmul.f32 %v7090, 0.5
        %v7219 = vmul.f32 %v7091, 0.5
        %v7220 = vmul.f32 %v7092, 0.5
        %v7221 = vmul.f32 %v7093, 0.5
        %v7222 = vtanh.pop %v7094
        %v7223 = vtanh.pop %v7095
        %v7224 = vtanh.pop %v7096
        %v7225 = vtanh.pop %v7097
        %v7226 = vtanh.pop %v7098
        %v7227 = vtanh.pop %v7099
        %v7228 = vtanh.pop %v7100
        %v7229 = vtanh.pop %v7101
        %v7230 = vtanh.pop %v7102
        %v7231 = vtanh.pop %v7103
        %v7232 = vtanh.pop %v7104
        %v7233 = vtanh.pop %v7105
        %v7234 = vtanh.pop %v7106
        %v7235 = vtanh.pop %v7107
        %v7236 = vtanh.pop %v7108
        %v7237 = vtanh.pop %v7109
        %v7238 = vtanh.pop %v7110
        %v7239 = vtanh.pop %v7111
        %v7240 = vtanh.pop %v7112
        %v7241 = vtanh.pop %v7113
        %v7242 = vtanh.pop %v7114
        %v7243 = vtanh.pop %v7115
        %v7244 = vtanh.pop %v7116
        %v7245 = vtanh.pop %v7117
        %v7246 = vtanh.pop %v7118
        %v7247 = vtanh.pop %v7119
        %v7248 = vtanh.pop %v7120
        %v7249 = vtanh.pop %v7121
        %v7250 = vtanh.pop %v7122
        %v7251 = vtanh.pop %v7123
        %v7252 = vtanh.pop %v7124
        %v7253 = vtanh.pop %v7125
        %v7254 = vtanh.pop %v7126
        %v7255 = vtanh.pop %v7127
        %v7256 = vtanh.pop %v7128
        %v7257 = vtanh.pop %v7129
        %v7258 = vtanh.pop %v7130
        %v7259 = vtanh.pop %v7131
        %v7260 = vtanh.pop %v7132
        %v7261 = vtanh.pop %v7133
        %v7262 = vtanh.pop %v7134
        %v7263 = vtanh.pop %v7135
        %v7264 = vtanh.pop %v7136
        %v7265 = vtanh.pop %v7137
        %v7266 = vtanh.pop %v7138
        %v7267 = vtanh.pop %v7139
        %v7268 = vtanh.pop %v7140
        %v7269 = vtanh.pop %v7141
        %v7270 = vtanh.pop %v7142
        %v7271 = vtanh.pop %v7143
        %v7272 = vtanh.pop %v7144
        %v7273 = vtanh.pop %v7145
        %v7274 = vtanh.pop %v7146
        %v7275 = vtanh.pop %v7147
        %v7276 = vtanh.pop %v7148
        %v7277 = vtanh.pop %v7149
        %v7278 = vtanh.pop %v7150
        %v7279 = vtanh.pop %v7151
        %v7280 = vtanh.pop %v7152
        %v7281 = vtanh.pop %v7153
        %v7282 = vtanh.pop %v7154
        %v7283 = vtanh.pop %v7155
        %v7284 = vtanh.pop %v7156
        %v7285 = vtanh.pop %v7157
        %v7286 = vtanh.pop %v7158
        %v7287 = vtanh.pop %v7159
        %v7288 = vtanh.pop %v7160
        %v7289 = vtanh.pop %v7161
        %v7290 = vtanh.pop %v7162
        %v7291 = vtanh.pop %v7163
        %v7292 = vtanh.pop %v7164
        %v7293 = vtanh.pop %v7165
        %v7294 = vtanh.pop %v7166
        %v7295 = vtanh.pop %v7167
        %v7296 = vtanh.pop %v7168
        %v7297 = vtanh.pop %v7169
        %v7298 = vtanh.pop %v7170
        %v7299 = vtanh.pop %v7171
        %v7300 = vtanh.pop %v7172
        %v7301 = vtanh.pop %v7173
        %v7302 = vtanh.pop %v7174
        %v7303 = vtanh.pop %v7175
        %v7304 = vtanh.pop %v7176
        %v7305 = vtanh.pop %v7177
        %v7306 = vtanh.pop %v7178
        %v7307 = vtanh.pop %v7179
        %v7308 = vtanh.pop %v7180
        %v7309 = vtanh.pop %v7181
        %v7310 = vtanh.pop %v7182
        %v7311 = vtanh.pop %v7183
        %v7312 = vtanh.pop %v7184
        %v7313 = vtanh.pop %v7185
        %v7314 = vtanh.pop %v7186
        %v7315 = vtanh.pop %v7187
        %v7316 = vtanh.pop %v7188
        %v7317 = vtanh.pop %v7189
        %v7318 = vtanh.pop %v7190
        %v7319 = vtanh.pop %v7191
        %v7320 = vtanh.pop %v7192
        %v7321 = vtanh.pop %v7193
        %v7322 = vtanh.pop %v7194
        %v7323 = vtanh.pop %v7195
        %v7324 = vtanh.pop %v7196
        %v7325 = vtanh.pop %v7197
        %v7326 = vtanh.pop %v7198
        %v7327 = vtanh.pop %v7199
        %v7328 = vtanh.pop %v7200
        %v7329 = vtanh.pop %v7201
        %v7330 = vtanh.pop %v7202
        %v7331 = vtanh.pop %v7203
        %v7332 = vtanh.pop %v7204
        %v7333 = vtanh.pop %v7205
        %v7334 = vtanh.pop %v7206
        %v7335 = vtanh.pop %v7207
        %v7336 = vtanh.pop %v7208
        %v7337 = vtanh.pop %v7209
        %v7338 = vtanh.pop %v7210
        %v7339 = vtanh.pop %v7211
        %v7340 = vtanh.pop %v7212
        %v7341 = vtanh.pop %v7213
        %v7342 = vtanh.pop %v7214
        %v7343 = vtanh.pop %v7215
        %v7344 = vtanh.pop %v7216
        %v7345 = vtanh.pop %v7217
        %v7346 = vtanh.pop %v7218
        %v7347 = vtanh.pop %v7219
        %v7348 = vtanh.pop %v7220
        %v7349 = vtanh.pop %v7221
        %v7350 = vmul.f32 %v7222, 0.5
        %v7351 = vmul.f32 %v7223, 0.5
        %v7352 = vmul.f32 %v7224, 0.5
        %v7353 = vmul.f32 %v7225, 0.5
        %v7354 = vmul.f32 %v7226, 0.5
        %v7355 = vmul.f32 %v7227, 0.5
        %v7356 = vmul.f32 %v7228, 0.5
        %v7357 = vmul.f32 %v7229, 0.5
        %v7358 = vmul.f32 %v7230, 0.5
        %v7359 = vmul.f32 %v7231, 0.5
        %v7360 = vmul.f32 %v7232, 0.5
        %v7361 = vmul.f32 %v7233, 0.5
        %v7362 = vmul.f32 %v7234, 0.5
        %v7363 = vmul.f32 %v7235, 0.5
        %v7364 = vmul.f32 %v7236, 0.5
        %v7365 = vmul.f32 %v7237, 0.5
        %v7366 = vmul.f32 %v7238, 0.5
        %v7367 = vmul.f32 %v7239, 0.5
        %v7368 = vmul.f32 %v7240, 0.5
        %v7369 = vmul.f32 %v7241, 0.5
        %v7370 = vmul.f32 %v7242, 0.5
        %v7371 = vmul.f32 %v7243, 0.5
        %v7372 = vmul.f32 %v7244, 0.5
        %v7373 = vmul.f32 %v7245, 0.5
        %v7374 = vmul.f32 %v7246, 0.5
        %v7375 = vmul.f32 %v7247, 0.5
        %v7376 = vmul.f32 %v7248, 0.5
        %v7377 = vmul.f32 %v7249, 0.5
        %v7378 = vmul.f32 %v7250, 0.5
        %v7379 = vmul.f32 %v7251, 0.5
        %v7380 = vmul.f32 %v7252, 0.5
        %v7381 = vmul.f32 %v7253, 0.5
        %v7382 = vmul.f32 %v7254, 0.5
        %v7383 = vmul.f32 %v7255, 0.5
        %v7384 = vmul.f32 %v7256, 0.5
        %v7385 = vmul.f32 %v7257, 0.5
        %v7386 = vmul.f32 %v7258, 0.5
        %v7387 = vmul.f32 %v7259, 0.5
        %v7388 = vmul.f32 %v7260, 0.5
        %v7389 = vmul.f32 %v7261, 0.5
        %v7390 = vmul.f32 %v7262, 0.5
        %v7391 = vmul.f32 %v7263, 0.5
        %v7392 = vmul.f32 %v7264, 0.5
        %v7393 = vmul.f32 %v7265, 0.5
        %v7394 = vmul.f32 %v7266, 0.5
        %v7395 = vmul.f32 %v7267, 0.5
        %v7396 = vmul.f32 %v7268, 0.5
        %v7397 = vmul.f32 %v7269, 0.5
        %v7398 = vmul.f32 %v7270, 0.5
        %v7399 = vmul.f32 %v7271, 0.5
        %v7400 = vmul.f32 %v7272, 0.5
        %v7401 = vmul.f32 %v7273, 0.5
        %v7402 = vmul.f32 %v7274, 0.5
        %v7403 = vmul.f32 %v7275, 0.5
        %v7404 = vmul.f32 %v7276, 0.5
        %v7405 = vmul.f32 %v7277, 0.5
        %v7406 = vmul.f32 %v7278, 0.5
        %v7407 = vmul.f32 %v7279, 0.5
        %v7408 = vmul.f32 %v7280, 0.5
        %v7409 = vmul.f32 %v7281, 0.5
        %v7410 = vmul.f32 %v7282, 0.5
        %v7411 = vmul.f32 %v7283, 0.5
        %v7412 = vmul.f32 %v7284, 0.5
        %v7413 = vmul.f32 %v7285, 0.5
        %v7414 = vmul.f32 %v7286, 0.5
        %v7415 = vmul.f32 %v7287, 0.5
        %v7416 = vmul.f32 %v7288, 0.5
        %v7417 = vmul.f32 %v7289, 0.5
        %v7418 = vmul.f32 %v7290, 0.5
        %v7419 = vmul.f32 %v7291, 0.5
        %v7420 = vmul.f32 %v7292, 0.5
        %v7421 = vmul.f32 %v7293, 0.5
        %v7422 = vmul.f32 %v7294, 0.5
        %v7423 = vmul.f32 %v7295, 0.5
        %v7424 = vmul.f32 %v7296, 0.5
        %v7425 = vmul.f32 %v7297, 0.5
        %v7426 = vmul.f32 %v7298, 0.5
        %v7427 = vmul.f32 %v7299, 0.5
        %v7428 = vmul.f32 %v7300, 0.5
        %v7429 = vmul.f32 %v7301, 0.5
        %v7430 = vmul.f32 %v7302, 0.5
        %v7431 = vmul.f32 %v7303, 0.5
        %v7432 = vmul.f32 %v7304, 0.5
        %v7433 = vmul.f32 %v7305, 0.5
        %v7434 = vmul.f32 %v7306, 0.5
        %v7435 = vmul.f32 %v7307, 0.5
        %v7436 = vmul.f32 %v7308, 0.5
        %v7437 = vmul.f32 %v7309, 0.5
        %v7438 = vmul.f32 %v7310, 0.5
        %v7439 = vmul.f32 %v7311, 0.5
        %v7440 = vmul.f32 %v7312, 0.5
        %v7441 = vmul.f32 %v7313, 0.5
        %v7442 = vmul.f32 %v7314, 0.5
        %v7443 = vmul.f32 %v7315, 0.5
        %v7444 = vmul.f32 %v7316, 0.5
        %v7445 = vmul.f32 %v7317, 0.5
        %v7446 = vmul.f32 %v7318, 0.5
        %v7447 = vmul.f32 %v7319, 0.5
        %v7448 = vmul.f32 %v7320, 0.5
        %v7449 = vmul.f32 %v7321, 0.5
        %v7450 = vmul.f32 %v7322, 0.5
        %v7451 = vmul.f32 %v7323, 0.5
        %v7452 = vmul.f32 %v7324, 0.5
        %v7453 = vmul.f32 %v7325, 0.5
        %v7454 = vmul.f32 %v7326, 0.5
        %v7455 = vmul.f32 %v7327, 0.5
        %v7456 = vmul.f32 %v7328, 0.5
        %v7457 = vmul.f32 %v7329, 0.5
        %v7458 = vmul.f32 %v7330, 0.5
        %v7459 = vmul.f32 %v7331, 0.5
        %v7460 = vmul.f32 %v7332, 0.5
        %v7461 = vmul.f32 %v7333, 0.5
        %v7462 = vmul.f32 %v7334, 0.5
        %v7463 = vmul.f32 %v7335, 0.5
        %v7464 = vmul.f32 %v7336, 0.5
        %v7465 = vmul.f32 %v7337, 0.5
        %v7466 = vmul.f32 %v7338, 0.5
        %v7467 = vmul.f32 %v7339, 0.5
        %v7468 = vmul.f32 %v7340, 0.5
        %v7469 = vmul.f32 %v7341, 0.5
        %v7470 = vmul.f32 %v7342, 0.5
        %v7471 = vmul.f32 %v7343, 0.5
        %v7472 = vmul.f32 %v7344, 0.5
        %v7473 = vmul.f32 %v7345, 0.5
        %v7474 = vmul.f32 %v7346, 0.5
        %v7475 = vmul.f32 %v7347, 0.5
        %v7476 = vmul.f32 %v7348, 0.5
        %v7477 = vmul.f32 %v7349, 0.5
        %v7478 = vadd.f32 %v7350, 0.5
        %v7479 = vadd.f32 %v7351, 0.5
        %v7480 = vadd.f32 %v7352, 0.5
        %v7481 = vadd.f32 %v7353, 0.5
        %v7482 = vadd.f32 %v7354, 0.5
        %v7483 = vadd.f32 %v7355, 0.5
        %v7484 = vadd.f32 %v7356, 0.5
        %v7485 = vadd.f32 %v7357, 0.5
        %v7486 = vadd.f32 %v7358, 0.5
        %v7487 = vadd.f32 %v7359, 0.5
        %v7488 = vadd.f32 %v7360, 0.5
        %v7489 = vadd.f32 %v7361, 0.5
        %v7490 = vadd.f32 %v7362, 0.5
        %v7491 = vadd.f32 %v7363, 0.5
        %v7492 = vadd.f32 %v7364, 0.5
        %v7493 = vadd.f32 %v7365, 0.5
        %v7494 = vadd.f32 %v7366, 0.5
        %v7495 = vadd.f32 %v7367, 0.5
        %v7496 = vadd.f32 %v7368, 0.5
        %v7497 = vadd.f32 %v7369, 0.5
        %v7498 = vadd.f32 %v7370, 0.5
        %v7499 = vadd.f32 %v7371, 0.5
        %v7500 = vadd.f32 %v7372, 0.5
        %v7501 = vadd.f32 %v7373, 0.5
        %v7502 = vadd.f32 %v7374, 0.5
        %v7503 = vadd.f32 %v7375, 0.5
        %v7504 = vadd.f32 %v7376, 0.5
        %v7505 = vadd.f32 %v7377, 0.5
        %v7506 = vadd.f32 %v7378, 0.5
        %v7507 = vadd.f32 %v7379, 0.5
        %v7508 = vadd.f32 %v7380, 0.5
        %v7509 = vadd.f32 %v7381, 0.5
        %v7510 = vadd.f32 %v7382, 0.5
        %v7511 = vadd.f32 %v7383, 0.5
        %v7512 = vadd.f32 %v7384, 0.5
        %v7513 = vadd.f32 %v7385, 0.5
        %v7514 = vadd.f32 %v7386, 0.5
        %v7515 = vadd.f32 %v7387, 0.5
        %v7516 = vadd.f32 %v7388, 0.5
        %v7517 = vadd.f32 %v7389, 0.5
        %v7518 = vadd.f32 %v7390, 0.5
        %v7519 = vadd.f32 %v7391, 0.5
        %v7520 = vadd.f32 %v7392, 0.5
        %v7521 = vadd.f32 %v7393, 0.5
        %v7522 = vadd.f32 %v7394, 0.5
        %v7523 = vadd.f32 %v7395, 0.5
        %v7524 = vadd.f32 %v7396, 0.5
        %v7525 = vadd.f32 %v7397, 0.5
        %v7526 = vadd.f32 %v7398, 0.5
        %v7527 = vadd.f32 %v7399, 0.5
        %v7528 = vadd.f32 %v7400, 0.5
        %v7529 = vadd.f32 %v7401, 0.5
        %v7530 = vadd.f32 %v7402, 0.5
        %v7531 = vadd.f32 %v7403, 0.5
        %v7532 = vadd.f32 %v7404, 0.5
        %v7533 = vadd.f32 %v7405, 0.5
        %v7534 = vadd.f32 %v7406, 0.5
        %v7535 = vadd.f32 %v7407, 0.5
        %v7536 = vadd.f32 %v7408, 0.5
        %v7537 = vadd.f32 %v7409, 0.5
        %v7538 = vadd.f32 %v7410, 0.5
        %v7539 = vadd.f32 %v7411, 0.5
        %v7540 = vadd.f32 %v7412, 0.5
        %v7541 = vadd.f32 %v7413, 0.5
        %v7542 = vadd.f32 %v7414, 0.5
        %v7543 = vadd.f32 %v7415, 0.5
        %v7544 = vadd.f32 %v7416, 0.5
        %v7545 = vadd.f32 %v7417, 0.5
        %v7546 = vadd.f32 %v7418, 0.5
        %v7547 = vadd.f32 %v7419, 0.5
        %v7548 = vadd.f32 %v7420, 0.5
        %v7549 = vadd.f32 %v7421, 0.5
        %v7550 = vadd.f32 %v7422, 0.5
        %v7551 = vadd.f32 %v7423, 0.5
        %v7552 = vadd.f32 %v7424, 0.5
        %v7553 = vadd.f32 %v7425, 0.5
        %v7554 = vadd.f32 %v7426, 0.5
        %v7555 = vadd.f32 %v7427, 0.5
        %v7556 = vadd.f32 %v7428, 0.5
        %v7557 = vadd.f32 %v7429, 0.5
        %v7558 = vadd.f32 %v7430, 0.5
        %v7559 = vadd.f32 %v7431, 0.5
        %v7560 = vadd.f32 %v7432, 0.5
        %v7561 = vadd.f32 %v7433, 0.5
        %v7562 = vadd.f32 %v7434, 0.5
        %v7563 = vadd.f32 %v7435, 0.5
        %v7564 = vadd.f32 %v7436, 0.5
        %v7565 = vadd.f32 %v7437, 0.5
        %v7566 = vadd.f32 %v7438, 0.5
        %v7567 = vadd.f32 %v7439, 0.5
        %v7568 = vadd.f32 %v7440, 0.5
        %v7569 = vadd.f32 %v7441, 0.5
        %v7570 = vadd.f32 %v7442, 0.5
        %v7571 = vadd.f32 %v7443, 0.5
        %v7572 = vadd.f32 %v7444, 0.5
        %v7573 = vadd.f32 %v7445, 0.5
        %v7574 = vadd.f32 %v7446, 0.5
        %v7575 = vadd.f32 %v7447, 0.5
        %v7576 = vadd.f32 %v7448, 0.5
        %v7577 = vadd.f32 %v7449, 0.5
        %v7578 = vadd.f32 %v7450, 0.5
        %v7579 = vadd.f32 %v7451, 0.5
        %v7580 = vadd.f32 %v7452, 0.5
        %v7581 = vadd.f32 %v7453, 0.5
        %v7582 = vadd.f32 %v7454, 0.5
        %v7583 = vadd.f32 %v7455, 0.5
        %v7584 = vadd.f32 %v7456, 0.5
        %v7585 = vadd.f32 %v7457, 0.5
        %v7586 = vadd.f32 %v7458, 0.5
        %v7587 = vadd.f32 %v7459, 0.5
        %v7588 = vadd.f32 %v7460, 0.5
        %v7589 = vadd.f32 %v7461, 0.5
        %v7590 = vadd.f32 %v7462, 0.5
        %v7591 = vadd.f32 %v7463, 0.5
        %v7592 = vadd.f32 %v7464, 0.5
        %v7593 = vadd.f32 %v7465, 0.5
        %v7594 = vadd.f32 %v7466, 0.5
        %v7595 = vadd.f32 %v7467, 0.5
        %v7596 = vadd.f32 %v7468, 0.5
        %v7597 = vadd.f32 %v7469, 0.5
        %v7598 = vadd.f32 %v7470, 0.5
        %v7599 = vadd.f32 %v7471, 0.5
        %v7600 = vadd.f32 %v7472, 0.5
        %v7601 = vadd.f32 %v7473, 0.5
        %v7602 = vadd.f32 %v7474, 0.5
        %v7603 = vadd.f32 %v7475, 0.5
        %v7604 = vadd.f32 %v7476, 0.5
        %v7605 = vadd.f32 %v7477, 0.5
        %v7606 = vmul.f32 %v6966, %v7478
        %v7607 = vmul.f32 %v6967, %v7479
        %v7608 = vmul.f32 %v6968, %v7480
        %v7609 = vmul.f32 %v6969, %v7481
        %v7610 = vmul.f32 %v6970, %v7482
        %v7611 = vmul.f32 %v6971, %v7483
        %v7612 = vmul.f32 %v6972, %v7484
        %v7613 = vmul.f32 %v6973, %v7485
        %v7614 = vmul.f32 %v6974, %v7486
        %v7615 = vmul.f32 %v6975, %v7487
        %v7616 = vmul.f32 %v6976, %v7488
        %v7617 = vmul.f32 %v6977, %v7489
        %v7618 = vmul.f32 %v6978, %v7490
        %v7619 = vmul.f32 %v6979, %v7491
        %v7620 = vmul.f32 %v6980, %v7492
        %v7621 = vmul.f32 %v6981, %v7493
        %v7622 = vmul.f32 %v6982, %v7494
        %v7623 = vmul.f32 %v6983, %v7495
        %v7624 = vmul.f32 %v6984, %v7496
        %v7625 = vmul.f32 %v6985, %v7497
        %v7626 = vmul.f32 %v6986, %v7498
        %v7627 = vmul.f32 %v6987, %v7499
        %v7628 = vmul.f32 %v6988, %v7500
        %v7629 = vmul.f32 %v6989, %v7501
        %v7630 = vmul.f32 %v6990, %v7502
        %v7631 = vmul.f32 %v6991, %v7503
        %v7632 = vmul.f32 %v6992, %v7504
        %v7633 = vmul.f32 %v6993, %v7505
        %v7634 = vmul.f32 %v6994, %v7506
        %v7635 = vmul.f32 %v6995, %v7507
        %v7636 = vmul.f32 %v6996, %v7508
        %v7637 = vmul.f32 %v6997, %v7509
        %v7638 = vmul.f32 %v6998, %v7510
        %v7639 = vmul.f32 %v6999, %v7511
        %v7640 = vmul.f32 %v7000, %v7512
        %v7641 = vmul.f32 %v7001, %v7513
        %v7642 = vmul.f32 %v7002, %v7514
        %v7643 = vmul.f32 %v7003, %v7515
        %v7644 = vmul.f32 %v7004, %v7516
        %v7645 = vmul.f32 %v7005, %v7517
        %v7646 = vmul.f32 %v7006, %v7518
        %v7647 = vmul.f32 %v7007, %v7519
        %v7648 = vmul.f32 %v7008, %v7520
        %v7649 = vmul.f32 %v7009, %v7521
        %v7650 = vmul.f32 %v7010, %v7522
        %v7651 = vmul.f32 %v7011, %v7523
        %v7652 = vmul.f32 %v7012, %v7524
        %v7653 = vmul.f32 %v7013, %v7525
        %v7654 = vmul.f32 %v7014, %v7526
        %v7655 = vmul.f32 %v7015, %v7527
        %v7656 = vmul.f32 %v7016, %v7528
        %v7657 = vmul.f32 %v7017, %v7529
        %v7658 = vmul.f32 %v7018, %v7530
        %v7659 = vmul.f32 %v7019, %v7531
        %v7660 = vmul.f32 %v7020, %v7532
        %v7661 = vmul.f32 %v7021, %v7533
        %v7662 = vmul.f32 %v7022, %v7534
        %v7663 = vmul.f32 %v7023, %v7535
        %v7664 = vmul.f32 %v7024, %v7536
        %v7665 = vmul.f32 %v7025, %v7537
        %v7666 = vmul.f32 %v7026, %v7538
        %v7667 = vmul.f32 %v7027, %v7539
        %v7668 = vmul.f32 %v7028, %v7540
        %v7669 = vmul.f32 %v7029, %v7541
        %v7670 = vmul.f32 %v7030, %v7542
        %v7671 = vmul.f32 %v7031, %v7543
        %v7672 = vmul.f32 %v7032, %v7544
        %v7673 = vmul.f32 %v7033, %v7545
        %v7674 = vmul.f32 %v7034, %v7546
        %v7675 = vmul.f32 %v7035, %v7547
        %v7676 = vmul.f32 %v7036, %v7548
        %v7677 = vmul.f32 %v7037, %v7549
        %v7678 = vmul.f32 %v7038, %v7550
        %v7679 = vmul.f32 %v7039, %v7551
        %v7680 = vmul.f32 %v7040, %v7552
        %v7681 = vmul.f32 %v7041, %v7553
        %v7682 = vmul.f32 %v7042, %v7554
        %v7683 = vmul.f32 %v7043, %v7555
        %v7684 = vmul.f32 %v7044, %v7556
        %v7685 = vmul.f32 %v7045, %v7557
        %v7686 = vmul.f32 %v7046, %v7558
        %v7687 = vmul.f32 %v7047, %v7559
        %v7688 = vmul.f32 %v7048, %v7560
        %v7689 = vmul.f32 %v7049, %v7561
        %v7690 = vmul.f32 %v7050, %v7562
        %v7691 = vmul.f32 %v7051, %v7563
        %v7692 = vmul.f32 %v7052, %v7564
        %v7693 = vmul.f32 %v7053, %v7565
        %v7694 = vmul.f32 %v7054, %v7566
        %v7695 = vmul.f32 %v7055, %v7567
        %v7696 = vmul.f32 %v7056, %v7568
        %v7697 = vmul.f32 %v7057, %v7569
        %v7698 = vmul.f32 %v7058, %v7570
        %v7699 = vmul.f32 %v7059, %v7571
        %v7700 = vmul.f32 %v7060, %v7572
        %v7701 = vmul.f32 %v7061, %v7573
        %v7702 = vmul.f32 %v7062, %v7574
        %v7703 = vmul.f32 %v7063, %v7575
        %v7704 = vmul.f32 %v7064, %v7576
        %v7705 = vmul.f32 %v7065, %v7577
        %v7706 = vmul.f32 %v7066, %v7578
        %v7707 = vmul.f32 %v7067, %v7579
        %v7708 = vmul.f32 %v7068, %v7580
        %v7709 = vmul.f32 %v7069, %v7581
        %v7710 = vmul.f32 %v7070, %v7582
        %v7711 = vmul.f32 %v7071, %v7583
        %v7712 = vmul.f32 %v7072, %v7584
        %v7713 = vmul.f32 %v7073, %v7585
        %v7714 = vmul.f32 %v7074, %v7586
        %v7715 = vmul.f32 %v7075, %v7587
        %v7716 = vmul.f32 %v7076, %v7588
        %v7717 = vmul.f32 %v7077, %v7589
        %v7718 = vmul.f32 %v7078, %v7590
        %v7719 = vmul.f32 %v7079, %v7591
        %v7720 = vmul.f32 %v7080, %v7592
        %v7721 = vmul.f32 %v7081, %v7593
        %v7722 = vmul.f32 %v7082, %v7594
        %v7723 = vmul.f32 %v7083, %v7595
        %v7724 = vmul.f32 %v7084, %v7596
        %v7725 = vmul.f32 %v7085, %v7597
        %v7726 = vmul.f32 %v7086, %v7598
        %v7727 = vmul.f32 %v7087, %v7599
        %v7728 = vmul.f32 %v7088, %v7600
        %v7729 = vmul.f32 %v7089, %v7601
        %v7730 = vmul.f32 %v7090, %v7602
        %v7731 = vmul.f32 %v7091, %v7603
        %v7732 = vmul.f32 %v7092, %v7604
        %v7733 = vmul.f32 %v7093, %v7605
        %v7734 = vpack.c.bf16 %v7614, %v7606
        %v7735 = vpack.c.bf16 %v7615, %v7607
        %v7736 = vpack.c.bf16 %v7616, %v7608
        %v7737 = vpack.c.bf16 %v7617, %v7609
        %v7738 = vpack.c.bf16 %v7618, %v7610
        %v7739 = vpack.c.bf16 %v7619, %v7611
        %v7740 = vpack.c.bf16 %v7620, %v7612
        %v7741 = vpack.c.bf16 %v7621, %v7613
        %v7742 = vpack.c.bf16 %v7630, %v7622
        %v7743 = vpack.c.bf16 %v7631, %v7623
        %v7744 = vpack.c.bf16 %v7632, %v7624
        %v7745 = vpack.c.bf16 %v7633, %v7625
        %v7746 = vpack.c.bf16 %v7634, %v7626
        %v7747 = vpack.c.bf16 %v7635, %v7627
        %v7748 = vpack.c.bf16 %v7636, %v7628
        %v7749 = vpack.c.bf16 %v7637, %v7629
        %v7750 = vpack.c.bf16 %v7646, %v7638
        %v7751 = vpack.c.bf16 %v7647, %v7639
        %v7752 = vpack.c.bf16 %v7648, %v7640
        %v7753 = vpack.c.bf16 %v7649, %v7641
        %v7754 = vpack.c.bf16 %v7650, %v7642
        %v7755 = vpack.c.bf16 %v7651, %v7643
        %v7756 = vpack.c.bf16 %v7652, %v7644
        %v7757 = vpack.c.bf16 %v7653, %v7645
        %v7758 = vpack.c.bf16 %v7662, %v7654
        %v7759 = vpack.c.bf16 %v7663, %v7655
        %v7760 = vpack.c.bf16 %v7664, %v7656
        %v7761 = vpack.c.bf16 %v7665, %v7657
        %v7762 = vpack.c.bf16 %v7666, %v7658
        %v7763 = vpack.c.bf16 %v7667, %v7659
        %v7764 = vpack.c.bf16 %v7668, %v7660
        %v7765 = vpack.c.bf16 %v7669, %v7661
        %v7766 = vpack.c.bf16 %v7678, %v7670
        %v7767 = vpack.c.bf16 %v7679, %v7671
        %v7768 = vpack.c.bf16 %v7680, %v7672
        %v7769 = vpack.c.bf16 %v7681, %v7673
        %v7770 = vpack.c.bf16 %v7682, %v7674
        %v7771 = vpack.c.bf16 %v7683, %v7675
        %v7772 = vpack.c.bf16 %v7684, %v7676
        %v7773 = vpack.c.bf16 %v7685, %v7677
        %v7774 = vpack.c.bf16 %v7694, %v7686
        %v7775 = vpack.c.bf16 %v7695, %v7687
        %v7776 = vpack.c.bf16 %v7696, %v7688
        %v7777 = vpack.c.bf16 %v7697, %v7689
        %v7778 = vpack.c.bf16 %v7698, %v7690
        %v7779 = vpack.c.bf16 %v7699, %v7691
        %v7780 = vpack.c.bf16 %v7700, %v7692
        %v7781 = vpack.c.bf16 %v7701, %v7693
        %v7782 = vpack.c.bf16 %v7710, %v7702
        %v7783 = vpack.c.bf16 %v7711, %v7703
        %v7784 = vpack.c.bf16 %v7712, %v7704
        %v7785 = vpack.c.bf16 %v7713, %v7705
        %v7786 = vpack.c.bf16 %v7714, %v7706
        %v7787 = vpack.c.bf16 %v7715, %v7707
        %v7788 = vpack.c.bf16 %v7716, %v7708
        %v7789 = vpack.c.bf16 %v7717, %v7709
        %v7790 = vpack.c.bf16 %v7726, %v7718
        %v7791 = vpack.c.bf16 %v7727, %v7719
        %v7792 = vpack.c.bf16 %v7728, %v7720
        %v7793 = vpack.c.bf16 %v7729, %v7721
        %v7794 = vpack.c.bf16 %v7730, %v7722
        %v7795 = vpack.c.bf16 %v7731, %v7723
        %v7796 = vpack.c.bf16 %v7732, %v7724
        %v7797 = vpack.c.bf16 %v7733, %v7725
        %v7798 = vld [vmem:[#allocation8] sm:$0xff]
        %v7799 = vld [vmem:[#allocation8 + $0x8] sm:$0xff]
        %v7800 = vld [vmem:[#allocation8 + $0x10] sm:$0xff]
        %v7801 = vld [vmem:[#allocation8 + $0x18] sm:$0xff]
        %v7802 = vld [vmem:[#allocation8 + $0x20] sm:$0xff]
        %v7803 = vld [vmem:[#allocation8 + $0x28] sm:$0xff]
        %v7804 = vld [vmem:[#allocation8 + $0x30] sm:$0xff]
        %v7805 = vld [vmem:[#allocation8 + $0x38] sm:$0xff]
        %v7806 = vld [vmem:[#allocation8 + $0x40] sm:$0xff]
        %v7807 = vld [vmem:[#allocation8 + $0x48] sm:$0xff]
        %v7808 = vld [vmem:[#allocation8 + $0x50] sm:$0xff]
        %v7809 = vld [vmem:[#allocation8 + $0x58] sm:$0xff]
        %v7810 = vld [vmem:[#allocation8 + $0x60] sm:$0xff]
        %v7811 = vld [vmem:[#allocation8 + $0x68] sm:$0xff]
        %v7812 = vld [vmem:[#allocation8 + $0x70] sm:$0xff]
        %v7813 = vld [vmem:[#allocation8 + $0x78] sm:$0xff]
        %v7814 = vld [vmem:[#allocation8 + $0x80] sm:$0xff]
        %v7815 = vld [vmem:[#allocation8 + $0x88] sm:$0xff]
        %v7816 = vld [vmem:[#allocation8 + $0x90] sm:$0xff]
        %v7817 = vld [vmem:[#allocation8 + $0x98] sm:$0xff]
        %v7818 = vld [vmem:[#allocation8 + $0xa0] sm:$0xff]
        %v7819 = vld [vmem:[#allocation8 + $0xa8] sm:$0xff]
        %v7820 = vld [vmem:[#allocation8 + $0xb0] sm:$0xff]
        %v7821 = vld [vmem:[#allocation8 + $0xb8] sm:$0xff]
        %v7822 = vld [vmem:[#allocation8 + $0xc0] sm:$0xff]
        %v7823 = vld [vmem:[#allocation8 + $0xc8] sm:$0xff]
        %v7824 = vld [vmem:[#allocation8 + $0xd0] sm:$0xff]
        %v7825 = vld [vmem:[#allocation8 + $0xd8] sm:$0xff]
        %v7826 = vld [vmem:[#allocation8 + $0xe0] sm:$0xff]
        %v7827 = vld [vmem:[#allocation8 + $0xe8] sm:$0xff]
        %v7828 = vld [vmem:[#allocation8 + $0xf0] sm:$0xff]
        %v7829 = vld [vmem:[#allocation8 + $0xf8] sm:$0xff]
        %v7830 = vld [vmem:[#allocation8 + $0x100] sm:$0xff]
        %v7831 = vld [vmem:[#allocation8 + $0x108] sm:$0xff]
        %v7832 = vld [vmem:[#allocation8 + $0x110] sm:$0xff]
        %v7833 = vld [vmem:[#allocation8 + $0x118] sm:$0xff]
        %v7834 = vld [vmem:[#allocation8 + $0x120] sm:$0xff]
        %v7835 = vld [vmem:[#allocation8 + $0x128] sm:$0xff]
        %v7836 = vld [vmem:[#allocation8 + $0x130] sm:$0xff]
        %v7837 = vld [vmem:[#allocation8 + $0x138] sm:$0xff]
        %v7838 = vld [vmem:[#allocation8 + $0x140] sm:$0xff]
        %v7839 = vld [vmem:[#allocation8 + $0x148] sm:$0xff]
        %v7840 = vld [vmem:[#allocation8 + $0x150] sm:$0xff]
        %v7841 = vld [vmem:[#allocation8 + $0x158] sm:$0xff]
        %v7842 = vld [vmem:[#allocation8 + $0x160] sm:$0xff]
        %v7843 = vld [vmem:[#allocation8 + $0x168] sm:$0xff]
        %v7844 = vld [vmem:[#allocation8 + $0x170] sm:$0xff]
        %v7845 = vld [vmem:[#allocation8 + $0x178] sm:$0xff]
        %v7846 = vld [vmem:[#allocation8 + $0x180] sm:$0xff]
        %v7847 = vld [vmem:[#allocation8 + $0x188] sm:$0xff]
        %v7848 = vld [vmem:[#allocation8 + $0x190] sm:$0xff]
        %v7849 = vld [vmem:[#allocation8 + $0x198] sm:$0xff]
        %v7850 = vld [vmem:[#allocation8 + $0x1a0] sm:$0xff]
        %v7851 = vld [vmem:[#allocation8 + $0x1a8] sm:$0xff]
        %v7852 = vld [vmem:[#allocation8 + $0x1b0] sm:$0xff]
        %v7853 = vld [vmem:[#allocation8 + $0x1b8] sm:$0xff]
        %v7854 = vld [vmem:[#allocation8 + $0x1c0] sm:$0xff]
        %v7855 = vld [vmem:[#allocation8 + $0x1c8] sm:$0xff]
        %v7856 = vld [vmem:[#allocation8 + $0x1d0] sm:$0xff]
        %v7857 = vld [vmem:[#allocation8 + $0x1d8] sm:$0xff]
        %v7858 = vld [vmem:[#allocation8 + $0x1e0] sm:$0xff]
        %v7859 = vld [vmem:[#allocation8 + $0x1e8] sm:$0xff]
        %v7860 = vld [vmem:[#allocation8 + $0x1f0] sm:$0xff]
        %v7861 = vld [vmem:[#allocation8 + $0x1f8] sm:$0xff]
        %v7862 = vld [vmem:[#allocation8 + $0x200] sm:$0xff]
        %v7863 = vld [vmem:[#allocation8 + $0x208] sm:$0xff]
        %v7864 = vld [vmem:[#allocation8 + $0x210] sm:$0xff]
        %v7865 = vld [vmem:[#allocation8 + $0x218] sm:$0xff]
        %v7866 = vld [vmem:[#allocation8 + $0x220] sm:$0xff]
        %v7867 = vld [vmem:[#allocation8 + $0x228] sm:$0xff]
        %v7868 = vld [vmem:[#allocation8 + $0x230] sm:$0xff]
        %v7869 = vld [vmem:[#allocation8 + $0x238] sm:$0xff]
        %v7870 = vld [vmem:[#allocation8 + $0x240] sm:$0xff]
        %v7871 = vld [vmem:[#allocation8 + $0x248] sm:$0xff]
        %v7872 = vld [vmem:[#allocation8 + $0x250] sm:$0xff]
        %v7873 = vld [vmem:[#allocation8 + $0x258] sm:$0xff]
        %v7874 = vld [vmem:[#allocation8 + $0x260] sm:$0xff]
        %v7875 = vld [vmem:[#allocation8 + $0x268] sm:$0xff]
        %v7876 = vld [vmem:[#allocation8 + $0x270] sm:$0xff]
        %v7877 = vld [vmem:[#allocation8 + $0x278] sm:$0xff]
        %v7878 = vld [vmem:[#allocation8 + $0x280] sm:$0xff]
        %v7879 = vld [vmem:[#allocation8 + $0x288] sm:$0xff]
        %v7880 = vld [vmem:[#allocation8 + $0x290] sm:$0xff]
        %v7881 = vld [vmem:[#allocation8 + $0x298] sm:$0xff]
        %v7882 = vld [vmem:[#allocation8 + $0x2a0] sm:$0xff]
        %v7883 = vld [vmem:[#allocation8 + $0x2a8] sm:$0xff]
        %v7884 = vld [vmem:[#allocation8 + $0x2b0] sm:$0xff]
        %v7885 = vld [vmem:[#allocation8 + $0x2b8] sm:$0xff]
        %v7886 = vld [vmem:[#allocation8 + $0x2c0] sm:$0xff]
        %v7887 = vld [vmem:[#allocation8 + $0x2c8] sm:$0xff]
        %v7888 = vld [vmem:[#allocation8 + $0x2d0] sm:$0xff]
        %v7889 = vld [vmem:[#allocation8 + $0x2d8] sm:$0xff]
        %v7890 = vld [vmem:[#allocation8 + $0x2e0] sm:$0xff]
        %v7891 = vld [vmem:[#allocation8 + $0x2e8] sm:$0xff]
        %v7892 = vld [vmem:[#allocation8 + $0x2f0] sm:$0xff]
        %v7893 = vld [vmem:[#allocation8 + $0x2f8] sm:$0xff]
        %v7894 = vld [vmem:[#allocation8 + $0x300] sm:$0xff]
        %v7895 = vld [vmem:[#allocation8 + $0x308] sm:$0xff]
        %v7896 = vld [vmem:[#allocation8 + $0x310] sm:$0xff]
        %v7897 = vld [vmem:[#allocation8 + $0x318] sm:$0xff]
        %v7898 = vld [vmem:[#allocation8 + $0x320] sm:$0xff]
        %v7899 = vld [vmem:[#allocation8 + $0x328] sm:$0xff]
        %v7900 = vld [vmem:[#allocation8 + $0x330] sm:$0xff]
        %v7901 = vld [vmem:[#allocation8 + $0x338] sm:$0xff]
        %v7902 = vld [vmem:[#allocation8 + $0x340] sm:$0xff]
        %v7903 = vld [vmem:[#allocation8 + $0x348] sm:$0xff]
        %v7904 = vld [vmem:[#allocation8 + $0x350] sm:$0xff]
        %v7905 = vld [vmem:[#allocation8 + $0x358] sm:$0xff]
        %v7906 = vld [vmem:[#allocation8 + $0x360] sm:$0xff]
        %v7907 = vld [vmem:[#allocation8 + $0x368] sm:$0xff]
        %v7908 = vld [vmem:[#allocation8 + $0x370] sm:$0xff]
        %v7909 = vld [vmem:[#allocation8 + $0x378] sm:$0xff]
        %v7910 = vld [vmem:[#allocation8 + $0x380] sm:$0xff]
        %v7911 = vld [vmem:[#allocation8 + $0x388] sm:$0xff]
        %v7912 = vld [vmem:[#allocation8 + $0x390] sm:$0xff]
        %v7913 = vld [vmem:[#allocation8 + $0x398] sm:$0xff]
        %v7914 = vld [vmem:[#allocation8 + $0x3a0] sm:$0xff]
        %v7915 = vld [vmem:[#allocation8 + $0x3a8] sm:$0xff]
        %v7916 = vld [vmem:[#allocation8 + $0x3b0] sm:$0xff]
        %v7917 = vld [vmem:[#allocation8 + $0x3b8] sm:$0xff]
        %v7918 = vld [vmem:[#allocation8 + $0x3c0] sm:$0xff]
        %v7919 = vld [vmem:[#allocation8 + $0x3c8] sm:$0xff]
        %v7920 = vld [vmem:[#allocation8 + $0x3d0] sm:$0xff]
        %v7921 = vld [vmem:[#allocation8 + $0x3d8] sm:$0xff]
        %v7922 = vld [vmem:[#allocation8 + $0x3e0] sm:$0xff]
        %v7923 = vld [vmem:[#allocation8 + $0x3e8] sm:$0xff]
        %v7924 = vld [vmem:[#allocation8 + $0x3f0] sm:$0xff]
        %v7925 = vld [vmem:[#allocation8 + $0x3f8] sm:$0xff]
        %v7927 = vperm.slane %v320, 0
        %v7928 = vperm.slane %v320, 1
        %v8059 = vunpack.c.l.b16 %v7798
        %v8060 = vunpack.c.h.b16 %v7798
        %v8061 = vunpack.c.l.b16 %v7799
        %v8062 = vunpack.c.h.b16 %v7799
        %v8063 = vunpack.c.l.b16 %v7800
        %v8064 = vunpack.c.h.b16 %v7800
        %v8065 = vunpack.c.l.b16 %v7801
        %v8066 = vunpack.c.h.b16 %v7801
        %v8067 = vunpack.c.l.b16 %v7802
        %v8068 = vunpack.c.h.b16 %v7802
        %v8069 = vunpack.c.l.b16 %v7803
        %v8070 = vunpack.c.h.b16 %v7803
        %v8071 = vunpack.c.l.b16 %v7804
        %v8072 = vunpack.c.h.b16 %v7804
        %v8073 = vunpack.c.l.b16 %v7805
        %v8074 = vunpack.c.h.b16 %v7805
        %v8075 = vunpack.c.l.b16 %v7806
        %v8076 = vunpack.c.h.b16 %v7806
        %v8077 = vunpack.c.l.b16 %v7807
        %v8078 = vunpack.c.h.b16 %v7807
        %v8079 = vunpack.c.l.b16 %v7808
        %v8080 = vunpack.c.h.b16 %v7808
        %v8081 = vunpack.c.l.b16 %v7809
        %v8082 = vunpack.c.h.b16 %v7809
        %v8083 = vunpack.c.l.b16 %v7810
        %v8084 = vunpack.c.h.b16 %v7810
        %v8085 = vunpack.c.l.b16 %v7811
        %v8086 = vunpack.c.h.b16 %v7811
        %v8087 = vunpack.c.l.b16 %v7812
        %v8088 = vunpack.c.h.b16 %v7812
        %v8089 = vunpack.c.l.b16 %v7813
        %v8090 = vunpack.c.h.b16 %v7813
        %v8091 = vunpack.c.l.b16 %v7814
        %v8092 = vunpack.c.h.b16 %v7814
        %v8093 = vunpack.c.l.b16 %v7815
        %v8094 = vunpack.c.h.b16 %v7815
        %v8095 = vunpack.c.l.b16 %v7816
        %v8096 = vunpack.c.h.b16 %v7816
        %v8097 = vunpack.c.l.b16 %v7817
        %v8098 = vunpack.c.h.b16 %v7817
        %v8099 = vunpack.c.l.b16 %v7818
        %v8100 = vunpack.c.h.b16 %v7818
        %v8101 = vunpack.c.l.b16 %v7819
        %v8102 = vunpack.c.h.b16 %v7819
        %v8103 = vunpack.c.l.b16 %v7820
        %v8104 = vunpack.c.h.b16 %v7820
        %v8105 = vunpack.c.l.b16 %v7821
        %v8106 = vunpack.c.h.b16 %v7821
        %v8107 = vunpack.c.l.b16 %v7822
        %v8108 = vunpack.c.h.b16 %v7822
        %v8109 = vunpack.c.l.b16 %v7823
        %v8110 = vunpack.c.h.b16 %v7823
        %v8111 = vunpack.c.l.b16 %v7824
        %v8112 = vunpack.c.h.b16 %v7824
        %v8113 = vunpack.c.l.b16 %v7825
        %v8114 = vunpack.c.h.b16 %v7825
        %v8115 = vunpack.c.l.b16 %v7826
        %v8116 = vunpack.c.h.b16 %v7826
        %v8117 = vunpack.c.l.b16 %v7827
        %v8118 = vunpack.c.h.b16 %v7827
        %v8119 = vunpack.c.l.b16 %v7828
        %v8120 = vunpack.c.h.b16 %v7828
        %v8121 = vunpack.c.l.b16 %v7829
        %v8122 = vunpack.c.h.b16 %v7829
        %v8123 = vunpack.c.l.b16 %v7830
        %v8124 = vunpack.c.h.b16 %v7830
        %v8125 = vunpack.c.l.b16 %v7831
        %v8126 = vunpack.c.h.b16 %v7831
        %v8127 = vunpack.c.l.b16 %v7832
        %v8128 = vunpack.c.h.b16 %v7832
        %v8129 = vunpack.c.l.b16 %v7833
        %v8130 = vunpack.c.h.b16 %v7833
        %v8131 = vunpack.c.l.b16 %v7834
        %v8132 = vunpack.c.h.b16 %v7834
        %v8133 = vunpack.c.l.b16 %v7835
        %v8134 = vunpack.c.h.b16 %v7835
        %v8135 = vunpack.c.l.b16 %v7836
        %v8136 = vunpack.c.h.b16 %v7836
        %v8137 = vunpack.c.l.b16 %v7837
        %v8138 = vunpack.c.h.b16 %v7837
        %v8139 = vunpack.c.l.b16 %v7838
        %v8140 = vunpack.c.h.b16 %v7838
        %v8141 = vunpack.c.l.b16 %v7839
        %v8142 = vunpack.c.h.b16 %v7839
        %v8143 = vunpack.c.l.b16 %v7840
        %v8144 = vunpack.c.h.b16 %v7840
        %v8145 = vunpack.c.l.b16 %v7841
        %v8146 = vunpack.c.h.b16 %v7841
        %v8147 = vunpack.c.l.b16 %v7842
        %v8148 = vunpack.c.h.b16 %v7842
        %v8149 = vunpack.c.l.b16 %v7843
        %v8150 = vunpack.c.h.b16 %v7843
        %v8151 = vunpack.c.l.b16 %v7844
        %v8152 = vunpack.c.h.b16 %v7844
        %v8153 = vunpack.c.l.b16 %v7845
        %v8154 = vunpack.c.h.b16 %v7845
        %v8155 = vunpack.c.l.b16 %v7846
        %v8156 = vunpack.c.h.b16 %v7846
        %v8157 = vunpack.c.l.b16 %v7847
        %v8158 = vunpack.c.h.b16 %v7847
        %v8159 = vunpack.c.l.b16 %v7848
        %v8160 = vunpack.c.h.b16 %v7848
        %v8161 = vunpack.c.l.b16 %v7849
        %v8162 = vunpack.c.h.b16 %v7849
        %v8163 = vunpack.c.l.b16 %v7850
        %v8164 = vunpack.c.h.b16 %v7850
        %v8165 = vunpack.c.l.b16 %v7851
        %v8166 = vunpack.c.h.b16 %v7851
        %v8167 = vunpack.c.l.b16 %v7852
        %v8168 = vunpack.c.h.b16 %v7852
        %v8169 = vunpack.c.l.b16 %v7853
        %v8170 = vunpack.c.h.b16 %v7853
        %v8171 = vunpack.c.l.b16 %v7854
        %v8172 = vunpack.c.h.b16 %v7854
        %v8173 = vunpack.c.l.b16 %v7855
        %v8174 = vunpack.c.h.b16 %v7855
        %v8175 = vunpack.c.l.b16 %v7856
        %v8176 = vunpack.c.h.b16 %v7856
        %v8177 = vunpack.c.l.b16 %v7857
        %v8178 = vunpack.c.h.b16 %v7857
        %v8179 = vunpack.c.l.b16 %v7858
        %v8180 = vunpack.c.h.b16 %v7858
        %v8181 = vunpack.c.l.b16 %v7859
        %v8182 = vunpack.c.h.b16 %v7859
        %v8183 = vunpack.c.l.b16 %v7860
        %v8184 = vunpack.c.h.b16 %v7860
        %v8185 = vunpack.c.l.b16 %v7861
        %v8186 = vunpack.c.h.b16 %v7861
        %v8187 = vunpack.c.l.b16 %v7862
        %v8188 = vunpack.c.h.b16 %v7862
        %v8189 = vunpack.c.l.b16 %v7863
        %v8190 = vunpack.c.h.b16 %v7863
        %v8191 = vunpack.c.l.b16 %v7864
        %v8192 = vunpack.c.h.b16 %v7864
        %v8193 = vunpack.c.l.b16 %v7865
        %v8194 = vunpack.c.h.b16 %v7865
        %v8195 = vunpack.c.l.b16 %v7866
        %v8196 = vunpack.c.h.b16 %v7866
        %v8197 = vunpack.c.l.b16 %v7867
        %v8198 = vunpack.c.h.b16 %v7867
        %v8199 = vunpack.c.l.b16 %v7868
        %v8200 = vunpack.c.h.b16 %v7868
        %v8201 = vunpack.c.l.b16 %v7869
        %v8202 = vunpack.c.h.b16 %v7869
        %v8203 = vunpack.c.l.b16 %v7870
        %v8204 = vunpack.c.h.b16 %v7870
        %v8205 = vunpack.c.l.b16 %v7871
        %v8206 = vunpack.c.h.b16 %v7871
        %v8207 = vunpack.c.l.b16 %v7872
        %v8208 = vunpack.c.h.b16 %v7872
        %v8209 = vunpack.c.l.b16 %v7873
        %v8210 = vunpack.c.h.b16 %v7873
        %v8211 = vunpack.c.l.b16 %v7874
        %v8212 = vunpack.c.h.b16 %v7874
        %v8213 = vunpack.c.l.b16 %v7875
        %v8214 = vunpack.c.h.b16 %v7875
        %v8215 = vunpack.c.l.b16 %v7876
        %v8216 = vunpack.c.h.b16 %v7876
        %v8217 = vunpack.c.l.b16 %v7877
        %v8218 = vunpack.c.h.b16 %v7877
        %v8219 = vunpack.c.l.b16 %v7878
        %v8220 = vunpack.c.h.b16 %v7878
        %v8221 = vunpack.c.l.b16 %v7879
        %v8222 = vunpack.c.h.b16 %v7879
        %v8223 = vunpack.c.l.b16 %v7880
        %v8224 = vunpack.c.h.b16 %v7880
        %v8225 = vunpack.c.l.b16 %v7881
        %v8226 = vunpack.c.h.b16 %v7881
        %v8227 = vunpack.c.l.b16 %v7882
        %v8228 = vunpack.c.h.b16 %v7882
        %v8229 = vunpack.c.l.b16 %v7883
        %v8230 = vunpack.c.h.b16 %v7883
        %v8231 = vunpack.c.l.b16 %v7884
        %v8232 = vunpack.c.h.b16 %v7884
        %v8233 = vunpack.c.l.b16 %v7885
        %v8234 = vunpack.c.h.b16 %v7885
        %v8235 = vunpack.c.l.b16 %v7886
        %v8236 = vunpack.c.h.b16 %v7886
        %v8237 = vunpack.c.l.b16 %v7887
        %v8238 = vunpack.c.h.b16 %v7887
        %v8239 = vunpack.c.l.b16 %v7888
        %v8240 = vunpack.c.h.b16 %v7888
        %v8241 = vunpack.c.l.b16 %v7889
        %v8242 = vunpack.c.h.b16 %v7889
        %v8243 = vunpack.c.l.b16 %v7890
        %v8244 = vunpack.c.h.b16 %v7890
        %v8245 = vunpack.c.l.b16 %v7891
        %v8246 = vunpack.c.h.b16 %v7891
        %v8247 = vunpack.c.l.b16 %v7892
        %v8248 = vunpack.c.h.b16 %v7892
        %v8249 = vunpack.c.l.b16 %v7893
        %v8250 = vunpack.c.h.b16 %v7893
        %v8251 = vunpack.c.l.b16 %v7894
        %v8252 = vunpack.c.h.b16 %v7894
        %v8253 = vunpack.c.l.b16 %v7895
        %v8254 = vunpack.c.h.b16 %v7895
        %v8255 = vunpack.c.l.b16 %v7896
        %v8256 = vunpack.c.h.b16 %v7896
        %v8257 = vunpack.c.l.b16 %v7897
        %v8258 = vunpack.c.h.b16 %v7897
        %v8259 = vunpack.c.l.b16 %v7898
        %v8260 = vunpack.c.h.b16 %v7898
        %v8261 = vunpack.c.l.b16 %v7899
        %v8262 = vunpack.c.h.b16 %v7899
        %v8263 = vunpack.c.l.b16 %v7900
        %v8264 = vunpack.c.h.b16 %v7900
        %v8265 = vunpack.c.l.b16 %v7901
        %v8266 = vunpack.c.h.b16 %v7901
        %v8267 = vunpack.c.l.b16 %v7902
        %v8268 = vunpack.c.h.b16 %v7902
        %v8269 = vunpack.c.l.b16 %v7903
        %v8270 = vunpack.c.h.b16 %v7903
        %v8271 = vunpack.c.l.b16 %v7904
        %v8272 = vunpack.c.h.b16 %v7904
        %v8273 = vunpack.c.l.b16 %v7905
        %v8274 = vunpack.c.h.b16 %v7905
        %v8275 = vunpack.c.l.b16 %v7906
        %v8276 = vunpack.c.h.b16 %v7906
        %v8277 = vunpack.c.l.b16 %v7907
        %v8278 = vunpack.c.h.b16 %v7907
        %v8279 = vunpack.c.l.b16 %v7908
        %v8280 = vunpack.c.h.b16 %v7908
        %v8281 = vunpack.c.l.b16 %v7909
        %v8282 = vunpack.c.h.b16 %v7909
        %v8283 = vunpack.c.l.b16 %v7910
        %v8284 = vunpack.c.h.b16 %v7910
        %v8285 = vunpack.c.l.b16 %v7911
        %v8286 = vunpack.c.h.b16 %v7911
        %v8287 = vunpack.c.l.b16 %v7912
        %v8288 = vunpack.c.h.b16 %v7912
        %v8289 = vunpack.c.l.b16 %v7913
        %v8290 = vunpack.c.h.b16 %v7913
        %v8291 = vunpack.c.l.b16 %v7914
        %v8292 = vunpack.c.h.b16 %v7914
        %v8293 = vunpack.c.l.b16 %v7915
        %v8294 = vunpack.c.h.b16 %v7915
        %v8295 = vunpack.c.l.b16 %v7916
        %v8296 = vunpack.c.h.b16 %v7916
        %v8297 = vunpack.c.l.b16 %v7917
        %v8298 = vunpack.c.h.b16 %v7917
        %v8299 = vunpack.c.l.b16 %v7918
        %v8300 = vunpack.c.h.b16 %v7918
        %v8301 = vunpack.c.l.b16 %v7919
        %v8302 = vunpack.c.h.b16 %v7919
        %v8303 = vunpack.c.l.b16 %v7920
        %v8304 = vunpack.c.h.b16 %v7920
        %v8305 = vunpack.c.l.b16 %v7921
        %v8306 = vunpack.c.h.b16 %v7921
        %v8307 = vunpack.c.l.b16 %v7922
        %v8308 = vunpack.c.h.b16 %v7922
        %v8309 = vunpack.c.l.b16 %v7923
        %v8310 = vunpack.c.h.b16 %v7923
        %v8311 = vunpack.c.l.b16 %v7924
        %v8312 = vunpack.c.h.b16 %v7924
        %v8313 = vunpack.c.l.b16 %v7925
        %v8314 = vunpack.c.h.b16 %v7925
        %v8315 = vpack.c.b16 %v8061, %v8059
        %v8316 = vpack.c.b16 %v8062, %v8060
        %v8317 = vpack.c.b16 %v8065, %v8063
        %v8318 = vpack.c.b16 %v8066, %v8064
        %v8319 = vpack.c.b16 %v8069, %v8067
        %v8320 = vpack.c.b16 %v8070, %v8068
        %v8321 = vpack.c.b16 %v8073, %v8071
        %v8322 = vpack.c.b16 %v8074, %v8072
        %v8323 = vpack.c.b16 %v8077, %v8075
        %v8324 = vpack.c.b16 %v8078, %v8076
        %v8325 = vpack.c.b16 %v8081, %v8079
        %v8326 = vpack.c.b16 %v8082, %v8080
        %v8327 = vpack.c.b16 %v8085, %v8083
        %v8328 = vpack.c.b16 %v8086, %v8084
        %v8329 = vpack.c.b16 %v8089, %v8087
        %v8330 = vpack.c.b16 %v8090, %v8088
        %v8331 = vpack.c.b16 %v8093, %v8091
        %v8332 = vpack.c.b16 %v8094, %v8092
        %v8333 = vpack.c.b16 %v8097, %v8095
        %v8334 = vpack.c.b16 %v8098, %v8096
        %v8335 = vpack.c.b16 %v8101, %v8099
        %v8336 = vpack.c.b16 %v8102, %v8100
        %v8337 = vpack.c.b16 %v8105, %v8103
        %v8338 = vpack.c.b16 %v8106, %v8104
        %v8339 = vpack.c.b16 %v8109, %v8107
        %v8340 = vpack.c.b16 %v8110, %v8108
        %v8341 = vpack.c.b16 %v8113, %v8111
        %v8342 = vpack.c.b16 %v8114, %v8112
        %v8343 = vpack.c.b16 %v8117, %v8115
        %v8344 = vpack.c.b16 %v8118, %v8116
        %v8345 = vpack.c.b16 %v8121, %v8119
        %v8346 = vpack.c.b16 %v8122, %v8120
        %v8347 = vpack.c.b16 %v8125, %v8123
        %v8348 = vpack.c.b16 %v8126, %v8124
        %v8349 = vpack.c.b16 %v8129, %v8127
        %v8350 = vpack.c.b16 %v8130, %v8128
        %v8351 = vpack.c.b16 %v8133, %v8131
        %v8352 = vpack.c.b16 %v8134, %v8132
        %v8353 = vpack.c.b16 %v8137, %v8135
        %v8354 = vpack.c.b16 %v8138, %v8136
        %v8355 = vpack.c.b16 %v8141, %v8139
        %v8356 = vpack.c.b16 %v8142, %v8140
        %v8357 = vpack.c.b16 %v8145, %v8143
        %v8358 = vpack.c.b16 %v8146, %v8144
        %v8359 = vpack.c.b16 %v8149, %v8147
        %v8360 = vpack.c.b16 %v8150, %v8148
        %v8361 = vpack.c.b16 %v8153, %v8151
        %v8362 = vpack.c.b16 %v8154, %v8152
        %v8363 = vpack.c.b16 %v8157, %v8155
        %v8364 = vpack.c.b16 %v8158, %v8156
        %v8365 = vpack.c.b16 %v8161, %v8159
        %v8366 = vpack.c.b16 %v8162, %v8160
        %v8367 = vpack.c.b16 %v8165, %v8163
        %v8368 = vpack.c.b16 %v8166, %v8164
        %v8369 = vpack.c.b16 %v8169, %v8167
        %v8370 = vpack.c.b16 %v8170, %v8168
        %v8371 = vpack.c.b16 %v8173, %v8171
        %v8372 = vpack.c.b16 %v8174, %v8172
        %v8373 = vpack.c.b16 %v8177, %v8175
        %v8374 = vpack.c.b16 %v8178, %v8176
        %v8375 = vpack.c.b16 %v8181, %v8179
        %v8376 = vpack.c.b16 %v8182, %v8180
        %v8377 = vpack.c.b16 %v8185, %v8183
        %v8378 = vpack.c.b16 %v8186, %v8184
        %v8379 = vpack.c.b16 %v8189, %v8187
        %v8380 = vpack.c.b16 %v8190, %v8188
        %v8381 = vpack.c.b16 %v8193, %v8191
        %v8382 = vpack.c.b16 %v8194, %v8192
        %v8383 = vpack.c.b16 %v8197, %v8195
        %v8384 = vpack.c.b16 %v8198, %v8196
        %v8385 = vpack.c.b16 %v8201, %v8199
        %v8386 = vpack.c.b16 %v8202, %v8200
        %v8387 = vpack.c.b16 %v8205, %v8203
        %v8388 = vpack.c.b16 %v8206, %v8204
        %v8389 = vpack.c.b16 %v8209, %v8207
        %v8390 = vpack.c.b16 %v8210, %v8208
        %v8391 = vpack.c.b16 %v8213, %v8211
        %v8392 = vpack.c.b16 %v8214, %v8212
        %v8393 = vpack.c.b16 %v8217, %v8215
        %v8394 = vpack.c.b16 %v8218, %v8216
        %v8395 = vpack.c.b16 %v8221, %v8219
        %v8396 = vpack.c.b16 %v8222, %v8220
        %v8397 = vpack.c.b16 %v8225, %v8223
        %v8398 = vpack.c.b16 %v8226, %v8224
        %v8399 = vpack.c.b16 %v8229, %v8227
        %v8400 = vpack.c.b16 %v8230, %v8228
        %v8401 = vpack.c.b16 %v8233, %v8231
        %v8402 = vpack.c.b16 %v8234, %v8232
        %v8403 = vpack.c.b16 %v8237, %v8235
        %v8404 = vpack.c.b16 %v8238, %v8236
        %v8405 = vpack.c.b16 %v8241, %v8239
        %v8406 = vpack.c.b16 %v8242, %v8240
        %v8407 = vpack.c.b16 %v8245, %v8243
        %v8408 = vpack.c.b16 %v8246, %v8244
        %v8409 = vpack.c.b16 %v8249, %v8247
        %v8410 = vpack.c.b16 %v8250, %v8248
        %v8411 = vpack.c.b16 %v8253, %v8251
        %v8412 = vpack.c.b16 %v8254, %v8252
        %v8413 = vpack.c.b16 %v8257, %v8255
        %v8414 = vpack.c.b16 %v8258, %v8256
        %v8415 = vpack.c.b16 %v8261, %v8259
        %v8416 = vpack.c.b16 %v8262, %v8260
        %v8417 = vpack.c.b16 %v8265, %v8263
        %v8418 = vpack.c.b16 %v8266, %v8264
        %v8419 = vpack.c.b16 %v8269, %v8267
        %v8420 = vpack.c.b16 %v8270, %v8268
        %v8421 = vpack.c.b16 %v8273, %v8271
        %v8422 = vpack.c.b16 %v8274, %v8272
        %v8423 = vpack.c.b16 %v8277, %v8275
        %v8424 = vpack.c.b16 %v8278, %v8276
        %v8425 = vpack.c.b16 %v8281, %v8279
        %v8426 = vpack.c.b16 %v8282, %v8280
        %v8427 = vpack.c.b16 %v8285, %v8283
        %v8428 = vpack.c.b16 %v8286, %v8284
        %v8429 = vpack.c.b16 %v8289, %v8287
        %v8430 = vpack.c.b16 %v8290, %v8288
        %v8431 = vpack.c.b16 %v8293, %v8291
        %v8432 = vpack.c.b16 %v8294, %v8292
        %v8433 = vpack.c.b16 %v8297, %v8295
        %v8434 = vpack.c.b16 %v8298, %v8296
        %v8435 = vpack.c.b16 %v8301, %v8299
        %v8436 = vpack.c.b16 %v8302, %v8300
        %v8437 = vpack.c.b16 %v8305, %v8303
        %v8438 = vpack.c.b16 %v8306, %v8304
        %v8439 = vpack.c.b16 %v8309, %v8307
        %v8440 = vpack.c.b16 %v8310, %v8308
        %v8441 = vpack.c.b16 %v8313, %v8311
        %v8442 = vpack.c.b16 %v8314, %v8312
        %8571 = vmatpush.bf16.msra.mxu0 %v8329
        %8572 = vmatpush.bf16.msra.mxu0 %v8327
        %8573 = vmatpush.bf16.msra.mxu0 %v8325
        %8574 = vmatpush.bf16.msra.mxu0 %v8323
        %8575 = vmatpush.bf16.msra.mxu0 %v8321
        %8576 = vmatpush.bf16.msra.mxu0 %v8319
        %8577 = vmatpush.bf16.msra.mxu0 %v8317
        %8578 = vmatpush.bf16.msra.mxu0 %v8315
        %8579 = vmatmul.bf16.gmra.mxu0 %v7734
        %v8580 = vpop.f32.mrf.mxu0
        %v8581 = vadd.f32 %v7927, %v8580
        %v8582 = vpop.f32.mrf.mxu0
        %v8583 = vadd.f32 %v7927, %v8582
        %8584 = vmatmul.bf16.gmra.mxu0 %v7742
        %v8585 = vpop.f32.mrf.mxu0
        %v8586 = vadd.f32 %v7927, %v8585
        %v8587 = vpop.f32.mrf.mxu0
        %v8588 = vadd.f32 %v7927, %v8587
        %8589 = vmatmul.bf16.gmra.mxu0 %v7750
        %v8590 = vpop.f32.mrf.mxu0
        %v8591 = vadd.f32 %v7927, %v8590
        %v8592 = vpop.f32.mrf.mxu0
        %v8593 = vadd.f32 %v7927, %v8592
        %8594 = vmatmul.bf16.gmra.mxu0 %v7758
        %v8595 = vpop.f32.mrf.mxu0
        %v8596 = vadd.f32 %v7927, %v8595
        %v8597 = vpop.f32.mrf.mxu0
        %v8598 = vadd.f32 %v7927, %v8597
        %8599 = vmatmul.bf16.gmra.mxu0 %v7766
        %v8600 = vpop.f32.mrf.mxu0
        %v8601 = vadd.f32 %v7927, %v8600
        %v8602 = vpop.f32.mrf.mxu0
        %v8603 = vadd.f32 %v7927, %v8602
        %8604 = vmatmul.bf16.gmra.mxu0 %v7774
        %v8605 = vpop.f32.mrf.mxu0
        %v8606 = vadd.f32 %v7927, %v8605
        %v8607 = vpop.f32.mrf.mxu0
        %v8608 = vadd.f32 %v7927, %v8607
        %8609 = vmatmul.bf16.gmra.mxu0 %v7782
        %v8610 = vpop.f32.mrf.mxu0
        %v8611 = vadd.f32 %v7927, %v8610
        %v8612 = vpop.f32.mrf.mxu0
        %v8613 = vadd.f32 %v7927, %v8612
        %8614 = vmatmul.bf16.gmra.mxu0 %v7790
        %v8615 = vpop.f32.mrf.mxu0
        %v8616 = vadd.f32 %v7927, %v8615
        %v8617 = vpop.f32.mrf.mxu0
        %v8618 = vadd.f32 %v7927, %v8617
        %8619 = vdwg.mxu0
        %8620 = vmatpush.bf16.msra.mxu0 %v8345
        %8621 = vmatpush.bf16.msra.mxu0 %v8343
        %8622 = vmatpush.bf16.msra.mxu0 %v8341
        %8623 = vmatpush.bf16.msra.mxu0 %v8339
        %8624 = vmatpush.bf16.msra.mxu0 %v8337
        %8625 = vmatpush.bf16.msra.mxu0 %v8335
        %8626 = vmatpush.bf16.msra.mxu0 %v8333
        %8627 = vmatpush.bf16.msra.mxu0 %v8331
        %8628 = vmatmul.bf16.gmra.mxu0 %v7735
        %v8629 = vpop.f32.mrf.mxu0
        %v8630 = vadd.f32 %v8581, %v8629
        %v8631 = vpop.f32.mrf.mxu0
        %v8632 = vadd.f32 %v8583, %v8631
        %8633 = vmatmul.bf16.gmra.mxu0 %v7743
        %v8634 = vpop.f32.mrf.mxu0
        %v8635 = vadd.f32 %v8586, %v8634
        %v8636 = vpop.f32.mrf.mxu0
        %v8637 = vadd.f32 %v8588, %v8636
        %8638 = vmatmul.bf16.gmra.mxu0 %v7751
        %v8639 = vpop.f32.mrf.mxu0
        %v8640 = vadd.f32 %v8591, %v8639
        %v8641 = vpop.f32.mrf.mxu0
        %v8642 = vadd.f32 %v8593, %v8641
        %8643 = vmatmul.bf16.gmra.mxu0 %v7759
        %v8644 = vpop.f32.mrf.mxu0
        %v8645 = vadd.f32 %v8596, %v8644
        %v8646 = vpop.f32.mrf.mxu0
        %v8647 = vadd.f32 %v8598, %v8646
        %8648 = vmatmul.bf16.gmra.mxu0 %v7767
        %v8649 = vpop.f32.mrf.mxu0
        %v8650 = vadd.f32 %v8601, %v8649
        %v8651 = vpop.f32.mrf.mxu0
        %v8652 = vadd.f32 %v8603, %v8651
        %8653 = vmatmul.bf16.gmra.mxu0 %v7775
        %v8654 = vpop.f32.mrf.mxu0
        %v8655 = vadd.f32 %v8606, %v8654
        %v8656 = vpop.f32.mrf.mxu0
        %v8657 = vadd.f32 %v8608, %v8656
        %8658 = vmatmul.bf16.gmra.mxu0 %v7783
        %v8659 = vpop.f32.mrf.mxu0
        %v8660 = vadd.f32 %v8611, %v8659
        %v8661 = vpop.f32.mrf.mxu0
        %v8662 = vadd.f32 %v8613, %v8661
        %8663 = vmatmul.bf16.gmra.mxu0 %v7791
        %v8664 = vpop.f32.mrf.mxu0
        %v8665 = vadd.f32 %v8616, %v8664
        %v8666 = vpop.f32.mrf.mxu0
        %v8667 = vadd.f32 %v8618, %v8666
        %8668 = vdwg.mxu0
        %8669 = vmatpush.bf16.msra.mxu0 %v8361
        %8670 = vmatpush.bf16.msra.mxu0 %v8359
        %8671 = vmatpush.bf16.msra.mxu0 %v8357
        %8672 = vmatpush.bf16.msra.mxu0 %v8355
        %8673 = vmatpush.bf16.msra.mxu0 %v8353
        %8674 = vmatpush.bf16.msra.mxu0 %v8351
        %8675 = vmatpush.bf16.msra.mxu0 %v8349
        %8676 = vmatpush.bf16.msra.mxu0 %v8347
        %8677 = vmatmul.bf16.gmra.mxu0 %v7736
        %v8678 = vpop.f32.mrf.mxu0
        %v8679 = vadd.f32 %v8630, %v8678
        %v8680 = vpop.f32.mrf.mxu0
        %v8681 = vadd.f32 %v8632, %v8680
        %8682 = vmatmul.bf16.gmra.mxu0 %v7744
        %v8683 = vpop.f32.mrf.mxu0
        %v8684 = vadd.f32 %v8635, %v8683
        %v8685 = vpop.f32.mrf.mxu0
        %v8686 = vadd.f32 %v8637, %v8685
        %8687 = vmatmul.bf16.gmra.mxu0 %v7752
        %v8688 = vpop.f32.mrf.mxu0
        %v8689 = vadd.f32 %v8640, %v8688
        %v8690 = vpop.f32.mrf.mxu0
        %v8691 = vadd.f32 %v8642, %v8690
        %8692 = vmatmul.bf16.gmra.mxu0 %v7760
        %v8693 = vpop.f32.mrf.mxu0
        %v8694 = vadd.f32 %v8645, %v8693
        %v8695 = vpop.f32.mrf.mxu0
        %v8696 = vadd.f32 %v8647, %v8695
        %8697 = vmatmul.bf16.gmra.mxu0 %v7768
        %v8698 = vpop.f32.mrf.mxu0
        %v8699 = vadd.f32 %v8650, %v8698
        %v8700 = vpop.f32.mrf.mxu0
        %v8701 = vadd.f32 %v8652, %v8700
        %8702 = vmatmul.bf16.gmra.mxu0 %v7776
        %v8703 = vpop.f32.mrf.mxu0
        %v8704 = vadd.f32 %v8655, %v8703
        %v8705 = vpop.f32.mrf.mxu0
        %v8706 = vadd.f32 %v8657, %v8705
        %8707 = vmatmul.bf16.gmra.mxu0 %v7784
        %v8708 = vpop.f32.mrf.mxu0
        %v8709 = vadd.f32 %v8660, %v8708
        %v8710 = vpop.f32.mrf.mxu0
        %v8711 = vadd.f32 %v8662, %v8710
        %8712 = vmatmul.bf16.gmra.mxu0 %v7792
        %v8713 = vpop.f32.mrf.mxu0
        %v8714 = vadd.f32 %v8665, %v8713
        %v8715 = vpop.f32.mrf.mxu0
        %v8716 = vadd.f32 %v8667, %v8715
        %8717 = vdwg.mxu0
        %8718 = vmatpush.bf16.msra.mxu0 %v8377
        %8719 = vmatpush.bf16.msra.mxu0 %v8375
        %8720 = vmatpush.bf16.msra.mxu0 %v8373
        %8721 = vmatpush.bf16.msra.mxu0 %v8371
        %8722 = vmatpush.bf16.msra.mxu0 %v8369
        %8723 = vmatpush.bf16.msra.mxu0 %v8367
        %8724 = vmatpush.bf16.msra.mxu0 %v8365
        %8725 = vmatpush.bf16.msra.mxu0 %v8363
        %8726 = vmatmul.bf16.gmra.mxu0 %v7737
        %v8727 = vpop.f32.mrf.mxu0
        %v8728 = vadd.f32 %v8679, %v8727
        %v8729 = vpop.f32.mrf.mxu0
        %v8730 = vadd.f32 %v8681, %v8729
        %8731 = vmatmul.bf16.gmra.mxu0 %v7745
        %v8732 = vpop.f32.mrf.mxu0
        %v8733 = vadd.f32 %v8684, %v8732
        %v8734 = vpop.f32.mrf.mxu0
        %v8735 = vadd.f32 %v8686, %v8734
        %8736 = vmatmul.bf16.gmra.mxu0 %v7753
        %v8737 = vpop.f32.mrf.mxu0
        %v8738 = vadd.f32 %v8689, %v8737
        %v8739 = vpop.f32.mrf.mxu0
        %v8740 = vadd.f32 %v8691, %v8739
        %8741 = vmatmul.bf16.gmra.mxu0 %v7761
        %v8742 = vpop.f32.mrf.mxu0
        %v8743 = vadd.f32 %v8694, %v8742
        %v8744 = vpop.f32.mrf.mxu0
        %v8745 = vadd.f32 %v8696, %v8744
        %8746 = vmatmul.bf16.gmra.mxu0 %v7769
        %v8747 = vpop.f32.mrf.mxu0
        %v8748 = vadd.f32 %v8699, %v8747
        %v8749 = vpop.f32.mrf.mxu0
        %v8750 = vadd.f32 %v8701, %v8749
        %8751 = vmatmul.bf16.gmra.mxu0 %v7777
        %v8752 = vpop.f32.mrf.mxu0
        %v8753 = vadd.f32 %v8704, %v8752
        %v8754 = vpop.f32.mrf.mxu0
        %v8755 = vadd.f32 %v8706, %v8754
        %8756 = vmatmul.bf16.gmra.mxu0 %v7785
        %v8757 = vpop.f32.mrf.mxu0
        %v8758 = vadd.f32 %v8709, %v8757
        %v8759 = vpop.f32.mrf.mxu0
        %v8760 = vadd.f32 %v8711, %v8759
        %8761 = vmatmul.bf16.gmra.mxu0 %v7793
        %v8762 = vpop.f32.mrf.mxu0
        %v8763 = vadd.f32 %v8714, %v8762
        %v8764 = vpop.f32.mrf.mxu0
        %v8765 = vadd.f32 %v8716, %v8764
        %8766 = vdwg.mxu0
        %8767 = vmatpush.bf16.msra.mxu0 %v8393
        %8768 = vmatpush.bf16.msra.mxu0 %v8391
        %8769 = vmatpush.bf16.msra.mxu0 %v8389
        %8770 = vmatpush.bf16.msra.mxu0 %v8387
        %8771 = vmatpush.bf16.msra.mxu0 %v8385
        %8772 = vmatpush.bf16.msra.mxu0 %v8383
        %8773 = vmatpush.bf16.msra.mxu0 %v8381
        %8774 = vmatpush.bf16.msra.mxu0 %v8379
        %8775 = vmatmul.bf16.gmra.mxu0 %v7738
        %v8776 = vpop.f32.mrf.mxu0
        %v8777 = vadd.f32 %v8728, %v8776
        %v8778 = vpop.f32.mrf.mxu0
        %v8779 = vadd.f32 %v8730, %v8778
        %8780 = vmatmul.bf16.gmra.mxu0 %v7746
        %v8781 = vpop.f32.mrf.mxu0
        %v8782 = vadd.f32 %v8733, %v8781
        %v8783 = vpop.f32.mrf.mxu0
        %v8784 = vadd.f32 %v8735, %v8783
        %8785 = vmatmul.bf16.gmra.mxu0 %v7754
        %v8786 = vpop.f32.mrf.mxu0
        %v8787 = vadd.f32 %v8738, %v8786
        %v8788 = vpop.f32.mrf.mxu0
        %v8789 = vadd.f32 %v8740, %v8788
        %8790 = vmatmul.bf16.gmra.mxu0 %v7762
        %v8791 = vpop.f32.mrf.mxu0
        %v8792 = vadd.f32 %v8743, %v8791
        %v8793 = vpop.f32.mrf.mxu0
        %v8794 = vadd.f32 %v8745, %v8793
        %8795 = vmatmul.bf16.gmra.mxu0 %v7770
        %v8796 = vpop.f32.mrf.mxu0
        %v8797 = vadd.f32 %v8748, %v8796
        %v8798 = vpop.f32.mrf.mxu0
        %v8799 = vadd.f32 %v8750, %v8798
        %8800 = vmatmul.bf16.gmra.mxu0 %v7778
        %v8801 = vpop.f32.mrf.mxu0
        %v8802 = vadd.f32 %v8753, %v8801
        %v8803 = vpop.f32.mrf.mxu0
        %v8804 = vadd.f32 %v8755, %v8803
        %8805 = vmatmul.bf16.gmra.mxu0 %v7786
        %v8806 = vpop.f32.mrf.mxu0
        %v8807 = vadd.f32 %v8758, %v8806
        %v8808 = vpop.f32.mrf.mxu0
        %v8809 = vadd.f32 %v8760, %v8808
        %8810 = vmatmul.bf16.gmra.mxu0 %v7794
        %v8811 = vpop.f32.mrf.mxu0
        %v8812 = vadd.f32 %v8763, %v8811
        %v8813 = vpop.f32.mrf.mxu0
        %v8814 = vadd.f32 %v8765, %v8813
        %8815 = vdwg.mxu0
        %8816 = vmatpush.bf16.msra.mxu0 %v8409
        %8817 = vmatpush.bf16.msra.mxu0 %v8407
        %8818 = vmatpush.bf16.msra.mxu0 %v8405
        %8819 = vmatpush.bf16.msra.mxu0 %v8403
        %8820 = vmatpush.bf16.msra.mxu0 %v8401
        %8821 = vmatpush.bf16.msra.mxu0 %v8399
        %8822 = vmatpush.bf16.msra.mxu0 %v8397
        %8823 = vmatpush.bf16.msra.mxu0 %v8395
        %8824 = vmatmul.bf16.gmra.mxu0 %v7739
        %v8825 = vpop.f32.mrf.mxu0
        %v8826 = vadd.f32 %v8777, %v8825
        %v8827 = vpop.f32.mrf.mxu0
        %v8828 = vadd.f32 %v8779, %v8827
        %8829 = vmatmul.bf16.gmra.mxu0 %v7747
        %v8830 = vpop.f32.mrf.mxu0
        %v8831 = vadd.f32 %v8782, %v8830
        %v8832 = vpop.f32.mrf.mxu0
        %v8833 = vadd.f32 %v8784, %v8832
        %8834 = vmatmul.bf16.gmra.mxu0 %v7755
        %v8835 = vpop.f32.mrf.mxu0
        %v8836 = vadd.f32 %v8787, %v8835
        %v8837 = vpop.f32.mrf.mxu0
        %v8838 = vadd.f32 %v8789, %v8837
        %8839 = vmatmul.bf16.gmra.mxu0 %v7763
        %v8840 = vpop.f32.mrf.mxu0
        %v8841 = vadd.f32 %v8792, %v8840
        %v8842 = vpop.f32.mrf.mxu0
        %v8843 = vadd.f32 %v8794, %v8842
        %8844 = vmatmul.bf16.gmra.mxu0 %v7771
        %v8845 = vpop.f32.mrf.mxu0
        %v8846 = vadd.f32 %v8797, %v8845
        %v8847 = vpop.f32.mrf.mxu0
        %v8848 = vadd.f32 %v8799, %v8847
        %8849 = vmatmul.bf16.gmra.mxu0 %v7779
        %v8850 = vpop.f32.mrf.mxu0
        %v8851 = vadd.f32 %v8802, %v8850
        %v8852 = vpop.f32.mrf.mxu0
        %v8853 = vadd.f32 %v8804, %v8852
        %8854 = vmatmul.bf16.gmra.mxu0 %v7787
        %v8855 = vpop.f32.mrf.mxu0
        %v8856 = vadd.f32 %v8807, %v8855
        %v8857 = vpop.f32.mrf.mxu0
        %v8858 = vadd.f32 %v8809, %v8857
        %8859 = vmatmul.bf16.gmra.mxu0 %v7795
        %v8860 = vpop.f32.mrf.mxu0
        %v8861 = vadd.f32 %v8812, %v8860
        %v8862 = vpop.f32.mrf.mxu0
        %v8863 = vadd.f32 %v8814, %v8862
        %8864 = vdwg.mxu0
        %8865 = vmatpush.bf16.msra.mxu0 %v8425
        %8866 = vmatpush.bf16.msra.mxu0 %v8423
        %8867 = vmatpush.bf16.msra.mxu0 %v8421
        %8868 = vmatpush.bf16.msra.mxu0 %v8419
        %8869 = vmatpush.bf16.msra.mxu0 %v8417
        %8870 = vmatpush.bf16.msra.mxu0 %v8415
        %8871 = vmatpush.bf16.msra.mxu0 %v8413
        %8872 = vmatpush.bf16.msra.mxu0 %v8411
        %8873 = vmatmul.bf16.gmra.mxu0 %v7740
        %v8874 = vpop.f32.mrf.mxu0
        %v8875 = vadd.f32 %v8826, %v8874
        %v8876 = vpop.f32.mrf.mxu0
        %v8877 = vadd.f32 %v8828, %v8876
        %8878 = vmatmul.bf16.gmra.mxu0 %v7748
        %v8879 = vpop.f32.mrf.mxu0
        %v8880 = vadd.f32 %v8831, %v8879
        %v8881 = vpop.f32.mrf.mxu0
        %v8882 = vadd.f32 %v8833, %v8881
        %8883 = vmatmul.bf16.gmra.mxu0 %v7756
        %v8884 = vpop.f32.mrf.mxu0
        %v8885 = vadd.f32 %v8836, %v8884
        %v8886 = vpop.f32.mrf.mxu0
        %v8887 = vadd.f32 %v8838, %v8886
        %8888 = vmatmul.bf16.gmra.mxu0 %v7764
        %v8889 = vpop.f32.mrf.mxu0
        %v8890 = vadd.f32 %v8841, %v8889
        %v8891 = vpop.f32.mrf.mxu0
        %v8892 = vadd.f32 %v8843, %v8891
        %8893 = vmatmul.bf16.gmra.mxu0 %v7772
        %v8894 = vpop.f32.mrf.mxu0
        %v8895 = vadd.f32 %v8846, %v8894
        %v8896 = vpop.f32.mrf.mxu0
        %v8897 = vadd.f32 %v8848, %v8896
        %8898 = vmatmul.bf16.gmra.mxu0 %v7780
        %v8899 = vpop.f32.mrf.mxu0
        %v8900 = vadd.f32 %v8851, %v8899
        %v8901 = vpop.f32.mrf.mxu0
        %v8902 = vadd.f32 %v8853, %v8901
        %8903 = vmatmul.bf16.gmra.mxu0 %v7788
        %v8904 = vpop.f32.mrf.mxu0
        %v8905 = vadd.f32 %v8856, %v8904
        %v8906 = vpop.f32.mrf.mxu0
        %v8907 = vadd.f32 %v8858, %v8906
        %8908 = vmatmul.bf16.gmra.mxu0 %v7796
        %v8909 = vpop.f32.mrf.mxu0
        %v8910 = vadd.f32 %v8861, %v8909
        %v8911 = vpop.f32.mrf.mxu0
        %v8912 = vadd.f32 %v8863, %v8911
        %8913 = vdwg.mxu0
        %8914 = vmatpush.bf16.msra.mxu0 %v8441
        %8915 = vmatpush.bf16.msra.mxu0 %v8439
        %8916 = vmatpush.bf16.msra.mxu0 %v8437
        %8917 = vmatpush.bf16.msra.mxu0 %v8435
        %8918 = vmatpush.bf16.msra.mxu0 %v8433
        %8919 = vmatpush.bf16.msra.mxu0 %v8431
        %8920 = vmatpush.bf16.msra.mxu0 %v8429
        %8921 = vmatpush.bf16.msra.mxu0 %v8427
        %8922 = vmatmul.bf16.gmra.mxu0 %v7741
        %v8923 = vpop.f32.mrf.mxu0
        %v8924 = vadd.f32 %v8875, %v8923
        %v8925 = vpop.f32.mrf.mxu0
        %v8926 = vadd.f32 %v8877, %v8925
        %8927 = vmatmul.bf16.gmra.mxu0 %v7749
        %v8928 = vpop.f32.mrf.mxu0
        %v8929 = vadd.f32 %v8880, %v8928
        %v8930 = vpop.f32.mrf.mxu0
        %v8931 = vadd.f32 %v8882, %v8930
        %8932 = vmatmul.bf16.gmra.mxu0 %v7757
        %v8933 = vpop.f32.mrf.mxu0
        %v8934 = vadd.f32 %v8885, %v8933
        %v8935 = vpop.f32.mrf.mxu0
        %v8936 = vadd.f32 %v8887, %v8935
        %8937 = vmatmul.bf16.gmra.mxu0 %v7765
        %v8938 = vpop.f32.mrf.mxu0
        %v8939 = vadd.f32 %v8890, %v8938
        %v8940 = vpop.f32.mrf.mxu0
        %v8941 = vadd.f32 %v8892, %v8940
        %8942 = vmatmul.bf16.gmra.mxu0 %v7773
        %v8943 = vpop.f32.mrf.mxu0
        %v8944 = vadd.f32 %v8895, %v8943
        %v8945 = vpop.f32.mrf.mxu0
        %v8946 = vadd.f32 %v8897, %v8945
        %8947 = vmatmul.bf16.gmra.mxu0 %v7781
        %v8948 = vpop.f32.mrf.mxu0
        %v8949 = vadd.f32 %v8900, %v8948
        %v8950 = vpop.f32.mrf.mxu0
        %v8951 = vadd.f32 %v8902, %v8950
        %8952 = vmatmul.bf16.gmra.mxu0 %v7789
        %v8953 = vpop.f32.mrf.mxu0
        %v8954 = vadd.f32 %v8905, %v8953
        %v8955 = vpop.f32.mrf.mxu0
        %v8956 = vadd.f32 %v8907, %v8955
        %8957 = vmatmul.bf16.gmra.mxu0 %v7797
        %v8958 = vpop.f32.mrf.mxu0
        %v8959 = vadd.f32 %v8910, %v8958
        %v8960 = vpop.f32.mrf.mxu0
        %v8961 = vadd.f32 %v8912, %v8960
        %8962 = vdwg.mxu0
        %8963 = vmatpush.bf16.msra.mxu0 %v8330
        %8964 = vmatpush.bf16.msra.mxu0 %v8328
        %8965 = vmatpush.bf16.msra.mxu0 %v8326
        %8966 = vmatpush.bf16.msra.mxu0 %v8324
        %8967 = vmatpush.bf16.msra.mxu0 %v8322
        %8968 = vmatpush.bf16.msra.mxu0 %v8320
        %8969 = vmatpush.bf16.msra.mxu0 %v8318
        %8970 = vmatpush.bf16.msra.mxu0 %v8316
        %8971 = vmatmul.bf16.gmra.mxu0 %v7734
        %v8972 = vpop.f32.mrf.mxu0
        %v8973 = vadd.f32 %v7928, %v8972
        %v8974 = vpop.f32.mrf.mxu0
        %v8975 = vadd.f32 %v7928, %v8974
        %8976 = vmatmul.bf16.gmra.mxu0 %v7742
        %v8977 = vpop.f32.mrf.mxu0
        %v8978 = vadd.f32 %v7928, %v8977
        %v8979 = vpop.f32.mrf.mxu0
        %v8980 = vadd.f32 %v7928, %v8979
        %8981 = vmatmul.bf16.gmra.mxu0 %v7750
        %v8982 = vpop.f32.mrf.mxu0
        %v8983 = vadd.f32 %v7928, %v8982
        %v8984 = vpop.f32.mrf.mxu0
        %v8985 = vadd.f32 %v7928, %v8984
        %8986 = vmatmul.bf16.gmra.mxu0 %v7758
        %v8987 = vpop.f32.mrf.mxu0
        %v8988 = vadd.f32 %v7928, %v8987
        %v8989 = vpop.f32.mrf.mxu0
        %v8990 = vadd.f32 %v7928, %v8989
        %8991 = vmatmul.bf16.gmra.mxu0 %v7766
        %v8992 = vpop.f32.mrf.mxu0
        %v8993 = vadd.f32 %v7928, %v8992
        %v8994 = vpop.f32.mrf.mxu0
        %v8995 = vadd.f32 %v7928, %v8994
        %8996 = vmatmul.bf16.gmra.mxu0 %v7774
        %v8997 = vpop.f32.mrf.mxu0
        %v8998 = vadd.f32 %v7928, %v8997
        %v8999 = vpop.f32.mrf.mxu0
        %v9000 = vadd.f32 %v7928, %v8999
        %9001 = vmatmul.bf16.gmra.mxu0 %v7782
        %v9002 = vpop.f32.mrf.mxu0
        %v9003 = vadd.f32 %v7928, %v9002
        %v9004 = vpop.f32.mrf.mxu0
        %v9005 = vadd.f32 %v7928, %v9004
        %9006 = vmatmul.bf16.gmra.mxu0 %v7790
        %v9007 = vpop.f32.mrf.mxu0
        %v9008 = vadd.f32 %v7928, %v9007
        %v9009 = vpop.f32.mrf.mxu0
        %v9010 = vadd.f32 %v7928, %v9009
        %9011 = vdwg.mxu0
        %9012 = vmatpush.bf16.msra.mxu0 %v8346
        %9013 = vmatpush.bf16.msra.mxu0 %v8344
        %9014 = vmatpush.bf16.msra.mxu0 %v8342
        %9015 = vmatpush.bf16.msra.mxu0 %v8340
        %9016 = vmatpush.bf16.msra.mxu0 %v8338
        %9017 = vmatpush.bf16.msra.mxu0 %v8336
        %9018 = vmatpush.bf16.msra.mxu0 %v8334
        %9019 = vmatpush.bf16.msra.mxu0 %v8332
        %9020 = vmatmul.bf16.gmra.mxu0 %v7735
        %v9021 = vpop.f32.mrf.mxu0
        %v9022 = vadd.f32 %v8973, %v9021
        %v9023 = vpop.f32.mrf.mxu0
        %v9024 = vadd.f32 %v8975, %v9023
        %9025 = vmatmul.bf16.gmra.mxu0 %v7743
        %v9026 = vpop.f32.mrf.mxu0
        %v9027 = vadd.f32 %v8978, %v9026
        %v9028 = vpop.f32.mrf.mxu0
        %v9029 = vadd.f32 %v8980, %v9028
        %9030 = vmatmul.bf16.gmra.mxu0 %v7751
        %v9031 = vpop.f32.mrf.mxu0
        %v9032 = vadd.f32 %v8983, %v9031
        %v9033 = vpop.f32.mrf.mxu0
        %v9034 = vadd.f32 %v8985, %v9033
        %9035 = vmatmul.bf16.gmra.mxu0 %v7759
        %v9036 = vpop.f32.mrf.mxu0
        %v9037 = vadd.f32 %v8988, %v9036
        %v9038 = vpop.f32.mrf.mxu0
        %v9039 = vadd.f32 %v8990, %v9038
        %9040 = vmatmul.bf16.gmra.mxu0 %v7767
        %v9041 = vpop.f32.mrf.mxu0
        %v9042 = vadd.f32 %v8993, %v9041
        %v9043 = vpop.f32.mrf.mxu0
        %v9044 = vadd.f32 %v8995, %v9043
        %9045 = vmatmul.bf16.gmra.mxu0 %v7775
        %v9046 = vpop.f32.mrf.mxu0
        %v9047 = vadd.f32 %v8998, %v9046
        %v9048 = vpop.f32.mrf.mxu0
        %v9049 = vadd.f32 %v9000, %v9048
        %9050 = vmatmul.bf16.gmra.mxu0 %v7783
        %v9051 = vpop.f32.mrf.mxu0
        %v9052 = vadd.f32 %v9003, %v9051
        %v9053 = vpop.f32.mrf.mxu0
        %v9054 = vadd.f32 %v9005, %v9053
        %9055 = vmatmul.bf16.gmra.mxu0 %v7791
        %v9056 = vpop.f32.mrf.mxu0
        %v9057 = vadd.f32 %v9008, %v9056
        %v9058 = vpop.f32.mrf.mxu0
        %v9059 = vadd.f32 %v9010, %v9058
        %9060 = vdwg.mxu0
        %9061 = vmatpush.bf16.msra.mxu0 %v8362
        %9062 = vmatpush.bf16.msra.mxu0 %v8360
        %9063 = vmatpush.bf16.msra.mxu0 %v8358
        %9064 = vmatpush.bf16.msra.mxu0 %v8356
        %9065 = vmatpush.bf16.msra.mxu0 %v8354
        %9066 = vmatpush.bf16.msra.mxu0 %v8352
        %9067 = vmatpush.bf16.msra.mxu0 %v8350
        %9068 = vmatpush.bf16.msra.mxu0 %v8348
        %9069 = vmatmul.bf16.gmra.mxu0 %v7736
        %v9070 = vpop.f32.mrf.mxu0
        %v9071 = vadd.f32 %v9022, %v9070
        %v9072 = vpop.f32.mrf.mxu0
        %v9073 = vadd.f32 %v9024, %v9072
        %9074 = vmatmul.bf16.gmra.mxu0 %v7744
        %v9075 = vpop.f32.mrf.mxu0
        %v9076 = vadd.f32 %v9027, %v9075
        %v9077 = vpop.f32.mrf.mxu0
        %v9078 = vadd.f32 %v9029, %v9077
        %9079 = vmatmul.bf16.gmra.mxu0 %v7752
        %v9080 = vpop.f32.mrf.mxu0
        %v9081 = vadd.f32 %v9032, %v9080
        %v9082 = vpop.f32.mrf.mxu0
        %v9083 = vadd.f32 %v9034, %v9082
        %9084 = vmatmul.bf16.gmra.mxu0 %v7760
        %v9085 = vpop.f32.mrf.mxu0
        %v9086 = vadd.f32 %v9037, %v9085
        %v9087 = vpop.f32.mrf.mxu0
        %v9088 = vadd.f32 %v9039, %v9087
        %9089 = vmatmul.bf16.gmra.mxu0 %v7768
        %v9090 = vpop.f32.mrf.mxu0
        %v9091 = vadd.f32 %v9042, %v9090
        %v9092 = vpop.f32.mrf.mxu0
        %v9093 = vadd.f32 %v9044, %v9092
        %9094 = vmatmul.bf16.gmra.mxu0 %v7776
        %v9095 = vpop.f32.mrf.mxu0
        %v9096 = vadd.f32 %v9047, %v9095
        %v9097 = vpop.f32.mrf.mxu0
        %v9098 = vadd.f32 %v9049, %v9097
        %9099 = vmatmul.bf16.gmra.mxu0 %v7784
        %v9100 = vpop.f32.mrf.mxu0
        %v9101 = vadd.f32 %v9052, %v9100
        %v9102 = vpop.f32.mrf.mxu0
        %v9103 = vadd.f32 %v9054, %v9102
        %9104 = vmatmul.bf16.gmra.mxu0 %v7792
        %v9105 = vpop.f32.mrf.mxu0
        %v9106 = vadd.f32 %v9057, %v9105
        %v9107 = vpop.f32.mrf.mxu0
        %v9108 = vadd.f32 %v9059, %v9107
        %9109 = vdwg.mxu0
        %9110 = vmatpush.bf16.msra.mxu0 %v8378
        %9111 = vmatpush.bf16.msra.mxu0 %v8376
        %9112 = vmatpush.bf16.msra.mxu0 %v8374
        %9113 = vmatpush.bf16.msra.mxu0 %v8372
        %9114 = vmatpush.bf16.msra.mxu0 %v8370
        %9115 = vmatpush.bf16.msra.mxu0 %v8368
        %9116 = vmatpush.bf16.msra.mxu0 %v8366
        %9117 = vmatpush.bf16.msra.mxu0 %v8364
        %9118 = vmatmul.bf16.gmra.mxu0 %v7737
        %v9119 = vpop.f32.mrf.mxu0
        %v9120 = vadd.f32 %v9071, %v9119
        %v9121 = vpop.f32.mrf.mxu0
        %v9122 = vadd.f32 %v9073, %v9121
        %9123 = vmatmul.bf16.gmra.mxu0 %v7745
        %v9124 = vpop.f32.mrf.mxu0
        %v9125 = vadd.f32 %v9076, %v9124
        %v9126 = vpop.f32.mrf.mxu0
        %v9127 = vadd.f32 %v9078, %v9126
        %9128 = vmatmul.bf16.gmra.mxu0 %v7753
        %v9129 = vpop.f32.mrf.mxu0
        %v9130 = vadd.f32 %v9081, %v9129
        %v9131 = vpop.f32.mrf.mxu0
        %v9132 = vadd.f32 %v9083, %v9131
        %9133 = vmatmul.bf16.gmra.mxu0 %v7761
        %v9134 = vpop.f32.mrf.mxu0
        %v9135 = vadd.f32 %v9086, %v9134
        %v9136 = vpop.f32.mrf.mxu0
        %v9137 = vadd.f32 %v9088, %v9136
        %9138 = vmatmul.bf16.gmra.mxu0 %v7769
        %v9139 = vpop.f32.mrf.mxu0
        %v9140 = vadd.f32 %v9091, %v9139
        %v9141 = vpop.f32.mrf.mxu0
        %v9142 = vadd.f32 %v9093, %v9141
        %9143 = vmatmul.bf16.gmra.mxu0 %v7777
        %v9144 = vpop.f32.mrf.mxu0
        %v9145 = vadd.f32 %v9096, %v9144
        %v9146 = vpop.f32.mrf.mxu0
        %v9147 = vadd.f32 %v9098, %v9146
        %9148 = vmatmul.bf16.gmra.mxu0 %v7785
        %v9149 = vpop.f32.mrf.mxu0
        %v9150 = vadd.f32 %v9101, %v9149
        %v9151 = vpop.f32.mrf.mxu0
        %v9152 = vadd.f32 %v9103, %v9151
        %9153 = vmatmul.bf16.gmra.mxu0 %v7793
        %v9154 = vpop.f32.mrf.mxu0
        %v9155 = vadd.f32 %v9106, %v9154
        %v9156 = vpop.f32.mrf.mxu0
        %v9157 = vadd.f32 %v9108, %v9156
        %9158 = vdwg.mxu0
        %9159 = vmatpush.bf16.msra.mxu0 %v8394
        %9160 = vmatpush.bf16.msra.mxu0 %v8392
        %9161 = vmatpush.bf16.msra.mxu0 %v8390
        %9162 = vmatpush.bf16.msra.mxu0 %v8388
        %9163 = vmatpush.bf16.msra.mxu0 %v8386
        %9164 = vmatpush.bf16.msra.mxu0 %v8384
        %9165 = vmatpush.bf16.msra.mxu0 %v8382
        %9166 = vmatpush.bf16.msra.mxu0 %v8380
        %9167 = vmatmul.bf16.gmra.mxu0 %v7738
        %v9168 = vpop.f32.mrf.mxu0
        %v9169 = vadd.f32 %v9120, %v9168
        %v9170 = vpop.f32.mrf.mxu0
        %v9171 = vadd.f32 %v9122, %v9170
        %9172 = vmatmul.bf16.gmra.mxu0 %v7746
        %v9173 = vpop.f32.mrf.mxu0
        %v9174 = vadd.f32 %v9125, %v9173
        %v9175 = vpop.f32.mrf.mxu0
        %v9176 = vadd.f32 %v9127, %v9175
        %9177 = vmatmul.bf16.gmra.mxu0 %v7754
        %v9178 = vpop.f32.mrf.mxu0
        %v9179 = vadd.f32 %v9130, %v9178
        %v9180 = vpop.f32.mrf.mxu0
        %v9181 = vadd.f32 %v9132, %v9180
        %9182 = vmatmul.bf16.gmra.mxu0 %v7762
        %v9183 = vpop.f32.mrf.mxu0
        %v9184 = vadd.f32 %v9135, %v9183
        %v9185 = vpop.f32.mrf.mxu0
        %v9186 = vadd.f32 %v9137, %v9185
        %9187 = vmatmul.bf16.gmra.mxu0 %v7770
        %v9188 = vpop.f32.mrf.mxu0
        %v9189 = vadd.f32 %v9140, %v9188
        %v9190 = vpop.f32.mrf.mxu0
        %v9191 = vadd.f32 %v9142, %v9190
        %9192 = vmatmul.bf16.gmra.mxu0 %v7778
        %v9193 = vpop.f32.mrf.mxu0
        %v9194 = vadd.f32 %v9145, %v9193
        %v9195 = vpop.f32.mrf.mxu0
        %v9196 = vadd.f32 %v9147, %v9195
        %9197 = vmatmul.bf16.gmra.mxu0 %v7786
        %v9198 = vpop.f32.mrf.mxu0
        %v9199 = vadd.f32 %v9150, %v9198
        %v9200 = vpop.f32.mrf.mxu0
        %v9201 = vadd.f32 %v9152, %v9200
        %9202 = vmatmul.bf16.gmra.mxu0 %v7794
        %v9203 = vpop.f32.mrf.mxu0
        %v9204 = vadd.f32 %v9155, %v9203
        %v9205 = vpop.f32.mrf.mxu0
        %v9206 = vadd.f32 %v9157, %v9205
        %9207 = vdwg.mxu0
        %9208 = vmatpush.bf16.msra.mxu0 %v8410
        %9209 = vmatpush.bf16.msra.mxu0 %v8408
        %9210 = vmatpush.bf16.msra.mxu0 %v8406
        %9211 = vmatpush.bf16.msra.mxu0 %v8404
        %9212 = vmatpush.bf16.msra.mxu0 %v8402
        %9213 = vmatpush.bf16.msra.mxu0 %v8400
        %9214 = vmatpush.bf16.msra.mxu0 %v8398
        %9215 = vmatpush.bf16.msra.mxu0 %v8396
        %9216 = vmatmul.bf16.gmra.mxu0 %v7739
        %v9217 = vpop.f32.mrf.mxu0
        %v9218 = vadd.f32 %v9169, %v9217
        %v9219 = vpop.f32.mrf.mxu0
        %v9220 = vadd.f32 %v9171, %v9219
        %9221 = vmatmul.bf16.gmra.mxu0 %v7747
        %v9222 = vpop.f32.mrf.mxu0
        %v9223 = vadd.f32 %v9174, %v9222
        %v9224 = vpop.f32.mrf.mxu0
        %v9225 = vadd.f32 %v9176, %v9224
        %9226 = vmatmul.bf16.gmra.mxu0 %v7755
        %v9227 = vpop.f32.mrf.mxu0
        %v9228 = vadd.f32 %v9179, %v9227
        %v9229 = vpop.f32.mrf.mxu0
        %v9230 = vadd.f32 %v9181, %v9229
        %9231 = vmatmul.bf16.gmra.mxu0 %v7763
        %v9232 = vpop.f32.mrf.mxu0
        %v9233 = vadd.f32 %v9184, %v9232
        %v9234 = vpop.f32.mrf.mxu0
        %v9235 = vadd.f32 %v9186, %v9234
        %9236 = vmatmul.bf16.gmra.mxu0 %v7771
        %v9237 = vpop.f32.mrf.mxu0
        %v9238 = vadd.f32 %v9189, %v9237
        %v9239 = vpop.f32.mrf.mxu0
        %v9240 = vadd.f32 %v9191, %v9239
        %9241 = vmatmul.bf16.gmra.mxu0 %v7779
        %v9242 = vpop.f32.mrf.mxu0
        %v9243 = vadd.f32 %v9194, %v9242
        %v9244 = vpop.f32.mrf.mxu0
        %v9245 = vadd.f32 %v9196, %v9244
        %9246 = vmatmul.bf16.gmra.mxu0 %v7787
        %v9247 = vpop.f32.mrf.mxu0
        %v9248 = vadd.f32 %v9199, %v9247
        %v9249 = vpop.f32.mrf.mxu0
        %v9250 = vadd.f32 %v9201, %v9249
        %9251 = vmatmul.bf16.gmra.mxu0 %v7795
        %v9252 = vpop.f32.mrf.mxu0
        %v9253 = vadd.f32 %v9204, %v9252
        %v9254 = vpop.f32.mrf.mxu0
        %v9255 = vadd.f32 %v9206, %v9254
        %9256 = vdwg.mxu0
        %9257 = vmatpush.bf16.msra.mxu0 %v8426
        %9258 = vmatpush.bf16.msra.mxu0 %v8424
        %9259 = vmatpush.bf16.msra.mxu0 %v8422
        %9260 = vmatpush.bf16.msra.mxu0 %v8420
        %9261 = vmatpush.bf16.msra.mxu0 %v8418
        %9262 = vmatpush.bf16.msra.mxu0 %v8416
        %9263 = vmatpush.bf16.msra.mxu0 %v8414
        %9264 = vmatpush.bf16.msra.mxu0 %v8412
        %9265 = vmatmul.bf16.gmra.mxu0 %v7740
        %v9266 = vpop.f32.mrf.mxu0
        %v9267 = vadd.f32 %v9218, %v9266
        %v9268 = vpop.f32.mrf.mxu0
        %v9269 = vadd.f32 %v9220, %v9268
        %9270 = vmatmul.bf16.gmra.mxu0 %v7748
        %v9271 = vpop.f32.mrf.mxu0
        %v9272 = vadd.f32 %v9223, %v9271
        %v9273 = vpop.f32.mrf.mxu0
        %v9274 = vadd.f32 %v9225, %v9273
        %9275 = vmatmul.bf16.gmra.mxu0 %v7756
        %v9276 = vpop.f32.mrf.mxu0
        %v9277 = vadd.f32 %v9228, %v9276
        %v9278 = vpop.f32.mrf.mxu0
        %v9279 = vadd.f32 %v9230, %v9278
        %9280 = vmatmul.bf16.gmra.mxu0 %v7764
        %v9281 = vpop.f32.mrf.mxu0
        %v9282 = vadd.f32 %v9233, %v9281
        %v9283 = vpop.f32.mrf.mxu0
        %v9284 = vadd.f32 %v9235, %v9283
        %9285 = vmatmul.bf16.gmra.mxu0 %v7772
        %v9286 = vpop.f32.mrf.mxu0
        %v9287 = vadd.f32 %v9238, %v9286
        %v9288 = vpop.f32.mrf.mxu0
        %v9289 = vadd.f32 %v9240, %v9288
        %9290 = vmatmul.bf16.gmra.mxu0 %v7780
        %v9291 = vpop.f32.mrf.mxu0
        %v9292 = vadd.f32 %v9243, %v9291
        %v9293 = vpop.f32.mrf.mxu0
        %v9294 = vadd.f32 %v9245, %v9293
        %9295 = vmatmul.bf16.gmra.mxu0 %v7788
        %v9296 = vpop.f32.mrf.mxu0
        %v9297 = vadd.f32 %v9248, %v9296
        %v9298 = vpop.f32.mrf.mxu0
        %v9299 = vadd.f32 %v9250, %v9298
        %9300 = vmatmul.bf16.gmra.mxu0 %v7796
        %v9301 = vpop.f32.mrf.mxu0
        %v9302 = vadd.f32 %v9253, %v9301
        %v9303 = vpop.f32.mrf.mxu0
        %v9304 = vadd.f32 %v9255, %v9303
        %9305 = vdwg.mxu0
        %9306 = vmatpush.bf16.msra.mxu0 %v8442
        %9307 = vmatpush.bf16.msra.mxu0 %v8440
        %9308 = vmatpush.bf16.msra.mxu0 %v8438
        %9309 = vmatpush.bf16.msra.mxu0 %v8436
        %9310 = vmatpush.bf16.msra.mxu0 %v8434
        %9311 = vmatpush.bf16.msra.mxu0 %v8432
        %9312 = vmatpush.bf16.msra.mxu0 %v8430
        %9313 = vmatpush.bf16.msra.mxu0 %v8428
        %9314 = vmatmul.bf16.gmra.mxu0 %v7741
        %v9315 = vpop.f32.mrf.mxu0
        %v9316 = vadd.f32 %v9267, %v9315
        %v9317 = vpop.f32.mrf.mxu0
        %v9318 = vadd.f32 %v9269, %v9317
        %9319 = vmatmul.bf16.gmra.mxu0 %v7749
        %v9320 = vpop.f32.mrf.mxu0
        %v9321 = vadd.f32 %v9272, %v9320
        %v9322 = vpop.f32.mrf.mxu0
        %v9323 = vadd.f32 %v9274, %v9322
        %9324 = vmatmul.bf16.gmra.mxu0 %v7757
        %v9325 = vpop.f32.mrf.mxu0
        %v9326 = vadd.f32 %v9277, %v9325
        %v9327 = vpop.f32.mrf.mxu0
        %v9328 = vadd.f32 %v9279, %v9327
        %9329 = vmatmul.bf16.gmra.mxu0 %v7765
        %v9330 = vpop.f32.mrf.mxu0
        %v9331 = vadd.f32 %v9282, %v9330
        %v9332 = vpop.f32.mrf.mxu0
        %v9333 = vadd.f32 %v9284, %v9332
        %9334 = vmatmul.bf16.gmra.mxu0 %v7773
        %v9335 = vpop.f32.mrf.mxu0
        %v9336 = vadd.f32 %v9287, %v9335
        %v9337 = vpop.f32.mrf.mxu0
        %v9338 = vadd.f32 %v9289, %v9337
        %9339 = vmatmul.bf16.gmra.mxu0 %v7781
        %v9340 = vpop.f32.mrf.mxu0
        %v9341 = vadd.f32 %v9292, %v9340
        %v9342 = vpop.f32.mrf.mxu0
        %v9343 = vadd.f32 %v9294, %v9342
        %9344 = vmatmul.bf16.gmra.mxu0 %v7789
        %v9345 = vpop.f32.mrf.mxu0
        %v9346 = vadd.f32 %v9297, %v9345
        %v9347 = vpop.f32.mrf.mxu0
        %v9348 = vadd.f32 %v9299, %v9347
        %9349 = vmatmul.bf16.gmra.mxu0 %v7797
        %v9350 = vpop.f32.mrf.mxu0
        %v9351 = vadd.f32 %v9302, %v9350
        %v9352 = vpop.f32.mrf.mxu0
        %v9353 = vadd.f32 %v9304, %v9352
        %9354 = vdwg.mxu0
        %v9355 = vmul.f32 %v8924, 0.5
        %v9356 = vmul.f32 %v9316, 0.5
        %v9357 = vmul.f32 %v8926, 0.5
        %v9358 = vmul.f32 %v9318, 0.5
        %v9359 = vmul.f32 %v8929, 0.5
        %v9360 = vmul.f32 %v9321, 0.5
        %v9361 = vmul.f32 %v8931, 0.5
        %v9362 = vmul.f32 %v9323, 0.5
        %v9363 = vmul.f32 %v8934, 0.5
        %v9364 = vmul.f32 %v9326, 0.5
        %v9365 = vmul.f32 %v8936, 0.5
        %v9366 = vmul.f32 %v9328, 0.5
        %v9367 = vmul.f32 %v8939, 0.5
        %v9368 = vmul.f32 %v9331, 0.5
        %v9369 = vmul.f32 %v8941, 0.5
        %v9370 = vmul.f32 %v9333, 0.5
        %v9371 = vmul.f32 %v8944, 0.5
        %v9372 = vmul.f32 %v9336, 0.5
        %v9373 = vmul.f32 %v8946, 0.5
        %v9374 = vmul.f32 %v9338, 0.5
        %v9375 = vmul.f32 %v8949, 0.5
        %v9376 = vmul.f32 %v9341, 0.5
        %v9377 = vmul.f32 %v8951, 0.5
        %v9378 = vmul.f32 %v9343, 0.5
        %v9379 = vmul.f32 %v8954, 0.5
        %v9380 = vmul.f32 %v9346, 0.5
        %v9381 = vmul.f32 %v8956, 0.5
        %v9382 = vmul.f32 %v9348, 0.5
        %v9383 = vmul.f32 %v8959, 0.5
        %v9384 = vmul.f32 %v9351, 0.5
        %v9385 = vmul.f32 %v8961, 0.5
        %v9386 = vmul.f32 %v9353, 0.5
        %v9387 = vtanh.pop %v9355
        %v9388 = vtanh.pop %v9356
        %v9389 = vtanh.pop %v9357
        %v9390 = vtanh.pop %v9358
        %v9391 = vtanh.pop %v9359
        %v9392 = vtanh.pop %v9360
        %v9393 = vtanh.pop %v9361
        %v9394 = vtanh.pop %v9362
        %v9395 = vtanh.pop %v9363
        %v9396 = vtanh.pop %v9364
        %v9397 = vtanh.pop %v9365
        %v9398 = vtanh.pop %v9366
        %v9399 = vtanh.pop %v9367
        %v9400 = vtanh.pop %v9368
        %v9401 = vtanh.pop %v9369
        %v9402 = vtanh.pop %v9370
        %v9403 = vtanh.pop %v9371
        %v9404 = vtanh.pop %v9372
        %v9405 = vtanh.pop %v9373
        %v9406 = vtanh.pop %v9374
        %v9407 = vtanh.pop %v9375
        %v9408 = vtanh.pop %v9376
        %v9409 = vtanh.pop %v9377
        %v9410 = vtanh.pop %v9378
        %v9411 = vtanh.pop %v9379
        %v9412 = vtanh.pop %v9380
        %v9413 = vtanh.pop %v9381
        %v9414 = vtanh.pop %v9382
        %v9415 = vtanh.pop %v9383
        %v9416 = vtanh.pop %v9384
        %v9417 = vtanh.pop %v9385
        %v9418 = vtanh.pop %v9386
        %v9419 = vmul.f32 %v9387, 0.5
        %v9420 = vmul.f32 %v9388, 0.5
        %v9421 = vmul.f32 %v9389, 0.5
        %v9422 = vmul.f32 %v9390, 0.5
        %v9423 = vmul.f32 %v9391, 0.5
        %v9424 = vmul.f32 %v9392, 0.5
        %v9425 = vmul.f32 %v9393, 0.5
        %v9426 = vmul.f32 %v9394, 0.5
        %v9427 = vmul.f32 %v9395, 0.5
        %v9428 = vmul.f32 %v9396, 0.5
        %v9429 = vmul.f32 %v9397, 0.5
        %v9430 = vmul.f32 %v9398, 0.5
        %v9431 = vmul.f32 %v9399, 0.5
        %v9432 = vmul.f32 %v9400, 0.5
        %v9433 = vmul.f32 %v9401, 0.5
        %v9434 = vmul.f32 %v9402, 0.5
        %v9435 = vmul.f32 %v9403, 0.5
        %v9436 = vmul.f32 %v9404, 0.5
        %v9437 = vmul.f32 %v9405, 0.5
        %v9438 = vmul.f32 %v9406, 0.5
        %v9439 = vmul.f32 %v9407, 0.5
        %v9440 = vmul.f32 %v9408, 0.5
        %v9441 = vmul.f32 %v9409, 0.5
        %v9442 = vmul.f32 %v9410, 0.5
        %v9443 = vmul.f32 %v9411, 0.5
        %v9444 = vmul.f32 %v9412, 0.5
        %v9445 = vmul.f32 %v9413, 0.5
        %v9446 = vmul.f32 %v9414, 0.5
        %v9447 = vmul.f32 %v9415, 0.5
        %v9448 = vmul.f32 %v9416, 0.5
        %v9449 = vmul.f32 %v9417, 0.5
        %v9450 = vmul.f32 %v9418, 0.5
        %v9451 = vadd.f32 %v9419, 0.5
        %v9452 = vadd.f32 %v9420, 0.5
        %v9453 = vadd.f32 %v9421, 0.5
        %v9454 = vadd.f32 %v9422, 0.5
        %v9455 = vadd.f32 %v9423, 0.5
        %v9456 = vadd.f32 %v9424, 0.5
        %v9457 = vadd.f32 %v9425, 0.5
        %v9458 = vadd.f32 %v9426, 0.5
        %v9459 = vadd.f32 %v9427, 0.5
        %v9460 = vadd.f32 %v9428, 0.5
        %v9461 = vadd.f32 %v9429, 0.5
        %v9462 = vadd.f32 %v9430, 0.5
        %v9463 = vadd.f32 %v9431, 0.5
        %v9464 = vadd.f32 %v9432, 0.5
        %v9465 = vadd.f32 %v9433, 0.5
        %v9466 = vadd.f32 %v9434, 0.5
        %v9467 = vadd.f32 %v9435, 0.5
        %v9468 = vadd.f32 %v9436, 0.5
        %v9469 = vadd.f32 %v9437, 0.5
        %v9470 = vadd.f32 %v9438, 0.5
        %v9471 = vadd.f32 %v9439, 0.5
        %v9472 = vadd.f32 %v9440, 0.5
        %v9473 = vadd.f32 %v9441, 0.5
        %v9474 = vadd.f32 %v9442, 0.5
        %v9475 = vadd.f32 %v9443, 0.5
        %v9476 = vadd.f32 %v9444, 0.5
        %v9477 = vadd.f32 %v9445, 0.5
        %v9478 = vadd.f32 %v9446, 0.5
        %v9479 = vadd.f32 %v9447, 0.5
        %v9480 = vadd.f32 %v9448, 0.5
        %v9481 = vadd.f32 %v9449, 0.5
        %v9482 = vadd.f32 %v9450, 0.5
        %v9483 = vmul.f32 %v8924, %v9451
        %v9484 = vmul.f32 %v9316, %v9452
        %v9485 = vmul.f32 %v8926, %v9453
        %v9486 = vmul.f32 %v9318, %v9454
        %v9487 = vmul.f32 %v8929, %v9455
        %v9488 = vmul.f32 %v9321, %v9456
        %v9489 = vmul.f32 %v8931, %v9457
        %v9490 = vmul.f32 %v9323, %v9458
        %v9491 = vmul.f32 %v8934, %v9459
        %v9492 = vmul.f32 %v9326, %v9460
        %v9493 = vmul.f32 %v8936, %v9461
        %v9494 = vmul.f32 %v9328, %v9462
        %v9495 = vmul.f32 %v8939, %v9463
        %v9496 = vmul.f32 %v9331, %v9464
        %v9497 = vmul.f32 %v8941, %v9465
        %v9498 = vmul.f32 %v9333, %v9466
        %v9499 = vmul.f32 %v8944, %v9467
        %v9500 = vmul.f32 %v9336, %v9468
        %v9501 = vmul.f32 %v8946, %v9469
        %v9502 = vmul.f32 %v9338, %v9470
        %v9503 = vmul.f32 %v8949, %v9471
        %v9504 = vmul.f32 %v9341, %v9472
        %v9505 = vmul.f32 %v8951, %v9473
        %v9506 = vmul.f32 %v9343, %v9474
        %v9507 = vmul.f32 %v8954, %v9475
        %v9508 = vmul.f32 %v9346, %v9476
        %v9509 = vmul.f32 %v8956, %v9477
        %v9510 = vmul.f32 %v9348, %v9478
        %v9511 = vmul.f32 %v8959, %v9479
        %v9512 = vmul.f32 %v9351, %v9480
        %v9513 = vmul.f32 %v8961, %v9481
        %v9514 = vmul.f32 %v9353, %v9482
        %v9515 = vpack.c.bf16 %v9485, %v9483
        %v9516 = vpack.c.bf16 %v9486, %v9484
        %v9517 = vpack.c.bf16 %v9489, %v9487
        %v9518 = vpack.c.bf16 %v9490, %v9488
        %v9519 = vpack.c.bf16 %v9493, %v9491
        %v9520 = vpack.c.bf16 %v9494, %v9492
        %v9521 = vpack.c.bf16 %v9497, %v9495
        %v9522 = vpack.c.bf16 %v9498, %v9496
        %v9523 = vpack.c.bf16 %v9501, %v9499
        %v9524 = vpack.c.bf16 %v9502, %v9500
        %v9525 = vpack.c.bf16 %v9505, %v9503
        %v9526 = vpack.c.bf16 %v9506, %v9504
        %v9527 = vpack.c.bf16 %v9509, %v9507
        %v9528 = vpack.c.bf16 %v9510, %v9508
        %v9529 = vpack.c.bf16 %v9513, %v9511
        %v9530 = vpack.c.bf16 %v9514, %v9512
        %v9531 = vld [vmem:[%s5] sm:$0xff]
        %v9532 = vld [vmem:[%s5 + $0x8] sm:$0xff]
        %v9533 = vld [vmem:[%s5 + $0x10] sm:$0xff]
        %v9534 = vld [vmem:[%s5 + $0x18] sm:$0xff]
        %v9535 = vld [vmem:[%s5 + $0x20] sm:$0xff]
        %v9536 = vld [vmem:[%s5 + $0x28] sm:$0xff]
        %v9537 = vld [vmem:[%s5 + $0x30] sm:$0xff]
        %v9538 = vld [vmem:[%s5 + $0x38] sm:$0xff]
        %v9539 = vld [vmem:[%s5 + $0x40] sm:$0xff]
        %v9540 = vld [vmem:[%s5 + $0x48] sm:$0xff]
        %v9541 = vld [vmem:[%s5 + $0x50] sm:$0xff]
        %v9542 = vld [vmem:[%s5 + $0x58] sm:$0xff]
        %v9543 = vld [vmem:[%s5 + $0x60] sm:$0xff]
        %v9544 = vld [vmem:[%s5 + $0x68] sm:$0xff]
        %v9545 = vld [vmem:[%s5 + $0x70] sm:$0xff]
        %v9546 = vld [vmem:[%s5 + $0x78] sm:$0xff]
        %v9547 = vld [vmem:[%s5 + $0x80] sm:$0xff]
        %v9548 = vld [vmem:[%s5 + $0x88] sm:$0xff]
        %v9549 = vld [vmem:[%s5 + $0x90] sm:$0xff]
        %v9550 = vld [vmem:[%s5 + $0x98] sm:$0xff]
        %v9551 = vld [vmem:[%s5 + $0xa0] sm:$0xff]
        %v9552 = vld [vmem:[%s5 + $0xa8] sm:$0xff]
        %v9553 = vld [vmem:[%s5 + $0xb0] sm:$0xff]
        %v9554 = vld [vmem:[%s5 + $0xb8] sm:$0xff]
        %v9555 = vld [vmem:[%s5 + $0xc0] sm:$0xff]
        %v9556 = vld [vmem:[%s5 + $0xc8] sm:$0xff]
        %v9557 = vld [vmem:[%s5 + $0xd0] sm:$0xff]
        %v9558 = vld [vmem:[%s5 + $0xd8] sm:$0xff]
        %v9559 = vld [vmem:[%s5 + $0xe0] sm:$0xff]
        %v9560 = vld [vmem:[%s5 + $0xe8] sm:$0xff]
        %v9561 = vld [vmem:[%s5 + $0xf0] sm:$0xff]
        %v9562 = vld [vmem:[%s5 + $0xf8] sm:$0xff]
        %v9564 = vperm.slane %v321, 0
        %v9565 = vperm.slane %v321, 1
        %v9600 = vunpack.c.l.b16 %v9531
        %v9601 = vunpack.c.h.b16 %v9531
        %v9602 = vunpack.c.l.b16 %v9532
        %v9603 = vunpack.c.h.b16 %v9532
        %v9604 = vunpack.c.l.b16 %v9533
        %v9605 = vunpack.c.h.b16 %v9533
        %v9606 = vunpack.c.l.b16 %v9534
        %v9607 = vunpack.c.h.b16 %v9534
        %v9608 = vunpack.c.l.b16 %v9535
        %v9609 = vunpack.c.h.b16 %v9535
        %v9610 = vunpack.c.l.b16 %v9536
        %v9611 = vunpack.c.h.b16 %v9536
        %v9612 = vunpack.c.l.b16 %v9537
        %v9613 = vunpack.c.h.b16 %v9537
        %v9614 = vunpack.c.l.b16 %v9538
        %v9615 = vunpack.c.h.b16 %v9538
        %v9616 = vunpack.c.l.b16 %v9539
        %v9617 = vunpack.c.h.b16 %v9539
        %v9618 = vunpack.c.l.b16 %v9540
        %v9619 = vunpack.c.h.b16 %v9540
        %v9620 = vunpack.c.l.b16 %v9541
        %v9621 = vunpack.c.h.b16 %v9541
        %v9622 = vunpack.c.l.b16 %v9542
        %v9623 = vunpack.c.h.b16 %v9542
        %v9624 = vunpack.c.l.b16 %v9543
        %v9625 = vunpack.c.h.b16 %v9543
        %v9626 = vunpack.c.l.b16 %v9544
        %v9627 = vunpack.c.h.b16 %v9544
        %v9628 = vunpack.c.l.b16 %v9545
        %v9629 = vunpack.c.h.b16 %v9545
        %v9630 = vunpack.c.l.b16 %v9546
        %v9631 = vunpack.c.h.b16 %v9546
        %v9632 = vunpack.c.l.b16 %v9547
        %v9633 = vunpack.c.h.b16 %v9547
        %v9634 = vunpack.c.l.b16 %v9548
        %v9635 = vunpack.c.h.b16 %v9548
        %v9636 = vunpack.c.l.b16 %v9549
        %v9637 = vunpack.c.h.b16 %v9549
        %v9638 = vunpack.c.l.b16 %v9550
        %v9639 = vunpack.c.h.b16 %v9550
        %v9640 = vunpack.c.l.b16 %v9551
        %v9641 = vunpack.c.h.b16 %v9551
        %v9642 = vunpack.c.l.b16 %v9552
        %v9643 = vunpack.c.h.b16 %v9552
        %v9644 = vunpack.c.l.b16 %v9553
        %v9645 = vunpack.c.h.b16 %v9553
        %v9646 = vunpack.c.l.b16 %v9554
        %v9647 = vunpack.c.h.b16 %v9554
        %v9648 = vunpack.c.l.b16 %v9555
        %v9649 = vunpack.c.h.b16 %v9555
        %v9650 = vunpack.c.l.b16 %v9556
        %v9651 = vunpack.c.h.b16 %v9556
        %v9652 = vunpack.c.l.b16 %v9557
        %v9653 = vunpack.c.h.b16 %v9557
        %v9654 = vunpack.c.l.b16 %v9558
        %v9655 = vunpack.c.h.b16 %v9558
        %v9656 = vunpack.c.l.b16 %v9559
        %v9657 = vunpack.c.h.b16 %v9559
        %v9658 = vunpack.c.l.b16 %v9560
        %v9659 = vunpack.c.h.b16 %v9560
        %v9660 = vunpack.c.l.b16 %v9561
        %v9661 = vunpack.c.h.b16 %v9561
        %v9662 = vunpack.c.l.b16 %v9562
        %v9663 = vunpack.c.h.b16 %v9562
        %v9664 = vpack.c.b16 %v9602, %v9600
        %v9665 = vpack.c.b16 %v9603, %v9601
        %v9666 = vpack.c.b16 %v9606, %v9604
        %v9667 = vpack.c.b16 %v9607, %v9605
        %v9668 = vpack.c.b16 %v9610, %v9608
        %v9669 = vpack.c.b16 %v9611, %v9609
        %v9670 = vpack.c.b16 %v9614, %v9612
        %v9671 = vpack.c.b16 %v9615, %v9613
        %v9672 = vpack.c.b16 %v9618, %v9616
        %v9673 = vpack.c.b16 %v9619, %v9617
        %v9674 = vpack.c.b16 %v9622, %v9620
        %v9675 = vpack.c.b16 %v9623, %v9621
        %v9676 = vpack.c.b16 %v9626, %v9624
        %v9677 = vpack.c.b16 %v9627, %v9625
        %v9678 = vpack.c.b16 %v9630, %v9628
        %v9679 = vpack.c.b16 %v9631, %v9629
        %v9680 = vpack.c.b16 %v9634, %v9632
        %v9681 = vpack.c.b16 %v9635, %v9633
        %v9682 = vpack.c.b16 %v9638, %v9636
        %v9683 = vpack.c.b16 %v9639, %v9637
        %v9684 = vpack.c.b16 %v9642, %v9640
        %v9685 = vpack.c.b16 %v9643, %v9641
        %v9686 = vpack.c.b16 %v9646, %v9644
        %v9687 = vpack.c.b16 %v9647, %v9645
        %v9688 = vpack.c.b16 %v9650, %v9648
        %v9689 = vpack.c.b16 %v9651, %v9649
        %v9690 = vpack.c.b16 %v9654, %v9652
        %v9691 = vpack.c.b16 %v9655, %v9653
        %v9692 = vpack.c.b16 %v9658, %v9656
        %v9693 = vpack.c.b16 %v9659, %v9657
        %v9694 = vpack.c.b16 %v9662, %v9660
        %v9695 = vpack.c.b16 %v9663, %v9661
        %9728 = vmatpush.bf16.msra.mxu0 %v9678
        %9729 = vmatpush.bf16.msra.mxu0 %v9676
        %9730 = vmatpush.bf16.msra.mxu0 %v9674
        %9731 = vmatpush.bf16.msra.mxu0 %v9672
        %9732 = vmatpush.bf16.msra.mxu0 %v9670
        %9733 = vmatpush.bf16.msra.mxu0 %v9668
        %9734 = vmatpush.bf16.msra.mxu0 %v9666
        %9735 = vmatpush.bf16.msra.mxu0 %v9664
        %9736 = vmatmul.bf16.gmra.mxu0 %v9515
        %v9737 = vpop.f32.mrf.mxu0
        %v9738 = vadd.f32 %v9564, %v9737
        %v9739 = vpop.f32.mrf.mxu0
        %v9740 = vadd.f32 %v9564, %v9739
        %9741 = vmatmul.bf16.gmra.mxu0 %v9517
        %v9742 = vpop.f32.mrf.mxu0
        %v9743 = vadd.f32 %v9564, %v9742
        %v9744 = vpop.f32.mrf.mxu0
        %v9745 = vadd.f32 %v9564, %v9744
        %9746 = vmatmul.bf16.gmra.mxu0 %v9519
        %v9747 = vpop.f32.mrf.mxu0
        %v9748 = vadd.f32 %v9564, %v9747
        %v9749 = vpop.f32.mrf.mxu0
        %v9750 = vadd.f32 %v9564, %v9749
        %9751 = vmatmul.bf16.gmra.mxu0 %v9521
        %v9752 = vpop.f32.mrf.mxu0
        %v9753 = vadd.f32 %v9564, %v9752
        %v9754 = vpop.f32.mrf.mxu0
        %v9755 = vadd.f32 %v9564, %v9754
        %9756 = vmatmul.bf16.gmra.mxu0 %v9523
        %v9757 = vpop.f32.mrf.mxu0
        %v9758 = vadd.f32 %v9564, %v9757
        %v9759 = vpop.f32.mrf.mxu0
        %v9760 = vadd.f32 %v9564, %v9759
        %9761 = vmatmul.bf16.gmra.mxu0 %v9525
        %v9762 = vpop.f32.mrf.mxu0
        %v9763 = vadd.f32 %v9564, %v9762
        %v9764 = vpop.f32.mrf.mxu0
        %v9765 = vadd.f32 %v9564, %v9764
        %9766 = vmatmul.bf16.gmra.mxu0 %v9527
        %v9767 = vpop.f32.mrf.mxu0
        %v9768 = vadd.f32 %v9564, %v9767
        %v9769 = vpop.f32.mrf.mxu0
        %v9770 = vadd.f32 %v9564, %v9769
        %9771 = vmatmul.bf16.gmra.mxu0 %v9529
        %v9772 = vpop.f32.mrf.mxu0
        %v9773 = vadd.f32 %v9564, %v9772
        %v9774 = vpop.f32.mrf.mxu0
        %v9775 = vadd.f32 %v9564, %v9774
        %9776 = vdwg.mxu0
        %9777 = vmatpush.bf16.msra.mxu0 %v9694
        %9778 = vmatpush.bf16.msra.mxu0 %v9692
        %9779 = vmatpush.bf16.msra.mxu0 %v9690
        %9780 = vmatpush.bf16.msra.mxu0 %v9688
        %9781 = vmatpush.bf16.msra.mxu0 %v9686
        %9782 = vmatpush.bf16.msra.mxu0 %v9684
        %9783 = vmatpush.bf16.msra.mxu0 %v9682
        %9784 = vmatpush.bf16.msra.mxu0 %v9680
        %9785 = vmatmul.bf16.gmra.mxu0 %v9516
        %v9786 = vpop.f32.mrf.mxu0
        %v9787 = vadd.f32 %v9738, %v9786
        %v9788 = vpop.f32.mrf.mxu0
        %v9789 = vadd.f32 %v9740, %v9788
        %9790 = vmatmul.bf16.gmra.mxu0 %v9518
        %v9791 = vpop.f32.mrf.mxu0
        %v9792 = vadd.f32 %v9743, %v9791
        %v9793 = vpop.f32.mrf.mxu0
        %v9794 = vadd.f32 %v9745, %v9793
        %9795 = vmatmul.bf16.gmra.mxu0 %v9520
        %v9796 = vpop.f32.mrf.mxu0
        %v9797 = vadd.f32 %v9748, %v9796
        %v9798 = vpop.f32.mrf.mxu0
        %v9799 = vadd.f32 %v9750, %v9798
        %9800 = vmatmul.bf16.gmra.mxu0 %v9522
        %v9801 = vpop.f32.mrf.mxu0
        %v9802 = vadd.f32 %v9753, %v9801
        %v9803 = vpop.f32.mrf.mxu0
        %v9804 = vadd.f32 %v9755, %v9803
        %9805 = vmatmul.bf16.gmra.mxu0 %v9524
        %v9806 = vpop.f32.mrf.mxu0
        %v9807 = vadd.f32 %v9758, %v9806
        %v9808 = vpop.f32.mrf.mxu0
        %v9809 = vadd.f32 %v9760, %v9808
        %9810 = vmatmul.bf16.gmra.mxu0 %v9526
        %v9811 = vpop.f32.mrf.mxu0
        %v9812 = vadd.f32 %v9763, %v9811
        %v9813 = vpop.f32.mrf.mxu0
        %v9814 = vadd.f32 %v9765, %v9813
        %9815 = vmatmul.bf16.gmra.mxu0 %v9528
        %v9816 = vpop.f32.mrf.mxu0
        %v9817 = vadd.f32 %v9768, %v9816
        %v9818 = vpop.f32.mrf.mxu0
        %v9819 = vadd.f32 %v9770, %v9818
        %9820 = vmatmul.bf16.gmra.mxu0 %v9530
        %v9821 = vpop.f32.mrf.mxu0
        %v9822 = vadd.f32 %v9773, %v9821
        %v9823 = vpop.f32.mrf.mxu0
        %v9824 = vadd.f32 %v9775, %v9823
        %9825 = vdwg.mxu0
        %9826 = vmatpush.bf16.msra.mxu0 %v9679
        %9827 = vmatpush.bf16.msra.mxu0 %v9677
        %9828 = vmatpush.bf16.msra.mxu0 %v9675
        %9829 = vmatpush.bf16.msra.mxu0 %v9673
        %9830 = vmatpush.bf16.msra.mxu0 %v9671
        %9831 = vmatpush.bf16.msra.mxu0 %v9669
        %9832 = vmatpush.bf16.msra.mxu0 %v9667
        %9833 = vmatpush.bf16.msra.mxu0 %v9665
        %9834 = vmatmul.bf16.gmra.mxu0 %v9515
        %v9835 = vpop.f32.mrf.mxu0
        %v9836 = vadd.f32 %v9565, %v9835
        %v9837 = vpop.f32.mrf.mxu0
        %v9838 = vadd.f32 %v9565, %v9837
        %9839 = vmatmul.bf16.gmra.mxu0 %v9517
        %v9840 = vpop.f32.mrf.mxu0
        %v9841 = vadd.f32 %v9565, %v9840
        %v9842 = vpop.f32.mrf.mxu0
        %v9843 = vadd.f32 %v9565, %v9842
        %9844 = vmatmul.bf16.gmra.mxu0 %v9519
        %v9845 = vpop.f32.mrf.mxu0
        %v9846 = vadd.f32 %v9565, %v9845
        %v9847 = vpop.f32.mrf.mxu0
        %v9848 = vadd.f32 %v9565, %v9847
        %9849 = vmatmul.bf16.gmra.mxu0 %v9521
        %v9850 = vpop.f32.mrf.mxu0
        %v9851 = vadd.f32 %v9565, %v9850
        %v9852 = vpop.f32.mrf.mxu0
        %v9853 = vadd.f32 %v9565, %v9852
        %9854 = vmatmul.bf16.gmra.mxu0 %v9523
        %v9855 = vpop.f32.mrf.mxu0
        %v9856 = vadd.f32 %v9565, %v9855
        %v9857 = vpop.f32.mrf.mxu0
        %v9858 = vadd.f32 %v9565, %v9857
        %9859 = vmatmul.bf16.gmra.mxu0 %v9525
        %v9860 = vpop.f32.mrf.mxu0
        %v9861 = vadd.f32 %v9565, %v9860
        %v9862 = vpop.f32.mrf.mxu0
        %v9863 = vadd.f32 %v9565, %v9862
        %9864 = vmatmul.bf16.gmra.mxu0 %v9527
        %v9865 = vpop.f32.mrf.mxu0
        %v9866 = vadd.f32 %v9565, %v9865
        %v9867 = vpop.f32.mrf.mxu0
        %v9868 = vadd.f32 %v9565, %v9867
        %9869 = vmatmul.bf16.gmra.mxu0 %v9529
        %v9870 = vpop.f32.mrf.mxu0
        %v9871 = vadd.f32 %v9565, %v9870
        %v9872 = vpop.f32.mrf.mxu0
        %v9873 = vadd.f32 %v9565, %v9872
        %9874 = vdwg.mxu0
        %9875 = vmatpush.bf16.msra.mxu0 %v9695
        %9876 = vmatpush.bf16.msra.mxu0 %v9693
        %9877 = vmatpush.bf16.msra.mxu0 %v9691
        %9878 = vmatpush.bf16.msra.mxu0 %v9689
        %9879 = vmatpush.bf16.msra.mxu0 %v9687
        %9880 = vmatpush.bf16.msra.mxu0 %v9685
        %9881 = vmatpush.bf16.msra.mxu0 %v9683
        %9882 = vmatpush.bf16.msra.mxu0 %v9681
        %9883 = vmatmul.bf16.gmra.mxu0 %v9516
        %v9884 = vpop.f32.mrf.mxu0
        %v9885 = vadd.f32 %v9836, %v9884
        %v9886 = vpop.f32.mrf.mxu0
        %v9887 = vadd.f32 %v9838, %v9886
        %9888 = vmatmul.bf16.gmra.mxu0 %v9518
        %v9889 = vpop.f32.mrf.mxu0
        %v9890 = vadd.f32 %v9841, %v9889
        %v9891 = vpop.f32.mrf.mxu0
        %v9892 = vadd.f32 %v9843, %v9891
        %9893 = vmatmul.bf16.gmra.mxu0 %v9520
        %v9894 = vpop.f32.mrf.mxu0
        %v9895 = vadd.f32 %v9846, %v9894
        %v9896 = vpop.f32.mrf.mxu0
        %v9897 = vadd.f32 %v9848, %v9896
        %9898 = vmatmul.bf16.gmra.mxu0 %v9522
        %v9899 = vpop.f32.mrf.mxu0
        %v9900 = vadd.f32 %v9851, %v9899
        %v9901 = vpop.f32.mrf.mxu0
        %v9902 = vadd.f32 %v9853, %v9901
        %9903 = vmatmul.bf16.gmra.mxu0 %v9524
        %v9904 = vpop.f32.mrf.mxu0
        %v9905 = vadd.f32 %v9856, %v9904
        %v9906 = vpop.f32.mrf.mxu0
        %v9907 = vadd.f32 %v9858, %v9906
        %9908 = vmatmul.bf16.gmra.mxu0 %v9526
        %v9909 = vpop.f32.mrf.mxu0
        %v9910 = vadd.f32 %v9861, %v9909
        %v9911 = vpop.f32.mrf.mxu0
        %v9912 = vadd.f32 %v9863, %v9911
        %9913 = vmatmul.bf16.gmra.mxu0 %v9528
        %v9914 = vpop.f32.mrf.mxu0
        %v9915 = vadd.f32 %v9866, %v9914
        %v9916 = vpop.f32.mrf.mxu0
        %v9917 = vadd.f32 %v9868, %v9916
        %9918 = vmatmul.bf16.gmra.mxu0 %v9530
        %v9919 = vpop.f32.mrf.mxu0
        %v9920 = vadd.f32 %v9871, %v9919
        %v9921 = vpop.f32.mrf.mxu0
        %v9922 = vadd.f32 %v9873, %v9921
        %9923 = vdwg.mxu0
        %9924 = vst [vmem:[%s310] sm:$0xff] %v9787
        %9925 = vst [vmem:[%s310 + $0x8] sm:$0xff] %v9885
        %9926 = vst [vmem:[%s310 + $0x10] sm:$0xff] %v9789
        %9927 = vst [vmem:[%s310 + $0x18] sm:$0xff] %v9887
        %9928 = vst [vmem:[%s310 + $0x20] sm:$0xff] %v9792
        %9929 = vst [vmem:[%s310 + $0x28] sm:$0xff] %v9890
        %9930 = vst [vmem:[%s310 + $0x30] sm:$0xff] %v9794
        %9931 = vst [vmem:[%s310 + $0x38] sm:$0xff] %v9892
        %9932 = vst [vmem:[%s310 + $0x40] sm:$0xff] %v9797
        %9933 = vst [vmem:[%s310 + $0x48] sm:$0xff] %v9895
        %9934 = vst [vmem:[%s310 + $0x50] sm:$0xff] %v9799
        %9935 = vst [vmem:[%s310 + $0x58] sm:$0xff] %v9897
        %9936 = vst [vmem:[%s310 + $0x60] sm:$0xff] %v9802
        %9937 = vst [vmem:[%s310 + $0x68] sm:$0xff] %v9900
        %9938 = vst [vmem:[%s310 + $0x70] sm:$0xff] %v9804
        %9939 = vst [vmem:[%s310 + $0x78] sm:$0xff] %v9902
        %9940 = vst [vmem:[%s310 + $0x80] sm:$0xff] %v9807
        %9941 = vst [vmem:[%s310 + $0x88] sm:$0xff] %v9905
        %9942 = vst [vmem:[%s310 + $0x90] sm:$0xff] %v9809
        %9943 = vst [vmem:[%s310 + $0x98] sm:$0xff] %v9907
        %9944 = vst [vmem:[%s310 + $0xa0] sm:$0xff] %v9812
        %9945 = vst [vmem:[%s310 + $0xa8] sm:$0xff] %v9910
        %9946 = vst [vmem:[%s310 + $0xb0] sm:$0xff] %v9814
        %9947 = vst [vmem:[%s310 + $0xb8] sm:$0xff] %v9912
        %9948 = vst [vmem:[%s310 + $0xc0] sm:$0xff] %v9817
        %9949 = vst [vmem:[%s310 + $0xc8] sm:$0xff] %v9915
        %9950 = vst [vmem:[%s310 + $0xd0] sm:$0xff] %v9819
        %9951 = vst [vmem:[%s310 + $0xd8] sm:$0xff] %v9917
        %9952 = vst [vmem:[%s310 + $0xe0] sm:$0xff] %v9822
        %9953 = vst [vmem:[%s310 + $0xe8] sm:$0xff] %v9920
        %9954 = vst [vmem:[%s310 + $0xf0] sm:$0xff] %v9824
        %9955 = vst [vmem:[%s310 + $0xf8] sm:$0xff] %v9922
        %s9956 = sand.u32 %s162, 1
        %s9957 = scalar_lea.sflag [#allocation4], %s9956
        %s9958 = sand.u32 %s162, 1
        %s9959 = smul.addr %s9958, 256
        %s9960 = scalar_lea.vmem [#allocation10], %s9959
        // Predicated region
        $region61: #{tpu_custom_call.1} parent=43 // pred_check
          %p9961 = pneg %p172
        $region62: #{tpu_custom_call.1} parent=43 // pred_check_branch
          %9963 = sbr.rel (%p9961) target = $region64
        $region63: #{tpu_custom_call.1} parent=43 // pred_region
          %s9964 = smul.u32 16, %s23
          %9966 = vsyncadd %s9957, 0
          %s9967 = smul.addr %s9964, 2
          %s9968 = smul.addr %s9967, 8
          %s9969 = scalar_lea.hbm %s6, %s9968
          %s9970 = sshll.u32 %s9960, 4
          %s9971 = int_to_ptr.vmem [resolvable:$true] %s9970
          %s9972 = sshll.u32 %s9969, 4
          %s9973 = int_to_ptr.hbm [resolvable:$true] %s9972
          %9978 = dma.vmem_to_hbm [thread:$0]  %s9971, 4096, %s9973, %s9957, 256, 256, 16
        $region64: #{tpu_custom_call.1} parent=43 // pred_fallthru
          _
      $region44: #{tpu_custom_call.1} parent=5 // pred_fallthru
        _
      %p9979 = scmp.le.s32.totalorder 2, %s18
      // Predicated region
      $region65: #{tpu_custom_call.1} parent=5 // pred_check
        %p9980 = pneg %p9979
      $region66: #{tpu_custom_call.1} parent=5 // pred_check_branch
        %9982 = sbr.rel (%p9980) target = $region68
      $region67: #{tpu_custom_call.1} parent=5 // pred_region
        %s9983 = ssub.s32 %s18, 2
        // Predicated region
        $region69: #{tpu_custom_call.1} parent=67 // pred_check
          %p9984 = pneg %p178
        $region70: #{tpu_custom_call.1} parent=67 // pred_check_branch
          %9986 = sbr.rel (%p9984) target = $region72
        $region71: #{tpu_custom_call.1} parent=67 // pred_region
          %s9987 = sand.u32 %s163, 1
          %s9988 = scalar_lea.sflag [#allocation4], %s9987
          %s9989 = sand.u32 %s163, 1
          %s9990 = smul.addr %s9989, 256
          %s9991 = scalar_lea.vmem [#allocation10], %s9990
          %9993 = dma.done %s9988, 4096
        $region72: #{tpu_custom_call.1} parent=67 // pred_fallthru
          _
      $region68: #{tpu_custom_call.1} parent=5 // pred_fallthru
        _
    $region6: #{tpu_custom_call.1} parent=1 // loop_footer
      %s22 = sadd.s32 1, %s18
    $region7: #{tpu_custom_call.1} parent=1 // loop_footer_branch
      %17 = sbr.rel target = $region3
    $region8: #{tpu_custom_call.1} parent=1 // loop_exit
      _
    %9994 = vsyncpa [#allocation3], 1
    %s9995 = scalar_lea.sflag [#allocation3], 1
    %9996 = vsyncpa %s9995, 1
    %9997 = vsyncpa [#allocation6], 1
    %9998 = vsyncpa [#allocation9], 1
    %9999 = vsyncpa [#allocation4], 1
    %s10000 = scalar_lea.sflag [#allocation4], 1
    %10001 = vsyncpa %s10000, 1

</llo_original>
